<compile_context>
chip_gen: v6e
topology: v6e:2x2x1
jax: 0.10.0
libtpu: 0.0.40
codegen_flags: <defaults>
</compile_context>

<pallas_src>
import functools

import numpy as np
import jax
import jax.numpy as jnp
from jax.experimental import pallas as pl
from jax.experimental.pallas import tpu as pltpu


def _round_up(n, m):
    return ((n + m - 1) // m) * m


def _pick_tile(n_pad, candidates=(2048, 1024, 512, 256, 128)):
    for t in candidates:
        if n_pad % t == 0:
            return t
    return n_pad


def _knn_vmem_bytes(tile_m, n_pad, dh, dc=8):
    cols = 2 * n_pad * (dc + dh + 2) * 4            # double-buffered full-column operands
    rows = 2 * tile_m * (dc + dh + 1 + 3 * 8) * 4   # row tiles + outputs
    work = 8 * tile_m * n_pad * 4                   # d2 / compare / where temporaries
    total = cols + rows + work + (4 << 20)
    return int(min(64 << 20, max(16 << 20, total)))


# --------------------------- Pallas kernels ---------------------------------

def _embed_mlp_kernel(x_ref, w1_ref, b1_ref, w2_ref, b2_ref, o_ref):
    # per-point embedding MLP:  relu(x @ W1 + b1) @ W2 + b2   (f32 throughout)
    h = jnp.dot(x_ref[...], w1_ref[...], preferred_element_type=jnp.float32)
    h = jnp.maximum(h + b1_ref[...], 0.0)
    o_ref[...] = jnp.dot(h, w2_ref[...], preferred_element_type=jnp.float32) + b2_ref[...]


def embed_mlp(x, w1, b1, w2, b2, *, tile_m):
    n, din = x.shape
    dout = w2.shape[1]
    return pl.pallas_call(
        _embed_mlp_kernel,
        out_shape=jax.ShapeDtypeStruct((n, dout), jnp.float32),
        grid=(n // tile_m,),
        in_specs=[
            pl.BlockSpec((tile_m, din), lambda i: (i, 0)),
            pl.BlockSpec(w1.shape, lambda i: (0, 0)),
            pl.BlockSpec(b1.shape, lambda i: (0, 0)),
            pl.BlockSpec(w2.shape, lambda i: (0, 0)),
            pl.BlockSpec(b2.shape, lambda i: (0, 0)),
        ],
        out_specs=pl.BlockSpec((tile_m, dout), lambda i: (i, 0)),
        compiler_params=pltpu.CompilerParams(
            dimension_semantics=("parallel",),
            vmem_limit_bytes=32 * 1024 * 1024),
    )(x, w1, b1, w2, b2)


def _knn_edge_kernel(nvalid_ref,
                     crow_ref, ccolT_ref, brow_ref, bcol_ref, csq_ref,
                     hrow_ref, hcol_ref, w_ref, b_ref,
                     idx_ref, score_ref, valid_ref, *, k):
    """Fused pairwise distance + per-row top-k + one-hot neighbor gather +
    bilinear edge score.  The [TM, N] distance block lives only in VMEM."""
    nv = nvalid_ref[0]
    i = pl.program_id(0)
    tm = crow_ref.shape[0]
    npad = ccolT_ref.shape[1]

    # Gram-matrix distances: lane-dense [TM,8]@[8,N] MXU matmul.
    # NOTE: ||a||^2 - 2ab + ||b||^2 in f32 can reorder near-coincident points
    # vs. an exact (a-b)^2; clamped at 0.
    c = crow_ref[...]                                                   # [TM, 8]
    g = jnp.dot(c, ccolT_ref[...], preferred_element_type=jnp.float32)  # [TM, N]
    row_sq = jnp.sum(c * c, axis=1, keepdims=True)                      # [TM, 1]
    d2 = jnp.maximum(row_sq - 2.0 * g + csq_ref[...], 0.0)              # [TM, N]

    col = jax.lax.broadcasted_iota(jnp.int32, (tm, npad), 1)
    row = i * tm + jax.lax.broadcasted_iota(jnp.int32, (tm, npad), 0)
    big = jnp.float32(1e30)
    invalid = (col >= nv) | (col == row) | (brow_ref[...] != bcol_ref[...])
    d2 = jnp.where(invalid, big, d2)

    # Per-node bilinear projection:  y = hybrid_row @ W_edge  (once per node).
    y = jnp.dot(hrow_ref[...], w_ref[...], preferred_element_type=jnp.float32)  # [TM, DH]
    hcol = hcol_ref[...]                                                # [N, DH]
    bias = b_ref[...]                                                   # [1, 1]
    row_idx = i * tm + jax.lax.broadcasted_iota(jnp.int32, (tm, 1), 0)  # [TM, 1]

    idx_cols, score_cols, valid_cols = [], [], []
    for _ in range(k):
        m = jnp.min(d2, axis=1, keepdims=True)                          # [TM, 1]
        ok = m < big                                                    # slot has a real neighbor
        is_min = d2 == m
        amin = jnp.min(jnp.where(is_min, col, npad), axis=1, keepdims=True)  # [TM, 1]
        picked = col == amin                                            # one-hot [TM, N]
        # Neighbor-feature gather rides the idle MXU: [TM,N] @ [N,DH].
        hn = jnp.dot(picked.astype(jnp.float32), hcol,
                     preferred_element_type=jnp.float32)                # [TM, DH]
        s = jnp.sum(hn * y, axis=1, keepdims=True) + bias               # [TM, 1]
        idx_cols.append(jnp.where(ok, amin, row_idx))
        score_cols.append(jnp.where(ok, s, 0.0))
        valid_cols.append(ok.astype(jnp.int32))
        d2 = jnp.where(picked, big, d2)                                 # mask the picked column

    idx_ref[...] = jnp.concatenate(idx_cols, axis=1)                    # [TM, k]
    score_ref[...] = jnp.concatenate(score_cols, axis=1)                # [TM, k]
    valid_ref[...] = jnp.concatenate(valid_cols, axis=1)                # [TM, k]


def knn_edge(n_valid, coords8, coords_t, b_row, b_col, col_sq,
             hybrid, w_edge, b_edge, *, k, tile_m):
    n_pad, dc = coords8.shape
    dh = hybrid.shape[1]
    kernel = functools.partial(_knn_edge_kernel, k=k)
    out_shape = (
        jax.ShapeDtypeStruct((n_pad, k), jnp.int32),
        jax.ShapeDtypeStruct((n_pad, k), jnp.float32),
        jax.ShapeDtypeStruct((n_pad, k), jnp.int32),
    )
    return pl.pallas_call(
        kernel,
        out_shape=out_shape,
        grid_spec=pltpu.PrefetchScalarGridSpec(
            num_scalar_prefetch=1,
            grid=(n_pad // tile_m,),
            in_specs=[
                pl.BlockSpec((tile_m, dc), lambda i, nv: (i, 0)),   # row coords tile
                pl.BlockSpec((dc, n_pad), lambda i, nv: (0, 0)),    # transposed columns (lane-dense)
                pl.BlockSpec((tile_m, 1), lambda i, nv: (i, 0)),    # row batch ids
                pl.BlockSpec((1, n_pad), lambda i, nv: (0, 0)),     # col batch ids
                pl.BlockSpec((1, n_pad), lambda i, nv: (0, 0)),     # col squared norms
                pl.BlockSpec((tile_m, dh), lambda i, nv: (i, 0)),   # row hybrid features
                pl.BlockSpec((n_pad, dh), lambda i, nv: (0, 0)),    # all hybrid features (gather src)
                pl.BlockSpec(w_edge.shape, lambda i, nv: (0, 0)),   # W_edge
                pl.BlockSpec(b_edge.shape, lambda i, nv: (0, 0)),   # b_edge
            ],
            out_specs=(
                pl.BlockSpec((tile_m, k), lambda i, nv: (i, 0)),
                pl.BlockSpec((tile_m, k), lambda i, nv: (i, 0)),
                pl.BlockSpec((tile_m, k), lambda i, nv: (i, 0)),
            ),
        ),
        compiler_params=pltpu.CompilerParams(
            dimension_semantics=("parallel",),
            vmem_limit_bytes=_knn_vmem_bytes(tile_m, n_pad, dh, dc)),
    )(n_valid, coords8, coords_t, b_row, b_col, col_sq, hybrid, hybrid,
      w_edge, b_edge)


# ------------------------- Jitted device forward ------------------------------

@functools.partial(jax.jit, static_argnames=("k", "feat_dim", "tile_knn"))
def _forward_device(pc_pad, cid_pad, n_valid, w1, b1, w2, b2, w_edge, b_edge,
                    *, k, feat_dim, tile_knn):
    n_pad = pc_pad.shape[0]
    coords = pc_pad[:, :3]
    batch_idx = pc_pad[:, 3].astype(jnp.int32)
    value = pc_pad[:, 4:5]

    # ---- embedding model (row-tiled Pallas MLP, large tiles) ------------------
    in_dim = w1.shape[0]
    feats = jnp.concatenate([coords, pc_pad[:, 3:4], value], axis=1)    # [n_pad, 5]
    feats = jnp.pad(feats, ((0, 0), (0, in_dim - feats.shape[1])))
    raw = embed_mlp(feats, w1, b1, w2, b2, tile_m=_pick_tile(n_pad))    # [n_pad, 22]

    fd = feat_dim
    spatial = coords + jnp.tanh(raw[:, :3])
    feature = raw[:, 3:3 + fd]
    covariance = jax.nn.softplus(raw[:, 3 + fd:5 + fd])
    occupancy = jax.nn.softplus(raw[:, 5 + fd:6 + fd])
    hybrid = jnp.concatenate([spatial, feature], axis=1)                # [n_pad, 19]

    # ---- fused kNN graph + edge scores ----------------------------------------
    dc = 8
    coords8 = jnp.pad(coords, ((0, 0), (0, dc - coords.shape[1])))      # [n_pad, 8]
    coords_t = coords8.T                                                # [8, n_pad]
    col_sq = jnp.sum(coords8 * coords8, axis=1)[None, :]                # [1, n_pad]
    b_row = batch_idx[:, None]
    b_col = batch_idx[None, :]

    nbr, score, valid = knn_edge(n_valid, coords8, coords_t, b_row, b_col,
                                 col_sq, hybrid, w_edge, b_edge,
                                 k=k, tile_m=tile_knn)

    src = jnp.repeat(jnp.arange(n_pad, dtype=jnp.int32), k)
    dst = nbr.reshape(-1)
    edge_index = jnp.stack([src, dst], axis=0)                          # [2, n_pad*k]
    edge_score = score.reshape(-1)
    edge_valid = valid.reshape(-1)
    edge_truth = (cid_pad[src] == cid_pad[dst]).astype(jnp.int32)

    return dict(spatial=spatial, feature=feature, covariance=covariance,
                occupancy=occupancy, hybrid=hybrid,
                edge_index=edge_index, edge_score=edge_score,
                edge_truth=edge_truth, edge_valid=edge_valid)


# ------------------------------ Module --------------------------------------

class GraphSPICEPallas:
    """GraphSPICE forward: skip-class masking -> embedding model -> neighbor
    graph construction (ParametricGDC-style kNN) -> edge scores / edge truth."""

    def __init__(self, skip_classes=(2, 3, 4), in_dim=8, hidden=32,
                 feat_dim=16, k=5, tile_knn=128, seed=42):
        assert tile_knn % 8 == 0
        self.skip_classes = tuple(skip_classes)
        self.k = k
        self.feat_dim = feat_dim
        self.tile_knn = tile_knn
        out_dim = 3 + feat_dim + 2 + 1   # spatial, feature, covariance, occupancy
        keys = jax.random.split(jax.random.PRNGKey(seed), 3)
        self.w1 = 0.1 * jax.random.normal(keys[0], (in_dim, hidden), jnp.float32)
        self.b1 = jnp.zeros((1, hidden), jnp.float32)
        self.w2 = 0.1 * jax.random.normal(keys[1], (hidden, out_dim), jnp.float32)
        self.b2 = jnp.zeros((1, out_dim), jnp.float32)
        hyb = 3 + feat_dim
        self.w_edge = 0.1 * jax.random.normal(keys[2], (hyb, hyb), jnp.float32)
        self.b_edge = jnp.zeros((1, 1), jnp.float32)
        self.training = True

    def __call__(self, point_cloud, cluster_label):
        pc_np = np.asarray(point_cloud, dtype=np.float32)
        cl_np = np.asarray(cluster_label, dtype=np.float32)

        # ---- skip-class mask (host-side, mirroring the np.isin in torch) ----
        mask = ~np.isin(cl_np[:, -1].astype(np.int64),
                        np.asarray(self.skip_classes))
        pc_m = pc_np[mask]
        cl_m = cl_np[mask]
        n_m = int(pc_m.shape[0])

        # ---- pad to a bucketed row count (>= 2 tiles so the "parallel" row
        #      grid shards across both TensorCores on v7x) --------------------
        tm = self.tile_knn
        n_pad = max(2 * tm, _round_up(max(n_m, 1), tm))
        pc_pad = np.zeros((n_pad, pc_m.shape[1]), np.float32)
        pc_pad[:n_m] = pc_m
        pc_pad[n_m:, 3] = -1.0                      # padded batch id never matches
        cid_pad = np.zeros((n_pad,), np.int32)
        cid_pad[:n_m] = cl_m[:, 4].astype(np.int32)
        n_valid = jnp.asarray([n_m], jnp.int32)

        out = _forward_device(jnp.asarray(pc_pad), jnp.asarray(cid_pad), n_valid,
                              self.w1, self.b1, self.w2, self.b2,
                              self.w_edge, self.b_edge,
                              k=self.k, feat_dim=self.feat_dim, tile_knn=tm)

        n_e = n_m * self.k
        spatial = out['spatial'][:n_m]
        feature = out['feature'][:n_m]
        covariance = out['covariance'][:n_m]
        occupancy = out['occupancy'][:n_m]
        hybrid = out['hybrid'][:n_m]
        edge_index = out['edge_index'][:, :n_e]
        edge_score = out['edge_score'][:n_e]
        edge_truth = out['edge_truth'][:n_e]
        edge_valid = out['edge_valid'][:n_e]

        coords = jnp.asarray(pc_m[:, :3])
        batch_idx = jnp.asarray(pc_m[:, 3].astype(np.int32))

        graph = {
            'x': hybrid, 'pos': coords, 'batch': batch_idx,
            'edge_index': edge_index, 'edge_attr': edge_score,
            'edge_truth': edge_truth, 'edge_valid': edge_valid,
        }
        res = {
            'spatial_embeddings': [spatial],
            'feature_embeddings': [feature],
            'covariance': [covariance],
            'occupancy': [occupancy],
            'hypergraph_features': [hybrid],
            'coordinates': [coords],
            'batch_indices': [batch_idx],
            'edge_score': [edge_score],
            'edge_index': [edge_index],
            'graph': [graph],
        }
        if self.training:
            res['edge_truth'] = [edge_truth]
        return res


# ------------------------------- Main ----------------------------------------

if __name__ == "__main__":
    key = jax.random.PRNGKey(0)
    k1, k2, k3, k4 = jax.random.split(key, 4)

    N = 512  # total points, 2 batches of 256
    coords = jax.random.uniform(k1, (N, 3), jnp.float32, 0.0, 10.0)
    batch = jnp.concatenate(
        [jnp.zeros((N // 2,), jnp.float32), jnp.ones((N // 2,), jnp.float32)])
    value = jax.random.uniform(k2, (N, 1), jnp.float32)
    point_cloud = jnp.concatenate([coords, batch[:, None], value], axis=1)   # [N, 5]

    semantic = jax.random.randint(k3, (N, 1), 0, 5).astype(jnp.float32)      # classes 0..4
    cluster_id = jax.random.randint(k4, (N, 1), 0, 6).astype(jnp.float32)
    cluster_label = jnp.concatenate(
        [coords, batch[:, None], cluster_id, semantic], axis=1)              # [N, 6]

    model = GraphSPICEPallas()
    res = model(point_cloud, cluster_label)

    jax.block_until_ready(res['spatial_embeddings'][0])
    jax.block_until_ready(res['edge_score'][0])
    jax.block_until_ready(res['edge_index'][0])
    jax.block_until_ready(res['edge_truth'][0])
    print("KERNEL_OK")
</pallas_src>

<mosaic_0001>
module attributes {stable_mosaic.version = 11 : i64} {
  func.func @_embed_mlp_kernel(%arg0: i32, %arg1: memref<256x8xf32, #tpu.memory_space<vmem>>, %arg2: memref<8x32xf32, #tpu.memory_space<vmem>>, %arg3: memref<1x32xf32, #tpu.memory_space<vmem>>, %arg4: memref<32x22xf32, #tpu.memory_space<vmem>>, %arg5: memref<1x22xf32, #tpu.memory_space<vmem>>, %arg6: memref<256x22xf32, #tpu.memory_space<vmem>>) attributes {dimension_semantics = [#tpu.dimension_semantics<parallel>], iteration_bounds = array<i64: 1>, scalar_prefetch = 0 : i64, scratch_operands = 0 : i64, tpu.core_type = #tpu.core_type<tc>, window_params = [{transform_indices = @transform_0, window_bounds = array<i64: 256, 8>}, {pipeline_mode = #tpu.pipeline_mode<synchronous>, transform_indices = @transform_1, window_bounds = array<i64: 8, 32>}, {pipeline_mode = #tpu.pipeline_mode<synchronous>, transform_indices = @transform_2, window_bounds = array<i64: 1, 32>}, {pipeline_mode = #tpu.pipeline_mode<synchronous>, transform_indices = @transform_3, window_bounds = array<i64: 32, 22>}, {pipeline_mode = #tpu.pipeline_mode<synchronous>, transform_indices = @transform_4, window_bounds = array<i64: 1, 22>}, {transform_indices = @transform_5, window_bounds = array<i64: 256, 22>}]} {
    %c0 = arith.constant 0 : index
    %c0_0 = arith.constant 0 : index
    %0 = vector.load %arg1[%c0, %c0_0] : memref<256x8xf32, #tpu.memory_space<vmem>>, vector<256x8xf32>
    %c0_1 = arith.constant 0 : index
    %c0_2 = arith.constant 0 : index
    %1 = vector.load %arg2[%c0_1, %c0_2] : memref<8x32xf32, #tpu.memory_space<vmem>>, vector<8x32xf32>
    %cst = arith.constant dense<0.000000e+00> : vector<256x32xf32>
    %2 = tpu.matmul %0, %1, %cst {dimension_numbers = #tpu.dot_dimension_numbers<[1], [0], [0], [1], [0, 0, 1, 1], [], []>} : vector<256x8xf32>, vector<8x32xf32>, vector<256x32xf32> -> vector<256x32xf32>
    %c0_3 = arith.constant 0 : index
    %c0_4 = arith.constant 0 : index
    %3 = vector.load %arg3[%c0_3, %c0_4] : memref<1x32xf32, #tpu.memory_space<vmem>>, vector<1x32xf32>
    %4 = vector.broadcast %3 : vector<1x32xf32> to vector<256x32xf32>
    %5 = arith.addf %2, %4 : vector<256x32xf32>
    %cst_5 = arith.constant 0.000000e+00 : f32
    %6 = vector.broadcast %cst_5 : f32 to vector<256x32xf32>
    %7 = arith.maximumf %5, %6 : vector<256x32xf32>
    %c0_6 = arith.constant 0 : index
    %c0_7 = arith.constant 0 : index
    %8 = vector.load %arg4[%c0_6, %c0_7] : memref<32x22xf32, #tpu.memory_space<vmem>>, vector<32x22xf32>
    %cst_8 = arith.constant dense<0.000000e+00> : vector<256x22xf32>
    %9 = tpu.matmul %7, %8, %cst_8 {dimension_numbers = #tpu.dot_dimension_numbers<[1], [0], [0], [1], [0, 0, 1, 1], [], []>} : vector<256x32xf32>, vector<32x22xf32>, vector<256x22xf32> -> vector<256x22xf32>
    %c0_9 = arith.constant 0 : index
    %c0_10 = arith.constant 0 : index
    %10 = vector.load %arg5[%c0_9, %c0_10] : memref<1x22xf32, #tpu.memory_space<vmem>>, vector<1x22xf32>
    %11 = vector.broadcast %10 : vector<1x22xf32> to vector<256x22xf32>
    %12 = arith.addf %9, %11 : vector<256x22xf32>
    %c0_11 = arith.constant 0 : index
    %c0_12 = arith.constant 0 : index
    %13 = vector.load %arg6[%c0_11, %c0_12] : memref<256x22xf32, #tpu.memory_space<vmem>>, vector<256x22xf32>
    tpu.vector_store %arg6[%c0_11, %c0_12], %12 {strides = array<i32>} : memref<256x22xf32, #tpu.memory_space<vmem>>, vector<256x22xf32>,
    return
  }
  func.func @transform_0(%arg0: i32) -> (i32, i32) {
    %c0_i32 = arith.constant 0 : i32
    %c0_i32_0 = arith.constant 0 : i32
    return %arg0, %c0_i32 : i32, i32
  }
  func.func @transform_1(%arg0: i32) -> (i32, i32) {
    %c0_i32 = arith.constant 0 : i32
    %c0_i32_0 = arith.constant 0 : i32
    %c0_i32_1 = arith.constant 0 : i32
    return %c0_i32, %c0_i32_0 : i32, i32
  }
  func.func @transform_2(%arg0: i32) -> (i32, i32) {
    %c0_i32 = arith.constant 0 : i32
    %c0_i32_0 = arith.constant 0 : i32
    %c0_i32_1 = arith.constant 0 : i32
    return %c0_i32, %c0_i32_0 : i32, i32
  }
  func.func @transform_3(%arg0: i32) -> (i32, i32) {
    %c0_i32 = arith.constant 0 : i32
    %c0_i32_0 = arith.constant 0 : i32
    %c0_i32_1 = arith.constant 0 : i32
    return %c0_i32, %c0_i32_0 : i32, i32
  }
  func.func @transform_4(%arg0: i32) -> (i32, i32) {
    %c0_i32 = arith.constant 0 : i32
    %c0_i32_0 = arith.constant 0 : i32
    %c0_i32_1 = arith.constant 0 : i32
    return %c0_i32, %c0_i32_0 : i32, i32
  }
  func.func @transform_5(%arg0: i32) -> (i32, i32) {
    %c0_i32 = arith.constant 0 : i32
    %c0_i32_0 = arith.constant 0 : i32
    return %arg0, %c0_i32 : i32, i32
  }
}

module attributes {stable_mosaic.version = 11 : i64} {
  func.func @_knn_edge_kernel(%arg0: i32, %arg1: memref<1xi32, #tpu.memory_space<smem>>, %arg2: memref<128x8xf32, #tpu.memory_space<vmem>>, %arg3: memref<8x256xf32, #tpu.memory_space<vmem>>, %arg4: memref<128x1xi32, #tpu.memory_space<vmem>>, %arg5: memref<1x256xi32, #tpu.memory_space<vmem>>, %arg6: memref<1x256xf32, #tpu.memory_space<vmem>>, %arg7: memref<128x19xf32, #tpu.memory_space<vmem>>, %arg8: memref<256x19xf32, #tpu.memory_space<vmem>>, %arg9: memref<19x19xf32, #tpu.memory_space<vmem>>, %arg10: memref<1x1xf32, #tpu.memory_space<vmem>>, %arg11: memref<128x5xi32, #tpu.memory_space<vmem>>, %arg12: memref<128x5xf32, #tpu.memory_space<vmem>>, %arg13: memref<128x5xi32, #tpu.memory_space<vmem>>) attributes {dimension_semantics = [#tpu.dimension_semantics<parallel>], iteration_bounds = array<i64: 2>, scalar_prefetch = 1 : i64, scratch_operands = 0 : i64, tpu.core_type = #tpu.core_type<tc>, window_params = [{transform_indices = @transform_0, window_bounds = array<i64: 128, 8>}, {pipeline_mode = #tpu.pipeline_mode<synchronous>, transform_indices = @transform_1, window_bounds = array<i64: 8, 256>}, {transform_indices = @transform_2, window_bounds = array<i64: 128, 1>}, {pipeline_mode = #tpu.pipeline_mode<synchronous>, transform_indices = @transform_3, window_bounds = array<i64: 1, 256>}, {pipeline_mode = #tpu.pipeline_mode<synchronous>, transform_indices = @transform_4, window_bounds = array<i64: 1, 256>}, {transform_indices = @transform_5, window_bounds = array<i64: 128, 19>}, {pipeline_mode = #tpu.pipeline_mode<synchronous>, transform_indices = @transform_6, window_bounds = array<i64: 256, 19>}, {pipeline_mode = #tpu.pipeline_mode<synchronous>, transform_indices = @transform_7, window_bounds = array<i64: 19, 19>}, {pipeline_mode = #tpu.pipeline_mode<synchronous>, transform_indices = @transform_8, window_bounds = array<i64: 1, 1>}, {transform_indices = @transform_9, window_bounds = array<i64: 128, 5>}, {transform_indices = @transform_10, window_bounds = array<i64: 128, 5>}, {transform_indices = @transform_11, window_bounds = array<i64: 128, 5>}]} {
    %c0 = arith.constant 0 : index
    %0 = memref.load %arg1[%c0] : memref<1xi32, #tpu.memory_space<smem>>
    %c0_0 = arith.constant 0 : index
    %c0_1 = arith.constant 0 : index
    %1 = vector.load %arg2[%c0_0, %c0_1] : memref<128x8xf32, #tpu.memory_space<vmem>>, vector<128x8xf32>
    %c0_2 = arith.constant 0 : index
    %c0_3 = arith.constant 0 : index
    %2 = vector.load %arg3[%c0_2, %c0_3] : memref<8x256xf32, #tpu.memory_space<vmem>>, vector<8x256xf32>
    %cst = arith.constant dense<0.000000e+00> : vector<128x256xf32>
    %3 = tpu.matmul %1, %2, %cst {dimension_numbers = #tpu.dot_dimension_numbers<[1], [0], [0], [1], [0, 0, 1, 1], [], []>} : vector<128x8xf32>, vector<8x256xf32>, vector<128x256xf32> -> vector<128x256xf32>
    %4 = arith.mulf %1, %1 : vector<128x8xf32>
    %cst_4 = arith.constant dense<0.000000e+00> : vector<128xf32>
    %5 = vector.multi_reduction <add>, %4, %cst_4 [1] : vector<128x8xf32> to vector<128xf32>
    %6 = vector.shape_cast %5 : vector<128xf32> to vector<128x1xf32>
    %cst_5 = arith.constant 2.000000e+00 : f32
    %7 = vector.broadcast %cst_5 : f32 to vector<128x256xf32>
    %8 = arith.mulf %7, %3 : vector<128x256xf32>
    %9 = vector.broadcast %6 : vector<128x1xf32> to vector<128x256xf32>
    %10 = arith.subf %9, %8 : vector<128x256xf32>
    %c0_6 = arith.constant 0 : index
    %c0_7 = arith.constant 0 : index
    %11 = vector.load %arg6[%c0_6, %c0_7] : memref<1x256xf32, #tpu.memory_space<vmem>>, vector<1x256xf32>
    %12 = vector.broadcast %11 : vector<1x256xf32> to vector<128x256xf32>
    %13 = arith.addf %10, %12 : vector<128x256xf32>
    %cst_8 = arith.constant 0.000000e+00 : f32
    %14 = vector.broadcast %cst_8 : f32 to vector<128x256xf32>
    %15 = arith.maximumf %13, %14 : vector<128x256xf32>
    %16 = tpu.iota {dimensions = array<i32: 1>} : vector<128x256xi32>
    %c128_i32 = arith.constant 128 : i32
    %17 = arith.muli %arg0, %c128_i32 : i32
    %18 = tpu.iota {dimensions = array<i32: 0>} : vector<128x256xi32>
    %19 = vector.broadcast %17 : i32 to vector<128x256xi32>
    %20 = arith.addi %19, %18 : vector<128x256xi32>
    %21 = vector.broadcast %0 : i32 to vector<128x256xi32>
    %22 = arith.cmpi sge, %16, %21 : vector<128x256xi32>
    %23 = arith.cmpi eq, %16, %20 : vector<128x256xi32>
    %24 = arith.ori %22, %23 : vector<128x256xi1>
    %c0_9 = arith.constant 0 : index
    %c0_10 = arith.constant 0 : index
    %25 = vector.load %arg4[%c0_9, %c0_10] : memref<128x1xi32, #tpu.memory_space<vmem>>, vector<128x1xi32>
    %c0_11 = arith.constant 0 : index
    %c0_12 = arith.constant 0 : index
    %26 = vector.load %arg5[%c0_11, %c0_12] : memref<1x256xi32, #tpu.memory_space<vmem>>, vector<1x256xi32>
    %27 = vector.broadcast %25 : vector<128x1xi32> to vector<128x256xi32>
    %28 = vector.broadcast %26 : vector<1x256xi32> to vector<128x256xi32>
    %29 = arith.cmpi ne, %27, %28 : vector<128x256xi32>
    %30 = arith.ori %24, %29 : vector<128x256xi1>
    %cst_13 = arith.constant 1.000000e+30 : f32
    %31 = vector.broadcast %cst_13 : f32 to vector<128x256xf32>
    %32 = arith.select %30, %31, %15 : vector<128x256xi1>, vector<128x256xf32>
    %c0_14 = arith.constant 0 : index
    %c0_15 = arith.constant 0 : index
    %33 = vector.load %arg7[%c0_14, %c0_15] : memref<128x19xf32, #tpu.memory_space<vmem>>, vector<128x19xf32>
    %c0_16 = arith.constant 0 : index
    %c0_17 = arith.constant 0 : index
    %34 = vector.load %arg9[%c0_16, %c0_17] : memref<19x19xf32, #tpu.memory_space<vmem>>, vector<19x19xf32>
    %cst_18 = arith.constant dense<0.000000e+00> : vector<128x19xf32>
    %35 = tpu.matmul %33, %34, %cst_18 {dimension_numbers = #tpu.dot_dimension_numbers<[1], [0], [0], [1], [0, 0, 1, 1], [], []>} : vector<128x19xf32>, vector<19x19xf32>, vector<128x19xf32> -> vector<128x19xf32>
    %c0_19 = arith.constant 0 : index
    %c0_20 = arith.constant 0 : index
    %36 = vector.load %arg8[%c0_19, %c0_20] : memref<256x19xf32, #tpu.memory_space<vmem>>, vector<256x19xf32>
    %c0_21 = arith.constant 0 : index
    %c0_22 = arith.constant 0 : index
    %37 = vector.load %arg10[%c0_21, %c0_22] : memref<1x1xf32, #tpu.memory_space<vmem>>, vector<1x1xf32>
    %c128_i32_23 = arith.constant 128 : i32
    %38 = arith.muli %arg0, %c128_i32_23 : i32
    %39 = tpu.iota {dimensions = array<i32: 0>} : vector<128x1xi32>
    %40 = vector.broadcast %38 : i32 to vector<128x1xi32>
    %41 = arith.addi %40, %39 : vector<128x1xi32>
    %cst_24 = arith.constant dense<0x7F800000> : vector<128xf32>
    %42 = vector.multi_reduction <minimumf>, %32, %cst_24 [1] : vector<128x256xf32> to vector<128xf32>
    %43 = vector.shape_cast %42 : vector<128xf32> to vector<128x1xf32>
    %cst_25 = arith.constant 1.000000e+30 : f32
    %44 = vector.broadcast %cst_25 : f32 to vector<128x1xf32>
    %45 = arith.cmpf olt, %43, %44 : vector<128x1xf32>
    %46 = vector.broadcast %43 : vector<128x1xf32> to vector<128x256xf32>
    %47 = arith.cmpf oeq, %32, %46 : vector<128x256xf32>
    %c256_i32 = arith.constant 256 : i32
    %48 = vector.broadcast %c256_i32 : i32 to vector<128x256xi32>
    %49 = arith.select %47, %16, %48 : vector<128x256xi1>, vector<128x256xi32>
    %cst_26 = arith.constant dense<2147483647> : vector<128xi32>
    %50 = vector.multi_reduction <minsi>, %49, %cst_26 [1] : vector<128x256xi32> to vector<128xi32>
    %51 = vector.shape_cast %50 : vector<128xi32> to vector<128x1xi32>
    %52 = vector.broadcast %51 : vector<128x1xi32> to vector<128x256xi32>
    %53 = arith.cmpi eq, %16, %52 : vector<128x256xi32>
    %54 = arith.extui %53 : vector<128x256xi1> to vector<128x256xi32>
    %55 = arith.sitofp %54 : vector<128x256xi32> to vector<128x256xf32>
    %cst_27 = arith.constant dense<0.000000e+00> : vector<128x19xf32>
    %56 = tpu.matmul %55, %36, %cst_27 {dimension_numbers = #tpu.dot_dimension_numbers<[1], [0], [0], [1], [0, 0, 1, 1], [], []>} : vector<128x256xf32>, vector<256x19xf32>, vector<128x19xf32> -> vector<128x19xf32>
    %57 = arith.mulf %56, %35 : vector<128x19xf32>
    %cst_28 = arith.constant dense<0.000000e+00> : vector<128xf32>
    %58 = vector.multi_reduction <add>, %57, %cst_28 [1] : vector<128x19xf32> to vector<128xf32>
    %59 = vector.shape_cast %58 : vector<128xf32> to vector<128x1xf32>
    %60 = vector.broadcast %37 : vector<1x1xf32> to vector<128x1xf32>
    %61 = arith.addf %59, %60 : vector<128x1xf32>
    %62 = arith.select %45, %51, %41 : vector<128x1xi1>, vector<128x1xi32>
    %cst_29 = arith.constant 0.000000e+00 : f32
    %63 = vector.broadcast %cst_29 : f32 to vector<128x1xf32>
    %64 = arith.select %45, %61, %63 : vector<128x1xi1>, vector<128x1xf32>
    %65 = arith.extui %45 : vector<128x1xi1> to vector<128x1xi32>
    %cst_30 = arith.constant 1.000000e+30 : f32
    %66 = vector.broadcast %cst_30 : f32 to vector<128x256xf32>
    %67 = arith.select %53, %66, %32 : vector<128x256xi1>, vector<128x256xf32>
    %cst_31 = arith.constant dense<0x7F800000> : vector<128xf32>
    %68 = vector.multi_reduction <minimumf>, %67, %cst_31 [1] : vector<128x256xf32> to vector<128xf32>
    %69 = vector.shape_cast %68 : vector<128xf32> to vector<128x1xf32>
    %cst_32 = arith.constant 1.000000e+30 : f32
    %70 = vector.broadcast %cst_32 : f32 to vector<128x1xf32>
    %71 = arith.cmpf olt, %69, %70 : vector<128x1xf32>
    %72 = vector.broadcast %69 : vector<128x1xf32> to vector<128x256xf32>
    %73 = arith.cmpf oeq, %67, %72 : vector<128x256xf32>
    %c256_i32_33 = arith.constant 256 : i32
    %74 = vector.broadcast %c256_i32_33 : i32 to vector<128x256xi32>
    %75 = arith.select %73, %16, %74 : vector<128x256xi1>, vector<128x256xi32>
    %cst_34 = arith.constant dense<2147483647> : vector<128xi32>
    %76 = vector.multi_reduction <minsi>, %75, %cst_34 [1] : vector<128x256xi32> to vector<128xi32>
    %77 = vector.shape_cast %76 : vector<128xi32> to vector<128x1xi32>
    %78 = vector.broadcast %77 : vector<128x1xi32> to vector<128x256xi32>
    %79 = arith.cmpi eq, %16, %78 : vector<128x256xi32>
    %80 = arith.extui %79 : vector<128x256xi1> to vector<128x256xi32>
    %81 = arith.sitofp %80 : vector<128x256xi32> to vector<128x256xf32>
    %cst_35 = arith.constant dense<0.000000e+00> : vector<128x19xf32>
    %82 = tpu.matmul %81, %36, %cst_35 {dimension_numbers = #tpu.dot_dimension_numbers<[1], [0], [0], [1], [0, 0, 1, 1], [], []>} : vector<128x256xf32>, vector<256x19xf32>, vector<128x19xf32> -> vector<128x19xf32>
    %83 = arith.mulf %82, %35 : vector<128x19xf32>
    %cst_36 = arith.constant dense<0.000000e+00> : vector<128xf32>
    %84 = vector.multi_reduction <add>, %83, %cst_36 [1] : vector<128x19xf32> to vector<128xf32>
    %85 = vector.shape_cast %84 : vector<128xf32> to vector<128x1xf32>
    %86 = vector.broadcast %37 : vector<1x1xf32> to vector<128x1xf32>
    %87 = arith.addf %85, %86 : vector<128x1xf32>
    %88 = arith.select %71, %77, %41 : vector<128x1xi1>, vector<128x1xi32>
    %cst_37 = arith.constant 0.000000e+00 : f32
    %89 = vector.broadcast %cst_37 : f32 to vector<128x1xf32>
    %90 = arith.select %71, %87, %89 : vector<128x1xi1>, vector<128x1xf32>
    %91 = arith.extui %71 : vector<128x1xi1> to vector<128x1xi32>
    %cst_38 = arith.constant 1.000000e+30 : f32
    %92 = vector.broadcast %cst_38 : f32 to vector<128x256xf32>
    %93 = arith.select %79, %92, %67 : vector<128x256xi1>, vector<128x256xf32>
    %cst_39 = arith.constant dense<0x7F800000> : vector<128xf32>
    %94 = vector.multi_reduction <minimumf>, %93, %cst_39 [1] : vector<128x256xf32> to vector<128xf32>
    %95 = vector.shape_cast %94 : vector<128xf32> to vector<128x1xf32>
    %cst_40 = arith.constant 1.000000e+30 : f32
    %96 = vector.broadcast %cst_40 : f32 to vector<128x1xf32>
    %97 = arith.cmpf olt, %95, %96 : vector<128x1xf32>
    %98 = vector.broadcast %95 : vector<128x1xf32> to vector<128x256xf32>
    %99 = arith.cmpf oeq, %93, %98 : vector<128x256xf32>
    %c256_i32_41 = arith.constant 256 : i32
    %100 = vector.broadcast %c256_i32_41 : i32 to vector<128x256xi32>
    %101 = arith.select %99, %16, %100 : vector<128x256xi1>, vector<128x256xi32>
    %cst_42 = arith.constant dense<2147483647> : vector<128xi32>
    %102 = vector.multi_reduction <minsi>, %101, %cst_42 [1] : vector<128x256xi32> to vector<128xi32>
    %103 = vector.shape_cast %102 : vector<128xi32> to vector<128x1xi32>
    %104 = vector.broadcast %103 : vector<128x1xi32> to vector<128x256xi32>
    %105 = arith.cmpi eq, %16, %104 : vector<128x256xi32>
    %106 = arith.extui %105 : vector<128x256xi1> to vector<128x256xi32>
    %107 = arith.sitofp %106 : vector<128x256xi32> to vector<128x256xf32>
    %cst_43 = arith.constant dense<0.000000e+00> : vector<128x19xf32>
    %108 = tpu.matmul %107, %36, %cst_43 {dimension_numbers = #tpu.dot_dimension_numbers<[1], [0], [0], [1], [0, 0, 1, 1], [], []>} : vector<128x256xf32>, vector<256x19xf32>, vector<128x19xf32> -> vector<128x19xf32>
    %109 = arith.mulf %108, %35 : vector<128x19xf32>
    %cst_44 = arith.constant dense<0.000000e+00> : vector<128xf32>
    %110 = vector.multi_reduction <add>, %109, %cst_44 [1] : vector<128x19xf32> to vector<128xf32>
    %111 = vector.shape_cast %110 : vector<128xf32> to vector<128x1xf32>
    %112 = vector.broadcast %37 : vector<1x1xf32> to vector<128x1xf32>
    %113 = arith.addf %111, %112 : vector<128x1xf32>
    %114 = arith.select %97, %103, %41 : vector<128x1xi1>, vector<128x1xi32>
    %cst_45 = arith.constant 0.000000e+00 : f32
    %115 = vector.broadcast %cst_45 : f32 to vector<128x1xf32>
    %116 = arith.select %97, %113, %115 : vector<128x1xi1>, vector<128x1xf32>
    %117 = arith.extui %97 : vector<128x1xi1> to vector<128x1xi32>
    %cst_46 = arith.constant 1.000000e+30 : f32
    %118 = vector.broadcast %cst_46 : f32 to vector<128x256xf32>
    %119 = arith.select %105, %118, %93 : vector<128x256xi1>, vector<128x256xf32>
    %cst_47 = arith.constant dense<0x7F800000> : vector<128xf32>
    %120 = vector.multi_reduction <minimumf>, %119, %cst_47 [1] : vector<128x256xf32> to vector<128xf32>
    %121 = vector.shape_cast %120 : vector<128xf32> to vector<128x1xf32>
    %cst_48 = arith.constant 1.000000e+30 : f32
    %122 = vector.broadcast %cst_48 : f32 to vector<128x1xf32>
    %123 = arith.cmpf olt, %121, %122 : vector<128x1xf32>
    %124 = vector.broadcast %121 : vector<128x1xf32> to vector<128x256xf32>
    %125 = arith.cmpf oeq, %119, %124 : vector<128x256xf32>
    %c256_i32_49 = arith.constant 256 : i32
    %126 = vector.broadcast %c256_i32_49 : i32 to vector<128x256xi32>
    %127 = arith.select %125, %16, %126 : vector<128x256xi1>, vector<128x256xi32>
    %cst_50 = arith.constant dense<2147483647> : vector<128xi32>
    %128 = vector.multi_reduction <minsi>, %127, %cst_50 [1] : vector<128x256xi32> to vector<128xi32>
    %129 = vector.shape_cast %128 : vector<128xi32> to vector<128x1xi32>
    %130 = vector.broadcast %129 : vector<128x1xi32> to vector<128x256xi32>
    %131 = arith.cmpi eq, %16, %130 : vector<128x256xi32>
    %132 = arith.extui %131 : vector<128x256xi1> to vector<128x256xi32>
    %133 = arith.sitofp %132 : vector<128x256xi32> to vector<128x256xf32>
    %cst_51 = arith.constant dense<0.000000e+00> : vector<128x19xf32>
    %134 = tpu.matmul %133, %36, %cst_51 {dimension_numbers = #tpu.dot_dimension_numbers<[1], [0], [0], [1], [0, 0, 1, 1], [], []>} : vector<128x256xf32>, vector<256x19xf32>, vector<128x19xf32> -> vector<128x19xf32>
    %135 = arith.mulf %134, %35 : vector<128x19xf32>
    %cst_52 = arith.constant dense<0.000000e+00> : vector<128xf32>
    %136 = vector.multi_reduction <add>, %135, %cst_52 [1] : vector<128x19xf32> to vector<128xf32>
    %137 = vector.shape_cast %136 : vector<128xf32> to vector<128x1xf32>
    %138 = vector.broadcast %37 : vector<1x1xf32> to vector<128x1xf32>
    %139 = arith.addf %137, %138 : vector<128x1xf32>
    %140 = arith.select %123, %129, %41 : vector<128x1xi1>, vector<128x1xi32>
    %cst_53 = arith.constant 0.000000e+00 : f32
    %141 = vector.broadcast %cst_53 : f32 to vector<128x1xf32>
    %142 = arith.select %123, %139, %141 : vector<128x1xi1>, vector<128x1xf32>
    %143 = arith.extui %123 : vector<128x1xi1> to vector<128x1xi32>
    %cst_54 = arith.constant 1.000000e+30 : f32
    %144 = vector.broadcast %cst_54 : f32 to vector<128x256xf32>
    %145 = arith.select %131, %144, %119 : vector<128x256xi1>, vector<128x256xf32>
    %cst_55 = arith.constant dense<0x7F800000> : vector<128xf32>
    %146 = vector.multi_reduction <minimumf>, %145, %cst_55 [1] : vector<128x256xf32> to vector<128xf32>
    %147 = vector.shape_cast %146 : vector<128xf32> to vector<128x1xf32>
    %cst_56 = arith.constant 1.000000e+30 : f32
    %148 = vector.broadcast %cst_56 : f32 to vector<128x1xf32>
    %149 = arith.cmpf olt, %147, %148 : vector<128x1xf32>
    %150 = vector.broadcast %147 : vector<128x1xf32> to vector<128x256xf32>
    %151 = arith.cmpf oeq, %145, %150 : vector<128x256xf32>
    %c256_i32_57 = arith.constant 256 : i32
    %152 = vector.broadcast %c256_i32_57 : i32 to vector<128x256xi32>
    %153 = arith.select %151, %16, %152 : vector<128x256xi1>, vector<128x256xi32>
    %cst_58 = arith.constant dense<2147483647> : vector<128xi32>
    %154 = vector.multi_reduction <minsi>, %153, %cst_58 [1] : vector<128x256xi32> to vector<128xi32>
    %155 = vector.shape_cast %154 : vector<128xi32> to vector<128x1xi32>
    %156 = vector.broadcast %155 : vector<128x1xi32> to vector<128x256xi32>
    %157 = arith.cmpi eq, %16, %156 : vector<128x256xi32>
    %158 = arith.extui %157 : vector<128x256xi1> to vector<128x256xi32>
    %159 = arith.sitofp %158 : vector<128x256xi32> to vector<128x256xf32>
    %cst_59 = arith.constant dense<0.000000e+00> : vector<128x19xf32>
    %160 = tpu.matmul %159, %36, %cst_59 {dimension_numbers = #tpu.dot_dimension_numbers<[1], [0], [0], [1], [0, 0, 1, 1], [], []>} : vector<128x256xf32>, vector<256x19xf32>, vector<128x19xf32> -> vector<128x19xf32>
    %161 = arith.mulf %160, %35 : vector<128x19xf32>
    %cst_60 = arith.constant dense<0.000000e+00> : vector<128xf32>
    %162 = vector.multi_reduction <add>, %161, %cst_60 [1] : vector<128x19xf32> to vector<128xf32>
    %163 = vector.shape_cast %162 : vector<128xf32> to vector<128x1xf32>
    %164 = vector.broadcast %37 : vector<1x1xf32> to vector<128x1xf32>
    %165 = arith.addf %163, %164 : vector<128x1xf32>
    %166 = arith.select %149, %155, %41 : vector<128x1xi1>, vector<128x1xi32>
    %cst_61 = arith.constant 0.000000e+00 : f32
    %167 = vector.broadcast %cst_61 : f32 to vector<128x1xf32>
    %168 = arith.select %149, %165, %167 : vector<128x1xi1>, vector<128x1xf32>
    %169 = arith.extui %149 : vector<128x1xi1> to vector<128x1xi32>
    %170 = tpu.concatenate %62, %88, %114, %140, %166 in 1 : vector<128x1xi32>, vector<128x1xi32>, vector<128x1xi32>, vector<128x1xi32>, vector<128x1xi32> -> vector<128x5xi32>
    %c0_62 = arith.constant 0 : index
    %c0_63 = arith.constant 0 : index
    %171 = vector.load %arg11[%c0_62, %c0_63] : memref<128x5xi32, #tpu.memory_space<vmem>>, vector<128x5xi32>
    tpu.vector_store %arg11[%c0_62, %c0_63], %170 {strides = array<i32>} : memref<128x5xi32, #tpu.memory_space<vmem>>, vector<128x5xi32>,
    %172 = tpu.concatenate %64, %90, %116, %142, %168 in 1 : vector<128x1xf32>, vector<128x1xf32>, vector<128x1xf32>, vector<128x1xf32>, vector<128x1xf32> -> vector<128x5xf32>
    %c0_64 = arith.constant 0 : index
    %c0_65 = arith.constant 0 : index
    %173 = vector.load %arg12[%c0_64, %c0_65] : memref<128x5xf32, #tpu.memory_space<vmem>>, vector<128x5xf32>
    tpu.vector_store %arg12[%c0_64, %c0_65], %172 {strides = array<i32>} : memref<128x5xf32, #tpu.memory_space<vmem>>, vector<128x5xf32>,
    %174 = tpu.concatenate %65, %91, %117, %143, %169 in 1 : vector<128x1xi32>, vector<128x1xi32>, vector<128x1xi32>, vector<128x1xi32>, vector<128x1xi32> -> vector<128x5xi32>
    %c0_66 = arith.constant 0 : index
    %c0_67 = arith.constant 0 : index
    %175 = vector.load %arg13[%c0_66, %c0_67] : memref<128x5xi32, #tpu.memory_space<vmem>>, vector<128x5xi32>
    tpu.vector_store %arg13[%c0_66, %c0_67], %174 {strides = array<i32>} : memref<128x5xi32, #tpu.memory_space<vmem>>, vector<128x5xi32>,
    return
  }
  func.func @transform_0(%arg0: i32, %arg1: memref<1xi32, #tpu.memory_space<smem>>) -> (i32, i32) {
    %c0_i32 = arith.constant 0 : i32
    %c0_i32_0 = arith.constant 0 : i32
    return %arg0, %c0_i32 : i32, i32
  }
  func.func @transform_1(%arg0: i32, %arg1: memref<1xi32, #tpu.memory_space<smem>>) -> (i32, i32) {
    %c0_i32 = arith.constant 0 : i32
    %c0_i32_0 = arith.constant 0 : i32
    %c0_i32_1 = arith.constant 0 : i32
    return %c0_i32, %c0_i32_0 : i32, i32
  }
  func.func @transform_2(%arg0: i32, %arg1: memref<1xi32, #tpu.memory_space<smem>>) -> (i32, i32) {
    %c0_i32 = arith.constant 0 : i32
    %c0_i32_0 = arith.constant 0 : i32
    return %arg0, %c0_i32 : i32, i32
  }
  func.func @transform_3(%arg0: i32, %arg1: memref<1xi32, #tpu.memory_space<smem>>) -> (i32, i32) {
    %c0_i32 = arith.constant 0 : i32
    %c0_i32_0 = arith.constant 0 : i32
    %c0_i32_1 = arith.constant 0 : i32
    return %c0_i32, %c0_i32_0 : i32, i32
  }
  func.func @transform_4(%arg0: i32, %arg1: memref<1xi32, #tpu.memory_space<smem>>) -> (i32, i32) {
    %c0_i32 = arith.constant 0 : i32
    %c0_i32_0 = arith.constant 0 : i32
    %c0_i32_1 = arith.constant 0 : i32
    return %c0_i32, %c0_i32_0 : i32, i32
  }
  func.func @transform_5(%arg0: i32, %arg1: memref<1xi32, #tpu.memory_space<smem>>) -> (i32, i32) {
    %c0_i32 = arith.constant 0 : i32
    %c0_i32_0 = arith.constant 0 : i32
    return %arg0, %c0_i32 : i32, i32
  }
  func.func @transform_6(%arg0: i32, %arg1: memref<1xi32, #tpu.memory_space<smem>>) -> (i32, i32) {
    %c0_i32 = arith.constant 0 : i32
    %c0_i32_0 = arith.constant 0 : i32
    %c0_i32_1 = arith.constant 0 : i32
    return %c0_i32, %c0_i32_0 : i32, i32
  }
  func.func @transform_7(%arg0: i32, %arg1: memref<1xi32, #tpu.memory_space<smem>>) -> (i32, i32) {
    %c0_i32 = arith.constant 0 : i32
    %c0_i32_0 = arith.constant 0 : i32
    %c0_i32_1 = arith.constant 0 : i32
    return %c0_i32, %c0_i32_0 : i32, i32
  }
  func.func @transform_8(%arg0: i32, %arg1: memref<1xi32, #tpu.memory_space<smem>>) -> (i32, i32) {
    %c0_i32 = arith.constant 0 : i32
    %c0_i32_0 = arith.constant 0 : i32
    %c0_i32_1 = arith.constant 0 : i32
    return %c0_i32, %c0_i32_0 : i32, i32
  }
  func.func @transform_9(%arg0: i32, %arg1: memref<1xi32, #tpu.memory_space<smem>>) -> (i32, i32) {
    %c0_i32 = arith.constant 0 : i32
    %c0_i32_0 = arith.constant 0 : i32
    return %arg0, %c0_i32 : i32, i32
  }
  func.func @transform_10(%arg0: i32, %arg1: memref<1xi32, #tpu.memory_space<smem>>) -> (i32, i32) {
    %c0_i32 = arith.constant 0 : i32
    %c0_i32_0 = arith.constant 0 : i32
    return %arg0, %c0_i32 : i32, i32
  }
  func.func @transform_11(%arg0: i32, %arg1: memref<1xi32, #tpu.memory_space<smem>>) -> (i32, i32) {
    %c0_i32 = arith.constant 0 : i32
    %c0_i32_0 = arith.constant 0 : i32
    return %arg0, %c0_i32 : i32, i32
  }
}

</mosaic_0001>

<llo_original>
// kernel: _forward_device.2
$region0: #{_forward_device.2}
  #allocation0 [shape = 'u32[]', space=smem, size = 0x4, offset = 0x4, fixed_abs, tag = 'smem constant byte address 0x4 - core index']
  #allocation1 [shape = 'u32[144,128]{1,0:T(1,128)}', space=vmem, size = 0x12000, scoped, tag = 'internal scratch']
  %s0 = inlined_call_operand.vmem [shape: f32[256,8], index: 0, kind: input, shape index: {}]
  %s1 = inlined_call_operand.vmem [shape: f32[8,32], index: 1, kind: input, shape index: {}]
  %s2 = inlined_call_operand.vmem [shape: f32[1,32], index: 2, kind: input, shape index: {}]
  %s3 = inlined_call_operand.vmem [shape: f32[32,22], index: 3, kind: input, shape index: {}]
  %s4 = inlined_call_operand.vmem [shape: f32[1,22], index: 4, kind: input, shape index: {}]
  %s5 = inlined_call_operand.vmem [shape: f32[256,22], index: 5, kind: output, shape index: {}]
  %s6 = sld [smem:[#allocation0]]
  $region30: #{_forward_device.2} parent=0
    _
  %s8 = ssub.s32 1, %s6
  %s9 = scalar_select 0, %s8, %s6
  // Predicated region
  $region2: #{_forward_device.2} parent=0 // pred_check
    _
  $region3: #{_forward_device.2} parent=0 // pred_check_branch
    %11 = sbr.rel (0) target = $region5
  $region4: #{_forward_device.2} parent=0 // pred_region
    _
  $region5: #{_forward_device.2} parent=0 // pred_fallthru
    _
  // Predicated region
  $region6: #{_forward_device.2} parent=0 // pred_check
    _
  $region7: #{_forward_device.2} parent=0 // pred_check_branch
    %13 = sbr.rel (0) target = $region9
  $region8: #{_forward_device.2} parent=0 // pred_region
    _
  $region9: #{_forward_device.2} parent=0 // pred_fallthru
    _
  // Predicated region
  $region10: #{_forward_device.2} parent=0 // pred_check
    _
  $region11: #{_forward_device.2} parent=0 // pred_check_branch
    %15 = sbr.rel (0) target = $region13
  $region12: #{_forward_device.2} parent=0 // pred_region
    _
  $region13: #{_forward_device.2} parent=0 // pred_fallthru
    _
  // Predicated region
  $region14: #{_forward_device.2} parent=0 // pred_check
    _
  $region15: #{_forward_device.2} parent=0 // pred_check_branch
    %17 = sbr.rel (0) target = $region17
  $region16: #{_forward_device.2} parent=0 // pred_region
    _
  $region17: #{_forward_device.2} parent=0 // pred_fallthru
    _
  // Predicated region
  $region18: #{_forward_device.2} parent=0 // pred_check
    _
  $region19: #{_forward_device.2} parent=0 // pred_check_branch
    %19 = sbr.rel (0) target = $region21
  $region20: #{_forward_device.2} parent=0 // pred_region
    _
  $region21: #{_forward_device.2} parent=0 // pred_fallthru
    _
  %v20 = vld [vmem:[%s0] sm:$0xff]
  %v21 = vld [vmem:[%s0 + $0x8] sm:$0xff]
  %v22 = vld [vmem:[%s0 + $0x10] sm:$0xff]
  %v23 = vld [vmem:[%s0 + $0x18] sm:$0xff]
  %v24 = vld [vmem:[%s0 + $0x20] sm:$0xff]
  %v25 = vld [vmem:[%s0 + $0x28] sm:$0xff]
  %v26 = vld [vmem:[%s0 + $0x30] sm:$0xff]
  %v27 = vld [vmem:[%s0 + $0x38] sm:$0xff]
  %v28 = vld [vmem:[%s0 + $0x40] sm:$0xff]
  %v29 = vld [vmem:[%s0 + $0x48] sm:$0xff]
  %v30 = vld [vmem:[%s0 + $0x50] sm:$0xff]
  %v31 = vld [vmem:[%s0 + $0x58] sm:$0xff]
  %v32 = vld [vmem:[%s0 + $0x60] sm:$0xff]
  %v33 = vld [vmem:[%s0 + $0x68] sm:$0xff]
  %v34 = vld [vmem:[%s0 + $0x70] sm:$0xff]
  %v35 = vld [vmem:[%s0 + $0x78] sm:$0xff]
  %v36 = vld [vmem:[%s0 + $0x80] sm:$0xff]
  %v37 = vld [vmem:[%s0 + $0x88] sm:$0xff]
  %v38 = vld [vmem:[%s0 + $0x90] sm:$0xff]
  %v39 = vld [vmem:[%s0 + $0x98] sm:$0xff]
  %v40 = vld [vmem:[%s0 + $0xa0] sm:$0xff]
  %v41 = vld [vmem:[%s0 + $0xa8] sm:$0xff]
  %v42 = vld [vmem:[%s0 + $0xb0] sm:$0xff]
  %v43 = vld [vmem:[%s0 + $0xb8] sm:$0xff]
  %v44 = vld [vmem:[%s0 + $0xc0] sm:$0xff]
  %v45 = vld [vmem:[%s0 + $0xc8] sm:$0xff]
  %v46 = vld [vmem:[%s0 + $0xd0] sm:$0xff]
  %v47 = vld [vmem:[%s0 + $0xd8] sm:$0xff]
  %v48 = vld [vmem:[%s0 + $0xe0] sm:$0xff]
  %v49 = vld [vmem:[%s0 + $0xe8] sm:$0xff]
  %v50 = vld [vmem:[%s0 + $0xf0] sm:$0xff]
  %v51 = vld [vmem:[%s0 + $0xf8] sm:$0xff]
  %v52 = vld [vmem:[%s1] sm:$0xff]
  %v53 = vld [vmem:[%s2] sm:$0x1]
  %v55 = vlaneseq
  %v56 = vshrl.u32 %v55, 7
  %v57 = vsub.s32 0, %v56
  %v58 = vrot.slane %v53, %v57
  %vm60 = vcmask 64512
  %v62 = vsel %vm60, %v20, 0
  %v65 = vsel %vm60, %v21, 0
  %v68 = vsel %vm60, %v22, 0
  %v71 = vsel %vm60, %v23, 0
  %v74 = vsel %vm60, %v24, 0
  %v77 = vsel %vm60, %v25, 0
  %v80 = vsel %vm60, %v26, 0
  %v83 = vsel %vm60, %v27, 0
  %v86 = vsel %vm60, %v28, 0
  %v89 = vsel %vm60, %v29, 0
  %v92 = vsel %vm60, %v30, 0
  %v95 = vsel %vm60, %v31, 0
  %v98 = vsel %vm60, %v32, 0
  %v101 = vsel %vm60, %v33, 0
  %v104 = vsel %vm60, %v34, 0
  %v107 = vsel %vm60, %v35, 0
  %v110 = vsel %vm60, %v36, 0
  %v113 = vsel %vm60, %v37, 0
  %v116 = vsel %vm60, %v38, 0
  %v119 = vsel %vm60, %v39, 0
  %v122 = vsel %vm60, %v40, 0
  %v125 = vsel %vm60, %v41, 0
  %v128 = vsel %vm60, %v42, 0
  %v131 = vsel %vm60, %v43, 0
  %v134 = vsel %vm60, %v44, 0
  %v137 = vsel %vm60, %v45, 0
  %v140 = vsel %vm60, %v46, 0
  %v143 = vsel %vm60, %v47, 0
  %v146 = vsel %vm60, %v48, 0
  %v149 = vsel %vm60, %v49, 0
  %v152 = vsel %vm60, %v50, 0
  %v155 = vsel %vm60, %v51, 0
  %157 = vmatprep.subr.mxu0 0.0
  %158 = vmatpush1.msra.mxu0 0.0
  %159 = vmatprep.subr.mxu0 0.0
  %160 = vmatpush1.msra.mxu0 0.0
  %161 = vmatprep.subr.mxu0 0.0
  %162 = vmatpush1.msra.mxu0 0.0
  %163 = vmatprep.subr.mxu0 0.0
  %164 = vmatpush1.msra.mxu0 0.0
  %165 = vmatprep.subr.mxu0 0.0
  %166 = vmatpush1.msra.mxu0 0.0
  %167 = vmatprep.subr.mxu0 0.0
  %168 = vmatpush1.msra.mxu0 0.0
  %169 = vmatprep.subr.mxu0 0.0
  %170 = vmatpush1.msra.mxu0 0.0
  %171 = vmatprep.subr.mxu0 0.0
  %172 = vmatpush1.msra.mxu0 0.0
  %173 = vmatprep.subr.mxu0 0.0
  %174 = vmatpush1.msra.mxu0 0.0
  %175 = vmatprep.subr.mxu0 0.0
  %176 = vmatpush1.msra.mxu0 0.0
  %177 = vmatprep.subr.mxu0 0.0
  %178 = vmatpush1.msra.mxu0 0.0
  %179 = vmatprep.subr.mxu0 0.0
  %180 = vmatpush1.msra.mxu0 0.0
  %181 = vmatprep.subr.mxu0 0.0
  %182 = vmatpush1.msra.mxu0 0.0
  %183 = vmatprep.subr.mxu0 0.0
  %184 = vmatpush1.msra.mxu0 0.0
  %185 = vmatprep.subr.mxu0 0.0
  %186 = vmatpush1.msra.mxu0 0.0
  %187 = vmatprep.subr.mxu0 0.0
  %188 = vmatpush1.msra.mxu0 %v52
  %189 = vmatprep.subr.mxu0 0.0
  %190 = vmatpush2.msra.mxu0 0.0
  %191 = vmatprep.subr.mxu0 0.0
  %192 = vmatpush2.msra.mxu0 0.0
  %193 = vmatprep.subr.mxu0 0.0
  %194 = vmatpush2.msra.mxu0 0.0
  %195 = vmatprep.subr.mxu0 0.0
  %196 = vmatpush2.msra.mxu0 0.0
  %197 = vmatprep.subr.mxu0 0.0
  %198 = vmatpush2.msra.mxu0 0.0
  %199 = vmatprep.subr.mxu0 0.0
  %200 = vmatpush2.msra.mxu0 0.0
  %201 = vmatprep.subr.mxu0 0.0
  %202 = vmatpush2.msra.mxu0 0.0
  %203 = vmatprep.subr.mxu0 0.0
  %204 = vmatpush2.msra.mxu0 0.0
  %205 = vmatprep.subr.mxu0 0.0
  %206 = vmatpush2.msra.mxu0 0.0
  %207 = vmatprep.subr.mxu0 0.0
  %208 = vmatpush2.msra.mxu0 0.0
  %209 = vmatprep.subr.mxu0 0.0
  %210 = vmatpush2.msra.mxu0 0.0
  %211 = vmatprep.subr.mxu0 0.0
  %212 = vmatpush2.msra.mxu0 0.0
  %213 = vmatprep.subr.mxu0 0.0
  %214 = vmatpush2.msra.mxu0 0.0
  %215 = vmatprep.subr.mxu0 0.0
  %216 = vmatpush2.msra.mxu0 0.0
  %217 = vmatprep.subr.mxu0 0.0
  %218 = vmatpush2.msra.mxu0 0.0
  %219 = vmatprep.subr.mxu0 0.0
  %220 = vmatpush2.msra.mxu0 0.0
  %221 = vmatprep.mubr.f32.mxu0 0.0
  %222 = vmatmul.mubr.f32.gmra.mxu0 %v62
  %v223 = vpop.f32.mrf.mxu0
  %v224 = vadd.f32 %v58, %v223
  %v225 = vpop.f32.mrf.mxu0
  %226 = vmatprep.mubr.f32.mxu0 0.0
  %227 = vmatmul.mubr.f32.gmra.mxu0 %v65
  %v228 = vpop.f32.mrf.mxu0
  %v229 = vadd.f32 %v58, %v228
  %v230 = vpop.f32.mrf.mxu0
  %231 = vmatprep.mubr.f32.mxu0 0.0
  %232 = vmatmul.mubr.f32.gmra.mxu0 %v68
  %v233 = vpop.f32.mrf.mxu0
  %v234 = vadd.f32 %v58, %v233
  %v235 = vpop.f32.mrf.mxu0
  %236 = vmatprep.mubr.f32.mxu0 0.0
  %237 = vmatmul.mubr.f32.gmra.mxu0 %v71
  %v238 = vpop.f32.mrf.mxu0
  %v239 = vadd.f32 %v58, %v238
  %v240 = vpop.f32.mrf.mxu0
  %241 = vmatprep.mubr.f32.mxu0 0.0
  %242 = vmatmul.mubr.f32.gmra.mxu0 %v74
  %v243 = vpop.f32.mrf.mxu0
  %v244 = vadd.f32 %v58, %v243
  %v245 = vpop.f32.mrf.mxu0
  %246 = vmatprep.mubr.f32.mxu0 0.0
  %247 = vmatmul.mubr.f32.gmra.mxu0 %v77
  %v248 = vpop.f32.mrf.mxu0
  %v249 = vadd.f32 %v58, %v248
  %v250 = vpop.f32.mrf.mxu0
  %251 = vmatprep.mubr.f32.mxu0 0.0
  %252 = vmatmul.mubr.f32.gmra.mxu0 %v80
  %v253 = vpop.f32.mrf.mxu0
  %v254 = vadd.f32 %v58, %v253
  %v255 = vpop.f32.mrf.mxu0
  %256 = vmatprep.mubr.f32.mxu0 0.0
  %257 = vmatmul.mubr.f32.gmra.mxu0 %v83
  %v258 = vpop.f32.mrf.mxu0
  %v259 = vadd.f32 %v58, %v258
  %v260 = vpop.f32.mrf.mxu0
  %261 = vmatprep.mubr.f32.mxu0 0.0
  %262 = vmatmul.mubr.f32.gmra.mxu0 %v86
  %v263 = vpop.f32.mrf.mxu0
  %v264 = vadd.f32 %v58, %v263
  %v265 = vpop.f32.mrf.mxu0
  %266 = vmatprep.mubr.f32.mxu0 0.0
  %267 = vmatmul.mubr.f32.gmra.mxu0 %v89
  %v268 = vpop.f32.mrf.mxu0
  %v269 = vadd.f32 %v58, %v268
  %v270 = vpop.f32.mrf.mxu0
  %271 = vmatprep.mubr.f32.mxu0 0.0
  %272 = vmatmul.mubr.f32.gmra.mxu0 %v92
  %v273 = vpop.f32.mrf.mxu0
  %v274 = vadd.f32 %v58, %v273
  %v275 = vpop.f32.mrf.mxu0
  %276 = vmatprep.mubr.f32.mxu0 0.0
  %277 = vmatmul.mubr.f32.gmra.mxu0 %v95
  %v278 = vpop.f32.mrf.mxu0
  %v279 = vadd.f32 %v58, %v278
  %v280 = vpop.f32.mrf.mxu0
  %281 = vmatprep.mubr.f32.mxu0 0.0
  %282 = vmatmul.mubr.f32.gmra.mxu0 %v98
  %v283 = vpop.f32.mrf.mxu0
  %v284 = vadd.f32 %v58, %v283
  %v285 = vpop.f32.mrf.mxu0
  %286 = vmatprep.mubr.f32.mxu0 0.0
  %287 = vmatmul.mubr.f32.gmra.mxu0 %v101
  %v288 = vpop.f32.mrf.mxu0
  %v289 = vadd.f32 %v58, %v288
  %v290 = vpop.f32.mrf.mxu0
  %291 = vmatprep.mubr.f32.mxu0 0.0
  %292 = vmatmul.mubr.f32.gmra.mxu0 %v104
  %v293 = vpop.f32.mrf.mxu0
  %v294 = vadd.f32 %v58, %v293
  %v295 = vpop.f32.mrf.mxu0
  %296 = vmatprep.mubr.f32.mxu0 0.0
  %297 = vmatmul.mubr.f32.gmra.mxu0 %v107
  %v298 = vpop.f32.mrf.mxu0
  %v299 = vadd.f32 %v58, %v298
  %v300 = vpop.f32.mrf.mxu0
  %301 = vmatprep.mubr.f32.mxu0 0.0
  %302 = vmatmul.mubr.f32.gmra.mxu0 %v110
  %v303 = vpop.f32.mrf.mxu0
  %v304 = vadd.f32 %v58, %v303
  %v305 = vpop.f32.mrf.mxu0
  %306 = vmatprep.mubr.f32.mxu0 0.0
  %307 = vmatmul.mubr.f32.gmra.mxu0 %v113
  %v308 = vpop.f32.mrf.mxu0
  %v309 = vadd.f32 %v58, %v308
  %v310 = vpop.f32.mrf.mxu0
  %311 = vmatprep.mubr.f32.mxu0 0.0
  %312 = vmatmul.mubr.f32.gmra.mxu0 %v116
  %v313 = vpop.f32.mrf.mxu0
  %v314 = vadd.f32 %v58, %v313
  %v315 = vpop.f32.mrf.mxu0
  %316 = vmatprep.mubr.f32.mxu0 0.0
  %317 = vmatmul.mubr.f32.gmra.mxu0 %v119
  %v318 = vpop.f32.mrf.mxu0
  %v319 = vadd.f32 %v58, %v318
  %v320 = vpop.f32.mrf.mxu0
  %321 = vmatprep.mubr.f32.mxu0 0.0
  %322 = vmatmul.mubr.f32.gmra.mxu0 %v122
  %v323 = vpop.f32.mrf.mxu0
  %v324 = vadd.f32 %v58, %v323
  %v325 = vpop.f32.mrf.mxu0
  %326 = vmatprep.mubr.f32.mxu0 0.0
  %327 = vmatmul.mubr.f32.gmra.mxu0 %v125
  %v328 = vpop.f32.mrf.mxu0
  %v329 = vadd.f32 %v58, %v328
  %v330 = vpop.f32.mrf.mxu0
  %331 = vmatprep.mubr.f32.mxu0 0.0
  %332 = vmatmul.mubr.f32.gmra.mxu0 %v128
  %v333 = vpop.f32.mrf.mxu0
  %v334 = vadd.f32 %v58, %v333
  %v335 = vpop.f32.mrf.mxu0
  %336 = vmatprep.mubr.f32.mxu0 0.0
  %337 = vmatmul.mubr.f32.gmra.mxu0 %v131
  %v338 = vpop.f32.mrf.mxu0
  %v339 = vadd.f32 %v58, %v338
  %v340 = vpop.f32.mrf.mxu0
  %341 = vmatprep.mubr.f32.mxu0 0.0
  %342 = vmatmul.mubr.f32.gmra.mxu0 %v134
  %v343 = vpop.f32.mrf.mxu0
  %v344 = vadd.f32 %v58, %v343
  %v345 = vpop.f32.mrf.mxu0
  %346 = vmatprep.mubr.f32.mxu0 0.0
  %347 = vmatmul.mubr.f32.gmra.mxu0 %v137
  %v348 = vpop.f32.mrf.mxu0
  %v349 = vadd.f32 %v58, %v348
  %v350 = vpop.f32.mrf.mxu0
  %351 = vmatprep.mubr.f32.mxu0 0.0
  %352 = vmatmul.mubr.f32.gmra.mxu0 %v140
  %v353 = vpop.f32.mrf.mxu0
  %v354 = vadd.f32 %v58, %v353
  %v355 = vpop.f32.mrf.mxu0
  %356 = vmatprep.mubr.f32.mxu0 0.0
  %357 = vmatmul.mubr.f32.gmra.mxu0 %v143
  %v358 = vpop.f32.mrf.mxu0
  %v359 = vadd.f32 %v58, %v358
  %v360 = vpop.f32.mrf.mxu0
  %361 = vmatprep.mubr.f32.mxu0 0.0
  %362 = vmatmul.mubr.f32.gmra.mxu0 %v146
  %v363 = vpop.f32.mrf.mxu0
  %v364 = vadd.f32 %v58, %v363
  %v365 = vpop.f32.mrf.mxu0
  %366 = vmatprep.mubr.f32.mxu0 0.0
  %367 = vmatmul.mubr.f32.gmra.mxu0 %v149
  %v368 = vpop.f32.mrf.mxu0
  %v369 = vadd.f32 %v58, %v368
  %v370 = vpop.f32.mrf.mxu0
  %371 = vmatprep.mubr.f32.mxu0 0.0
  %372 = vmatmul.mubr.f32.gmra.mxu0 %v152
  %v373 = vpop.f32.mrf.mxu0
  %v374 = vadd.f32 %v58, %v373
  %v375 = vpop.f32.mrf.mxu0
  %376 = vmatprep.mubr.f32.mxu0 0.0
  %377 = vmatmul.mubr.f32.gmra.mxu0 %v155
  %v378 = vpop.f32.mrf.mxu0
  %v379 = vadd.f32 %v58, %v378
  %v380 = vpop.f32.mrf.mxu0
  %381 = vdwg.mxu0
  %v382 = vmax.f32 %v224, 0.0
  %v383 = vmax.f32 %v229, 0.0
  %v384 = vmax.f32 %v234, 0.0
  %v385 = vmax.f32 %v239, 0.0
  %v386 = vmax.f32 %v244, 0.0
  %v387 = vmax.f32 %v249, 0.0
  %v388 = vmax.f32 %v254, 0.0
  %v389 = vmax.f32 %v259, 0.0
  %v390 = vmax.f32 %v264, 0.0
  %v391 = vmax.f32 %v269, 0.0
  %v392 = vmax.f32 %v274, 0.0
  %v393 = vmax.f32 %v279, 0.0
  %v394 = vmax.f32 %v284, 0.0
  %v395 = vmax.f32 %v289, 0.0
  %v396 = vmax.f32 %v294, 0.0
  %v397 = vmax.f32 %v299, 0.0
  %v398 = vmax.f32 %v304, 0.0
  %v399 = vmax.f32 %v309, 0.0
  %v400 = vmax.f32 %v314, 0.0
  %v401 = vmax.f32 %v319, 0.0
  %v402 = vmax.f32 %v324, 0.0
  %v403 = vmax.f32 %v329, 0.0
  %v404 = vmax.f32 %v334, 0.0
  %v405 = vmax.f32 %v339, 0.0
  %v406 = vmax.f32 %v344, 0.0
  %v407 = vmax.f32 %v349, 0.0
  %v408 = vmax.f32 %v354, 0.0
  %v409 = vmax.f32 %v359, 0.0
  %v410 = vmax.f32 %v364, 0.0
  %v411 = vmax.f32 %v369, 0.0
  %v412 = vmax.f32 %v374, 0.0
  %v413 = vmax.f32 %v379, 0.0
  %v414 = vld [vmem:[%s3] sm:$0xff]
  %v415 = vld [vmem:[%s3 + $0x8] sm:$0xff]
  %v416 = vld [vmem:[%s3 + $0x10] sm:$0xff]
  %v417 = vld [vmem:[%s3 + $0x18] sm:$0xff]
  %v418 = vld [vmem:[%s4] sm:$0x1]
  %v420 = vlaneseq
  %v421 = vshrl.u32 %v420, 7
  %v422 = vsub.s32 0, %v421
  %v423 = vrot.slane %v418, %v422
  %vm425 = vcmask 261120
  %v427 = vsel %vm425, %v382, 0
  %v430 = vsel %vm425, %v383, 0
  %v433 = vsel %vm425, %v384, 0
  %v436 = vsel %vm425, %v385, 0
  %v439 = vsel %vm425, %v386, 0
  %v442 = vsel %vm425, %v387, 0
  %v445 = vsel %vm425, %v388, 0
  %v448 = vsel %vm425, %v389, 0
  %v451 = vsel %vm425, %v390, 0
  %v454 = vsel %vm425, %v391, 0
  %v457 = vsel %vm425, %v392, 0
  %v460 = vsel %vm425, %v393, 0
  %v463 = vsel %vm425, %v394, 0
  %v466 = vsel %vm425, %v395, 0
  %v469 = vsel %vm425, %v396, 0
  %v472 = vsel %vm425, %v397, 0
  %v475 = vsel %vm425, %v398, 0
  %v478 = vsel %vm425, %v399, 0
  %v481 = vsel %vm425, %v400, 0
  %v484 = vsel %vm425, %v401, 0
  %v487 = vsel %vm425, %v402, 0
  %v490 = vsel %vm425, %v403, 0
  %v493 = vsel %vm425, %v404, 0
  %v496 = vsel %vm425, %v405, 0
  %v499 = vsel %vm425, %v406, 0
  %v502 = vsel %vm425, %v407, 0
  %v505 = vsel %vm425, %v408, 0
  %v508 = vsel %vm425, %v409, 0
  %v511 = vsel %vm425, %v410, 0
  %v514 = vsel %vm425, %v411, 0
  %v517 = vsel %vm425, %v412, 0
  %v520 = vsel %vm425, %v413, 0
  %522 = vmatprep.subr.mxu0 0.0
  %523 = vmatpush1.msra.mxu0 0.0
  %524 = vmatprep.subr.mxu0 0.0
  %525 = vmatpush1.msra.mxu0 0.0
  %526 = vmatprep.subr.mxu0 0.0
  %527 = vmatpush1.msra.mxu0 0.0
  %528 = vmatprep.subr.mxu0 0.0
  %529 = vmatpush1.msra.mxu0 0.0
  %530 = vmatprep.subr.mxu0 0.0
  %531 = vmatpush1.msra.mxu0 0.0
  %532 = vmatprep.subr.mxu0 0.0
  %533 = vmatpush1.msra.mxu0 0.0
  %534 = vmatprep.subr.mxu0 0.0
  %535 = vmatpush1.msra.mxu0 0.0
  %536 = vmatprep.subr.mxu0 0.0
  %537 = vmatpush1.msra.mxu0 0.0
  %538 = vmatprep.subr.mxu0 0.0
  %539 = vmatpush1.msra.mxu0 0.0
  %540 = vmatprep.subr.mxu0 0.0
  %541 = vmatpush1.msra.mxu0 0.0
  %542 = vmatprep.subr.mxu0 0.0
  %543 = vmatpush1.msra.mxu0 0.0
  %544 = vmatprep.subr.mxu0 0.0
  %545 = vmatpush1.msra.mxu0 0.0
  %546 = vmatprep.subr.mxu0 0.0
  %547 = vmatpush1.msra.mxu0 %v417
  %548 = vmatprep.subr.mxu0 0.0
  %549 = vmatpush1.msra.mxu0 %v416
  %550 = vmatprep.subr.mxu0 0.0
  %551 = vmatpush1.msra.mxu0 %v415
  %552 = vmatprep.subr.mxu0 0.0
  %553 = vmatpush1.msra.mxu0 %v414
  %554 = vmatprep.subr.mxu0 0.0
  %555 = vmatpush2.msra.mxu0 0.0
  %556 = vmatprep.subr.mxu0 0.0
  %557 = vmatpush2.msra.mxu0 0.0
  %558 = vmatprep.subr.mxu0 0.0
  %559 = vmatpush2.msra.mxu0 0.0
  %560 = vmatprep.subr.mxu0 0.0
  %561 = vmatpush2.msra.mxu0 0.0
  %562 = vmatprep.subr.mxu0 0.0
  %563 = vmatpush2.msra.mxu0 0.0
  %564 = vmatprep.subr.mxu0 0.0
  %565 = vmatpush2.msra.mxu0 0.0
  %566 = vmatprep.subr.mxu0 0.0
  %567 = vmatpush2.msra.mxu0 0.0
  %568 = vmatprep.subr.mxu0 0.0
  %569 = vmatpush2.msra.mxu0 0.0
  %570 = vmatprep.subr.mxu0 0.0
  %571 = vmatpush2.msra.mxu0 0.0
  %572 = vmatprep.subr.mxu0 0.0
  %573 = vmatpush2.msra.mxu0 0.0
  %574 = vmatprep.subr.mxu0 0.0
  %575 = vmatpush2.msra.mxu0 0.0
  %576 = vmatprep.subr.mxu0 0.0
  %577 = vmatpush2.msra.mxu0 0.0
  %578 = vmatprep.subr.mxu0 0.0
  %579 = vmatpush2.msra.mxu0 0.0
  %580 = vmatprep.subr.mxu0 0.0
  %581 = vmatpush2.msra.mxu0 0.0
  %582 = vmatprep.subr.mxu0 0.0
  %583 = vmatpush2.msra.mxu0 0.0
  %584 = vmatprep.subr.mxu0 0.0
  %585 = vmatpush2.msra.mxu0 0.0
  %586 = vmatprep.mubr.f32.mxu0 0.0
  %587 = vmatmul.mubr.f32.gmra.mxu0 %v427
  %v588 = vpop.f32.mrf.mxu0
  %v589 = vadd.f32 %v423, %v588
  %v590 = vpop.f32.mrf.mxu0
  %591 = vmatprep.mubr.f32.mxu0 0.0
  %592 = vmatmul.mubr.f32.gmra.mxu0 %v430
  %v593 = vpop.f32.mrf.mxu0
  %v594 = vadd.f32 %v423, %v593
  %v595 = vpop.f32.mrf.mxu0
  %596 = vmatprep.mubr.f32.mxu0 0.0
  %597 = vmatmul.mubr.f32.gmra.mxu0 %v433
  %v598 = vpop.f32.mrf.mxu0
  %v599 = vadd.f32 %v423, %v598
  %v600 = vpop.f32.mrf.mxu0
  %601 = vmatprep.mubr.f32.mxu0 0.0
  %602 = vmatmul.mubr.f32.gmra.mxu0 %v436
  %v603 = vpop.f32.mrf.mxu0
  %v604 = vadd.f32 %v423, %v603
  %v605 = vpop.f32.mrf.mxu0
  %606 = vmatprep.mubr.f32.mxu0 0.0
  %607 = vmatmul.mubr.f32.gmra.mxu0 %v439
  %v608 = vpop.f32.mrf.mxu0
  %v609 = vadd.f32 %v423, %v608
  %v610 = vpop.f32.mrf.mxu0
  %611 = vmatprep.mubr.f32.mxu0 0.0
  %612 = vmatmul.mubr.f32.gmra.mxu0 %v442
  %v613 = vpop.f32.mrf.mxu0
  %v614 = vadd.f32 %v423, %v613
  %v615 = vpop.f32.mrf.mxu0
  %616 = vmatprep.mubr.f32.mxu0 0.0
  %617 = vmatmul.mubr.f32.gmra.mxu0 %v445
  %v618 = vpop.f32.mrf.mxu0
  %v619 = vadd.f32 %v423, %v618
  %v620 = vpop.f32.mrf.mxu0
  %621 = vmatprep.mubr.f32.mxu0 0.0
  %622 = vmatmul.mubr.f32.gmra.mxu0 %v448
  %v623 = vpop.f32.mrf.mxu0
  %v624 = vadd.f32 %v423, %v623
  %v625 = vpop.f32.mrf.mxu0
  %626 = vmatprep.mubr.f32.mxu0 0.0
  %627 = vmatmul.mubr.f32.gmra.mxu0 %v451
  %v628 = vpop.f32.mrf.mxu0
  %v629 = vadd.f32 %v423, %v628
  %v630 = vpop.f32.mrf.mxu0
  %631 = vmatprep.mubr.f32.mxu0 0.0
  %632 = vmatmul.mubr.f32.gmra.mxu0 %v454
  %v633 = vpop.f32.mrf.mxu0
  %v634 = vadd.f32 %v423, %v633
  %v635 = vpop.f32.mrf.mxu0
  %636 = vmatprep.mubr.f32.mxu0 0.0
  %637 = vmatmul.mubr.f32.gmra.mxu0 %v457
  %v638 = vpop.f32.mrf.mxu0
  %v639 = vadd.f32 %v423, %v638
  %v640 = vpop.f32.mrf.mxu0
  %641 = vmatprep.mubr.f32.mxu0 0.0
  %642 = vmatmul.mubr.f32.gmra.mxu0 %v460
  %v643 = vpop.f32.mrf.mxu0
  %v644 = vadd.f32 %v423, %v643
  %v645 = vpop.f32.mrf.mxu0
  %646 = vmatprep.mubr.f32.mxu0 0.0
  %647 = vmatmul.mubr.f32.gmra.mxu0 %v463
  %v648 = vpop.f32.mrf.mxu0
  %v649 = vadd.f32 %v423, %v648
  %v650 = vpop.f32.mrf.mxu0
  %651 = vmatprep.mubr.f32.mxu0 0.0
  %652 = vmatmul.mubr.f32.gmra.mxu0 %v466
  %v653 = vpop.f32.mrf.mxu0
  %v654 = vadd.f32 %v423, %v653
  %v655 = vpop.f32.mrf.mxu0
  %656 = vmatprep.mubr.f32.mxu0 0.0
  %657 = vmatmul.mubr.f32.gmra.mxu0 %v469
  %v658 = vpop.f32.mrf.mxu0
  %v659 = vadd.f32 %v423, %v658
  %v660 = vpop.f32.mrf.mxu0
  %661 = vmatprep.mubr.f32.mxu0 0.0
  %662 = vmatmul.mubr.f32.gmra.mxu0 %v472
  %v663 = vpop.f32.mrf.mxu0
  %v664 = vadd.f32 %v423, %v663
  %v665 = vpop.f32.mrf.mxu0
  %666 = vmatprep.mubr.f32.mxu0 0.0
  %667 = vmatmul.mubr.f32.gmra.mxu0 %v475
  %v668 = vpop.f32.mrf.mxu0
  %v669 = vadd.f32 %v423, %v668
  %v670 = vpop.f32.mrf.mxu0
  %671 = vmatprep.mubr.f32.mxu0 0.0
  %672 = vmatmul.mubr.f32.gmra.mxu0 %v478
  %v673 = vpop.f32.mrf.mxu0
  %v674 = vadd.f32 %v423, %v673
  %v675 = vpop.f32.mrf.mxu0
  %676 = vmatprep.mubr.f32.mxu0 0.0
  %677 = vmatmul.mubr.f32.gmra.mxu0 %v481
  %v678 = vpop.f32.mrf.mxu0
  %v679 = vadd.f32 %v423, %v678
  %v680 = vpop.f32.mrf.mxu0
  %681 = vmatprep.mubr.f32.mxu0 0.0
  %682 = vmatmul.mubr.f32.gmra.mxu0 %v484
  %v683 = vpop.f32.mrf.mxu0
  %v684 = vadd.f32 %v423, %v683
  %v685 = vpop.f32.mrf.mxu0
  %686 = vmatprep.mubr.f32.mxu0 0.0
  %687 = vmatmul.mubr.f32.gmra.mxu0 %v487
  %v688 = vpop.f32.mrf.mxu0
  %v689 = vadd.f32 %v423, %v688
  %v690 = vpop.f32.mrf.mxu0
  %691 = vmatprep.mubr.f32.mxu0 0.0
  %692 = vmatmul.mubr.f32.gmra.mxu0 %v490
  %v693 = vpop.f32.mrf.mxu0
  %v694 = vadd.f32 %v423, %v693
  %v695 = vpop.f32.mrf.mxu0
  %696 = vmatprep.mubr.f32.mxu0 0.0
  %697 = vmatmul.mubr.f32.gmra.mxu0 %v493
  %v698 = vpop.f32.mrf.mxu0
  %v699 = vadd.f32 %v423, %v698
  %v700 = vpop.f32.mrf.mxu0
  %701 = vmatprep.mubr.f32.mxu0 0.0
  %702 = vmatmul.mubr.f32.gmra.mxu0 %v496
  %v703 = vpop.f32.mrf.mxu0
  %v704 = vadd.f32 %v423, %v703
  %v705 = vpop.f32.mrf.mxu0
  %706 = vmatprep.mubr.f32.mxu0 0.0
  %707 = vmatmul.mubr.f32.gmra.mxu0 %v499
  %v708 = vpop.f32.mrf.mxu0
  %v709 = vadd.f32 %v423, %v708
  %v710 = vpop.f32.mrf.mxu0
  %711 = vmatprep.mubr.f32.mxu0 0.0
  %712 = vmatmul.mubr.f32.gmra.mxu0 %v502
  %v713 = vpop.f32.mrf.mxu0
  %v714 = vadd.f32 %v423, %v713
  %v715 = vpop.f32.mrf.mxu0
  %716 = vmatprep.mubr.f32.mxu0 0.0
  %717 = vmatmul.mubr.f32.gmra.mxu0 %v505
  %v718 = vpop.f32.mrf.mxu0
  %v719 = vadd.f32 %v423, %v718
  %v720 = vpop.f32.mrf.mxu0
  %721 = vmatprep.mubr.f32.mxu0 0.0
  %722 = vmatmul.mubr.f32.gmra.mxu0 %v508
  %v723 = vpop.f32.mrf.mxu0
  %v724 = vadd.f32 %v423, %v723
  %v725 = vpop.f32.mrf.mxu0
  %726 = vmatprep.mubr.f32.mxu0 0.0
  %727 = vmatmul.mubr.f32.gmra.mxu0 %v511
  %v728 = vpop.f32.mrf.mxu0
  %v729 = vadd.f32 %v423, %v728
  %v730 = vpop.f32.mrf.mxu0
  %731 = vmatprep.mubr.f32.mxu0 0.0
  %732 = vmatmul.mubr.f32.gmra.mxu0 %v514
  %v733 = vpop.f32.mrf.mxu0
  %v734 = vadd.f32 %v423, %v733
  %v735 = vpop.f32.mrf.mxu0
  %736 = vmatprep.mubr.f32.mxu0 0.0
  %737 = vmatmul.mubr.f32.gmra.mxu0 %v517
  %v738 = vpop.f32.mrf.mxu0
  %v739 = vadd.f32 %v423, %v738
  %v740 = vpop.f32.mrf.mxu0
  %741 = vmatprep.mubr.f32.mxu0 0.0
  %742 = vmatmul.mubr.f32.gmra.mxu0 %v520
  %v743 = vpop.f32.mrf.mxu0
  %v744 = vadd.f32 %v423, %v743
  %v745 = vpop.f32.mrf.mxu0
  %746 = vdwg.mxu0
  %vm747 = vcmask 179200
  %748 = vst.msk [vmem:[%s5] sm:$0xff] %vm747, %v589
  %749 = vst.msk [vmem:[%s5 + $0x8] sm:$0xff] %vm747, %v594
  %750 = vst.msk [vmem:[%s5 + $0x10] sm:$0xff] %vm747, %v599
  %751 = vst.msk [vmem:[%s5 + $0x18] sm:$0xff] %vm747, %v604
  %752 = vst.msk [vmem:[%s5 + $0x20] sm:$0xff] %vm747, %v609
  %753 = vst.msk [vmem:[%s5 + $0x28] sm:$0xff] %vm747, %v614
  %754 = vst.msk [vmem:[%s5 + $0x30] sm:$0xff] %vm747, %v619
  %755 = vst.msk [vmem:[%s5 + $0x38] sm:$0xff] %vm747, %v624
  %756 = vst.msk [vmem:[%s5 + $0x40] sm:$0xff] %vm747, %v629
  %757 = vst.msk [vmem:[%s5 + $0x48] sm:$0xff] %vm747, %v634
  %758 = vst.msk [vmem:[%s5 + $0x50] sm:$0xff] %vm747, %v639
  %759 = vst.msk [vmem:[%s5 + $0x58] sm:$0xff] %vm747, %v644
  %760 = vst.msk [vmem:[%s5 + $0x60] sm:$0xff] %vm747, %v649
  %761 = vst.msk [vmem:[%s5 + $0x68] sm:$0xff] %vm747, %v654
  %762 = vst.msk [vmem:[%s5 + $0x70] sm:$0xff] %vm747, %v659
  %763 = vst.msk [vmem:[%s5 + $0x78] sm:$0xff] %vm747, %v664
  %764 = vst.msk [vmem:[%s5 + $0x80] sm:$0xff] %vm747, %v669
  %765 = vst.msk [vmem:[%s5 + $0x88] sm:$0xff] %vm747, %v674
  %766 = vst.msk [vmem:[%s5 + $0x90] sm:$0xff] %vm747, %v679
  %767 = vst.msk [vmem:[%s5 + $0x98] sm:$0xff] %vm747, %v684
  %768 = vst.msk [vmem:[%s5 + $0xa0] sm:$0xff] %vm747, %v689
  %769 = vst.msk [vmem:[%s5 + $0xa8] sm:$0xff] %vm747, %v694
  %770 = vst.msk [vmem:[%s5 + $0xb0] sm:$0xff] %vm747, %v699
  %771 = vst.msk [vmem:[%s5 + $0xb8] sm:$0xff] %vm747, %v704
  %772 = vst.msk [vmem:[%s5 + $0xc0] sm:$0xff] %vm747, %v709
  %773 = vst.msk [vmem:[%s5 + $0xc8] sm:$0xff] %vm747, %v714
  %774 = vst.msk [vmem:[%s5 + $0xd0] sm:$0xff] %vm747, %v719
  %775 = vst.msk [vmem:[%s5 + $0xd8] sm:$0xff] %vm747, %v724
  %776 = vst.msk [vmem:[%s5 + $0xe0] sm:$0xff] %vm747, %v729
  %777 = vst.msk [vmem:[%s5 + $0xe8] sm:$0xff] %vm747, %v734
  %778 = vst.msk [vmem:[%s5 + $0xf0] sm:$0xff] %vm747, %v739
  %779 = vst.msk [vmem:[%s5 + $0xf8] sm:$0xff] %vm747, %v744
  // Predicated region
  $region22: #{_forward_device.2} parent=0 // pred_check
    _
  $region23: #{_forward_device.2} parent=0 // pred_check_branch
    %781 = sbr.rel (0) target = $region25
  $region24: #{_forward_device.2} parent=0 // pred_region
    _
  $region25: #{_forward_device.2} parent=0 // pred_fallthru
    _
  // Predicated region
  $region26: #{_forward_device.2} parent=0 // pred_check
    _
  $region27: #{_forward_device.2} parent=0 // pred_check_branch
    %783 = sbr.rel (0) target = $region29
  $region28: #{_forward_device.2} parent=0 // pred_region
    _
  $region29: #{_forward_device.2} parent=0 // pred_fallthru
    _

// kernel: _forward_device.3
$region0: #{_forward_device.3}
  #allocation0 [shape = 'u32[]', space=smem, size = 0x4, offset = 0x4, fixed_abs, tag = 'smem constant byte address 0x4 - core index']
  #allocation1 [shape = 'u32[144,128]{1,0:T(1,128)}', space=vmem, size = 0x12000, scoped, tag = 'internal scratch']
  #allocation2 [shape = 's32[1]{0}', space=sflag, size = 0x4, scoped, tag = 'scoped memory for _forward_device.3']
  #allocation3 [shape = 's32[1]{0:T(128)S(6)}', space=smem, size = 0x200, scoped, tag = 'prefetched SMEM operand 0']
  #allocation4 [shape = 'f32[1,1]{1,0:T(1,128)S(1)}', space=vmem, size = 0x200, scoped, tag = 'scoped memory for _forward_device.3']
  %s0 = inlined_call_operand.<no memory space> [shape: s32[1], index: 0, kind: input, shape index: {}]
  %s1 = inlined_call_operand.vmem [shape: f32[256,8], index: 1, kind: input, shape index: {}]
  %s2 = inlined_call_operand.vmem [shape: f32[8,256], index: 2, kind: input, shape index: {}]
  %s3 = inlined_call_operand.vmem [shape: s32[256,1], index: 3, kind: input, shape index: {}]
  %s4 = inlined_call_operand.vmem [shape: s32[1,256], index: 4, kind: input, shape index: {}]
  %s5 = inlined_call_operand.vmem [shape: f32[1,256], index: 5, kind: input, shape index: {}]
  %s6 = inlined_call_operand.vmem [shape: f32[256,19], index: 6, kind: input, shape index: {}, may-alias: {6,7}]
  %s7 = inlined_call_operand.vmem [shape: f32[256,19], index: 7, kind: input, shape index: {}, may-alias: {6,7}]
  %s8 = inlined_call_operand.vmem [shape: f32[19,19], index: 8, kind: input, shape index: {}]
  %s9 = inlined_call_operand.<no memory space> [shape: f32[1,1], index: 9, kind: input, shape index: {}]
  %s10 = inlined_call_operand.vmem [shape: s32[256,5], index: 10, kind: output, shape index: {0}]
  %s11 = inlined_call_operand.vmem [shape: f32[256,5], index: 11, kind: output, shape index: {1}]
  %s12 = inlined_call_operand.vmem [shape: s32[256,5], index: 12, kind: output, shape index: {2}]
  %13 = xla_tuple %s10, %s11, %s12
  %s14 = sld [smem:[#allocation0]]
  $region85: #{_forward_device.3} parent=0
    _
  %s16 = ssub.s32 1, %s14
  %s17 = scalar_select 0, %s16, %s14
  %18 = sst [smem:[#allocation3]] %s0
  %v19 = vstv %s9
  %20 = vst [vmem:[#allocation4] sm:$0x1] %v19
  loop: start=0, step=1, limit=4
  $region2: #{_forward_device.3} parent=0 // loop_pre_header
    _
  $region3: #{_forward_device.3} parent=0 // loop_header
    %s22 = sphi 0, %s26
    %p23 = scmp.ge.s32.totalorder %s22, 4
    %s32 = sphi 0, %s34
    %s35 = sphi 0, %s32
    %s36 = sphi 0, %s35
    %s52 = sphi 0, %s36
    %s56 = sphi 0, %s56
    %s58 = sphi 0, %s56
    %s59 = sphi 0, %s58
    %s73 = sphi 0, %s59
    %s79 = sphi 0, %s81
    %s82 = sphi 0, %s79
    %s83 = sphi 0, %s82
    %s99 = sphi 0, %s83
    %s103 = sphi 0, %s103
    %s105 = sphi 0, %s103
    %s106 = sphi 0, %s105
    %s120 = sphi 0, %s106
    %s124 = sphi 0, %s124
    %s126 = sphi 0, %s124
    %s127 = sphi 0, %s126
    %s141 = sphi 0, %s127
    %s147 = sphi 0, %s149
    %s150 = sphi 0, %s147
    %s151 = sphi 0, %s150
    %s167 = sphi 0, %s151
    %s171 = sphi 0, %s171
    %s173 = sphi 0, %s171
    %s174 = sphi 0, %s173
    %s188 = sphi 0, %s174
    %s192 = sphi 0, %s192
    %s194 = sphi 0, %s192
    %s195 = sphi 0, %s194
    %s209 = sphi 0, %s195
    %s213 = sphi 0, %s213
    %s215 = sphi 0, %s213
    %s216 = sphi 0, %s215
    %s230 = sphi 0, %s216
    %s236 = sphi 0, %s238
    %s239 = sphi 0, %s236
    %s240 = sphi 0, %s239
    %s256 = sphi 0, %s240
    %s262 = sphi 0, %s264
    %s265 = sphi 0, %s262
    %s266 = sphi 0, %s265
    %s282 = sphi 0, %s266
    %s288 = sphi 0, %s290
    %s291 = sphi 0, %s288
    %s292 = sphi 0, %s291
    %s308 = sphi 0, %s292
  $region4: #{_forward_device.3} parent=0 // loop_header_branch
    %25 = sbr.rel (%p23) target = $region8
  $region5: #{_forward_device.3} parent=0 // loop_body
    %s27 = ssub.s32 %s22, 1
    %s28 = ssub.s32 %s22, 2
    %s29 = sadd.s32 %s22, 1
    %s30 = ssub.s32 %s22, %s29
    %p31 = scmp.eq.s32.totalorder %s30, 0
    %s33 = sadd.s32 %s32, 1
    %s34 = scalar_select %p31, %s32, %s33
    %p37 = pneg %p31
    %p38 = scmp.eq.s32.totalorder %s22, 1
    %p39 = por %p37, %p38
    %p40 = scmp.ne.s32.totalorder %s32, %s35
    %p41 = scmp.eq.s32.totalorder %s22, 0
    %p42 = por %p40, %p41
    %p43 = scmp.ne.s32.totalorder %s32, %s35
    %p44 = scmp.eq.s32.totalorder %s27, 1
    %p45 = por %p43, %p44
    %p46 = scmp.ne.s32.totalorder %s35, %s36
    %p47 = scmp.eq.s32.totalorder %s27, 0
    %p48 = por %p46, %p47
    %p49 = scmp.ne.s32.totalorder %s35, %s36
    %p50 = scmp.eq.s32.totalorder %s28, 1
    %p51 = por %p49, %p50
    %p53 = scmp.ne.s32.totalorder %s36, %s52
    %p54 = scmp.eq.s32.totalorder %s28, 0
    %p55 = por %p53, %p54
    %s57 = sadd.s32 %s56, 1
    %p60 = scmp.eq.s32.totalorder %s22, 1
    %p61 = scmp.ne.s32.totalorder %s56, %s58
    %p62 = scmp.eq.s32.totalorder %s22, 0
    %p63 = por %p61, %p62
    %p64 = scmp.ne.s32.totalorder %s56, %s58
    %p65 = scmp.eq.s32.totalorder %s27, 1
    %p66 = por %p64, %p65
    %p67 = scmp.ne.s32.totalorder %s58, %s59
    %p68 = scmp.eq.s32.totalorder %s27, 0
    %p69 = por %p67, %p68
    %p70 = scmp.ne.s32.totalorder %s58, %s59
    %p71 = scmp.eq.s32.totalorder %s28, 1
    %p72 = por %p70, %p71
    %p74 = scmp.ne.s32.totalorder %s59, %s73
    %p75 = scmp.eq.s32.totalorder %s28, 0
    %p76 = por %p74, %p75
    %s77 = ssub.s32 %s22, %s29
    %p78 = scmp.eq.s32.totalorder %s77, 0
    %s80 = sadd.s32 %s79, 1
    %s81 = scalar_select %p78, %s79, %s80
    %p84 = pneg %p78
    %p85 = scmp.eq.s32.totalorder %s22, 1
    %p86 = por %p84, %p85
    %p87 = scmp.ne.s32.totalorder %s79, %s82
    %p88 = scmp.eq.s32.totalorder %s22, 0
    %p89 = por %p87, %p88
    %p90 = scmp.ne.s32.totalorder %s79, %s82
    %p91 = scmp.eq.s32.totalorder %s27, 1
    %p92 = por %p90, %p91
    %p93 = scmp.ne.s32.totalorder %s82, %s83
    %p94 = scmp.eq.s32.totalorder %s27, 0
    %p95 = por %p93, %p94
    %p96 = scmp.ne.s32.totalorder %s82, %s83
    %p97 = scmp.eq.s32.totalorder %s28, 1
    %p98 = por %p96, %p97
    %p100 = scmp.ne.s32.totalorder %s83, %s99
    %p101 = scmp.eq.s32.totalorder %s28, 0
    %p102 = por %p100, %p101
    %s104 = sadd.s32 %s103, 1
    %p107 = scmp.eq.s32.totalorder %s22, 1
    %p108 = scmp.ne.s32.totalorder %s103, %s105
    %p109 = scmp.eq.s32.totalorder %s22, 0
    %p110 = por %p108, %p109
    %p111 = scmp.ne.s32.totalorder %s103, %s105
    %p112 = scmp.eq.s32.totalorder %s27, 1
    %p113 = por %p111, %p112
    %p114 = scmp.ne.s32.totalorder %s105, %s106
    %p115 = scmp.eq.s32.totalorder %s27, 0
    %p116 = por %p114, %p115
    %p117 = scmp.ne.s32.totalorder %s105, %s106
    %p118 = scmp.eq.s32.totalorder %s28, 1
    %p119 = por %p117, %p118
    %p121 = scmp.ne.s32.totalorder %s106, %s120
    %p122 = scmp.eq.s32.totalorder %s28, 0
    %p123 = por %p121, %p122
    %s125 = sadd.s32 %s124, 1
    %p128 = scmp.eq.s32.totalorder %s22, 1
    %p129 = scmp.ne.s32.totalorder %s124, %s126
    %p130 = scmp.eq.s32.totalorder %s22, 0
    %p131 = por %p129, %p130
    %p132 = scmp.ne.s32.totalorder %s124, %s126
    %p133 = scmp.eq.s32.totalorder %s27, 1
    %p134 = por %p132, %p133
    %p135 = scmp.ne.s32.totalorder %s126, %s127
    %p136 = scmp.eq.s32.totalorder %s27, 0
    %p137 = por %p135, %p136
    %p138 = scmp.ne.s32.totalorder %s126, %s127
    %p139 = scmp.eq.s32.totalorder %s28, 1
    %p140 = por %p138, %p139
    %p142 = scmp.ne.s32.totalorder %s127, %s141
    %p143 = scmp.eq.s32.totalorder %s28, 0
    %p144 = por %p142, %p143
    %s145 = ssub.s32 %s22, %s29
    %p146 = scmp.eq.s32.totalorder %s145, 0
    %s148 = sadd.s32 %s147, 1
    %s149 = scalar_select %p146, %s147, %s148
    %p152 = pneg %p146
    %p153 = scmp.eq.s32.totalorder %s22, 1
    %p154 = por %p152, %p153
    %p155 = scmp.ne.s32.totalorder %s147, %s150
    %p156 = scmp.eq.s32.totalorder %s22, 0
    %p157 = por %p155, %p156
    %p158 = scmp.ne.s32.totalorder %s147, %s150
    %p159 = scmp.eq.s32.totalorder %s27, 1
    %p160 = por %p158, %p159
    %p161 = scmp.ne.s32.totalorder %s150, %s151
    %p162 = scmp.eq.s32.totalorder %s27, 0
    %p163 = por %p161, %p162
    %p164 = scmp.ne.s32.totalorder %s150, %s151
    %p165 = scmp.eq.s32.totalorder %s28, 1
    %p166 = por %p164, %p165
    %p168 = scmp.ne.s32.totalorder %s151, %s167
    %p169 = scmp.eq.s32.totalorder %s28, 0
    %p170 = por %p168, %p169
    %s172 = sadd.s32 %s171, 1
    %p175 = scmp.eq.s32.totalorder %s22, 1
    %p176 = scmp.ne.s32.totalorder %s171, %s173
    %p177 = scmp.eq.s32.totalorder %s22, 0
    %p178 = por %p176, %p177
    %p179 = scmp.ne.s32.totalorder %s171, %s173
    %p180 = scmp.eq.s32.totalorder %s27, 1
    %p181 = por %p179, %p180
    %p182 = scmp.ne.s32.totalorder %s173, %s174
    %p183 = scmp.eq.s32.totalorder %s27, 0
    %p184 = por %p182, %p183
    %p185 = scmp.ne.s32.totalorder %s173, %s174
    %p186 = scmp.eq.s32.totalorder %s28, 1
    %p187 = por %p185, %p186
    %p189 = scmp.ne.s32.totalorder %s174, %s188
    %p190 = scmp.eq.s32.totalorder %s28, 0
    %p191 = por %p189, %p190
    %s193 = sadd.s32 %s192, 1
    %p196 = scmp.eq.s32.totalorder %s22, 1
    %p197 = scmp.ne.s32.totalorder %s192, %s194
    %p198 = scmp.eq.s32.totalorder %s22, 0
    %p199 = por %p197, %p198
    %p200 = scmp.ne.s32.totalorder %s192, %s194
    %p201 = scmp.eq.s32.totalorder %s27, 1
    %p202 = por %p200, %p201
    %p203 = scmp.ne.s32.totalorder %s194, %s195
    %p204 = scmp.eq.s32.totalorder %s27, 0
    %p205 = por %p203, %p204
    %p206 = scmp.ne.s32.totalorder %s194, %s195
    %p207 = scmp.eq.s32.totalorder %s28, 1
    %p208 = por %p206, %p207
    %p210 = scmp.ne.s32.totalorder %s195, %s209
    %p211 = scmp.eq.s32.totalorder %s28, 0
    %p212 = por %p210, %p211
    %s214 = sadd.s32 %s213, 1
    %p217 = scmp.eq.s32.totalorder %s22, 1
    %p218 = scmp.ne.s32.totalorder %s213, %s215
    %p219 = scmp.eq.s32.totalorder %s22, 0
    %p220 = por %p218, %p219
    %p221 = scmp.ne.s32.totalorder %s213, %s215
    %p222 = scmp.eq.s32.totalorder %s27, 1
    %p223 = por %p221, %p222
    %p224 = scmp.ne.s32.totalorder %s215, %s216
    %p225 = scmp.eq.s32.totalorder %s27, 0
    %p226 = por %p224, %p225
    %p227 = scmp.ne.s32.totalorder %s215, %s216
    %p228 = scmp.eq.s32.totalorder %s28, 1
    %p229 = por %p227, %p228
    %p231 = scmp.ne.s32.totalorder %s216, %s230
    %p232 = scmp.eq.s32.totalorder %s28, 0
    %p233 = por %p231, %p232
    %s234 = ssub.s32 %s22, %s29
    %p235 = scmp.eq.s32.totalorder %s234, 0
    %s237 = sadd.s32 %s236, 1
    %s238 = scalar_select %p235, %s236, %s237
    %p241 = pneg %p235
    %p242 = scmp.eq.s32.totalorder %s22, 1
    %p243 = por %p241, %p242
    %p244 = scmp.ne.s32.totalorder %s236, %s239
    %p245 = scmp.eq.s32.totalorder %s22, 0
    %p246 = por %p244, %p245
    %p247 = scmp.ne.s32.totalorder %s236, %s239
    %p248 = scmp.eq.s32.totalorder %s27, 1
    %p249 = por %p247, %p248
    %p250 = scmp.ne.s32.totalorder %s239, %s240
    %p251 = scmp.eq.s32.totalorder %s27, 0
    %p252 = por %p250, %p251
    %p253 = scmp.ne.s32.totalorder %s239, %s240
    %p254 = scmp.eq.s32.totalorder %s28, 1
    %p255 = por %p253, %p254
    %p257 = scmp.ne.s32.totalorder %s240, %s256
    %p258 = scmp.eq.s32.totalorder %s28, 0
    %p259 = por %p257, %p258
    %s260 = ssub.s32 %s22, %s29
    %p261 = scmp.eq.s32.totalorder %s260, 0
    %s263 = sadd.s32 %s262, 1
    %s264 = scalar_select %p261, %s262, %s263
    %p267 = pneg %p261
    %p268 = scmp.eq.s32.totalorder %s22, 1
    %p269 = por %p267, %p268
    %p270 = scmp.ne.s32.totalorder %s262, %s265
    %p271 = scmp.eq.s32.totalorder %s22, 0
    %p272 = por %p270, %p271
    %p273 = scmp.ne.s32.totalorder %s262, %s265
    %p274 = scmp.eq.s32.totalorder %s27, 1
    %p275 = por %p273, %p274
    %p276 = scmp.ne.s32.totalorder %s265, %s266
    %p277 = scmp.eq.s32.totalorder %s27, 0
    %p278 = por %p276, %p277
    %p279 = scmp.ne.s32.totalorder %s265, %s266
    %p280 = scmp.eq.s32.totalorder %s28, 1
    %p281 = por %p279, %p280
    %p283 = scmp.ne.s32.totalorder %s266, %s282
    %p284 = scmp.eq.s32.totalorder %s28, 0
    %p285 = por %p283, %p284
    %s286 = ssub.s32 %s22, %s29
    %p287 = scmp.eq.s32.totalorder %s286, 0
    %s289 = sadd.s32 %s288, 1
    %s290 = scalar_select %p287, %s288, %s289
    %p293 = pneg %p287
    %p294 = scmp.eq.s32.totalorder %s22, 1
    %p295 = por %p293, %p294
    %p296 = scmp.ne.s32.totalorder %s288, %s291
    %p297 = scmp.eq.s32.totalorder %s22, 0
    %p298 = por %p296, %p297
    %p299 = scmp.ne.s32.totalorder %s288, %s291
    %p300 = scmp.eq.s32.totalorder %s27, 1
    %p301 = por %p299, %p300
    %p302 = scmp.ne.s32.totalorder %s291, %s292
    %p303 = scmp.eq.s32.totalorder %s27, 0
    %p304 = por %p302, %p303
    %p305 = scmp.ne.s32.totalorder %s291, %s292
    %p306 = scmp.eq.s32.totalorder %s28, 1
    %p307 = por %p305, %p306
    %p309 = scmp.ne.s32.totalorder %s292, %s308
    %p310 = scmp.eq.s32.totalorder %s28, 0
    %p311 = por %p309, %p310
    %p312 = scmp.le.s32.totalorder 1, %s22
    %p313 = scmp.lt.s32.totalorder %s22, 3
    %p314 = pnand %p312, %p313
    %p315 = pneg %p314
    // Predicated region
    $region9: #{_forward_device.3} parent=5 // pred_check
      _
    $region10: #{_forward_device.3} parent=5 // pred_check_branch
      %317 = sbr.rel (%p314) target = $region12
    $region11: #{_forward_device.3} parent=5 // pred_region
      %s318 = ssub.s32 %s22, 1
      // Predicated region
      $region13: #{_forward_device.3} parent=11 // pred_check
        %p319 = pneg %p69
      $region14: #{_forward_device.3} parent=11 // pred_check_branch
        %321 = sbr.rel (%p319) target = $region16
      $region15: #{_forward_device.3} parent=11 // pred_region
        _
      $region16: #{_forward_device.3} parent=11 // pred_fallthru
        _
      // Predicated region
      $region17: #{_forward_device.3} parent=11 // pred_check
        %p322 = pneg %p116
      $region18: #{_forward_device.3} parent=11 // pred_check_branch
        %324 = sbr.rel (%p322) target = $region20
      $region19: #{_forward_device.3} parent=11 // pred_region
        _
      $region20: #{_forward_device.3} parent=11 // pred_fallthru
        _
      // Predicated region
      $region21: #{_forward_device.3} parent=11 // pred_check
        %p325 = pneg %p137
      $region22: #{_forward_device.3} parent=11 // pred_check_branch
        %327 = sbr.rel (%p325) target = $region24
      $region23: #{_forward_device.3} parent=11 // pred_region
        _
      $region24: #{_forward_device.3} parent=11 // pred_fallthru
        _
      // Predicated region
      $region25: #{_forward_device.3} parent=11 // pred_check
        %p328 = pneg %p184
      $region26: #{_forward_device.3} parent=11 // pred_check_branch
        %330 = sbr.rel (%p328) target = $region28
      $region27: #{_forward_device.3} parent=11 // pred_region
        _
      $region28: #{_forward_device.3} parent=11 // pred_fallthru
        _
      // Predicated region
      $region29: #{_forward_device.3} parent=11 // pred_check
        %p331 = pneg %p205
      $region30: #{_forward_device.3} parent=11 // pred_check_branch
        %333 = sbr.rel (%p331) target = $region32
      $region31: #{_forward_device.3} parent=11 // pred_region
        _
      $region32: #{_forward_device.3} parent=11 // pred_fallthru
        _
      // Predicated region
      $region33: #{_forward_device.3} parent=11 // pred_check
        %p334 = pneg %p226
      $region34: #{_forward_device.3} parent=11 // pred_check_branch
        %336 = sbr.rel (%p334) target = $region36
      $region35: #{_forward_device.3} parent=11 // pred_region
        _
      $region36: #{_forward_device.3} parent=11 // pred_fallthru
        _
    $region12: #{_forward_device.3} parent=5 // pred_fallthru
      _
    %p337 = scmp.lt.s32.totalorder %s22, 2
    // Predicated region
    $region37: #{_forward_device.3} parent=5 // pred_check
      %p338 = pneg %p337
    $region38: #{_forward_device.3} parent=5 // pred_check_branch
      %340 = sbr.rel (%p338) target = $region40
    $region39: #{_forward_device.3} parent=5 // pred_region
      // Predicated region
      $region41: #{_forward_device.3} parent=39 // pred_check
        %p341 = pneg %p42
      $region42: #{_forward_device.3} parent=39 // pred_check_branch
        %343 = sbr.rel (%p341) target = $region44
      $region43: #{_forward_device.3} parent=39 // pred_region
        %s344 = smul.u32 16, %s22
        %p345 = scmp.lt.s32.totalorder %s344, 31
        %s346 = scalar_select %p345, %s344, 31
        %s347 = smul.addr %s346, 8
        %s348 = scalar_lea.vmem %s1, %s347
        %s349 = smul.u32 16, %s22
      $region44: #{_forward_device.3} parent=39 // pred_fallthru
        _
      // Predicated region
      $region45: #{_forward_device.3} parent=39 // pred_check
        %p350 = pneg %p89
      $region46: #{_forward_device.3} parent=39 // pred_check_branch
        %352 = sbr.rel (%p350) target = $region48
      $region47: #{_forward_device.3} parent=39 // pred_region
        %s353 = smul.u32 16, %s22
        %p354 = scmp.lt.s32.totalorder %s353, 31
        %s355 = scalar_select %p354, %s353, 31
        %s356 = smul.addr %s355, 8
        %s357 = scalar_lea.vmem %s3, %s356
        %s358 = smul.u32 16, %s22
      $region48: #{_forward_device.3} parent=39 // pred_fallthru
        _
      // Predicated region
      $region49: #{_forward_device.3} parent=39 // pred_check
        %p359 = pneg %p157
      $region50: #{_forward_device.3} parent=39 // pred_check_branch
        %361 = sbr.rel (%p359) target = $region52
      $region51: #{_forward_device.3} parent=39 // pred_region
        %s362 = smul.u32 16, %s22
        %p363 = scmp.lt.s32.totalorder %s362, 31
        %s364 = scalar_select %p363, %s362, 31
        %s365 = smul.addr %s364, 8
        %s366 = scalar_lea.vmem %s6, %s365
        %s367 = smul.u32 16, %s22
      $region52: #{_forward_device.3} parent=39 // pred_fallthru
        _
    $region40: #{_forward_device.3} parent=5 // pred_fallthru
      _
    %p368 = scmp.le.s32.totalorder 1, %s22
    %p369 = scmp.lt.s32.totalorder %s22, 3
    %p370 = pnand %p368, %p369
    %p371 = pneg %p370
    // Predicated region
    $region53: #{_forward_device.3} parent=5 // pred_check
      _
    $region54: #{_forward_device.3} parent=5 // pred_check_branch
      %373 = sbr.rel (%p370) target = $region56
    $region55: #{_forward_device.3} parent=5 // pred_region
      %s374 = ssub.s32 %s22, 1
      %s375 = smul.u32 16, %s27
      %p376 = scmp.lt.s32.totalorder %s375, 31
      %s377 = scalar_select %p376, %s375, 31
      %s378 = smul.addr %s377, 8
      %s379 = scalar_lea.vmem %s1, %s378
      %p380 = pneg %p48
      %p381 = pneg %p45
      %p382 = pneg %p69
      %p383 = pneg %p66
      %s384 = smul.u32 16, %s27
      %p385 = scmp.lt.s32.totalorder %s384, 31
      %s386 = scalar_select %p385, %s384, 31
      %s387 = smul.addr %s386, 8
      %s388 = scalar_lea.vmem %s3, %s387
      %p389 = pneg %p95
      %p390 = pneg %p92
      %p391 = pneg %p116
      %p392 = pneg %p113
      %p393 = pneg %p137
      %p394 = pneg %p134
      %s395 = smul.u32 16, %s27
      %p396 = scmp.lt.s32.totalorder %s395, 31
      %s397 = scalar_select %p396, %s395, 31
      %s398 = smul.addr %s397, 8
      %s399 = scalar_lea.vmem %s6, %s398
      %p400 = pneg %p163
      %p401 = pneg %p160
      %p402 = pneg %p184
      %p403 = pneg %p181
      %p404 = pneg %p205
      %p405 = pneg %p202
      %p406 = pneg %p226
      %p407 = pneg %p223
      %p408 = pneg %p252
      %p409 = pneg %p249
      %s410 = smul.u32 16, %s27
      %p411 = scmp.lt.s32.totalorder %s410, 31
      %s412 = scalar_select %p411, %s410, 31
      %s413 = smul.addr %s412, 8
      %s414 = scalar_lea.vmem %s10, %s413
      %p415 = pneg %p278
      %p416 = pneg %p275
      %s417 = smul.u32 16, %s27
      %p418 = scmp.lt.s32.totalorder %s417, 31
      %s419 = scalar_select %p418, %s417, 31
      %s420 = smul.addr %s419, 8
      %s421 = scalar_lea.vmem %s11, %s420
      %p422 = pneg %p304
      %p423 = pneg %p301
      %s424 = smul.u32 16, %s27
      %p425 = scmp.lt.s32.totalorder %s424, 31
      %s426 = scalar_select %p425, %s424, 31
      %s427 = smul.addr %s426, 8
      %s428 = scalar_lea.vmem %s12, %s427
      %s429 = smul.u32 16, %s27
      %p430 = scmp.lt.s32.totalorder %s429, 31
      %s431 = scalar_select %p430, %s429, 31
      %s432 = smul.addr %s431, 8
      %s433 = scalar_lea.vmem %s1, %s432
      %s434 = smul.u32 16, %s27
      %s435 = smul.u32 16, %s27
      %p436 = scmp.lt.s32.totalorder %s435, 31
      %s437 = scalar_select %p436, %s435, 31
      %s438 = smul.addr %s437, 8
      %s439 = scalar_lea.vmem %s3, %s438
      %s440 = smul.u32 16, %s27
      %s441 = smul.u32 16, %s27
      %p442 = scmp.lt.s32.totalorder %s441, 31
      %s443 = scalar_select %p442, %s441, 31
      %s444 = smul.addr %s443, 8
      %s445 = scalar_lea.vmem %s6, %s444
      %s446 = smul.u32 16, %s27
      %s447 = smul.u32 16, %s27
      %p448 = scmp.lt.s32.totalorder %s447, 31
      %s449 = scalar_select %p448, %s447, 31
      %s450 = smul.addr %s449, 8
      %s451 = scalar_lea.vmem %s10, %s450
      %s452 = smul.u32 16, %s27
      %s453 = smul.u32 16, %s27
      %p454 = scmp.lt.s32.totalorder %s453, 31
      %s455 = scalar_select %p454, %s453, 31
      %s456 = smul.addr %s455, 8
      %s457 = scalar_lea.vmem %s11, %s456
      %s458 = smul.u32 16, %s27
      %s459 = smul.u32 16, %s27
      %p460 = scmp.lt.s32.totalorder %s459, 31
      %s461 = scalar_select %p460, %s459, 31
      %s462 = smul.addr %s461, 8
      %s463 = scalar_lea.vmem %s12, %s462
      %s464 = smul.u32 16, %s27
      %s465 = sld [smem:[#allocation3]]
      %v466 = vld [vmem:[%s433] sm:$0xff]
      %v467 = vld [vmem:[%s433 + $0x8] sm:$0xff]
      %v468 = vld [vmem:[%s433 + $0x10] sm:$0xff]
      %v469 = vld [vmem:[%s433 + $0x18] sm:$0xff]
      %v470 = vld [vmem:[%s433 + $0x20] sm:$0xff]
      %v471 = vld [vmem:[%s433 + $0x28] sm:$0xff]
      %v472 = vld [vmem:[%s433 + $0x30] sm:$0xff]
      %v473 = vld [vmem:[%s433 + $0x38] sm:$0xff]
      %v474 = vld [vmem:[%s433 + $0x40] sm:$0xff]
      %v475 = vld [vmem:[%s433 + $0x48] sm:$0xff]
      %v476 = vld [vmem:[%s433 + $0x50] sm:$0xff]
      %v477 = vld [vmem:[%s433 + $0x58] sm:$0xff]
      %v478 = vld [vmem:[%s433 + $0x60] sm:$0xff]
      %v479 = vld [vmem:[%s433 + $0x68] sm:$0xff]
      %v480 = vld [vmem:[%s433 + $0x70] sm:$0xff]
      %v481 = vld [vmem:[%s433 + $0x78] sm:$0xff]
      %v482 = vld [vmem:[%s2] sm:$0xff]
      %v483 = vld [vmem:[%s2 + $0x8] sm:$0xff]
      %vm484 = vcmask 64512
      %v486 = vsel %vm484, %v466, 0
      %v489 = vsel %vm484, %v467, 0
      %v492 = vsel %vm484, %v468, 0
      %v495 = vsel %vm484, %v469, 0
      %v498 = vsel %vm484, %v470, 0
      %v501 = vsel %vm484, %v471, 0
      %v504 = vsel %vm484, %v472, 0
      %v507 = vsel %vm484, %v473, 0
      %v510 = vsel %vm484, %v474, 0
      %v513 = vsel %vm484, %v475, 0
      %v516 = vsel %vm484, %v476, 0
      %v519 = vsel %vm484, %v477, 0
      %v522 = vsel %vm484, %v478, 0
      %v525 = vsel %vm484, %v479, 0
      %v528 = vsel %vm484, %v480, 0
      %v531 = vsel %vm484, %v481, 0
      %533 = vmatprep.subr.mxu0 0.0
      %534 = vmatpush1.msra.mxu0 0.0
      %535 = vmatprep.subr.mxu0 0.0
      %536 = vmatpush1.msra.mxu0 0.0
      %537 = vmatprep.subr.mxu0 0.0
      %538 = vmatpush1.msra.mxu0 0.0
      %539 = vmatprep.subr.mxu0 0.0
      %540 = vmatpush1.msra.mxu0 0.0
      %541 = vmatprep.subr.mxu0 0.0
      %542 = vmatpush1.msra.mxu0 0.0
      %543 = vmatprep.subr.mxu0 0.0
      %544 = vmatpush1.msra.mxu0 0.0
      %545 = vmatprep.subr.mxu0 0.0
      %546 = vmatpush1.msra.mxu0 0.0
      %547 = vmatprep.subr.mxu0 0.0
      %548 = vmatpush1.msra.mxu0 0.0
      %549 = vmatprep.subr.mxu0 0.0
      %550 = vmatpush1.msra.mxu0 0.0
      %551 = vmatprep.subr.mxu0 0.0
      %552 = vmatpush1.msra.mxu0 0.0
      %553 = vmatprep.subr.mxu0 0.0
      %554 = vmatpush1.msra.mxu0 0.0
      %555 = vmatprep.subr.mxu0 0.0
      %556 = vmatpush1.msra.mxu0 0.0
      %557 = vmatprep.subr.mxu0 0.0
      %558 = vmatpush1.msra.mxu0 0.0
      %559 = vmatprep.subr.mxu0 0.0
      %560 = vmatpush1.msra.mxu0 0.0
      %561 = vmatprep.subr.mxu0 0.0
      %562 = vmatpush1.msra.mxu0 0.0
      %563 = vmatprep.subr.mxu0 %v483
      %564 = vmatpush1.msra.mxu0 %v482
      %565 = vmatprep.subr.mxu0 0.0
      %566 = vmatpush2.msra.mxu0 0.0
      %567 = vmatprep.subr.mxu0 0.0
      %568 = vmatpush2.msra.mxu0 0.0
      %569 = vmatprep.subr.mxu0 0.0
      %570 = vmatpush2.msra.mxu0 0.0
      %571 = vmatprep.subr.mxu0 0.0
      %572 = vmatpush2.msra.mxu0 0.0
      %573 = vmatprep.subr.mxu0 0.0
      %574 = vmatpush2.msra.mxu0 0.0
      %575 = vmatprep.subr.mxu0 0.0
      %576 = vmatpush2.msra.mxu0 0.0
      %577 = vmatprep.subr.mxu0 0.0
      %578 = vmatpush2.msra.mxu0 0.0
      %579 = vmatprep.subr.mxu0 0.0
      %580 = vmatpush2.msra.mxu0 0.0
      %581 = vmatprep.subr.mxu0 0.0
      %582 = vmatpush2.msra.mxu0 0.0
      %583 = vmatprep.subr.mxu0 0.0
      %584 = vmatpush2.msra.mxu0 0.0
      %585 = vmatprep.subr.mxu0 0.0
      %586 = vmatpush2.msra.mxu0 0.0
      %587 = vmatprep.subr.mxu0 0.0
      %588 = vmatpush2.msra.mxu0 0.0
      %589 = vmatprep.subr.mxu0 0.0
      %590 = vmatpush2.msra.mxu0 0.0
      %591 = vmatprep.subr.mxu0 0.0
      %592 = vmatpush2.msra.mxu0 0.0
      %593 = vmatprep.subr.mxu0 0.0
      %594 = vmatpush2.msra.mxu0 0.0
      %595 = vmatprep.subr.mxu0 0.0
      %596 = vmatpush2.msra.mxu0 0.0
      %597 = vmatprep.mubr.f32.mxu0 0.0
      %598 = vmatmul.mubr.f32.gmra.mxu0 %v486
      %v599 = vpop.f32.mrf.mxu0
      %v600 = vadd.f32 0.0, %v599
      %v601 = vpop.f32.mrf.mxu0
      %v602 = vadd.f32 0.0, %v601
      %603 = vmatprep.mubr.f32.mxu0 0.0
      %604 = vmatmul.mubr.f32.gmra.mxu0 %v489
      %v605 = vpop.f32.mrf.mxu0
      %v606 = vadd.f32 0.0, %v605
      %v607 = vpop.f32.mrf.mxu0
      %v608 = vadd.f32 0.0, %v607
      %609 = vmatprep.mubr.f32.mxu0 0.0
      %610 = vmatmul.mubr.f32.gmra.mxu0 %v492
      %v611 = vpop.f32.mrf.mxu0
      %v612 = vadd.f32 0.0, %v611
      %v613 = vpop.f32.mrf.mxu0
      %v614 = vadd.f32 0.0, %v613
      %615 = vmatprep.mubr.f32.mxu0 0.0
      %616 = vmatmul.mubr.f32.gmra.mxu0 %v495
      %v617 = vpop.f32.mrf.mxu0
      %v618 = vadd.f32 0.0, %v617
      %v619 = vpop.f32.mrf.mxu0
      %v620 = vadd.f32 0.0, %v619
      %621 = vmatprep.mubr.f32.mxu0 0.0
      %622 = vmatmul.mubr.f32.gmra.mxu0 %v498
      %v623 = vpop.f32.mrf.mxu0
      %v624 = vadd.f32 0.0, %v623
      %v625 = vpop.f32.mrf.mxu0
      %v626 = vadd.f32 0.0, %v625
      %627 = vmatprep.mubr.f32.mxu0 0.0
      %628 = vmatmul.mubr.f32.gmra.mxu0 %v501
      %v629 = vpop.f32.mrf.mxu0
      %v630 = vadd.f32 0.0, %v629
      %v631 = vpop.f32.mrf.mxu0
      %v632 = vadd.f32 0.0, %v631
      %633 = vmatprep.mubr.f32.mxu0 0.0
      %634 = vmatmul.mubr.f32.gmra.mxu0 %v504
      %v635 = vpop.f32.mrf.mxu0
      %v636 = vadd.f32 0.0, %v635
      %v637 = vpop.f32.mrf.mxu0
      %v638 = vadd.f32 0.0, %v637
      %639 = vmatprep.mubr.f32.mxu0 0.0
      %640 = vmatmul.mubr.f32.gmra.mxu0 %v507
      %v641 = vpop.f32.mrf.mxu0
      %v642 = vadd.f32 0.0, %v641
      %v643 = vpop.f32.mrf.mxu0
      %v644 = vadd.f32 0.0, %v643
      %645 = vmatprep.mubr.f32.mxu0 0.0
      %646 = vmatmul.mubr.f32.gmra.mxu0 %v510
      %v647 = vpop.f32.mrf.mxu0
      %v648 = vadd.f32 0.0, %v647
      %v649 = vpop.f32.mrf.mxu0
      %v650 = vadd.f32 0.0, %v649
      %651 = vmatprep.mubr.f32.mxu0 0.0
      %652 = vmatmul.mubr.f32.gmra.mxu0 %v513
      %v653 = vpop.f32.mrf.mxu0
      %v654 = vadd.f32 0.0, %v653
      %v655 = vpop.f32.mrf.mxu0
      %v656 = vadd.f32 0.0, %v655
      %657 = vmatprep.mubr.f32.mxu0 0.0
      %658 = vmatmul.mubr.f32.gmra.mxu0 %v516
      %v659 = vpop.f32.mrf.mxu0
      %v660 = vadd.f32 0.0, %v659
      %v661 = vpop.f32.mrf.mxu0
      %v662 = vadd.f32 0.0, %v661
      %663 = vmatprep.mubr.f32.mxu0 0.0
      %664 = vmatmul.mubr.f32.gmra.mxu0 %v519
      %v665 = vpop.f32.mrf.mxu0
      %v666 = vadd.f32 0.0, %v665
      %v667 = vpop.f32.mrf.mxu0
      %v668 = vadd.f32 0.0, %v667
      %669 = vmatprep.mubr.f32.mxu0 0.0
      %670 = vmatmul.mubr.f32.gmra.mxu0 %v522
      %v671 = vpop.f32.mrf.mxu0
      %v672 = vadd.f32 0.0, %v671
      %v673 = vpop.f32.mrf.mxu0
      %v674 = vadd.f32 0.0, %v673
      %675 = vmatprep.mubr.f32.mxu0 0.0
      %676 = vmatmul.mubr.f32.gmra.mxu0 %v525
      %v677 = vpop.f32.mrf.mxu0
      %v678 = vadd.f32 0.0, %v677
      %v679 = vpop.f32.mrf.mxu0
      %v680 = vadd.f32 0.0, %v679
      %681 = vmatprep.mubr.f32.mxu0 0.0
      %682 = vmatmul.mubr.f32.gmra.mxu0 %v528
      %v683 = vpop.f32.mrf.mxu0
      %v684 = vadd.f32 0.0, %v683
      %v685 = vpop.f32.mrf.mxu0
      %v686 = vadd.f32 0.0, %v685
      %687 = vmatprep.mubr.f32.mxu0 0.0
      %688 = vmatmul.mubr.f32.gmra.mxu0 %v531
      %v689 = vpop.f32.mrf.mxu0
      %v690 = vadd.f32 0.0, %v689
      %v691 = vpop.f32.mrf.mxu0
      %v692 = vadd.f32 0.0, %v691
      %693 = vdwg.mxu0
      %v694 = vmul.f32 %v466, %v466
      %v695 = vmul.f32 %v467, %v467
      %v696 = vmul.f32 %v468, %v468
      %v697 = vmul.f32 %v469, %v469
      %v698 = vmul.f32 %v470, %v470
      %v699 = vmul.f32 %v471, %v471
      %v700 = vmul.f32 %v472, %v472
      %v701 = vmul.f32 %v473, %v473
      %v702 = vmul.f32 %v474, %v474
      %v703 = vmul.f32 %v475, %v475
      %v704 = vmul.f32 %v476, %v476
      %v705 = vmul.f32 %v477, %v477
      %v706 = vmul.f32 %v478, %v478
      %v707 = vmul.f32 %v479, %v479
      %v708 = vmul.f32 %v480, %v480
      %v709 = vmul.f32 %v481, %v481
      %v710 = vsel %vm484, %v694, 0.0
      %711 = vadd.xlane.f32.xlu0 %v710
      %v712 = vpop.xlane.xlu0 %711
      %v713 = vsel %vm484, %v695, 0.0
      %714 = vadd.xlane.f32.xlu0 %v713
      %v715 = vpop.xlane.xlu0 %714
      %v716 = vsel %vm484, %v696, 0.0
      %717 = vadd.xlane.f32.xlu0 %v716
      %v718 = vpop.xlane.xlu0 %717
      %v719 = vsel %vm484, %v697, 0.0
      %720 = vadd.xlane.f32.xlu0 %v719
      %v721 = vpop.xlane.xlu0 %720
      %v722 = vsel %vm484, %v698, 0.0
      %723 = vadd.xlane.f32.xlu0 %v722
      %v724 = vpop.xlane.xlu0 %723
      %v725 = vsel %vm484, %v699, 0.0
      %726 = vadd.xlane.f32.xlu0 %v725
      %v727 = vpop.xlane.xlu0 %726
      %v728 = vsel %vm484, %v700, 0.0
      %729 = vadd.xlane.f32.xlu0 %v728
      %v730 = vpop.xlane.xlu0 %729
      %v731 = vsel %vm484, %v701, 0.0
      %732 = vadd.xlane.f32.xlu0 %v731
      %v733 = vpop.xlane.xlu0 %732
      %v734 = vsel %vm484, %v702, 0.0
      %735 = vadd.xlane.f32.xlu0 %v734
      %v736 = vpop.xlane.xlu0 %735
      %v737 = vsel %vm484, %v703, 0.0
      %738 = vadd.xlane.f32.xlu0 %v737
      %v739 = vpop.xlane.xlu0 %738
      %v740 = vsel %vm484, %v704, 0.0
      %741 = vadd.xlane.f32.xlu0 %v740
      %v742 = vpop.xlane.xlu0 %741
      %v743 = vsel %vm484, %v705, 0.0
      %744 = vadd.xlane.f32.xlu0 %v743
      %v745 = vpop.xlane.xlu0 %744
      %v746 = vsel %vm484, %v706, 0.0
      %747 = vadd.xlane.f32.xlu0 %v746
      %v748 = vpop.xlane.xlu0 %747
      %v749 = vsel %vm484, %v707, 0.0
      %750 = vadd.xlane.f32.xlu0 %v749
      %v751 = vpop.xlane.xlu0 %750
      %v752 = vsel %vm484, %v708, 0.0
      %753 = vadd.xlane.f32.xlu0 %v752
      %v754 = vpop.xlane.xlu0 %753
      %v755 = vsel %vm484, %v709, 0.0
      %756 = vadd.xlane.f32.xlu0 %v755
      %v757 = vpop.xlane.xlu0 %756
      %v758 = vmul.f32 %v600, 2.0
      %v759 = vmul.f32 %v602, 2.0
      %v760 = vmul.f32 %v606, 2.0
      %v761 = vmul.f32 %v608, 2.0
      %v762 = vmul.f32 %v612, 2.0
      %v763 = vmul.f32 %v614, 2.0
      %v764 = vmul.f32 %v618, 2.0
      %v765 = vmul.f32 %v620, 2.0
      %v766 = vmul.f32 %v624, 2.0
      %v767 = vmul.f32 %v626, 2.0
      %v768 = vmul.f32 %v630, 2.0
      %v769 = vmul.f32 %v632, 2.0
      %v770 = vmul.f32 %v636, 2.0
      %v771 = vmul.f32 %v638, 2.0
      %v772 = vmul.f32 %v642, 2.0
      %v773 = vmul.f32 %v644, 2.0
      %v774 = vmul.f32 %v648, 2.0
      %v775 = vmul.f32 %v650, 2.0
      %v776 = vmul.f32 %v654, 2.0
      %v777 = vmul.f32 %v656, 2.0
      %v778 = vmul.f32 %v660, 2.0
      %v779 = vmul.f32 %v662, 2.0
      %v780 = vmul.f32 %v666, 2.0
      %v781 = vmul.f32 %v668, 2.0
      %v782 = vmul.f32 %v672, 2.0
      %v783 = vmul.f32 %v674, 2.0
      %v784 = vmul.f32 %v678, 2.0
      %v785 = vmul.f32 %v680, 2.0
      %v786 = vmul.f32 %v684, 2.0
      %v787 = vmul.f32 %v686, 2.0
      %v788 = vmul.f32 %v690, 2.0
      %v789 = vmul.f32 %v692, 2.0
      %v790 = vsub.f32 %v712, %v758
      %v791 = vsub.f32 %v712, %v759
      %v792 = vsub.f32 %v715, %v760
      %v793 = vsub.f32 %v715, %v761
      %v794 = vsub.f32 %v718, %v762
      %v795 = vsub.f32 %v718, %v763
      %v796 = vsub.f32 %v721, %v764
      %v797 = vsub.f32 %v721, %v765
      %v798 = vsub.f32 %v724, %v766
      %v799 = vsub.f32 %v724, %v767
      %v800 = vsub.f32 %v727, %v768
      %v801 = vsub.f32 %v727, %v769
      %v802 = vsub.f32 %v730, %v770
      %v803 = vsub.f32 %v730, %v771
      %v804 = vsub.f32 %v733, %v772
      %v805 = vsub.f32 %v733, %v773
      %v806 = vsub.f32 %v736, %v774
      %v807 = vsub.f32 %v736, %v775
      %v808 = vsub.f32 %v739, %v776
      %v809 = vsub.f32 %v739, %v777
      %v810 = vsub.f32 %v742, %v778
      %v811 = vsub.f32 %v742, %v779
      %v812 = vsub.f32 %v745, %v780
      %v813 = vsub.f32 %v745, %v781
      %v814 = vsub.f32 %v748, %v782
      %v815 = vsub.f32 %v748, %v783
      %v816 = vsub.f32 %v751, %v784
      %v817 = vsub.f32 %v751, %v785
      %v818 = vsub.f32 %v754, %v786
      %v819 = vsub.f32 %v754, %v787
      %v820 = vsub.f32 %v757, %v788
      %v821 = vsub.f32 %v757, %v789
      %v822 = vld [vmem:[%s5] sm:$0x3]
      %v824 = vlaneseq
      %v825 = vshrl.u32 %v824, 7
      %v826 = vsub.s32 0, %v825
      %v827 = vrot.slane %v822, %v826
      %v828 = vlaneseq
      %v829 = vshrl.u32 %v828, 7
      %v830 = vsub.s32 1, %v829
      %v831 = vrot.slane %v822, %v830
      %v834 = vadd.f32 %v790, %v827
      %v835 = vadd.f32 %v791, %v831
      %v836 = vadd.f32 %v792, %v827
      %v837 = vadd.f32 %v793, %v831
      %v838 = vadd.f32 %v794, %v827
      %v839 = vadd.f32 %v795, %v831
      %v840 = vadd.f32 %v796, %v827
      %v841 = vadd.f32 %v797, %v831
      %v842 = vadd.f32 %v798, %v827
      %v843 = vadd.f32 %v799, %v831
      %v844 = vadd.f32 %v800, %v827
      %v845 = vadd.f32 %v801, %v831
      %v846 = vadd.f32 %v802, %v827
      %v847 = vadd.f32 %v803, %v831
      %v848 = vadd.f32 %v804, %v827
      %v849 = vadd.f32 %v805, %v831
      %v850 = vadd.f32 %v806, %v827
      %v851 = vadd.f32 %v807, %v831
      %v852 = vadd.f32 %v808, %v827
      %v853 = vadd.f32 %v809, %v831
      %v854 = vadd.f32 %v810, %v827
      %v855 = vadd.f32 %v811, %v831
      %v856 = vadd.f32 %v812, %v827
      %v857 = vadd.f32 %v813, %v831
      %v858 = vadd.f32 %v814, %v827
      %v859 = vadd.f32 %v815, %v831
      %v860 = vadd.f32 %v816, %v827
      %v861 = vadd.f32 %v817, %v831
      %v862 = vadd.f32 %v818, %v827
      %v863 = vadd.f32 %v819, %v831
      %v864 = vadd.f32 %v820, %v827
      %v865 = vadd.f32 %v821, %v831
      %v866 = vmax.f32 %v834, 0.0
      %v867 = vmax.f32 %v835, 0.0
      %v868 = vmax.f32 %v836, 0.0
      %v869 = vmax.f32 %v837, 0.0
      %v870 = vmax.f32 %v838, 0.0
      %v871 = vmax.f32 %v839, 0.0
      %v872 = vmax.f32 %v840, 0.0
      %v873 = vmax.f32 %v841, 0.0
      %v874 = vmax.f32 %v842, 0.0
      %v875 = vmax.f32 %v843, 0.0
      %v876 = vmax.f32 %v844, 0.0
      %v877 = vmax.f32 %v845, 0.0
      %v878 = vmax.f32 %v846, 0.0
      %v879 = vmax.f32 %v847, 0.0
      %v880 = vmax.f32 %v848, 0.0
      %v881 = vmax.f32 %v849, 0.0
      %v882 = vmax.f32 %v850, 0.0
      %v883 = vmax.f32 %v851, 0.0
      %v884 = vmax.f32 %v852, 0.0
      %v885 = vmax.f32 %v853, 0.0
      %v886 = vmax.f32 %v854, 0.0
      %v887 = vmax.f32 %v855, 0.0
      %v888 = vmax.f32 %v856, 0.0
      %v889 = vmax.f32 %v857, 0.0
      %v890 = vmax.f32 %v858, 0.0
      %v891 = vmax.f32 %v859, 0.0
      %v892 = vmax.f32 %v860, 0.0
      %v893 = vmax.f32 %v861, 0.0
      %v894 = vmax.f32 %v862, 0.0
      %v895 = vmax.f32 %v863, 0.0
      %v896 = vmax.f32 %v864, 0.0
      %v897 = vmax.f32 %v865, 0.0
      %v898 = vlaneseq
      %v899 = vand.u32 %v898, 127
      %v900 = vadd.s32 %v899, 128
      %s901 = smul.u32 %s27, 128
      %v902 = vlaneseq
      %v903 = vshrl.u32 %v902, 7
      %v904 = vadd.s32 %v903, 8
      %v905 = vadd.s32 %v903, 16
      %v906 = vadd.s32 %v903, 24
      %v907 = vadd.s32 %v903, 32
      %v908 = vadd.s32 %v903, 40
      %v909 = vadd.s32 %v903, 48
      %v910 = vadd.s32 %v903, 56
      %v911 = vadd.s32 %v903, 64
      %v912 = vadd.s32 %v903, 72
      %v913 = vadd.s32 %v903, 80
      %v914 = vadd.s32 %v903, 88
      %v915 = vadd.s32 %v903, 96
      %v916 = vadd.s32 %v903, 104
      %v917 = vadd.s32 %v903, 112
      %v918 = vadd.s32 %v903, 120
      %v919 = vstv %s901
      %v920 = vadd.s32 %v919, %v903
      %v921 = vadd.s32 %v919, %v904
      %v922 = vadd.s32 %v919, %v905
      %v923 = vadd.s32 %v919, %v906
      %v924 = vadd.s32 %v919, %v907
      %v925 = vadd.s32 %v919, %v908
      %v926 = vadd.s32 %v919, %v909
      %v927 = vadd.s32 %v919, %v910
      %v928 = vadd.s32 %v919, %v911
      %v929 = vadd.s32 %v919, %v912
      %v930 = vadd.s32 %v919, %v913
      %v931 = vadd.s32 %v919, %v914
      %v932 = vadd.s32 %v919, %v915
      %v933 = vadd.s32 %v919, %v916
      %v934 = vadd.s32 %v919, %v917
      %v935 = vadd.s32 %v919, %v918
      %v936 = vstv %s465
      %vm937 = vcmp.ge.s32.totalorder %v899, %v936
      %vm938 = vcmp.ge.s32.totalorder %v900, %v936
      %vm939 = vcmp.eq.s32.totalorder %v899, %v920
      %vm940 = vcmp.eq.s32.totalorder %v900, %v920
      %vm941 = vcmp.eq.s32.totalorder %v899, %v921
      %vm942 = vcmp.eq.s32.totalorder %v900, %v921
      %vm943 = vcmp.eq.s32.totalorder %v899, %v922
      %vm944 = vcmp.eq.s32.totalorder %v900, %v922
      %vm945 = vcmp.eq.s32.totalorder %v899, %v923
      %vm946 = vcmp.eq.s32.totalorder %v900, %v923
      %vm947 = vcmp.eq.s32.totalorder %v899, %v924
      %vm948 = vcmp.eq.s32.totalorder %v900, %v924
      %vm949 = vcmp.eq.s32.totalorder %v899, %v925
      %vm950 = vcmp.eq.s32.totalorder %v900, %v925
      %vm951 = vcmp.eq.s32.totalorder %v899, %v926
      %vm952 = vcmp.eq.s32.totalorder %v900, %v926
      %vm953 = vcmp.eq.s32.totalorder %v899, %v927
      %vm954 = vcmp.eq.s32.totalorder %v900, %v927
      %vm955 = vcmp.eq.s32.totalorder %v899, %v928
      %vm956 = vcmp.eq.s32.totalorder %v900, %v928
      %vm957 = vcmp.eq.s32.totalorder %v899, %v929
      %vm958 = vcmp.eq.s32.totalorder %v900, %v929
      %vm959 = vcmp.eq.s32.totalorder %v899, %v930
      %vm960 = vcmp.eq.s32.totalorder %v900, %v930
      %vm961 = vcmp.eq.s32.totalorder %v899, %v931
      %vm962 = vcmp.eq.s32.totalorder %v900, %v931
      %vm963 = vcmp.eq.s32.totalorder %v899, %v932
      %vm964 = vcmp.eq.s32.totalorder %v900, %v932
      %vm965 = vcmp.eq.s32.totalorder %v899, %v933
      %vm966 = vcmp.eq.s32.totalorder %v900, %v933
      %vm967 = vcmp.eq.s32.totalorder %v899, %v934
      %vm968 = vcmp.eq.s32.totalorder %v900, %v934
      %vm969 = vcmp.eq.s32.totalorder %v899, %v935
      %vm970 = vcmp.eq.s32.totalorder %v900, %v935
      %vm971 = vmor %vm937, %vm939
      %vm972 = vmor %vm938, %vm940
      %vm973 = vmor %vm937, %vm941
      %vm974 = vmor %vm938, %vm942
      %vm975 = vmor %vm937, %vm943
      %vm976 = vmor %vm938, %vm944
      %vm977 = vmor %vm937, %vm945
      %vm978 = vmor %vm938, %vm946
      %vm979 = vmor %vm937, %vm947
      %vm980 = vmor %vm938, %vm948
      %vm981 = vmor %vm937, %vm949
      %vm982 = vmor %vm938, %vm950
      %vm983 = vmor %vm937, %vm951
      %vm984 = vmor %vm938, %vm952
      %vm985 = vmor %vm937, %vm953
      %vm986 = vmor %vm938, %vm954
      %vm987 = vmor %vm937, %vm955
      %vm988 = vmor %vm938, %vm956
      %vm989 = vmor %vm937, %vm957
      %vm990 = vmor %vm938, %vm958
      %vm991 = vmor %vm937, %vm959
      %vm992 = vmor %vm938, %vm960
      %vm993 = vmor %vm937, %vm961
      %vm994 = vmor %vm938, %vm962
      %vm995 = vmor %vm937, %vm963
      %vm996 = vmor %vm938, %vm964
      %vm997 = vmor %vm937, %vm965
      %vm998 = vmor %vm938, %vm966
      %vm999 = vmor %vm937, %vm967
      %vm1000 = vmor %vm938, %vm968
      %vm1001 = vmor %vm937, %vm969
      %vm1002 = vmor %vm938, %vm970
      %v1003 = vld [vmem:[%s439] sm:$0xff]
      %v1004 = vld [vmem:[%s439 + $0x8] sm:$0xff]
      %v1005 = vld [vmem:[%s439 + $0x10] sm:$0xff]
      %v1006 = vld [vmem:[%s439 + $0x18] sm:$0xff]
      %v1007 = vld [vmem:[%s439 + $0x20] sm:$0xff]
      %v1008 = vld [vmem:[%s439 + $0x28] sm:$0xff]
      %v1009 = vld [vmem:[%s439 + $0x30] sm:$0xff]
      %v1010 = vld [vmem:[%s439 + $0x38] sm:$0xff]
      %v1011 = vld [vmem:[%s439 + $0x40] sm:$0xff]
      %v1012 = vld [vmem:[%s439 + $0x48] sm:$0xff]
      %v1013 = vld [vmem:[%s439 + $0x50] sm:$0xff]
      %v1014 = vld [vmem:[%s439 + $0x58] sm:$0xff]
      %v1015 = vld [vmem:[%s439 + $0x60] sm:$0xff]
      %v1016 = vld [vmem:[%s439 + $0x68] sm:$0xff]
      %v1017 = vld [vmem:[%s439 + $0x70] sm:$0xff]
      %v1018 = vld [vmem:[%s439 + $0x78] sm:$0xff]
      %v1019 = vld [vmem:[%s4] sm:$0x3]
      %1020 = vset.pattern.permute.xlu0 0
      %1021 = vperm.xlu0 %1020, %v1003
      %v1022 = vpop.permute.xlu0 %1021
      %1023 = vset.pattern.permute.xlu0 0
      %1024 = vperm.xlu0 %1023, %v1004
      %v1025 = vpop.permute.xlu0 %1024
      %1026 = vset.pattern.permute.xlu0 0
      %1027 = vperm.xlu0 %1026, %v1005
      %v1028 = vpop.permute.xlu0 %1027
      %1029 = vset.pattern.permute.xlu0 0
      %1030 = vperm.xlu0 %1029, %v1006
      %v1031 = vpop.permute.xlu0 %1030
      %1032 = vset.pattern.permute.xlu0 0
      %1033 = vperm.xlu0 %1032, %v1007
      %v1034 = vpop.permute.xlu0 %1033
      %1035 = vset.pattern.permute.xlu0 0
      %1036 = vperm.xlu0 %1035, %v1008
      %v1037 = vpop.permute.xlu0 %1036
      %1038 = vset.pattern.permute.xlu0 0
      %1039 = vperm.xlu0 %1038, %v1009
      %v1040 = vpop.permute.xlu0 %1039
      %1041 = vset.pattern.permute.xlu0 0
      %1042 = vperm.xlu0 %1041, %v1010
      %v1043 = vpop.permute.xlu0 %1042
      %1044 = vset.pattern.permute.xlu0 0
      %1045 = vperm.xlu0 %1044, %v1011
      %v1046 = vpop.permute.xlu0 %1045
      %1047 = vset.pattern.permute.xlu0 0
      %1048 = vperm.xlu0 %1047, %v1012
      %v1049 = vpop.permute.xlu0 %1048
      %1050 = vset.pattern.permute.xlu0 0
      %1051 = vperm.xlu0 %1050, %v1013
      %v1052 = vpop.permute.xlu0 %1051
      %1053 = vset.pattern.permute.xlu0 0
      %1054 = vperm.xlu0 %1053, %v1014
      %v1055 = vpop.permute.xlu0 %1054
      %1056 = vset.pattern.permute.xlu0 0
      %1057 = vperm.xlu0 %1056, %v1015
      %v1058 = vpop.permute.xlu0 %1057
      %1059 = vset.pattern.permute.xlu0 0
      %1060 = vperm.xlu0 %1059, %v1016
      %v1061 = vpop.permute.xlu0 %1060
      %1062 = vset.pattern.permute.xlu0 0
      %1063 = vperm.xlu0 %1062, %v1017
      %v1064 = vpop.permute.xlu0 %1063
      %1065 = vset.pattern.permute.xlu0 0
      %1066 = vperm.xlu0 %1065, %v1018
      %v1067 = vpop.permute.xlu0 %1066
      %v1068 = vlaneseq
      %v1069 = vshrl.u32 %v1068, 7
      %v1070 = vsub.s32 0, %v1069
      %v1071 = vrot.slane %v1019, %v1070
      %v1072 = vlaneseq
      %v1073 = vshrl.u32 %v1072, 7
      %v1074 = vsub.s32 1, %v1073
      %v1075 = vrot.slane %v1019, %v1074
      %vm1076 = vcmp.ne.s32.totalorder %v1022, %v1071
      %vm1077 = vcmp.ne.s32.totalorder %v1022, %v1075
      %vm1078 = vcmp.ne.s32.totalorder %v1025, %v1071
      %vm1079 = vcmp.ne.s32.totalorder %v1025, %v1075
      %vm1080 = vcmp.ne.s32.totalorder %v1028, %v1071
      %vm1081 = vcmp.ne.s32.totalorder %v1028, %v1075
      %vm1082 = vcmp.ne.s32.totalorder %v1031, %v1071
      %vm1083 = vcmp.ne.s32.totalorder %v1031, %v1075
      %vm1084 = vcmp.ne.s32.totalorder %v1034, %v1071
      %vm1085 = vcmp.ne.s32.totalorder %v1034, %v1075
      %vm1086 = vcmp.ne.s32.totalorder %v1037, %v1071
      %vm1087 = vcmp.ne.s32.totalorder %v1037, %v1075
      %vm1088 = vcmp.ne.s32.totalorder %v1040, %v1071
      %vm1089 = vcmp.ne.s32.totalorder %v1040, %v1075
      %vm1090 = vcmp.ne.s32.totalorder %v1043, %v1071
      %vm1091 = vcmp.ne.s32.totalorder %v1043, %v1075
      %vm1092 = vcmp.ne.s32.totalorder %v1046, %v1071
      %vm1093 = vcmp.ne.s32.totalorder %v1046, %v1075
      %vm1094 = vcmp.ne.s32.totalorder %v1049, %v1071
      %vm1095 = vcmp.ne.s32.totalorder %v1049, %v1075
      %vm1096 = vcmp.ne.s32.totalorder %v1052, %v1071
      %vm1097 = vcmp.ne.s32.totalorder %v1052, %v1075
      %vm1098 = vcmp.ne.s32.totalorder %v1055, %v1071
      %vm1099 = vcmp.ne.s32.totalorder %v1055, %v1075
      %vm1100 = vcmp.ne.s32.totalorder %v1058, %v1071
      %vm1101 = vcmp.ne.s32.totalorder %v1058, %v1075
      %vm1102 = vcmp.ne.s32.totalorder %v1061, %v1071
      %vm1103 = vcmp.ne.s32.totalorder %v1061, %v1075
      %vm1104 = vcmp.ne.s32.totalorder %v1064, %v1071
      %vm1105 = vcmp.ne.s32.totalorder %v1064, %v1075
      %vm1106 = vcmp.ne.s32.totalorder %v1067, %v1071
      %vm1107 = vcmp.ne.s32.totalorder %v1067, %v1075
      %vm1108 = vmor %vm971, %vm1076
      %vm1109 = vmor %vm972, %vm1077
      %vm1110 = vmor %vm973, %vm1078
      %vm1111 = vmor %vm974, %vm1079
      %vm1112 = vmor %vm975, %vm1080
      %vm1113 = vmor %vm976, %vm1081
      %vm1114 = vmor %vm977, %vm1082
      %vm1115 = vmor %vm978, %vm1083
      %vm1116 = vmor %vm979, %vm1084
      %vm1117 = vmor %vm980, %vm1085
      %vm1118 = vmor %vm981, %vm1086
      %vm1119 = vmor %vm982, %vm1087
      %vm1120 = vmor %vm983, %vm1088
      %vm1121 = vmor %vm984, %vm1089
      %vm1122 = vmor %vm985, %vm1090
      %vm1123 = vmor %vm986, %vm1091
      %vm1124 = vmor %vm987, %vm1092
      %vm1125 = vmor %vm988, %vm1093
      %vm1126 = vmor %vm989, %vm1094
      %vm1127 = vmor %vm990, %vm1095
      %vm1128 = vmor %vm991, %vm1096
      %vm1129 = vmor %vm992, %vm1097
      %vm1130 = vmor %vm993, %vm1098
      %vm1131 = vmor %vm994, %vm1099
      %vm1132 = vmor %vm995, %vm1100
      %vm1133 = vmor %vm996, %vm1101
      %vm1134 = vmor %vm997, %vm1102
      %vm1135 = vmor %vm998, %vm1103
      %vm1136 = vmor %vm999, %vm1104
      %vm1137 = vmor %vm1000, %vm1105
      %vm1138 = vmor %vm1001, %vm1106
      %vm1139 = vmor %vm1002, %vm1107
      %v1140 = vsel %vm1108, 1e+30, %v866
      %v1141 = vsel %vm1109, 1e+30, %v867
      %v1142 = vsel %vm1110, 1e+30, %v868
      %v1143 = vsel %vm1111, 1e+30, %v869
      %v1144 = vsel %vm1112, 1e+30, %v870
      %v1145 = vsel %vm1113, 1e+30, %v871
      %v1146 = vsel %vm1114, 1e+30, %v872
      %v1147 = vsel %vm1115, 1e+30, %v873
      %v1148 = vsel %vm1116, 1e+30, %v874
      %v1149 = vsel %vm1117, 1e+30, %v875
      %v1150 = vsel %vm1118, 1e+30, %v876
      %v1151 = vsel %vm1119, 1e+30, %v877
      %v1152 = vsel %vm1120, 1e+30, %v878
      %v1153 = vsel %vm1121, 1e+30, %v879
      %v1154 = vsel %vm1122, 1e+30, %v880
      %v1155 = vsel %vm1123, 1e+30, %v881
      %v1156 = vsel %vm1124, 1e+30, %v882
      %v1157 = vsel %vm1125, 1e+30, %v883
      %v1158 = vsel %vm1126, 1e+30, %v884
      %v1159 = vsel %vm1127, 1e+30, %v885
      %v1160 = vsel %vm1128, 1e+30, %v886
      %v1161 = vsel %vm1129, 1e+30, %v887
      %v1162 = vsel %vm1130, 1e+30, %v888
      %v1163 = vsel %vm1131, 1e+30, %v889
      %v1164 = vsel %vm1132, 1e+30, %v890
      %v1165 = vsel %vm1133, 1e+30, %v891
      %v1166 = vsel %vm1134, 1e+30, %v892
      %v1167 = vsel %vm1135, 1e+30, %v893
      %v1168 = vsel %vm1136, 1e+30, %v894
      %v1169 = vsel %vm1137, 1e+30, %v895
      %v1170 = vsel %vm1138, 1e+30, %v896
      %v1171 = vsel %vm1139, 1e+30, %v897
      %v1172 = vld [vmem:[%s445] sm:$0xff]
      %v1173 = vld [vmem:[%s445 + $0x8] sm:$0xff]
      %v1174 = vld [vmem:[%s445 + $0x10] sm:$0xff]
      %v1175 = vld [vmem:[%s445 + $0x18] sm:$0xff]
      %v1176 = vld [vmem:[%s445 + $0x20] sm:$0xff]
      %v1177 = vld [vmem:[%s445 + $0x28] sm:$0xff]
      %v1178 = vld [vmem:[%s445 + $0x30] sm:$0xff]
      %v1179 = vld [vmem:[%s445 + $0x38] sm:$0xff]
      %v1180 = vld [vmem:[%s445 + $0x40] sm:$0xff]
      %v1181 = vld [vmem:[%s445 + $0x48] sm:$0xff]
      %v1182 = vld [vmem:[%s445 + $0x50] sm:$0xff]
      %v1183 = vld [vmem:[%s445 + $0x58] sm:$0xff]
      %v1184 = vld [vmem:[%s445 + $0x60] sm:$0xff]
      %v1185 = vld [vmem:[%s445 + $0x68] sm:$0xff]
      %v1186 = vld [vmem:[%s445 + $0x70] sm:$0xff]
      %v1187 = vld [vmem:[%s445 + $0x78] sm:$0xff]
      %v1188 = vld [vmem:[%s8] sm:$0xff]
      %v1189 = vld [vmem:[%s8 + $0x8] sm:$0xff]
      %v1190 = vld [vmem:[%s8 + $0x10] sm:$0x7]
      %vm1191 = vcmask 154624
      %v1193 = vsel %vm1191, %v1172, 0
      %v1196 = vsel %vm1191, %v1173, 0
      %v1199 = vsel %vm1191, %v1174, 0
      %v1202 = vsel %vm1191, %v1175, 0
      %v1205 = vsel %vm1191, %v1176, 0
      %v1208 = vsel %vm1191, %v1177, 0
      %v1211 = vsel %vm1191, %v1178, 0
      %v1214 = vsel %vm1191, %v1179, 0
      %v1217 = vsel %vm1191, %v1180, 0
      %v1220 = vsel %vm1191, %v1181, 0
      %v1223 = vsel %vm1191, %v1182, 0
      %v1226 = vsel %vm1191, %v1183, 0
      %v1229 = vsel %vm1191, %v1184, 0
      %v1232 = vsel %vm1191, %v1185, 0
      %v1235 = vsel %vm1191, %v1186, 0
      %v1238 = vsel %vm1191, %v1187, 0
      %vm1240 = vcmask 1042432
      %v1242 = vsel %vm1240, %v1190, 0
      %1244 = vmatprep.subr.mxu0 0.0
      %1245 = vmatpush1.msra.mxu0 0.0
      %1246 = vmatprep.subr.mxu0 0.0
      %1247 = vmatpush1.msra.mxu0 0.0
      %1248 = vmatprep.subr.mxu0 0.0
      %1249 = vmatpush1.msra.mxu0 0.0
      %1250 = vmatprep.subr.mxu0 0.0
      %1251 = vmatpush1.msra.mxu0 0.0
      %1252 = vmatprep.subr.mxu0 0.0
      %1253 = vmatpush1.msra.mxu0 0.0
      %1254 = vmatprep.subr.mxu0 0.0
      %1255 = vmatpush1.msra.mxu0 0.0
      %1256 = vmatprep.subr.mxu0 0.0
      %1257 = vmatpush1.msra.mxu0 0.0
      %1258 = vmatprep.subr.mxu0 0.0
      %1259 = vmatpush1.msra.mxu0 0.0
      %1260 = vmatprep.subr.mxu0 0.0
      %1261 = vmatpush1.msra.mxu0 0.0
      %1262 = vmatprep.subr.mxu0 0.0
      %1263 = vmatpush1.msra.mxu0 0.0
      %1264 = vmatprep.subr.mxu0 0.0
      %1265 = vmatpush1.msra.mxu0 0.0
      %1266 = vmatprep.subr.mxu0 0.0
      %1267 = vmatpush1.msra.mxu0 0.0
      %1268 = vmatprep.subr.mxu0 0.0
      %1269 = vmatpush1.msra.mxu0 0.0
      %1270 = vmatprep.subr.mxu0 0.0
      %1271 = vmatpush1.msra.mxu0 %v1242
      %1272 = vmatprep.subr.mxu0 0.0
      %1273 = vmatpush1.msra.mxu0 %v1189
      %1274 = vmatprep.subr.mxu0 0.0
      %1275 = vmatpush1.msra.mxu0 %v1188
      %1276 = vmatprep.subr.mxu0 0.0
      %1277 = vmatpush2.msra.mxu0 0.0
      %1278 = vmatprep.subr.mxu0 0.0
      %1279 = vmatpush2.msra.mxu0 0.0
      %1280 = vmatprep.subr.mxu0 0.0
      %1281 = vmatpush2.msra.mxu0 0.0
      %1282 = vmatprep.subr.mxu0 0.0
      %1283 = vmatpush2.msra.mxu0 0.0
      %1284 = vmatprep.subr.mxu0 0.0
      %1285 = vmatpush2.msra.mxu0 0.0
      %1286 = vmatprep.subr.mxu0 0.0
      %1287 = vmatpush2.msra.mxu0 0.0
      %1288 = vmatprep.subr.mxu0 0.0
      %1289 = vmatpush2.msra.mxu0 0.0
      %1290 = vmatprep.subr.mxu0 0.0
      %1291 = vmatpush2.msra.mxu0 0.0
      %1292 = vmatprep.subr.mxu0 0.0
      %1293 = vmatpush2.msra.mxu0 0.0
      %1294 = vmatprep.subr.mxu0 0.0
      %1295 = vmatpush2.msra.mxu0 0.0
      %1296 = vmatprep.subr.mxu0 0.0
      %1297 = vmatpush2.msra.mxu0 0.0
      %1298 = vmatprep.subr.mxu0 0.0
      %1299 = vmatpush2.msra.mxu0 0.0
      %1300 = vmatprep.subr.mxu0 0.0
      %1301 = vmatpush2.msra.mxu0 0.0
      %1302 = vmatprep.subr.mxu0 0.0
      %1303 = vmatpush2.msra.mxu0 0.0
      %1304 = vmatprep.subr.mxu0 0.0
      %1305 = vmatpush2.msra.mxu0 0.0
      %1306 = vmatprep.subr.mxu0 0.0
      %1307 = vmatpush2.msra.mxu0 0.0
      %1308 = vmatprep.mubr.f32.mxu0 0.0
      %1309 = vmatmul.mubr.f32.gmra.mxu0 %v1193
      %v1310 = vpop.f32.mrf.mxu0
      %v1311 = vadd.f32 0.0, %v1310
      %v1312 = vpop.f32.mrf.mxu0
      %1313 = vmatprep.mubr.f32.mxu0 0.0
      %1314 = vmatmul.mubr.f32.gmra.mxu0 %v1196
      %v1315 = vpop.f32.mrf.mxu0
      %v1316 = vadd.f32 0.0, %v1315
      %v1317 = vpop.f32.mrf.mxu0
      %1318 = vmatprep.mubr.f32.mxu0 0.0
      %1319 = vmatmul.mubr.f32.gmra.mxu0 %v1199
      %v1320 = vpop.f32.mrf.mxu0
      %v1321 = vadd.f32 0.0, %v1320
      %v1322 = vpop.f32.mrf.mxu0
      %1323 = vmatprep.mubr.f32.mxu0 0.0
      %1324 = vmatmul.mubr.f32.gmra.mxu0 %v1202
      %v1325 = vpop.f32.mrf.mxu0
      %v1326 = vadd.f32 0.0, %v1325
      %v1327 = vpop.f32.mrf.mxu0
      %1328 = vmatprep.mubr.f32.mxu0 0.0
      %1329 = vmatmul.mubr.f32.gmra.mxu0 %v1205
      %v1330 = vpop.f32.mrf.mxu0
      %v1331 = vadd.f32 0.0, %v1330
      %v1332 = vpop.f32.mrf.mxu0
      %1333 = vmatprep.mubr.f32.mxu0 0.0
      %1334 = vmatmul.mubr.f32.gmra.mxu0 %v1208
      %v1335 = vpop.f32.mrf.mxu0
      %v1336 = vadd.f32 0.0, %v1335
      %v1337 = vpop.f32.mrf.mxu0
      %1338 = vmatprep.mubr.f32.mxu0 0.0
      %1339 = vmatmul.mubr.f32.gmra.mxu0 %v1211
      %v1340 = vpop.f32.mrf.mxu0
      %v1341 = vadd.f32 0.0, %v1340
      %v1342 = vpop.f32.mrf.mxu0
      %1343 = vmatprep.mubr.f32.mxu0 0.0
      %1344 = vmatmul.mubr.f32.gmra.mxu0 %v1214
      %v1345 = vpop.f32.mrf.mxu0
      %v1346 = vadd.f32 0.0, %v1345
      %v1347 = vpop.f32.mrf.mxu0
      %1348 = vmatprep.mubr.f32.mxu0 0.0
      %1349 = vmatmul.mubr.f32.gmra.mxu0 %v1217
      %v1350 = vpop.f32.mrf.mxu0
      %v1351 = vadd.f32 0.0, %v1350
      %v1352 = vpop.f32.mrf.mxu0
      %1353 = vmatprep.mubr.f32.mxu0 0.0
      %1354 = vmatmul.mubr.f32.gmra.mxu0 %v1220
      %v1355 = vpop.f32.mrf.mxu0
      %v1356 = vadd.f32 0.0, %v1355
      %v1357 = vpop.f32.mrf.mxu0
      %1358 = vmatprep.mubr.f32.mxu0 0.0
      %1359 = vmatmul.mubr.f32.gmra.mxu0 %v1223
      %v1360 = vpop.f32.mrf.mxu0
      %v1361 = vadd.f32 0.0, %v1360
      %v1362 = vpop.f32.mrf.mxu0
      %1363 = vmatprep.mubr.f32.mxu0 0.0
      %1364 = vmatmul.mubr.f32.gmra.mxu0 %v1226
      %v1365 = vpop.f32.mrf.mxu0
      %v1366 = vadd.f32 0.0, %v1365
      %v1367 = vpop.f32.mrf.mxu0
      %1368 = vmatprep.mubr.f32.mxu0 0.0
      %1369 = vmatmul.mubr.f32.gmra.mxu0 %v1229
      %v1370 = vpop.f32.mrf.mxu0
      %v1371 = vadd.f32 0.0, %v1370
      %v1372 = vpop.f32.mrf.mxu0
      %1373 = vmatprep.mubr.f32.mxu0 0.0
      %1374 = vmatmul.mubr.f32.gmra.mxu0 %v1232
      %v1375 = vpop.f32.mrf.mxu0
      %v1376 = vadd.f32 0.0, %v1375
      %v1377 = vpop.f32.mrf.mxu0
      %1378 = vmatprep.mubr.f32.mxu0 0.0
      %1379 = vmatmul.mubr.f32.gmra.mxu0 %v1235
      %v1380 = vpop.f32.mrf.mxu0
      %v1381 = vadd.f32 0.0, %v1380
      %v1382 = vpop.f32.mrf.mxu0
      %1383 = vmatprep.mubr.f32.mxu0 0.0
      %1384 = vmatmul.mubr.f32.gmra.mxu0 %v1238
      %v1385 = vpop.f32.mrf.mxu0
      %v1386 = vadd.f32 0.0, %v1385
      %v1387 = vpop.f32.mrf.mxu0
      %1388 = vdwg.mxu0
      %v1389 = vld [vmem:[%s7] sm:$0xff]
      %v1390 = vld [vmem:[%s7 + $0x8] sm:$0xff]
      %v1391 = vld [vmem:[%s7 + $0x10] sm:$0xff]
      %v1392 = vld [vmem:[%s7 + $0x18] sm:$0xff]
      %v1393 = vld [vmem:[%s7 + $0x20] sm:$0xff]
      %v1394 = vld [vmem:[%s7 + $0x28] sm:$0xff]
      %v1395 = vld [vmem:[%s7 + $0x30] sm:$0xff]
      %v1396 = vld [vmem:[%s7 + $0x38] sm:$0xff]
      %v1397 = vld [vmem:[%s7 + $0x40] sm:$0xff]
      %v1398 = vld [vmem:[%s7 + $0x48] sm:$0xff]
      %v1399 = vld [vmem:[%s7 + $0x50] sm:$0xff]
      %v1400 = vld [vmem:[%s7 + $0x58] sm:$0xff]
      %v1401 = vld [vmem:[%s7 + $0x60] sm:$0xff]
      %v1402 = vld [vmem:[%s7 + $0x68] sm:$0xff]
      %v1403 = vld [vmem:[%s7 + $0x70] sm:$0xff]
      %v1404 = vld [vmem:[%s7 + $0x78] sm:$0xff]
      %v1405 = vld [vmem:[%s7 + $0x80] sm:$0xff]
      %v1406 = vld [vmem:[%s7 + $0x88] sm:$0xff]
      %v1407 = vld [vmem:[%s7 + $0x90] sm:$0xff]
      %v1408 = vld [vmem:[%s7 + $0x98] sm:$0xff]
      %v1409 = vld [vmem:[%s7 + $0xa0] sm:$0xff]
      %v1410 = vld [vmem:[%s7 + $0xa8] sm:$0xff]
      %v1411 = vld [vmem:[%s7 + $0xb0] sm:$0xff]
      %v1412 = vld [vmem:[%s7 + $0xb8] sm:$0xff]
      %v1413 = vld [vmem:[%s7 + $0xc0] sm:$0xff]
      %v1414 = vld [vmem:[%s7 + $0xc8] sm:$0xff]
      %v1415 = vld [vmem:[%s7 + $0xd0] sm:$0xff]
      %v1416 = vld [vmem:[%s7 + $0xd8] sm:$0xff]
      %v1417 = vld [vmem:[%s7 + $0xe0] sm:$0xff]
      %v1418 = vld [vmem:[%s7 + $0xe8] sm:$0xff]
      %v1419 = vld [vmem:[%s7 + $0xf0] sm:$0xff]
      %v1420 = vld [vmem:[%s7 + $0xf8] sm:$0xff]
      %v1421 = vld [vmem:[#allocation4] sm:$0x1]
      %v1422 = vmin.f32 %v1140, %v1141
      %1423 = vmin.xlane.f32.xlu0 %v1422
      %v1424 = vpop.xlane.xlu0 %1423
      %v1425 = vmin.f32 %v1142, %v1143
      %1426 = vmin.xlane.f32.xlu0 %v1425
      %v1427 = vpop.xlane.xlu0 %1426
      %v1428 = vmin.f32 %v1144, %v1145
      %1429 = vmin.xlane.f32.xlu0 %v1428
      %v1430 = vpop.xlane.xlu0 %1429
      %v1431 = vmin.f32 %v1146, %v1147
      %1432 = vmin.xlane.f32.xlu0 %v1431
      %v1433 = vpop.xlane.xlu0 %1432
      %v1434 = vmin.f32 %v1148, %v1149
      %1435 = vmin.xlane.f32.xlu0 %v1434
      %v1436 = vpop.xlane.xlu0 %1435
      %v1437 = vmin.f32 %v1150, %v1151
      %1438 = vmin.xlane.f32.xlu0 %v1437
      %v1439 = vpop.xlane.xlu0 %1438
      %v1440 = vmin.f32 %v1152, %v1153
      %1441 = vmin.xlane.f32.xlu0 %v1440
      %v1442 = vpop.xlane.xlu0 %1441
      %v1443 = vmin.f32 %v1154, %v1155
      %1444 = vmin.xlane.f32.xlu0 %v1443
      %v1445 = vpop.xlane.xlu0 %1444
      %v1446 = vmin.f32 %v1156, %v1157
      %1447 = vmin.xlane.f32.xlu0 %v1446
      %v1448 = vpop.xlane.xlu0 %1447
      %v1449 = vmin.f32 %v1158, %v1159
      %1450 = vmin.xlane.f32.xlu0 %v1449
      %v1451 = vpop.xlane.xlu0 %1450
      %v1452 = vmin.f32 %v1160, %v1161
      %1453 = vmin.xlane.f32.xlu0 %v1452
      %v1454 = vpop.xlane.xlu0 %1453
      %v1455 = vmin.f32 %v1162, %v1163
      %1456 = vmin.xlane.f32.xlu0 %v1455
      %v1457 = vpop.xlane.xlu0 %1456
      %v1458 = vmin.f32 %v1164, %v1165
      %1459 = vmin.xlane.f32.xlu0 %v1458
      %v1460 = vpop.xlane.xlu0 %1459
      %v1461 = vmin.f32 %v1166, %v1167
      %1462 = vmin.xlane.f32.xlu0 %v1461
      %v1463 = vpop.xlane.xlu0 %1462
      %v1464 = vmin.f32 %v1168, %v1169
      %1465 = vmin.xlane.f32.xlu0 %v1464
      %v1466 = vpop.xlane.xlu0 %1465
      %v1467 = vmin.f32 %v1170, %v1171
      %1468 = vmin.xlane.f32.xlu0 %v1467
      %v1469 = vpop.xlane.xlu0 %1468
      %vm1470 = vcmp.lt.f32.partialorder %v1424, 1e+30
      %vm1471 = vcmp.lt.f32.partialorder %v1427, 1e+30
      %vm1472 = vcmp.lt.f32.partialorder %v1430, 1e+30
      %vm1473 = vcmp.lt.f32.partialorder %v1433, 1e+30
      %vm1474 = vcmp.lt.f32.partialorder %v1436, 1e+30
      %vm1475 = vcmp.lt.f32.partialorder %v1439, 1e+30
      %vm1476 = vcmp.lt.f32.partialorder %v1442, 1e+30
      %vm1477 = vcmp.lt.f32.partialorder %v1445, 1e+30
      %vm1478 = vcmp.lt.f32.partialorder %v1448, 1e+30
      %vm1479 = vcmp.lt.f32.partialorder %v1451, 1e+30
      %vm1480 = vcmp.lt.f32.partialorder %v1454, 1e+30
      %vm1481 = vcmp.lt.f32.partialorder %v1457, 1e+30
      %vm1482 = vcmp.lt.f32.partialorder %v1460, 1e+30
      %vm1483 = vcmp.lt.f32.partialorder %v1463, 1e+30
      %vm1484 = vcmp.lt.f32.partialorder %v1466, 1e+30
      %vm1485 = vcmp.lt.f32.partialorder %v1469, 1e+30
      %vm1486 = vcmp.eq.f32.partialorder %v1140, %v1424
      %vm1487 = vcmp.eq.f32.partialorder %v1141, %v1424
      %vm1488 = vcmp.eq.f32.partialorder %v1142, %v1427
      %vm1489 = vcmp.eq.f32.partialorder %v1143, %v1427
      %vm1490 = vcmp.eq.f32.partialorder %v1144, %v1430
      %vm1491 = vcmp.eq.f32.partialorder %v1145, %v1430
      %vm1492 = vcmp.eq.f32.partialorder %v1146, %v1433
      %vm1493 = vcmp.eq.f32.partialorder %v1147, %v1433
      %vm1494 = vcmp.eq.f32.partialorder %v1148, %v1436
      %vm1495 = vcmp.eq.f32.partialorder %v1149, %v1436
      %vm1496 = vcmp.eq.f32.partialorder %v1150, %v1439
      %vm1497 = vcmp.eq.f32.partialorder %v1151, %v1439
      %vm1498 = vcmp.eq.f32.partialorder %v1152, %v1442
      %vm1499 = vcmp.eq.f32.partialorder %v1153, %v1442
      %vm1500 = vcmp.eq.f32.partialorder %v1154, %v1445
      %vm1501 = vcmp.eq.f32.partialorder %v1155, %v1445
      %vm1502 = vcmp.eq.f32.partialorder %v1156, %v1448
      %vm1503 = vcmp.eq.f32.partialorder %v1157, %v1448
      %vm1504 = vcmp.eq.f32.partialorder %v1158, %v1451
      %vm1505 = vcmp.eq.f32.partialorder %v1159, %v1451
      %vm1506 = vcmp.eq.f32.partialorder %v1160, %v1454
      %vm1507 = vcmp.eq.f32.partialorder %v1161, %v1454
      %vm1508 = vcmp.eq.f32.partialorder %v1162, %v1457
      %vm1509 = vcmp.eq.f32.partialorder %v1163, %v1457
      %vm1510 = vcmp.eq.f32.partialorder %v1164, %v1460
      %vm1511 = vcmp.eq.f32.partialorder %v1165, %v1460
      %vm1512 = vcmp.eq.f32.partialorder %v1166, %v1463
      %vm1513 = vcmp.eq.f32.partialorder %v1167, %v1463
      %vm1514 = vcmp.eq.f32.partialorder %v1168, %v1466
      %vm1515 = vcmp.eq.f32.partialorder %v1169, %v1466
      %vm1516 = vcmp.eq.f32.partialorder %v1170, %v1469
      %vm1517 = vcmp.eq.f32.partialorder %v1171, %v1469
      %v1518 = vsel %vm1486, %v899, 256
      %v1519 = vsel %vm1487, %v900, 256
      %v1520 = vsel %vm1488, %v899, 256
      %v1521 = vsel %vm1489, %v900, 256
      %v1522 = vsel %vm1490, %v899, 256
      %v1523 = vsel %vm1491, %v900, 256
      %v1524 = vsel %vm1492, %v899, 256
      %v1525 = vsel %vm1493, %v900, 256
      %v1526 = vsel %vm1494, %v899, 256
      %v1527 = vsel %vm1495, %v900, 256
      %v1528 = vsel %vm1496, %v899, 256
      %v1529 = vsel %vm1497, %v900, 256
      %v1530 = vsel %vm1498, %v899, 256
      %v1531 = vsel %vm1499, %v900, 256
      %v1532 = vsel %vm1500, %v899, 256
      %v1533 = vsel %vm1501, %v900, 256
      %v1534 = vsel %vm1502, %v899, 256
      %v1535 = vsel %vm1503, %v900, 256
      %v1536 = vsel %vm1504, %v899, 256
      %v1537 = vsel %vm1505, %v900, 256
      %v1538 = vsel %vm1506, %v899, 256
      %v1539 = vsel %vm1507, %v900, 256
      %v1540 = vsel %vm1508, %v899, 256
      %v1541 = vsel %vm1509, %v900, 256
      %v1542 = vsel %vm1510, %v899, 256
      %v1543 = vsel %vm1511, %v900, 256
      %v1544 = vsel %vm1512, %v899, 256
      %v1545 = vsel %vm1513, %v900, 256
      %v1546 = vsel %vm1514, %v899, 256
      %v1547 = vsel %vm1515, %v900, 256
      %v1548 = vsel %vm1516, %v899, 256
      %v1549 = vsel %vm1517, %v900, 256
      %vm1550 = vcmp.lt.s32.totalorder %v1518, %v1519
      %v1551 = vsel %vm1550, %v1518, %v1519
      %v1552 = vand.u32 %v1551, 65535
      %v1553 = vshra.s32 %v1551, 16
      %v1554 = vcvt.s32.f32 %v1552
      %v1555 = vcvt.s32.f32 %v1553
      %1556 = vmin.xlane.f32.xlu0 %v1555
      %v1557 = vpop.xlane.xlu0 %1556
      %vm1558 = vcmp.eq.f32.partialorder %v1555, %v1557
      %v1559 = vsel %vm1558, %v1554, inf
      %1560 = vmin.xlane.f32.xlu0 %v1559
      %v1561 = vpop.xlane.xlu0 %1560
      %v1562 = vcvt.f32.s32 %v1561
      %v1563 = vcvt.f32.s32 %v1557
      %v1564 = vshll.u32 %v1563, 16
      %v1565 = vadd.s32 %v1564, %v1562
      %vm1566 = vcmp.lt.s32.totalorder %v1520, %v1521
      %v1567 = vsel %vm1566, %v1520, %v1521
      %v1568 = vand.u32 %v1567, 65535
      %v1569 = vshra.s32 %v1567, 16
      %v1570 = vcvt.s32.f32 %v1568
      %v1571 = vcvt.s32.f32 %v1569
      %1572 = vmin.xlane.f32.xlu0 %v1571
      %v1573 = vpop.xlane.xlu0 %1572
      %vm1574 = vcmp.eq.f32.partialorder %v1571, %v1573
      %v1575 = vsel %vm1574, %v1570, inf
      %1576 = vmin.xlane.f32.xlu0 %v1575
      %v1577 = vpop.xlane.xlu0 %1576
      %v1578 = vcvt.f32.s32 %v1577
      %v1579 = vcvt.f32.s32 %v1573
      %v1580 = vshll.u32 %v1579, 16
      %v1581 = vadd.s32 %v1580, %v1578
      %vm1582 = vcmp.lt.s32.totalorder %v1522, %v1523
      %v1583 = vsel %vm1582, %v1522, %v1523
      %v1584 = vand.u32 %v1583, 65535
      %v1585 = vshra.s32 %v1583, 16
      %v1586 = vcvt.s32.f32 %v1584
      %v1587 = vcvt.s32.f32 %v1585
      %1588 = vmin.xlane.f32.xlu0 %v1587
      %v1589 = vpop.xlane.xlu0 %1588
      %vm1590 = vcmp.eq.f32.partialorder %v1587, %v1589
      %v1591 = vsel %vm1590, %v1586, inf
      %1592 = vmin.xlane.f32.xlu0 %v1591
      %v1593 = vpop.xlane.xlu0 %1592
      %v1594 = vcvt.f32.s32 %v1593
      %v1595 = vcvt.f32.s32 %v1589
      %v1596 = vshll.u32 %v1595, 16
      %v1597 = vadd.s32 %v1596, %v1594
      %vm1598 = vcmp.lt.s32.totalorder %v1524, %v1525
      %v1599 = vsel %vm1598, %v1524, %v1525
      %v1600 = vand.u32 %v1599, 65535
      %v1601 = vshra.s32 %v1599, 16
      %v1602 = vcvt.s32.f32 %v1600
      %v1603 = vcvt.s32.f32 %v1601
      %1604 = vmin.xlane.f32.xlu0 %v1603
      %v1605 = vpop.xlane.xlu0 %1604
      %vm1606 = vcmp.eq.f32.partialorder %v1603, %v1605
      %v1607 = vsel %vm1606, %v1602, inf
      %1608 = vmin.xlane.f32.xlu0 %v1607
      %v1609 = vpop.xlane.xlu0 %1608
      %v1610 = vcvt.f32.s32 %v1609
      %v1611 = vcvt.f32.s32 %v1605
      %v1612 = vshll.u32 %v1611, 16
      %v1613 = vadd.s32 %v1612, %v1610
      %vm1614 = vcmp.lt.s32.totalorder %v1526, %v1527
      %v1615 = vsel %vm1614, %v1526, %v1527
      %v1616 = vand.u32 %v1615, 65535
      %v1617 = vshra.s32 %v1615, 16
      %v1618 = vcvt.s32.f32 %v1616
      %v1619 = vcvt.s32.f32 %v1617
      %1620 = vmin.xlane.f32.xlu0 %v1619
      %v1621 = vpop.xlane.xlu0 %1620
      %vm1622 = vcmp.eq.f32.partialorder %v1619, %v1621
      %v1623 = vsel %vm1622, %v1618, inf
      %1624 = vmin.xlane.f32.xlu0 %v1623
      %v1625 = vpop.xlane.xlu0 %1624
      %v1626 = vcvt.f32.s32 %v1625
      %v1627 = vcvt.f32.s32 %v1621
      %v1628 = vshll.u32 %v1627, 16
      %v1629 = vadd.s32 %v1628, %v1626
      %vm1630 = vcmp.lt.s32.totalorder %v1528, %v1529
      %v1631 = vsel %vm1630, %v1528, %v1529
      %v1632 = vand.u32 %v1631, 65535
      %v1633 = vshra.s32 %v1631, 16
      %v1634 = vcvt.s32.f32 %v1632
      %v1635 = vcvt.s32.f32 %v1633
      %1636 = vmin.xlane.f32.xlu0 %v1635
      %v1637 = vpop.xlane.xlu0 %1636
      %vm1638 = vcmp.eq.f32.partialorder %v1635, %v1637
      %v1639 = vsel %vm1638, %v1634, inf
      %1640 = vmin.xlane.f32.xlu0 %v1639
      %v1641 = vpop.xlane.xlu0 %1640
      %v1642 = vcvt.f32.s32 %v1641
      %v1643 = vcvt.f32.s32 %v1637
      %v1644 = vshll.u32 %v1643, 16
      %v1645 = vadd.s32 %v1644, %v1642
      %vm1646 = vcmp.lt.s32.totalorder %v1530, %v1531
      %v1647 = vsel %vm1646, %v1530, %v1531
      %v1648 = vand.u32 %v1647, 65535
      %v1649 = vshra.s32 %v1647, 16
      %v1650 = vcvt.s32.f32 %v1648
      %v1651 = vcvt.s32.f32 %v1649
      %1652 = vmin.xlane.f32.xlu0 %v1651
      %v1653 = vpop.xlane.xlu0 %1652
      %vm1654 = vcmp.eq.f32.partialorder %v1651, %v1653
      %v1655 = vsel %vm1654, %v1650, inf
      %1656 = vmin.xlane.f32.xlu0 %v1655
      %v1657 = vpop.xlane.xlu0 %1656
      %v1658 = vcvt.f32.s32 %v1657
      %v1659 = vcvt.f32.s32 %v1653
      %v1660 = vshll.u32 %v1659, 16
      %v1661 = vadd.s32 %v1660, %v1658
      %vm1662 = vcmp.lt.s32.totalorder %v1532, %v1533
      %v1663 = vsel %vm1662, %v1532, %v1533
      %v1664 = vand.u32 %v1663, 65535
      %v1665 = vshra.s32 %v1663, 16
      %v1666 = vcvt.s32.f32 %v1664
      %v1667 = vcvt.s32.f32 %v1665
      %1668 = vmin.xlane.f32.xlu0 %v1667
      %v1669 = vpop.xlane.xlu0 %1668
      %vm1670 = vcmp.eq.f32.partialorder %v1667, %v1669
      %v1671 = vsel %vm1670, %v1666, inf
      %1672 = vmin.xlane.f32.xlu0 %v1671
      %v1673 = vpop.xlane.xlu0 %1672
      %v1674 = vcvt.f32.s32 %v1673
      %v1675 = vcvt.f32.s32 %v1669
      %v1676 = vshll.u32 %v1675, 16
      %v1677 = vadd.s32 %v1676, %v1674
      %vm1678 = vcmp.lt.s32.totalorder %v1534, %v1535
      %v1679 = vsel %vm1678, %v1534, %v1535
      %v1680 = vand.u32 %v1679, 65535
      %v1681 = vshra.s32 %v1679, 16
      %v1682 = vcvt.s32.f32 %v1680
      %v1683 = vcvt.s32.f32 %v1681
      %1684 = vmin.xlane.f32.xlu0 %v1683
      %v1685 = vpop.xlane.xlu0 %1684
      %vm1686 = vcmp.eq.f32.partialorder %v1683, %v1685
      %v1687 = vsel %vm1686, %v1682, inf
      %1688 = vmin.xlane.f32.xlu0 %v1687
      %v1689 = vpop.xlane.xlu0 %1688
      %v1690 = vcvt.f32.s32 %v1689
      %v1691 = vcvt.f32.s32 %v1685
      %v1692 = vshll.u32 %v1691, 16
      %v1693 = vadd.s32 %v1692, %v1690
      %vm1694 = vcmp.lt.s32.totalorder %v1536, %v1537
      %v1695 = vsel %vm1694, %v1536, %v1537
      %v1696 = vand.u32 %v1695, 65535
      %v1697 = vshra.s32 %v1695, 16
      %v1698 = vcvt.s32.f32 %v1696
      %v1699 = vcvt.s32.f32 %v1697
      %1700 = vmin.xlane.f32.xlu0 %v1699
      %v1701 = vpop.xlane.xlu0 %1700
      %vm1702 = vcmp.eq.f32.partialorder %v1699, %v1701
      %v1703 = vsel %vm1702, %v1698, inf
      %1704 = vmin.xlane.f32.xlu0 %v1703
      %v1705 = vpop.xlane.xlu0 %1704
      %v1706 = vcvt.f32.s32 %v1705
      %v1707 = vcvt.f32.s32 %v1701
      %v1708 = vshll.u32 %v1707, 16
      %v1709 = vadd.s32 %v1708, %v1706
      %vm1710 = vcmp.lt.s32.totalorder %v1538, %v1539
      %v1711 = vsel %vm1710, %v1538, %v1539
      %v1712 = vand.u32 %v1711, 65535
      %v1713 = vshra.s32 %v1711, 16
      %v1714 = vcvt.s32.f32 %v1712
      %v1715 = vcvt.s32.f32 %v1713
      %1716 = vmin.xlane.f32.xlu0 %v1715
      %v1717 = vpop.xlane.xlu0 %1716
      %vm1718 = vcmp.eq.f32.partialorder %v1715, %v1717
      %v1719 = vsel %vm1718, %v1714, inf
      %1720 = vmin.xlane.f32.xlu0 %v1719
      %v1721 = vpop.xlane.xlu0 %1720
      %v1722 = vcvt.f32.s32 %v1721
      %v1723 = vcvt.f32.s32 %v1717
      %v1724 = vshll.u32 %v1723, 16
      %v1725 = vadd.s32 %v1724, %v1722
      %vm1726 = vcmp.lt.s32.totalorder %v1540, %v1541
      %v1727 = vsel %vm1726, %v1540, %v1541
      %v1728 = vand.u32 %v1727, 65535
      %v1729 = vshra.s32 %v1727, 16
      %v1730 = vcvt.s32.f32 %v1728
      %v1731 = vcvt.s32.f32 %v1729
      %1732 = vmin.xlane.f32.xlu0 %v1731
      %v1733 = vpop.xlane.xlu0 %1732
      %vm1734 = vcmp.eq.f32.partialorder %v1731, %v1733
      %v1735 = vsel %vm1734, %v1730, inf
      %1736 = vmin.xlane.f32.xlu0 %v1735
      %v1737 = vpop.xlane.xlu0 %1736
      %v1738 = vcvt.f32.s32 %v1737
      %v1739 = vcvt.f32.s32 %v1733
      %v1740 = vshll.u32 %v1739, 16
      %v1741 = vadd.s32 %v1740, %v1738
      %vm1742 = vcmp.lt.s32.totalorder %v1542, %v1543
      %v1743 = vsel %vm1742, %v1542, %v1543
      %v1744 = vand.u32 %v1743, 65535
      %v1745 = vshra.s32 %v1743, 16
      %v1746 = vcvt.s32.f32 %v1744
      %v1747 = vcvt.s32.f32 %v1745
      %1748 = vmin.xlane.f32.xlu0 %v1747
      %v1749 = vpop.xlane.xlu0 %1748
      %vm1750 = vcmp.eq.f32.partialorder %v1747, %v1749
      %v1751 = vsel %vm1750, %v1746, inf
      %1752 = vmin.xlane.f32.xlu0 %v1751
      %v1753 = vpop.xlane.xlu0 %1752
      %v1754 = vcvt.f32.s32 %v1753
      %v1755 = vcvt.f32.s32 %v1749
      %v1756 = vshll.u32 %v1755, 16
      %v1757 = vadd.s32 %v1756, %v1754
      %vm1758 = vcmp.lt.s32.totalorder %v1544, %v1545
      %v1759 = vsel %vm1758, %v1544, %v1545
      %v1760 = vand.u32 %v1759, 65535
      %v1761 = vshra.s32 %v1759, 16
      %v1762 = vcvt.s32.f32 %v1760
      %v1763 = vcvt.s32.f32 %v1761
      %1764 = vmin.xlane.f32.xlu0 %v1763
      %v1765 = vpop.xlane.xlu0 %1764
      %vm1766 = vcmp.eq.f32.partialorder %v1763, %v1765
      %v1767 = vsel %vm1766, %v1762, inf
      %1768 = vmin.xlane.f32.xlu0 %v1767
      %v1769 = vpop.xlane.xlu0 %1768
      %v1770 = vcvt.f32.s32 %v1769
      %v1771 = vcvt.f32.s32 %v1765
      %v1772 = vshll.u32 %v1771, 16
      %v1773 = vadd.s32 %v1772, %v1770
      %vm1774 = vcmp.lt.s32.totalorder %v1546, %v1547
      %v1775 = vsel %vm1774, %v1546, %v1547
      %v1776 = vand.u32 %v1775, 65535
      %v1777 = vshra.s32 %v1775, 16
      %v1778 = vcvt.s32.f32 %v1776
      %v1779 = vcvt.s32.f32 %v1777
      %1780 = vmin.xlane.f32.xlu0 %v1779
      %v1781 = vpop.xlane.xlu0 %1780
      %vm1782 = vcmp.eq.f32.partialorder %v1779, %v1781
      %v1783 = vsel %vm1782, %v1778, inf
      %1784 = vmin.xlane.f32.xlu0 %v1783
      %v1785 = vpop.xlane.xlu0 %1784
      %v1786 = vcvt.f32.s32 %v1785
      %v1787 = vcvt.f32.s32 %v1781
      %v1788 = vshll.u32 %v1787, 16
      %v1789 = vadd.s32 %v1788, %v1786
      %vm1790 = vcmp.lt.s32.totalorder %v1548, %v1549
      %v1791 = vsel %vm1790, %v1548, %v1549
      %v1792 = vand.u32 %v1791, 65535
      %v1793 = vshra.s32 %v1791, 16
      %v1794 = vcvt.s32.f32 %v1792
      %v1795 = vcvt.s32.f32 %v1793
      %1796 = vmin.xlane.f32.xlu0 %v1795
      %v1797 = vpop.xlane.xlu0 %1796
      %vm1798 = vcmp.eq.f32.partialorder %v1795, %v1797
      %v1799 = vsel %vm1798, %v1794, inf
      %1800 = vmin.xlane.f32.xlu0 %v1799
      %v1801 = vpop.xlane.xlu0 %1800
      %v1802 = vcvt.f32.s32 %v1801
      %v1803 = vcvt.f32.s32 %v1797
      %v1804 = vshll.u32 %v1803, 16
      %v1805 = vadd.s32 %v1804, %v1802
      %vm1806 = vcmp.eq.s32.totalorder %v899, %v1565
      %vm1807 = vcmp.eq.s32.totalorder %v900, %v1565
      %vm1808 = vcmp.eq.s32.totalorder %v899, %v1581
      %vm1809 = vcmp.eq.s32.totalorder %v900, %v1581
      %vm1810 = vcmp.eq.s32.totalorder %v899, %v1597
      %vm1811 = vcmp.eq.s32.totalorder %v900, %v1597
      %vm1812 = vcmp.eq.s32.totalorder %v899, %v1613
      %vm1813 = vcmp.eq.s32.totalorder %v900, %v1613
      %vm1814 = vcmp.eq.s32.totalorder %v899, %v1629
      %vm1815 = vcmp.eq.s32.totalorder %v900, %v1629
      %vm1816 = vcmp.eq.s32.totalorder %v899, %v1645
      %vm1817 = vcmp.eq.s32.totalorder %v900, %v1645
      %vm1818 = vcmp.eq.s32.totalorder %v899, %v1661
      %vm1819 = vcmp.eq.s32.totalorder %v900, %v1661
      %vm1820 = vcmp.eq.s32.totalorder %v899, %v1677
      %vm1821 = vcmp.eq.s32.totalorder %v900, %v1677
      %vm1822 = vcmp.eq.s32.totalorder %v899, %v1693
      %vm1823 = vcmp.eq.s32.totalorder %v900, %v1693
      %vm1824 = vcmp.eq.s32.totalorder %v899, %v1709
      %vm1825 = vcmp.eq.s32.totalorder %v900, %v1709
      %vm1826 = vcmp.eq.s32.totalorder %v899, %v1725
      %vm1827 = vcmp.eq.s32.totalorder %v900, %v1725
      %vm1828 = vcmp.eq.s32.totalorder %v899, %v1741
      %vm1829 = vcmp.eq.s32.totalorder %v900, %v1741
      %vm1830 = vcmp.eq.s32.totalorder %v899, %v1757
      %vm1831 = vcmp.eq.s32.totalorder %v900, %v1757
      %vm1832 = vcmp.eq.s32.totalorder %v899, %v1773
      %vm1833 = vcmp.eq.s32.totalorder %v900, %v1773
      %vm1834 = vcmp.eq.s32.totalorder %v899, %v1789
      %vm1835 = vcmp.eq.s32.totalorder %v900, %v1789
      %vm1836 = vcmp.eq.s32.totalorder %v899, %v1805
      %vm1837 = vcmp.eq.s32.totalorder %v900, %v1805
      %v1838 = vsel %vm1806, 1, 0
      %v1839 = vsel %vm1807, 1, 0
      %v1840 = vsel %vm1808, 1, 0
      %v1841 = vsel %vm1809, 1, 0
      %v1842 = vsel %vm1810, 1, 0
      %v1843 = vsel %vm1811, 1, 0
      %v1844 = vsel %vm1812, 1, 0
      %v1845 = vsel %vm1813, 1, 0
      %v1846 = vsel %vm1814, 1, 0
      %v1847 = vsel %vm1815, 1, 0
      %v1848 = vsel %vm1816, 1, 0
      %v1849 = vsel %vm1817, 1, 0
      %v1850 = vsel %vm1818, 1, 0
      %v1851 = vsel %vm1819, 1, 0
      %v1852 = vsel %vm1820, 1, 0
      %v1853 = vsel %vm1821, 1, 0
      %v1854 = vsel %vm1822, 1, 0
      %v1855 = vsel %vm1823, 1, 0
      %v1856 = vsel %vm1824, 1, 0
      %v1857 = vsel %vm1825, 1, 0
      %v1858 = vsel %vm1826, 1, 0
      %v1859 = vsel %vm1827, 1, 0
      %v1860 = vsel %vm1828, 1, 0
      %v1861 = vsel %vm1829, 1, 0
      %v1862 = vsel %vm1830, 1, 0
      %v1863 = vsel %vm1831, 1, 0
      %v1864 = vsel %vm1832, 1, 0
      %v1865 = vsel %vm1833, 1, 0
      %v1866 = vsel %vm1834, 1, 0
      %v1867 = vsel %vm1835, 1, 0
      %v1868 = vsel %vm1836, 1, 0
      %v1869 = vsel %vm1837, 1, 0
      %v1870 = vcvt.s32.f32 %v1838
      %v1871 = vcvt.s32.f32 %v1839
      %v1872 = vcvt.s32.f32 %v1840
      %v1873 = vcvt.s32.f32 %v1841
      %v1874 = vcvt.s32.f32 %v1842
      %v1875 = vcvt.s32.f32 %v1843
      %v1876 = vcvt.s32.f32 %v1844
      %v1877 = vcvt.s32.f32 %v1845
      %v1878 = vcvt.s32.f32 %v1846
      %v1879 = vcvt.s32.f32 %v1847
      %v1880 = vcvt.s32.f32 %v1848
      %v1881 = vcvt.s32.f32 %v1849
      %v1882 = vcvt.s32.f32 %v1850
      %v1883 = vcvt.s32.f32 %v1851
      %v1884 = vcvt.s32.f32 %v1852
      %v1885 = vcvt.s32.f32 %v1853
      %v1886 = vcvt.s32.f32 %v1854
      %v1887 = vcvt.s32.f32 %v1855
      %v1888 = vcvt.s32.f32 %v1856
      %v1889 = vcvt.s32.f32 %v1857
      %v1890 = vcvt.s32.f32 %v1858
      %v1891 = vcvt.s32.f32 %v1859
      %v1892 = vcvt.s32.f32 %v1860
      %v1893 = vcvt.s32.f32 %v1861
      %v1894 = vcvt.s32.f32 %v1862
      %v1895 = vcvt.s32.f32 %v1863
      %v1896 = vcvt.s32.f32 %v1864
      %v1897 = vcvt.s32.f32 %v1865
      %v1898 = vcvt.s32.f32 %v1866
      %v1899 = vcvt.s32.f32 %v1867
      %v1900 = vcvt.s32.f32 %v1868
      %v1901 = vcvt.s32.f32 %v1869
      %1902 = vmatprep.subr.mxu0 0.0
      %1903 = vmatpush1.msra.mxu0 %v1404
      %1904 = vmatprep.subr.mxu0 0.0
      %1905 = vmatpush1.msra.mxu0 %v1403
      %1906 = vmatprep.subr.mxu0 0.0
      %1907 = vmatpush1.msra.mxu0 %v1402
      %1908 = vmatprep.subr.mxu0 0.0
      %1909 = vmatpush1.msra.mxu0 %v1401
      %1910 = vmatprep.subr.mxu0 0.0
      %1911 = vmatpush1.msra.mxu0 %v1400
      %1912 = vmatprep.subr.mxu0 0.0
      %1913 = vmatpush1.msra.mxu0 %v1399
      %1914 = vmatprep.subr.mxu0 0.0
      %1915 = vmatpush1.msra.mxu0 %v1398
      %1916 = vmatprep.subr.mxu0 0.0
      %1917 = vmatpush1.msra.mxu0 %v1397
      %1918 = vmatprep.subr.mxu0 0.0
      %1919 = vmatpush1.msra.mxu0 %v1396
      %1920 = vmatprep.subr.mxu0 0.0
      %1921 = vmatpush1.msra.mxu0 %v1395
      %1922 = vmatprep.subr.mxu0 0.0
      %1923 = vmatpush1.msra.mxu0 %v1394
      %1924 = vmatprep.subr.mxu0 0.0
      %1925 = vmatpush1.msra.mxu0 %v1393
      %1926 = vmatprep.subr.mxu0 0.0
      %1927 = vmatpush1.msra.mxu0 %v1392
      %1928 = vmatprep.subr.mxu0 0.0
      %1929 = vmatpush1.msra.mxu0 %v1391
      %1930 = vmatprep.subr.mxu0 0.0
      %1931 = vmatpush1.msra.mxu0 %v1390
      %1932 = vmatprep.subr.mxu0 0.0
      %1933 = vmatpush1.msra.mxu0 %v1389
      %1934 = vmatprep.subr.mxu0 0.0
      %1935 = vmatpush2.msra.mxu0 %v1420
      %1936 = vmatprep.subr.mxu0 0.0
      %1937 = vmatpush2.msra.mxu0 %v1419
      %1938 = vmatprep.subr.mxu0 0.0
      %1939 = vmatpush2.msra.mxu0 %v1418
      %1940 = vmatprep.subr.mxu0 0.0
      %1941 = vmatpush2.msra.mxu0 %v1417
      %1942 = vmatprep.subr.mxu0 0.0
      %1943 = vmatpush2.msra.mxu0 %v1416
      %1944 = vmatprep.subr.mxu0 0.0
      %1945 = vmatpush2.msra.mxu0 %v1415
      %1946 = vmatprep.subr.mxu0 0.0
      %1947 = vmatpush2.msra.mxu0 %v1414
      %1948 = vmatprep.subr.mxu0 0.0
      %1949 = vmatpush2.msra.mxu0 %v1413
      %1950 = vmatprep.subr.mxu0 0.0
      %1951 = vmatpush2.msra.mxu0 %v1412
      %1952 = vmatprep.subr.mxu0 0.0
      %1953 = vmatpush2.msra.mxu0 %v1411
      %1954 = vmatprep.subr.mxu0 0.0
      %1955 = vmatpush2.msra.mxu0 %v1410
      %1956 = vmatprep.subr.mxu0 0.0
      %1957 = vmatpush2.msra.mxu0 %v1409
      %1958 = vmatprep.subr.mxu0 0.0
      %1959 = vmatpush2.msra.mxu0 %v1408
      %1960 = vmatprep.subr.mxu0 0.0
      %1961 = vmatpush2.msra.mxu0 %v1407
      %1962 = vmatprep.subr.mxu0 0.0
      %1963 = vmatpush2.msra.mxu0 %v1406
      %1964 = vmatprep.subr.mxu0 0.0
      %1965 = vmatpush2.msra.mxu0 %v1405
      %1966 = vmatprep.mubr.f32.mxu0 %v1871
      %1967 = vmatmul.mubr.f32.gmra.mxu0 %v1870
      %v1968 = vpop.f32.mrf.mxu0
      %v1969 = vadd.f32 0.0, %v1968
      %v1970 = vpop.f32.mrf.mxu0
      %1971 = vmatprep.mubr.f32.mxu0 %v1873
      %1972 = vmatmul.mubr.f32.gmra.mxu0 %v1872
      %v1973 = vpop.f32.mrf.mxu0
      %v1974 = vadd.f32 0.0, %v1973
      %v1975 = vpop.f32.mrf.mxu0
      %1976 = vmatprep.mubr.f32.mxu0 %v1875
      %1977 = vmatmul.mubr.f32.gmra.mxu0 %v1874
      %v1978 = vpop.f32.mrf.mxu0
      %v1979 = vadd.f32 0.0, %v1978
      %v1980 = vpop.f32.mrf.mxu0
      %1981 = vmatprep.mubr.f32.mxu0 %v1877
      %1982 = vmatmul.mubr.f32.gmra.mxu0 %v1876
      %v1983 = vpop.f32.mrf.mxu0
      %v1984 = vadd.f32 0.0, %v1983
      %v1985 = vpop.f32.mrf.mxu0
      %1986 = vmatprep.mubr.f32.mxu0 %v1879
      %1987 = vmatmul.mubr.f32.gmra.mxu0 %v1878
      %v1988 = vpop.f32.mrf.mxu0
      %v1989 = vadd.f32 0.0, %v1988
      %v1990 = vpop.f32.mrf.mxu0
      %1991 = vmatprep.mubr.f32.mxu0 %v1881
      %1992 = vmatmul.mubr.f32.gmra.mxu0 %v1880
      %v1993 = vpop.f32.mrf.mxu0
      %v1994 = vadd.f32 0.0, %v1993
      %v1995 = vpop.f32.mrf.mxu0
      %1996 = vmatprep.mubr.f32.mxu0 %v1883
      %1997 = vmatmul.mubr.f32.gmra.mxu0 %v1882
      %v1998 = vpop.f32.mrf.mxu0
      %v1999 = vadd.f32 0.0, %v1998
      %v2000 = vpop.f32.mrf.mxu0
      %2001 = vmatprep.mubr.f32.mxu0 %v1885
      %2002 = vmatmul.mubr.f32.gmra.mxu0 %v1884
      %v2003 = vpop.f32.mrf.mxu0
      %v2004 = vadd.f32 0.0, %v2003
      %v2005 = vpop.f32.mrf.mxu0
      %2006 = vmatprep.mubr.f32.mxu0 %v1887
      %2007 = vmatmul.mubr.f32.gmra.mxu0 %v1886
      %v2008 = vpop.f32.mrf.mxu0
      %v2009 = vadd.f32 0.0, %v2008
      %v2010 = vpop.f32.mrf.mxu0
      %2011 = vmatprep.mubr.f32.mxu0 %v1889
      %2012 = vmatmul.mubr.f32.gmra.mxu0 %v1888
      %v2013 = vpop.f32.mrf.mxu0
      %v2014 = vadd.f32 0.0, %v2013
      %v2015 = vpop.f32.mrf.mxu0
      %2016 = vmatprep.mubr.f32.mxu0 %v1891
      %2017 = vmatmul.mubr.f32.gmra.mxu0 %v1890
      %v2018 = vpop.f32.mrf.mxu0
      %v2019 = vadd.f32 0.0, %v2018
      %v2020 = vpop.f32.mrf.mxu0
      %2021 = vmatprep.mubr.f32.mxu0 %v1893
      %2022 = vmatmul.mubr.f32.gmra.mxu0 %v1892
      %v2023 = vpop.f32.mrf.mxu0
      %v2024 = vadd.f32 0.0, %v2023
      %v2025 = vpop.f32.mrf.mxu0
      %2026 = vmatprep.mubr.f32.mxu0 %v1895
      %2027 = vmatmul.mubr.f32.gmra.mxu0 %v1894
      %v2028 = vpop.f32.mrf.mxu0
      %v2029 = vadd.f32 0.0, %v2028
      %v2030 = vpop.f32.mrf.mxu0
      %2031 = vmatprep.mubr.f32.mxu0 %v1897
      %2032 = vmatmul.mubr.f32.gmra.mxu0 %v1896
      %v2033 = vpop.f32.mrf.mxu0
      %v2034 = vadd.f32 0.0, %v2033
      %v2035 = vpop.f32.mrf.mxu0
      %2036 = vmatprep.mubr.f32.mxu0 %v1899
      %2037 = vmatmul.mubr.f32.gmra.mxu0 %v1898
      %v2038 = vpop.f32.mrf.mxu0
      %v2039 = vadd.f32 0.0, %v2038
      %v2040 = vpop.f32.mrf.mxu0
      %2041 = vmatprep.mubr.f32.mxu0 %v1901
      %2042 = vmatmul.mubr.f32.gmra.mxu0 %v1900
      %v2043 = vpop.f32.mrf.mxu0
      %v2044 = vadd.f32 0.0, %v2043
      %v2045 = vpop.f32.mrf.mxu0
      %2046 = vdwg.mxu0
      %v2047 = vmul.f32 %v1969, %v1311
      %v2048 = vmul.f32 %v1974, %v1316
      %v2049 = vmul.f32 %v1979, %v1321
      %v2050 = vmul.f32 %v1984, %v1326
      %v2051 = vmul.f32 %v1989, %v1331
      %v2052 = vmul.f32 %v1994, %v1336
      %v2053 = vmul.f32 %v1999, %v1341
      %v2054 = vmul.f32 %v2004, %v1346
      %v2055 = vmul.f32 %v2009, %v1351
      %v2056 = vmul.f32 %v2014, %v1356
      %v2057 = vmul.f32 %v2019, %v1361
      %v2058 = vmul.f32 %v2024, %v1366
      %v2059 = vmul.f32 %v2029, %v1371
      %v2060 = vmul.f32 %v2034, %v1376
      %v2061 = vmul.f32 %v2039, %v1381
      %v2062 = vmul.f32 %v2044, %v1386
      %v2063 = vsel %vm1191, %v2047, 0.0
      %2064 = vadd.xlane.f32.xlu0 %v2063
      %v2065 = vpop.xlane.xlu0 %2064
      %v2066 = vsel %vm1191, %v2048, 0.0
      %2067 = vadd.xlane.f32.xlu0 %v2066
      %v2068 = vpop.xlane.xlu0 %2067
      %v2069 = vsel %vm1191, %v2049, 0.0
      %2070 = vadd.xlane.f32.xlu0 %v2069
      %v2071 = vpop.xlane.xlu0 %2070
      %v2072 = vsel %vm1191, %v2050, 0.0
      %2073 = vadd.xlane.f32.xlu0 %v2072
      %v2074 = vpop.xlane.xlu0 %2073
      %v2075 = vsel %vm1191, %v2051, 0.0
      %2076 = vadd.xlane.f32.xlu0 %v2075
      %v2077 = vpop.xlane.xlu0 %2076
      %v2078 = vsel %vm1191, %v2052, 0.0
      %2079 = vadd.xlane.f32.xlu0 %v2078
      %v2080 = vpop.xlane.xlu0 %2079
      %v2081 = vsel %vm1191, %v2053, 0.0
      %2082 = vadd.xlane.f32.xlu0 %v2081
      %v2083 = vpop.xlane.xlu0 %2082
      %v2084 = vsel %vm1191, %v2054, 0.0
      %2085 = vadd.xlane.f32.xlu0 %v2084
      %v2086 = vpop.xlane.xlu0 %2085
      %v2087 = vsel %vm1191, %v2055, 0.0
      %2088 = vadd.xlane.f32.xlu0 %v2087
      %v2089 = vpop.xlane.xlu0 %2088
      %v2090 = vsel %vm1191, %v2056, 0.0
      %2091 = vadd.xlane.f32.xlu0 %v2090
      %v2092 = vpop.xlane.xlu0 %2091
      %v2093 = vsel %vm1191, %v2057, 0.0
      %2094 = vadd.xlane.f32.xlu0 %v2093
      %v2095 = vpop.xlane.xlu0 %2094
      %v2096 = vsel %vm1191, %v2058, 0.0
      %2097 = vadd.xlane.f32.xlu0 %v2096
      %v2098 = vpop.xlane.xlu0 %2097
      %v2099 = vsel %vm1191, %v2059, 0.0
      %2100 = vadd.xlane.f32.xlu0 %v2099
      %v2101 = vpop.xlane.xlu0 %2100
      %v2102 = vsel %vm1191, %v2060, 0.0
      %2103 = vadd.xlane.f32.xlu0 %v2102
      %v2104 = vpop.xlane.xlu0 %2103
      %v2105 = vsel %vm1191, %v2061, 0.0
      %2106 = vadd.xlane.f32.xlu0 %v2105
      %v2107 = vpop.xlane.xlu0 %2106
      %v2108 = vsel %vm1191, %v2062, 0.0
      %2109 = vadd.xlane.f32.xlu0 %v2108
      %v2110 = vpop.xlane.xlu0 %2109
      %v2112 = vlaneseq
      %v2113 = vshrl.u32 %v2112, 7
      %v2114 = vsub.s32 0, %v2113
      %v2115 = vrot.slane %v1421, %v2114
      %v2117 = vadd.f32 %v2065, %v2115
      %v2118 = vadd.f32 %v2068, %v2115
      %v2119 = vadd.f32 %v2071, %v2115
      %v2120 = vadd.f32 %v2074, %v2115
      %v2121 = vadd.f32 %v2077, %v2115
      %v2122 = vadd.f32 %v2080, %v2115
      %v2123 = vadd.f32 %v2083, %v2115
      %v2124 = vadd.f32 %v2086, %v2115
      %v2125 = vadd.f32 %v2089, %v2115
      %v2126 = vadd.f32 %v2092, %v2115
      %v2127 = vadd.f32 %v2095, %v2115
      %v2128 = vadd.f32 %v2098, %v2115
      %v2129 = vadd.f32 %v2101, %v2115
      %v2130 = vadd.f32 %v2104, %v2115
      %v2131 = vadd.f32 %v2107, %v2115
      %v2132 = vadd.f32 %v2110, %v2115
      %v2133 = vsel %vm1470, %v1565, %v920
      %v2134 = vsel %vm1471, %v1581, %v921
      %v2135 = vsel %vm1472, %v1597, %v922
      %v2136 = vsel %vm1473, %v1613, %v923
      %v2137 = vsel %vm1474, %v1629, %v924
      %v2138 = vsel %vm1475, %v1645, %v925
      %v2139 = vsel %vm1476, %v1661, %v926
      %v2140 = vsel %vm1477, %v1677, %v927
      %v2141 = vsel %vm1478, %v1693, %v928
      %v2142 = vsel %vm1479, %v1709, %v929
      %v2143 = vsel %vm1480, %v1725, %v930
      %v2144 = vsel %vm1481, %v1741, %v931
      %v2145 = vsel %vm1482, %v1757, %v932
      %v2146 = vsel %vm1483, %v1773, %v933
      %v2147 = vsel %vm1484, %v1789, %v934
      %v2148 = vsel %vm1485, %v1805, %v935
      %v2149 = vsel %vm1470, %v2117, 0.0
      %v2150 = vsel %vm1471, %v2118, 0.0
      %v2151 = vsel %vm1472, %v2119, 0.0
      %v2152 = vsel %vm1473, %v2120, 0.0
      %v2153 = vsel %vm1474, %v2121, 0.0
      %v2154 = vsel %vm1475, %v2122, 0.0
      %v2155 = vsel %vm1476, %v2123, 0.0
      %v2156 = vsel %vm1477, %v2124, 0.0
      %v2157 = vsel %vm1478, %v2125, 0.0
      %v2158 = vsel %vm1479, %v2126, 0.0
      %v2159 = vsel %vm1480, %v2127, 0.0
      %v2160 = vsel %vm1481, %v2128, 0.0
      %v2161 = vsel %vm1482, %v2129, 0.0
      %v2162 = vsel %vm1483, %v2130, 0.0
      %v2163 = vsel %vm1484, %v2131, 0.0
      %v2164 = vsel %vm1485, %v2132, 0.0
      %v2165 = vsel %vm1470, 1, 0
      %v2166 = vsel %vm1471, 1, 0
      %v2167 = vsel %vm1472, 1, 0
      %v2168 = vsel %vm1473, 1, 0
      %v2169 = vsel %vm1474, 1, 0
      %v2170 = vsel %vm1475, 1, 0
      %v2171 = vsel %vm1476, 1, 0
      %v2172 = vsel %vm1477, 1, 0
      %v2173 = vsel %vm1478, 1, 0
      %v2174 = vsel %vm1479, 1, 0
      %v2175 = vsel %vm1480, 1, 0
      %v2176 = vsel %vm1481, 1, 0
      %v2177 = vsel %vm1482, 1, 0
      %v2178 = vsel %vm1483, 1, 0
      %v2179 = vsel %vm1484, 1, 0
      %v2180 = vsel %vm1485, 1, 0
      %v2181 = vsel %vm1806, 1e+30, %v1140
      %v2182 = vsel %vm1807, 1e+30, %v1141
      %v2183 = vsel %vm1808, 1e+30, %v1142
      %v2184 = vsel %vm1809, 1e+30, %v1143
      %v2185 = vsel %vm1810, 1e+30, %v1144
      %v2186 = vsel %vm1811, 1e+30, %v1145
      %v2187 = vsel %vm1812, 1e+30, %v1146
      %v2188 = vsel %vm1813, 1e+30, %v1147
      %v2189 = vsel %vm1814, 1e+30, %v1148
      %v2190 = vsel %vm1815, 1e+30, %v1149
      %v2191 = vsel %vm1816, 1e+30, %v1150
      %v2192 = vsel %vm1817, 1e+30, %v1151
      %v2193 = vsel %vm1818, 1e+30, %v1152
      %v2194 = vsel %vm1819, 1e+30, %v1153
      %v2195 = vsel %vm1820, 1e+30, %v1154
      %v2196 = vsel %vm1821, 1e+30, %v1155
      %v2197 = vsel %vm1822, 1e+30, %v1156
      %v2198 = vsel %vm1823, 1e+30, %v1157
      %v2199 = vsel %vm1824, 1e+30, %v1158
      %v2200 = vsel %vm1825, 1e+30, %v1159
      %v2201 = vsel %vm1826, 1e+30, %v1160
      %v2202 = vsel %vm1827, 1e+30, %v1161
      %v2203 = vsel %vm1828, 1e+30, %v1162
      %v2204 = vsel %vm1829, 1e+30, %v1163
      %v2205 = vsel %vm1830, 1e+30, %v1164
      %v2206 = vsel %vm1831, 1e+30, %v1165
      %v2207 = vsel %vm1832, 1e+30, %v1166
      %v2208 = vsel %vm1833, 1e+30, %v1167
      %v2209 = vsel %vm1834, 1e+30, %v1168
      %v2210 = vsel %vm1835, 1e+30, %v1169
      %v2211 = vsel %vm1836, 1e+30, %v1170
      %v2212 = vsel %vm1837, 1e+30, %v1171
      %v2213 = vmin.f32 %v2181, %v2182
      %2214 = vmin.xlane.f32.xlu0 %v2213
      %v2215 = vpop.xlane.xlu0 %2214
      %v2216 = vmin.f32 %v2183, %v2184
      %2217 = vmin.xlane.f32.xlu0 %v2216
      %v2218 = vpop.xlane.xlu0 %2217
      %v2219 = vmin.f32 %v2185, %v2186
      %2220 = vmin.xlane.f32.xlu0 %v2219
      %v2221 = vpop.xlane.xlu0 %2220
      %v2222 = vmin.f32 %v2187, %v2188
      %2223 = vmin.xlane.f32.xlu0 %v2222
      %v2224 = vpop.xlane.xlu0 %2223
      %v2225 = vmin.f32 %v2189, %v2190
      %2226 = vmin.xlane.f32.xlu0 %v2225
      %v2227 = vpop.xlane.xlu0 %2226
      %v2228 = vmin.f32 %v2191, %v2192
      %2229 = vmin.xlane.f32.xlu0 %v2228
      %v2230 = vpop.xlane.xlu0 %2229
      %v2231 = vmin.f32 %v2193, %v2194
      %2232 = vmin.xlane.f32.xlu0 %v2231
      %v2233 = vpop.xlane.xlu0 %2232
      %v2234 = vmin.f32 %v2195, %v2196
      %2235 = vmin.xlane.f32.xlu0 %v2234
      %v2236 = vpop.xlane.xlu0 %2235
      %v2237 = vmin.f32 %v2197, %v2198
      %2238 = vmin.xlane.f32.xlu0 %v2237
      %v2239 = vpop.xlane.xlu0 %2238
      %v2240 = vmin.f32 %v2199, %v2200
      %2241 = vmin.xlane.f32.xlu0 %v2240
      %v2242 = vpop.xlane.xlu0 %2241
      %v2243 = vmin.f32 %v2201, %v2202
      %2244 = vmin.xlane.f32.xlu0 %v2243
      %v2245 = vpop.xlane.xlu0 %2244
      %v2246 = vmin.f32 %v2203, %v2204
      %2247 = vmin.xlane.f32.xlu0 %v2246
      %v2248 = vpop.xlane.xlu0 %2247
      %v2249 = vmin.f32 %v2205, %v2206
      %2250 = vmin.xlane.f32.xlu0 %v2249
      %v2251 = vpop.xlane.xlu0 %2250
      %v2252 = vmin.f32 %v2207, %v2208
      %2253 = vmin.xlane.f32.xlu0 %v2252
      %v2254 = vpop.xlane.xlu0 %2253
      %v2255 = vmin.f32 %v2209, %v2210
      %2256 = vmin.xlane.f32.xlu0 %v2255
      %v2257 = vpop.xlane.xlu0 %2256
      %v2258 = vmin.f32 %v2211, %v2212
      %2259 = vmin.xlane.f32.xlu0 %v2258
      %v2260 = vpop.xlane.xlu0 %2259
      %vm2261 = vcmp.lt.f32.partialorder %v2215, 1e+30
      %vm2262 = vcmp.lt.f32.partialorder %v2218, 1e+30
      %vm2263 = vcmp.lt.f32.partialorder %v2221, 1e+30
      %vm2264 = vcmp.lt.f32.partialorder %v2224, 1e+30
      %vm2265 = vcmp.lt.f32.partialorder %v2227, 1e+30
      %vm2266 = vcmp.lt.f32.partialorder %v2230, 1e+30
      %vm2267 = vcmp.lt.f32.partialorder %v2233, 1e+30
      %vm2268 = vcmp.lt.f32.partialorder %v2236, 1e+30
      %vm2269 = vcmp.lt.f32.partialorder %v2239, 1e+30
      %vm2270 = vcmp.lt.f32.partialorder %v2242, 1e+30
      %vm2271 = vcmp.lt.f32.partialorder %v2245, 1e+30
      %vm2272 = vcmp.lt.f32.partialorder %v2248, 1e+30
      %vm2273 = vcmp.lt.f32.partialorder %v2251, 1e+30
      %vm2274 = vcmp.lt.f32.partialorder %v2254, 1e+30
      %vm2275 = vcmp.lt.f32.partialorder %v2257, 1e+30
      %vm2276 = vcmp.lt.f32.partialorder %v2260, 1e+30
      %vm2277 = vcmp.eq.f32.partialorder %v2181, %v2215
      %vm2278 = vcmp.eq.f32.partialorder %v2182, %v2215
      %vm2279 = vcmp.eq.f32.partialorder %v2183, %v2218
      %vm2280 = vcmp.eq.f32.partialorder %v2184, %v2218
      %vm2281 = vcmp.eq.f32.partialorder %v2185, %v2221
      %vm2282 = vcmp.eq.f32.partialorder %v2186, %v2221
      %vm2283 = vcmp.eq.f32.partialorder %v2187, %v2224
      %vm2284 = vcmp.eq.f32.partialorder %v2188, %v2224
      %vm2285 = vcmp.eq.f32.partialorder %v2189, %v2227
      %vm2286 = vcmp.eq.f32.partialorder %v2190, %v2227
      %vm2287 = vcmp.eq.f32.partialorder %v2191, %v2230
      %vm2288 = vcmp.eq.f32.partialorder %v2192, %v2230
      %vm2289 = vcmp.eq.f32.partialorder %v2193, %v2233
      %vm2290 = vcmp.eq.f32.partialorder %v2194, %v2233
      %vm2291 = vcmp.eq.f32.partialorder %v2195, %v2236
      %vm2292 = vcmp.eq.f32.partialorder %v2196, %v2236
      %vm2293 = vcmp.eq.f32.partialorder %v2197, %v2239
      %vm2294 = vcmp.eq.f32.partialorder %v2198, %v2239
      %vm2295 = vcmp.eq.f32.partialorder %v2199, %v2242
      %vm2296 = vcmp.eq.f32.partialorder %v2200, %v2242
      %vm2297 = vcmp.eq.f32.partialorder %v2201, %v2245
      %vm2298 = vcmp.eq.f32.partialorder %v2202, %v2245
      %vm2299 = vcmp.eq.f32.partialorder %v2203, %v2248
      %vm2300 = vcmp.eq.f32.partialorder %v2204, %v2248
      %vm2301 = vcmp.eq.f32.partialorder %v2205, %v2251
      %vm2302 = vcmp.eq.f32.partialorder %v2206, %v2251
      %vm2303 = vcmp.eq.f32.partialorder %v2207, %v2254
      %vm2304 = vcmp.eq.f32.partialorder %v2208, %v2254
      %vm2305 = vcmp.eq.f32.partialorder %v2209, %v2257
      %vm2306 = vcmp.eq.f32.partialorder %v2210, %v2257
      %vm2307 = vcmp.eq.f32.partialorder %v2211, %v2260
      %vm2308 = vcmp.eq.f32.partialorder %v2212, %v2260
      %v2309 = vsel %vm2277, %v899, 256
      %v2310 = vsel %vm2278, %v900, 256
      %v2311 = vsel %vm2279, %v899, 256
      %v2312 = vsel %vm2280, %v900, 256
      %v2313 = vsel %vm2281, %v899, 256
      %v2314 = vsel %vm2282, %v900, 256
      %v2315 = vsel %vm2283, %v899, 256
      %v2316 = vsel %vm2284, %v900, 256
      %v2317 = vsel %vm2285, %v899, 256
      %v2318 = vsel %vm2286, %v900, 256
      %v2319 = vsel %vm2287, %v899, 256
      %v2320 = vsel %vm2288, %v900, 256
      %v2321 = vsel %vm2289, %v899, 256
      %v2322 = vsel %vm2290, %v900, 256
      %v2323 = vsel %vm2291, %v899, 256
      %v2324 = vsel %vm2292, %v900, 256
      %v2325 = vsel %vm2293, %v899, 256
      %v2326 = vsel %vm2294, %v900, 256
      %v2327 = vsel %vm2295, %v899, 256
      %v2328 = vsel %vm2296, %v900, 256
      %v2329 = vsel %vm2297, %v899, 256
      %v2330 = vsel %vm2298, %v900, 256
      %v2331 = vsel %vm2299, %v899, 256
      %v2332 = vsel %vm2300, %v900, 256
      %v2333 = vsel %vm2301, %v899, 256
      %v2334 = vsel %vm2302, %v900, 256
      %v2335 = vsel %vm2303, %v899, 256
      %v2336 = vsel %vm2304, %v900, 256
      %v2337 = vsel %vm2305, %v899, 256
      %v2338 = vsel %vm2306, %v900, 256
      %v2339 = vsel %vm2307, %v899, 256
      %v2340 = vsel %vm2308, %v900, 256
      %vm2341 = vcmp.lt.s32.totalorder %v2309, %v2310
      %v2342 = vsel %vm2341, %v2309, %v2310
      %v2343 = vand.u32 %v2342, 65535
      %v2344 = vshra.s32 %v2342, 16
      %v2345 = vcvt.s32.f32 %v2343
      %v2346 = vcvt.s32.f32 %v2344
      %2347 = vmin.xlane.f32.xlu0 %v2346
      %v2348 = vpop.xlane.xlu0 %2347
      %vm2349 = vcmp.eq.f32.partialorder %v2346, %v2348
      %v2350 = vsel %vm2349, %v2345, inf
      %2351 = vmin.xlane.f32.xlu0 %v2350
      %v2352 = vpop.xlane.xlu0 %2351
      %v2353 = vcvt.f32.s32 %v2352
      %v2354 = vcvt.f32.s32 %v2348
      %v2355 = vshll.u32 %v2354, 16
      %v2356 = vadd.s32 %v2355, %v2353
      %vm2357 = vcmp.lt.s32.totalorder %v2311, %v2312
      %v2358 = vsel %vm2357, %v2311, %v2312
      %v2359 = vand.u32 %v2358, 65535
      %v2360 = vshra.s32 %v2358, 16
      %v2361 = vcvt.s32.f32 %v2359
      %v2362 = vcvt.s32.f32 %v2360
      %2363 = vmin.xlane.f32.xlu0 %v2362
      %v2364 = vpop.xlane.xlu0 %2363
      %vm2365 = vcmp.eq.f32.partialorder %v2362, %v2364
      %v2366 = vsel %vm2365, %v2361, inf
      %2367 = vmin.xlane.f32.xlu0 %v2366
      %v2368 = vpop.xlane.xlu0 %2367
      %v2369 = vcvt.f32.s32 %v2368
      %v2370 = vcvt.f32.s32 %v2364
      %v2371 = vshll.u32 %v2370, 16
      %v2372 = vadd.s32 %v2371, %v2369
      %vm2373 = vcmp.lt.s32.totalorder %v2313, %v2314
      %v2374 = vsel %vm2373, %v2313, %v2314
      %v2375 = vand.u32 %v2374, 65535
      %v2376 = vshra.s32 %v2374, 16
      %v2377 = vcvt.s32.f32 %v2375
      %v2378 = vcvt.s32.f32 %v2376
      %2379 = vmin.xlane.f32.xlu0 %v2378
      %v2380 = vpop.xlane.xlu0 %2379
      %vm2381 = vcmp.eq.f32.partialorder %v2378, %v2380
      %v2382 = vsel %vm2381, %v2377, inf
      %2383 = vmin.xlane.f32.xlu0 %v2382
      %v2384 = vpop.xlane.xlu0 %2383
      %v2385 = vcvt.f32.s32 %v2384
      %v2386 = vcvt.f32.s32 %v2380
      %v2387 = vshll.u32 %v2386, 16
      %v2388 = vadd.s32 %v2387, %v2385
      %vm2389 = vcmp.lt.s32.totalorder %v2315, %v2316
      %v2390 = vsel %vm2389, %v2315, %v2316
      %v2391 = vand.u32 %v2390, 65535
      %v2392 = vshra.s32 %v2390, 16
      %v2393 = vcvt.s32.f32 %v2391
      %v2394 = vcvt.s32.f32 %v2392
      %2395 = vmin.xlane.f32.xlu0 %v2394
      %v2396 = vpop.xlane.xlu0 %2395
      %vm2397 = vcmp.eq.f32.partialorder %v2394, %v2396
      %v2398 = vsel %vm2397, %v2393, inf
      %2399 = vmin.xlane.f32.xlu0 %v2398
      %v2400 = vpop.xlane.xlu0 %2399
      %v2401 = vcvt.f32.s32 %v2400
      %v2402 = vcvt.f32.s32 %v2396
      %v2403 = vshll.u32 %v2402, 16
      %v2404 = vadd.s32 %v2403, %v2401
      %vm2405 = vcmp.lt.s32.totalorder %v2317, %v2318
      %v2406 = vsel %vm2405, %v2317, %v2318
      %v2407 = vand.u32 %v2406, 65535
      %v2408 = vshra.s32 %v2406, 16
      %v2409 = vcvt.s32.f32 %v2407
      %v2410 = vcvt.s32.f32 %v2408
      %2411 = vmin.xlane.f32.xlu0 %v2410
      %v2412 = vpop.xlane.xlu0 %2411
      %vm2413 = vcmp.eq.f32.partialorder %v2410, %v2412
      %v2414 = vsel %vm2413, %v2409, inf
      %2415 = vmin.xlane.f32.xlu0 %v2414
      %v2416 = vpop.xlane.xlu0 %2415
      %v2417 = vcvt.f32.s32 %v2416
      %v2418 = vcvt.f32.s32 %v2412
      %v2419 = vshll.u32 %v2418, 16
      %v2420 = vadd.s32 %v2419, %v2417
      %vm2421 = vcmp.lt.s32.totalorder %v2319, %v2320
      %v2422 = vsel %vm2421, %v2319, %v2320
      %v2423 = vand.u32 %v2422, 65535
      %v2424 = vshra.s32 %v2422, 16
      %v2425 = vcvt.s32.f32 %v2423
      %v2426 = vcvt.s32.f32 %v2424
      %2427 = vmin.xlane.f32.xlu0 %v2426
      %v2428 = vpop.xlane.xlu0 %2427
      %vm2429 = vcmp.eq.f32.partialorder %v2426, %v2428
      %v2430 = vsel %vm2429, %v2425, inf
      %2431 = vmin.xlane.f32.xlu0 %v2430
      %v2432 = vpop.xlane.xlu0 %2431
      %v2433 = vcvt.f32.s32 %v2432
      %v2434 = vcvt.f32.s32 %v2428
      %v2435 = vshll.u32 %v2434, 16
      %v2436 = vadd.s32 %v2435, %v2433
      %vm2437 = vcmp.lt.s32.totalorder %v2321, %v2322
      %v2438 = vsel %vm2437, %v2321, %v2322
      %v2439 = vand.u32 %v2438, 65535
      %v2440 = vshra.s32 %v2438, 16
      %v2441 = vcvt.s32.f32 %v2439
      %v2442 = vcvt.s32.f32 %v2440
      %2443 = vmin.xlane.f32.xlu0 %v2442
      %v2444 = vpop.xlane.xlu0 %2443
      %vm2445 = vcmp.eq.f32.partialorder %v2442, %v2444
      %v2446 = vsel %vm2445, %v2441, inf
      %2447 = vmin.xlane.f32.xlu0 %v2446
      %v2448 = vpop.xlane.xlu0 %2447
      %v2449 = vcvt.f32.s32 %v2448
      %v2450 = vcvt.f32.s32 %v2444
      %v2451 = vshll.u32 %v2450, 16
      %v2452 = vadd.s32 %v2451, %v2449
      %vm2453 = vcmp.lt.s32.totalorder %v2323, %v2324
      %v2454 = vsel %vm2453, %v2323, %v2324
      %v2455 = vand.u32 %v2454, 65535
      %v2456 = vshra.s32 %v2454, 16
      %v2457 = vcvt.s32.f32 %v2455
      %v2458 = vcvt.s32.f32 %v2456
      %2459 = vmin.xlane.f32.xlu0 %v2458
      %v2460 = vpop.xlane.xlu0 %2459
      %vm2461 = vcmp.eq.f32.partialorder %v2458, %v2460
      %v2462 = vsel %vm2461, %v2457, inf
      %2463 = vmin.xlane.f32.xlu0 %v2462
      %v2464 = vpop.xlane.xlu0 %2463
      %v2465 = vcvt.f32.s32 %v2464
      %v2466 = vcvt.f32.s32 %v2460
      %v2467 = vshll.u32 %v2466, 16
      %v2468 = vadd.s32 %v2467, %v2465
      %vm2469 = vcmp.lt.s32.totalorder %v2325, %v2326
      %v2470 = vsel %vm2469, %v2325, %v2326
      %v2471 = vand.u32 %v2470, 65535
      %v2472 = vshra.s32 %v2470, 16
      %v2473 = vcvt.s32.f32 %v2471
      %v2474 = vcvt.s32.f32 %v2472
      %2475 = vmin.xlane.f32.xlu0 %v2474
      %v2476 = vpop.xlane.xlu0 %2475
      %vm2477 = vcmp.eq.f32.partialorder %v2474, %v2476
      %v2478 = vsel %vm2477, %v2473, inf
      %2479 = vmin.xlane.f32.xlu0 %v2478
      %v2480 = vpop.xlane.xlu0 %2479
      %v2481 = vcvt.f32.s32 %v2480
      %v2482 = vcvt.f32.s32 %v2476
      %v2483 = vshll.u32 %v2482, 16
      %v2484 = vadd.s32 %v2483, %v2481
      %vm2485 = vcmp.lt.s32.totalorder %v2327, %v2328
      %v2486 = vsel %vm2485, %v2327, %v2328
      %v2487 = vand.u32 %v2486, 65535
      %v2488 = vshra.s32 %v2486, 16
      %v2489 = vcvt.s32.f32 %v2487
      %v2490 = vcvt.s32.f32 %v2488
      %2491 = vmin.xlane.f32.xlu0 %v2490
      %v2492 = vpop.xlane.xlu0 %2491
      %vm2493 = vcmp.eq.f32.partialorder %v2490, %v2492
      %v2494 = vsel %vm2493, %v2489, inf
      %2495 = vmin.xlane.f32.xlu0 %v2494
      %v2496 = vpop.xlane.xlu0 %2495
      %v2497 = vcvt.f32.s32 %v2496
      %v2498 = vcvt.f32.s32 %v2492
      %v2499 = vshll.u32 %v2498, 16
      %v2500 = vadd.s32 %v2499, %v2497
      %vm2501 = vcmp.lt.s32.totalorder %v2329, %v2330
      %v2502 = vsel %vm2501, %v2329, %v2330
      %v2503 = vand.u32 %v2502, 65535
      %v2504 = vshra.s32 %v2502, 16
      %v2505 = vcvt.s32.f32 %v2503
      %v2506 = vcvt.s32.f32 %v2504
      %2507 = vmin.xlane.f32.xlu0 %v2506
      %v2508 = vpop.xlane.xlu0 %2507
      %vm2509 = vcmp.eq.f32.partialorder %v2506, %v2508
      %v2510 = vsel %vm2509, %v2505, inf
      %2511 = vmin.xlane.f32.xlu0 %v2510
      %v2512 = vpop.xlane.xlu0 %2511
      %v2513 = vcvt.f32.s32 %v2512
      %v2514 = vcvt.f32.s32 %v2508
      %v2515 = vshll.u32 %v2514, 16
      %v2516 = vadd.s32 %v2515, %v2513
      %vm2517 = vcmp.lt.s32.totalorder %v2331, %v2332
      %v2518 = vsel %vm2517, %v2331, %v2332
      %v2519 = vand.u32 %v2518, 65535
      %v2520 = vshra.s32 %v2518, 16
      %v2521 = vcvt.s32.f32 %v2519
      %v2522 = vcvt.s32.f32 %v2520
      %2523 = vmin.xlane.f32.xlu0 %v2522
      %v2524 = vpop.xlane.xlu0 %2523
      %vm2525 = vcmp.eq.f32.partialorder %v2522, %v2524
      %v2526 = vsel %vm2525, %v2521, inf
      %2527 = vmin.xlane.f32.xlu0 %v2526
      %v2528 = vpop.xlane.xlu0 %2527
      %v2529 = vcvt.f32.s32 %v2528
      %v2530 = vcvt.f32.s32 %v2524
      %v2531 = vshll.u32 %v2530, 16
      %v2532 = vadd.s32 %v2531, %v2529
      %vm2533 = vcmp.lt.s32.totalorder %v2333, %v2334
      %v2534 = vsel %vm2533, %v2333, %v2334
      %v2535 = vand.u32 %v2534, 65535
      %v2536 = vshra.s32 %v2534, 16
      %v2537 = vcvt.s32.f32 %v2535
      %v2538 = vcvt.s32.f32 %v2536
      %2539 = vmin.xlane.f32.xlu0 %v2538
      %v2540 = vpop.xlane.xlu0 %2539
      %vm2541 = vcmp.eq.f32.partialorder %v2538, %v2540
      %v2542 = vsel %vm2541, %v2537, inf
      %2543 = vmin.xlane.f32.xlu0 %v2542
      %v2544 = vpop.xlane.xlu0 %2543
      %v2545 = vcvt.f32.s32 %v2544
      %v2546 = vcvt.f32.s32 %v2540
      %v2547 = vshll.u32 %v2546, 16
      %v2548 = vadd.s32 %v2547, %v2545
      %vm2549 = vcmp.lt.s32.totalorder %v2335, %v2336
      %v2550 = vsel %vm2549, %v2335, %v2336
      %v2551 = vand.u32 %v2550, 65535
      %v2552 = vshra.s32 %v2550, 16
      %v2553 = vcvt.s32.f32 %v2551
      %v2554 = vcvt.s32.f32 %v2552
      %2555 = vmin.xlane.f32.xlu0 %v2554
      %v2556 = vpop.xlane.xlu0 %2555
      %vm2557 = vcmp.eq.f32.partialorder %v2554, %v2556
      %v2558 = vsel %vm2557, %v2553, inf
      %2559 = vmin.xlane.f32.xlu0 %v2558
      %v2560 = vpop.xlane.xlu0 %2559
      %v2561 = vcvt.f32.s32 %v2560
      %v2562 = vcvt.f32.s32 %v2556
      %v2563 = vshll.u32 %v2562, 16
      %v2564 = vadd.s32 %v2563, %v2561
      %vm2565 = vcmp.lt.s32.totalorder %v2337, %v2338
      %v2566 = vsel %vm2565, %v2337, %v2338
      %v2567 = vand.u32 %v2566, 65535
      %v2568 = vshra.s32 %v2566, 16
      %v2569 = vcvt.s32.f32 %v2567
      %v2570 = vcvt.s32.f32 %v2568
      %2571 = vmin.xlane.f32.xlu0 %v2570
      %v2572 = vpop.xlane.xlu0 %2571
      %vm2573 = vcmp.eq.f32.partialorder %v2570, %v2572
      %v2574 = vsel %vm2573, %v2569, inf
      %2575 = vmin.xlane.f32.xlu0 %v2574
      %v2576 = vpop.xlane.xlu0 %2575
      %v2577 = vcvt.f32.s32 %v2576
      %v2578 = vcvt.f32.s32 %v2572
      %v2579 = vshll.u32 %v2578, 16
      %v2580 = vadd.s32 %v2579, %v2577
      %vm2581 = vcmp.lt.s32.totalorder %v2339, %v2340
      %v2582 = vsel %vm2581, %v2339, %v2340
      %v2583 = vand.u32 %v2582, 65535
      %v2584 = vshra.s32 %v2582, 16
      %v2585 = vcvt.s32.f32 %v2583
      %v2586 = vcvt.s32.f32 %v2584
      %2587 = vmin.xlane.f32.xlu0 %v2586
      %v2588 = vpop.xlane.xlu0 %2587
      %vm2589 = vcmp.eq.f32.partialorder %v2586, %v2588
      %v2590 = vsel %vm2589, %v2585, inf
      %2591 = vmin.xlane.f32.xlu0 %v2590
      %v2592 = vpop.xlane.xlu0 %2591
      %v2593 = vcvt.f32.s32 %v2592
      %v2594 = vcvt.f32.s32 %v2588
      %v2595 = vshll.u32 %v2594, 16
      %v2596 = vadd.s32 %v2595, %v2593
      %vm2597 = vcmp.eq.s32.totalorder %v899, %v2356
      %vm2598 = vcmp.eq.s32.totalorder %v900, %v2356
      %vm2599 = vcmp.eq.s32.totalorder %v899, %v2372
      %vm2600 = vcmp.eq.s32.totalorder %v900, %v2372
      %vm2601 = vcmp.eq.s32.totalorder %v899, %v2388
      %vm2602 = vcmp.eq.s32.totalorder %v900, %v2388
      %vm2603 = vcmp.eq.s32.totalorder %v899, %v2404
      %vm2604 = vcmp.eq.s32.totalorder %v900, %v2404
      %vm2605 = vcmp.eq.s32.totalorder %v899, %v2420
      %vm2606 = vcmp.eq.s32.totalorder %v900, %v2420
      %vm2607 = vcmp.eq.s32.totalorder %v899, %v2436
      %vm2608 = vcmp.eq.s32.totalorder %v900, %v2436
      %vm2609 = vcmp.eq.s32.totalorder %v899, %v2452
      %vm2610 = vcmp.eq.s32.totalorder %v900, %v2452
      %vm2611 = vcmp.eq.s32.totalorder %v899, %v2468
      %vm2612 = vcmp.eq.s32.totalorder %v900, %v2468
      %vm2613 = vcmp.eq.s32.totalorder %v899, %v2484
      %vm2614 = vcmp.eq.s32.totalorder %v900, %v2484
      %vm2615 = vcmp.eq.s32.totalorder %v899, %v2500
      %vm2616 = vcmp.eq.s32.totalorder %v900, %v2500
      %vm2617 = vcmp.eq.s32.totalorder %v899, %v2516
      %vm2618 = vcmp.eq.s32.totalorder %v900, %v2516
      %vm2619 = vcmp.eq.s32.totalorder %v899, %v2532
      %vm2620 = vcmp.eq.s32.totalorder %v900, %v2532
      %vm2621 = vcmp.eq.s32.totalorder %v899, %v2548
      %vm2622 = vcmp.eq.s32.totalorder %v900, %v2548
      %vm2623 = vcmp.eq.s32.totalorder %v899, %v2564
      %vm2624 = vcmp.eq.s32.totalorder %v900, %v2564
      %vm2625 = vcmp.eq.s32.totalorder %v899, %v2580
      %vm2626 = vcmp.eq.s32.totalorder %v900, %v2580
      %vm2627 = vcmp.eq.s32.totalorder %v899, %v2596
      %vm2628 = vcmp.eq.s32.totalorder %v900, %v2596
      %v2629 = vsel %vm2597, 1, 0
      %v2630 = vsel %vm2598, 1, 0
      %v2631 = vsel %vm2599, 1, 0
      %v2632 = vsel %vm2600, 1, 0
      %v2633 = vsel %vm2601, 1, 0
      %v2634 = vsel %vm2602, 1, 0
      %v2635 = vsel %vm2603, 1, 0
      %v2636 = vsel %vm2604, 1, 0
      %v2637 = vsel %vm2605, 1, 0
      %v2638 = vsel %vm2606, 1, 0
      %v2639 = vsel %vm2607, 1, 0
      %v2640 = vsel %vm2608, 1, 0
      %v2641 = vsel %vm2609, 1, 0
      %v2642 = vsel %vm2610, 1, 0
      %v2643 = vsel %vm2611, 1, 0
      %v2644 = vsel %vm2612, 1, 0
      %v2645 = vsel %vm2613, 1, 0
      %v2646 = vsel %vm2614, 1, 0
      %v2647 = vsel %vm2615, 1, 0
      %v2648 = vsel %vm2616, 1, 0
      %v2649 = vsel %vm2617, 1, 0
      %v2650 = vsel %vm2618, 1, 0
      %v2651 = vsel %vm2619, 1, 0
      %v2652 = vsel %vm2620, 1, 0
      %v2653 = vsel %vm2621, 1, 0
      %v2654 = vsel %vm2622, 1, 0
      %v2655 = vsel %vm2623, 1, 0
      %v2656 = vsel %vm2624, 1, 0
      %v2657 = vsel %vm2625, 1, 0
      %v2658 = vsel %vm2626, 1, 0
      %v2659 = vsel %vm2627, 1, 0
      %v2660 = vsel %vm2628, 1, 0
      %v2661 = vcvt.s32.f32 %v2629
      %v2662 = vcvt.s32.f32 %v2630
      %v2663 = vcvt.s32.f32 %v2631
      %v2664 = vcvt.s32.f32 %v2632
      %v2665 = vcvt.s32.f32 %v2633
      %v2666 = vcvt.s32.f32 %v2634
      %v2667 = vcvt.s32.f32 %v2635
      %v2668 = vcvt.s32.f32 %v2636
      %v2669 = vcvt.s32.f32 %v2637
      %v2670 = vcvt.s32.f32 %v2638
      %v2671 = vcvt.s32.f32 %v2639
      %v2672 = vcvt.s32.f32 %v2640
      %v2673 = vcvt.s32.f32 %v2641
      %v2674 = vcvt.s32.f32 %v2642
      %v2675 = vcvt.s32.f32 %v2643
      %v2676 = vcvt.s32.f32 %v2644
      %v2677 = vcvt.s32.f32 %v2645
      %v2678 = vcvt.s32.f32 %v2646
      %v2679 = vcvt.s32.f32 %v2647
      %v2680 = vcvt.s32.f32 %v2648
      %v2681 = vcvt.s32.f32 %v2649
      %v2682 = vcvt.s32.f32 %v2650
      %v2683 = vcvt.s32.f32 %v2651
      %v2684 = vcvt.s32.f32 %v2652
      %v2685 = vcvt.s32.f32 %v2653
      %v2686 = vcvt.s32.f32 %v2654
      %v2687 = vcvt.s32.f32 %v2655
      %v2688 = vcvt.s32.f32 %v2656
      %v2689 = vcvt.s32.f32 %v2657
      %v2690 = vcvt.s32.f32 %v2658
      %v2691 = vcvt.s32.f32 %v2659
      %v2692 = vcvt.s32.f32 %v2660
      %2693 = vmatprep.subr.mxu0 0.0
      %2694 = vmatpush1.msra.mxu0 %v1404
      %2695 = vmatprep.subr.mxu0 0.0
      %2696 = vmatpush1.msra.mxu0 %v1403
      %2697 = vmatprep.subr.mxu0 0.0
      %2698 = vmatpush1.msra.mxu0 %v1402
      %2699 = vmatprep.subr.mxu0 0.0
      %2700 = vmatpush1.msra.mxu0 %v1401
      %2701 = vmatprep.subr.mxu0 0.0
      %2702 = vmatpush1.msra.mxu0 %v1400
      %2703 = vmatprep.subr.mxu0 0.0
      %2704 = vmatpush1.msra.mxu0 %v1399
      %2705 = vmatprep.subr.mxu0 0.0
      %2706 = vmatpush1.msra.mxu0 %v1398
      %2707 = vmatprep.subr.mxu0 0.0
      %2708 = vmatpush1.msra.mxu0 %v1397
      %2709 = vmatprep.subr.mxu0 0.0
      %2710 = vmatpush1.msra.mxu0 %v1396
      %2711 = vmatprep.subr.mxu0 0.0
      %2712 = vmatpush1.msra.mxu0 %v1395
      %2713 = vmatprep.subr.mxu0 0.0
      %2714 = vmatpush1.msra.mxu0 %v1394
      %2715 = vmatprep.subr.mxu0 0.0
      %2716 = vmatpush1.msra.mxu0 %v1393
      %2717 = vmatprep.subr.mxu0 0.0
      %2718 = vmatpush1.msra.mxu0 %v1392
      %2719 = vmatprep.subr.mxu0 0.0
      %2720 = vmatpush1.msra.mxu0 %v1391
      %2721 = vmatprep.subr.mxu0 0.0
      %2722 = vmatpush1.msra.mxu0 %v1390
      %2723 = vmatprep.subr.mxu0 0.0
      %2724 = vmatpush1.msra.mxu0 %v1389
      %2725 = vmatprep.subr.mxu0 0.0
      %2726 = vmatpush2.msra.mxu0 %v1420
      %2727 = vmatprep.subr.mxu0 0.0
      %2728 = vmatpush2.msra.mxu0 %v1419
      %2729 = vmatprep.subr.mxu0 0.0
      %2730 = vmatpush2.msra.mxu0 %v1418
      %2731 = vmatprep.subr.mxu0 0.0
      %2732 = vmatpush2.msra.mxu0 %v1417
      %2733 = vmatprep.subr.mxu0 0.0
      %2734 = vmatpush2.msra.mxu0 %v1416
      %2735 = vmatprep.subr.mxu0 0.0
      %2736 = vmatpush2.msra.mxu0 %v1415
      %2737 = vmatprep.subr.mxu0 0.0
      %2738 = vmatpush2.msra.mxu0 %v1414
      %2739 = vmatprep.subr.mxu0 0.0
      %2740 = vmatpush2.msra.mxu0 %v1413
      %2741 = vmatprep.subr.mxu0 0.0
      %2742 = vmatpush2.msra.mxu0 %v1412
      %2743 = vmatprep.subr.mxu0 0.0
      %2744 = vmatpush2.msra.mxu0 %v1411
      %2745 = vmatprep.subr.mxu0 0.0
      %2746 = vmatpush2.msra.mxu0 %v1410
      %2747 = vmatprep.subr.mxu0 0.0
      %2748 = vmatpush2.msra.mxu0 %v1409
      %2749 = vmatprep.subr.mxu0 0.0
      %2750 = vmatpush2.msra.mxu0 %v1408
      %2751 = vmatprep.subr.mxu0 0.0
      %2752 = vmatpush2.msra.mxu0 %v1407
      %2753 = vmatprep.subr.mxu0 0.0
      %2754 = vmatpush2.msra.mxu0 %v1406
      %2755 = vmatprep.subr.mxu0 0.0
      %2756 = vmatpush2.msra.mxu0 %v1405
      %2757 = vmatprep.mubr.f32.mxu0 %v2662
      %2758 = vmatmul.mubr.f32.gmra.mxu0 %v2661
      %v2759 = vpop.f32.mrf.mxu0
      %v2760 = vadd.f32 0.0, %v2759
      %v2761 = vpop.f32.mrf.mxu0
      %2762 = vmatprep.mubr.f32.mxu0 %v2664
      %2763 = vmatmul.mubr.f32.gmra.mxu0 %v2663
      %v2764 = vpop.f32.mrf.mxu0
      %v2765 = vadd.f32 0.0, %v2764
      %v2766 = vpop.f32.mrf.mxu0
      %2767 = vmatprep.mubr.f32.mxu0 %v2666
      %2768 = vmatmul.mubr.f32.gmra.mxu0 %v2665
      %v2769 = vpop.f32.mrf.mxu0
      %v2770 = vadd.f32 0.0, %v2769
      %v2771 = vpop.f32.mrf.mxu0
      %2772 = vmatprep.mubr.f32.mxu0 %v2668
      %2773 = vmatmul.mubr.f32.gmra.mxu0 %v2667
      %v2774 = vpop.f32.mrf.mxu0
      %v2775 = vadd.f32 0.0, %v2774
      %v2776 = vpop.f32.mrf.mxu0
      %2777 = vmatprep.mubr.f32.mxu0 %v2670
      %2778 = vmatmul.mubr.f32.gmra.mxu0 %v2669
      %v2779 = vpop.f32.mrf.mxu0
      %v2780 = vadd.f32 0.0, %v2779
      %v2781 = vpop.f32.mrf.mxu0
      %2782 = vmatprep.mubr.f32.mxu0 %v2672
      %2783 = vmatmul.mubr.f32.gmra.mxu0 %v2671
      %v2784 = vpop.f32.mrf.mxu0
      %v2785 = vadd.f32 0.0, %v2784
      %v2786 = vpop.f32.mrf.mxu0
      %2787 = vmatprep.mubr.f32.mxu0 %v2674
      %2788 = vmatmul.mubr.f32.gmra.mxu0 %v2673
      %v2789 = vpop.f32.mrf.mxu0
      %v2790 = vadd.f32 0.0, %v2789
      %v2791 = vpop.f32.mrf.mxu0
      %2792 = vmatprep.mubr.f32.mxu0 %v2676
      %2793 = vmatmul.mubr.f32.gmra.mxu0 %v2675
      %v2794 = vpop.f32.mrf.mxu0
      %v2795 = vadd.f32 0.0, %v2794
      %v2796 = vpop.f32.mrf.mxu0
      %2797 = vmatprep.mubr.f32.mxu0 %v2678
      %2798 = vmatmul.mubr.f32.gmra.mxu0 %v2677
      %v2799 = vpop.f32.mrf.mxu0
      %v2800 = vadd.f32 0.0, %v2799
      %v2801 = vpop.f32.mrf.mxu0
      %2802 = vmatprep.mubr.f32.mxu0 %v2680
      %2803 = vmatmul.mubr.f32.gmra.mxu0 %v2679
      %v2804 = vpop.f32.mrf.mxu0
      %v2805 = vadd.f32 0.0, %v2804
      %v2806 = vpop.f32.mrf.mxu0
      %2807 = vmatprep.mubr.f32.mxu0 %v2682
      %2808 = vmatmul.mubr.f32.gmra.mxu0 %v2681
      %v2809 = vpop.f32.mrf.mxu0
      %v2810 = vadd.f32 0.0, %v2809
      %v2811 = vpop.f32.mrf.mxu0
      %2812 = vmatprep.mubr.f32.mxu0 %v2684
      %2813 = vmatmul.mubr.f32.gmra.mxu0 %v2683
      %v2814 = vpop.f32.mrf.mxu0
      %v2815 = vadd.f32 0.0, %v2814
      %v2816 = vpop.f32.mrf.mxu0
      %2817 = vmatprep.mubr.f32.mxu0 %v2686
      %2818 = vmatmul.mubr.f32.gmra.mxu0 %v2685
      %v2819 = vpop.f32.mrf.mxu0
      %v2820 = vadd.f32 0.0, %v2819
      %v2821 = vpop.f32.mrf.mxu0
      %2822 = vmatprep.mubr.f32.mxu0 %v2688
      %2823 = vmatmul.mubr.f32.gmra.mxu0 %v2687
      %v2824 = vpop.f32.mrf.mxu0
      %v2825 = vadd.f32 0.0, %v2824
      %v2826 = vpop.f32.mrf.mxu0
      %2827 = vmatprep.mubr.f32.mxu0 %v2690
      %2828 = vmatmul.mubr.f32.gmra.mxu0 %v2689
      %v2829 = vpop.f32.mrf.mxu0
      %v2830 = vadd.f32 0.0, %v2829
      %v2831 = vpop.f32.mrf.mxu0
      %2832 = vmatprep.mubr.f32.mxu0 %v2692
      %2833 = vmatmul.mubr.f32.gmra.mxu0 %v2691
      %v2834 = vpop.f32.mrf.mxu0
      %v2835 = vadd.f32 0.0, %v2834
      %v2836 = vpop.f32.mrf.mxu0
      %2837 = vdwg.mxu0
      %v2838 = vmul.f32 %v2760, %v1311
      %v2839 = vmul.f32 %v2765, %v1316
      %v2840 = vmul.f32 %v2770, %v1321
      %v2841 = vmul.f32 %v2775, %v1326
      %v2842 = vmul.f32 %v2780, %v1331
      %v2843 = vmul.f32 %v2785, %v1336
      %v2844 = vmul.f32 %v2790, %v1341
      %v2845 = vmul.f32 %v2795, %v1346
      %v2846 = vmul.f32 %v2800, %v1351
      %v2847 = vmul.f32 %v2805, %v1356
      %v2848 = vmul.f32 %v2810, %v1361
      %v2849 = vmul.f32 %v2815, %v1366
      %v2850 = vmul.f32 %v2820, %v1371
      %v2851 = vmul.f32 %v2825, %v1376
      %v2852 = vmul.f32 %v2830, %v1381
      %v2853 = vmul.f32 %v2835, %v1386
      %v2854 = vsel %vm1191, %v2838, 0.0
      %2855 = vadd.xlane.f32.xlu0 %v2854
      %v2856 = vpop.xlane.xlu0 %2855
      %v2857 = vsel %vm1191, %v2839, 0.0
      %2858 = vadd.xlane.f32.xlu0 %v2857
      %v2859 = vpop.xlane.xlu0 %2858
      %v2860 = vsel %vm1191, %v2840, 0.0
      %2861 = vadd.xlane.f32.xlu0 %v2860
      %v2862 = vpop.xlane.xlu0 %2861
      %v2863 = vsel %vm1191, %v2841, 0.0
      %2864 = vadd.xlane.f32.xlu0 %v2863
      %v2865 = vpop.xlane.xlu0 %2864
      %v2866 = vsel %vm1191, %v2842, 0.0
      %2867 = vadd.xlane.f32.xlu0 %v2866
      %v2868 = vpop.xlane.xlu0 %2867
      %v2869 = vsel %vm1191, %v2843, 0.0
      %2870 = vadd.xlane.f32.xlu0 %v2869
      %v2871 = vpop.xlane.xlu0 %2870
      %v2872 = vsel %vm1191, %v2844, 0.0
      %2873 = vadd.xlane.f32.xlu0 %v2872
      %v2874 = vpop.xlane.xlu0 %2873
      %v2875 = vsel %vm1191, %v2845, 0.0
      %2876 = vadd.xlane.f32.xlu0 %v2875
      %v2877 = vpop.xlane.xlu0 %2876
      %v2878 = vsel %vm1191, %v2846, 0.0
      %2879 = vadd.xlane.f32.xlu0 %v2878
      %v2880 = vpop.xlane.xlu0 %2879
      %v2881 = vsel %vm1191, %v2847, 0.0
      %2882 = vadd.xlane.f32.xlu0 %v2881
      %v2883 = vpop.xlane.xlu0 %2882
      %v2884 = vsel %vm1191, %v2848, 0.0
      %2885 = vadd.xlane.f32.xlu0 %v2884
      %v2886 = vpop.xlane.xlu0 %2885
      %v2887 = vsel %vm1191, %v2849, 0.0
      %2888 = vadd.xlane.f32.xlu0 %v2887
      %v2889 = vpop.xlane.xlu0 %2888
      %v2890 = vsel %vm1191, %v2850, 0.0
      %2891 = vadd.xlane.f32.xlu0 %v2890
      %v2892 = vpop.xlane.xlu0 %2891
      %v2893 = vsel %vm1191, %v2851, 0.0
      %2894 = vadd.xlane.f32.xlu0 %v2893
      %v2895 = vpop.xlane.xlu0 %2894
      %v2896 = vsel %vm1191, %v2852, 0.0
      %2897 = vadd.xlane.f32.xlu0 %v2896
      %v2898 = vpop.xlane.xlu0 %2897
      %v2899 = vsel %vm1191, %v2853, 0.0
      %2900 = vadd.xlane.f32.xlu0 %v2899
      %v2901 = vpop.xlane.xlu0 %2900
      %v2902 = vadd.f32 %v2856, %v2115
      %v2903 = vadd.f32 %v2859, %v2115
      %v2904 = vadd.f32 %v2862, %v2115
      %v2905 = vadd.f32 %v2865, %v2115
      %v2906 = vadd.f32 %v2868, %v2115
      %v2907 = vadd.f32 %v2871, %v2115
      %v2908 = vadd.f32 %v2874, %v2115
      %v2909 = vadd.f32 %v2877, %v2115
      %v2910 = vadd.f32 %v2880, %v2115
      %v2911 = vadd.f32 %v2883, %v2115
      %v2912 = vadd.f32 %v2886, %v2115
      %v2913 = vadd.f32 %v2889, %v2115
      %v2914 = vadd.f32 %v2892, %v2115
      %v2915 = vadd.f32 %v2895, %v2115
      %v2916 = vadd.f32 %v2898, %v2115
      %v2917 = vadd.f32 %v2901, %v2115
      %v2918 = vsel %vm2261, %v2356, %v920
      %v2919 = vsel %vm2262, %v2372, %v921
      %v2920 = vsel %vm2263, %v2388, %v922
      %v2921 = vsel %vm2264, %v2404, %v923
      %v2922 = vsel %vm2265, %v2420, %v924
      %v2923 = vsel %vm2266, %v2436, %v925
      %v2924 = vsel %vm2267, %v2452, %v926
      %v2925 = vsel %vm2268, %v2468, %v927
      %v2926 = vsel %vm2269, %v2484, %v928
      %v2927 = vsel %vm2270, %v2500, %v929
      %v2928 = vsel %vm2271, %v2516, %v930
      %v2929 = vsel %vm2272, %v2532, %v931
      %v2930 = vsel %vm2273, %v2548, %v932
      %v2931 = vsel %vm2274, %v2564, %v933
      %v2932 = vsel %vm2275, %v2580, %v934
      %v2933 = vsel %vm2276, %v2596, %v935
      %v2934 = vsel %vm2261, %v2902, 0.0
      %v2935 = vsel %vm2262, %v2903, 0.0
      %v2936 = vsel %vm2263, %v2904, 0.0
      %v2937 = vsel %vm2264, %v2905, 0.0
      %v2938 = vsel %vm2265, %v2906, 0.0
      %v2939 = vsel %vm2266, %v2907, 0.0
      %v2940 = vsel %vm2267, %v2908, 0.0
      %v2941 = vsel %vm2268, %v2909, 0.0
      %v2942 = vsel %vm2269, %v2910, 0.0
      %v2943 = vsel %vm2270, %v2911, 0.0
      %v2944 = vsel %vm2271, %v2912, 0.0
      %v2945 = vsel %vm2272, %v2913, 0.0
      %v2946 = vsel %vm2273, %v2914, 0.0
      %v2947 = vsel %vm2274, %v2915, 0.0
      %v2948 = vsel %vm2275, %v2916, 0.0
      %v2949 = vsel %vm2276, %v2917, 0.0
      %v2950 = vsel %vm2261, 1, 0
      %v2951 = vsel %vm2262, 1, 0
      %v2952 = vsel %vm2263, 1, 0
      %v2953 = vsel %vm2264, 1, 0
      %v2954 = vsel %vm2265, 1, 0
      %v2955 = vsel %vm2266, 1, 0
      %v2956 = vsel %vm2267, 1, 0
      %v2957 = vsel %vm2268, 1, 0
      %v2958 = vsel %vm2269, 1, 0
      %v2959 = vsel %vm2270, 1, 0
      %v2960 = vsel %vm2271, 1, 0
      %v2961 = vsel %vm2272, 1, 0
      %v2962 = vsel %vm2273, 1, 0
      %v2963 = vsel %vm2274, 1, 0
      %v2964 = vsel %vm2275, 1, 0
      %v2965 = vsel %vm2276, 1, 0
      %v2966 = vsel %vm2597, 1e+30, %v2181
      %v2967 = vsel %vm2598, 1e+30, %v2182
      %v2968 = vsel %vm2599, 1e+30, %v2183
      %v2969 = vsel %vm2600, 1e+30, %v2184
      %v2970 = vsel %vm2601, 1e+30, %v2185
      %v2971 = vsel %vm2602, 1e+30, %v2186
      %v2972 = vsel %vm2603, 1e+30, %v2187
      %v2973 = vsel %vm2604, 1e+30, %v2188
      %v2974 = vsel %vm2605, 1e+30, %v2189
      %v2975 = vsel %vm2606, 1e+30, %v2190
      %v2976 = vsel %vm2607, 1e+30, %v2191
      %v2977 = vsel %vm2608, 1e+30, %v2192
      %v2978 = vsel %vm2609, 1e+30, %v2193
      %v2979 = vsel %vm2610, 1e+30, %v2194
      %v2980 = vsel %vm2611, 1e+30, %v2195
      %v2981 = vsel %vm2612, 1e+30, %v2196
      %v2982 = vsel %vm2613, 1e+30, %v2197
      %v2983 = vsel %vm2614, 1e+30, %v2198
      %v2984 = vsel %vm2615, 1e+30, %v2199
      %v2985 = vsel %vm2616, 1e+30, %v2200
      %v2986 = vsel %vm2617, 1e+30, %v2201
      %v2987 = vsel %vm2618, 1e+30, %v2202
      %v2988 = vsel %vm2619, 1e+30, %v2203
      %v2989 = vsel %vm2620, 1e+30, %v2204
      %v2990 = vsel %vm2621, 1e+30, %v2205
      %v2991 = vsel %vm2622, 1e+30, %v2206
      %v2992 = vsel %vm2623, 1e+30, %v2207
      %v2993 = vsel %vm2624, 1e+30, %v2208
      %v2994 = vsel %vm2625, 1e+30, %v2209
      %v2995 = vsel %vm2626, 1e+30, %v2210
      %v2996 = vsel %vm2627, 1e+30, %v2211
      %v2997 = vsel %vm2628, 1e+30, %v2212
      %v2998 = vmin.f32 %v2966, %v2967
      %2999 = vmin.xlane.f32.xlu0 %v2998
      %v3000 = vpop.xlane.xlu0 %2999
      %v3001 = vmin.f32 %v2968, %v2969
      %3002 = vmin.xlane.f32.xlu0 %v3001
      %v3003 = vpop.xlane.xlu0 %3002
      %v3004 = vmin.f32 %v2970, %v2971
      %3005 = vmin.xlane.f32.xlu0 %v3004
      %v3006 = vpop.xlane.xlu0 %3005
      %v3007 = vmin.f32 %v2972, %v2973
      %3008 = vmin.xlane.f32.xlu0 %v3007
      %v3009 = vpop.xlane.xlu0 %3008
      %v3010 = vmin.f32 %v2974, %v2975
      %3011 = vmin.xlane.f32.xlu0 %v3010
      %v3012 = vpop.xlane.xlu0 %3011
      %v3013 = vmin.f32 %v2976, %v2977
      %3014 = vmin.xlane.f32.xlu0 %v3013
      %v3015 = vpop.xlane.xlu0 %3014
      %v3016 = vmin.f32 %v2978, %v2979
      %3017 = vmin.xlane.f32.xlu0 %v3016
      %v3018 = vpop.xlane.xlu0 %3017
      %v3019 = vmin.f32 %v2980, %v2981
      %3020 = vmin.xlane.f32.xlu0 %v3019
      %v3021 = vpop.xlane.xlu0 %3020
      %v3022 = vmin.f32 %v2982, %v2983
      %3023 = vmin.xlane.f32.xlu0 %v3022
      %v3024 = vpop.xlane.xlu0 %3023
      %v3025 = vmin.f32 %v2984, %v2985
      %3026 = vmin.xlane.f32.xlu0 %v3025
      %v3027 = vpop.xlane.xlu0 %3026
      %v3028 = vmin.f32 %v2986, %v2987
      %3029 = vmin.xlane.f32.xlu0 %v3028
      %v3030 = vpop.xlane.xlu0 %3029
      %v3031 = vmin.f32 %v2988, %v2989
      %3032 = vmin.xlane.f32.xlu0 %v3031
      %v3033 = vpop.xlane.xlu0 %3032
      %v3034 = vmin.f32 %v2990, %v2991
      %3035 = vmin.xlane.f32.xlu0 %v3034
      %v3036 = vpop.xlane.xlu0 %3035
      %v3037 = vmin.f32 %v2992, %v2993
      %3038 = vmin.xlane.f32.xlu0 %v3037
      %v3039 = vpop.xlane.xlu0 %3038
      %v3040 = vmin.f32 %v2994, %v2995
      %3041 = vmin.xlane.f32.xlu0 %v3040
      %v3042 = vpop.xlane.xlu0 %3041
      %v3043 = vmin.f32 %v2996, %v2997
      %3044 = vmin.xlane.f32.xlu0 %v3043
      %v3045 = vpop.xlane.xlu0 %3044
      %vm3046 = vcmp.lt.f32.partialorder %v3000, 1e+30
      %vm3047 = vcmp.lt.f32.partialorder %v3003, 1e+30
      %vm3048 = vcmp.lt.f32.partialorder %v3006, 1e+30
      %vm3049 = vcmp.lt.f32.partialorder %v3009, 1e+30
      %vm3050 = vcmp.lt.f32.partialorder %v3012, 1e+30
      %vm3051 = vcmp.lt.f32.partialorder %v3015, 1e+30
      %vm3052 = vcmp.lt.f32.partialorder %v3018, 1e+30
      %vm3053 = vcmp.lt.f32.partialorder %v3021, 1e+30
      %vm3054 = vcmp.lt.f32.partialorder %v3024, 1e+30
      %vm3055 = vcmp.lt.f32.partialorder %v3027, 1e+30
      %vm3056 = vcmp.lt.f32.partialorder %v3030, 1e+30
      %vm3057 = vcmp.lt.f32.partialorder %v3033, 1e+30
      %vm3058 = vcmp.lt.f32.partialorder %v3036, 1e+30
      %vm3059 = vcmp.lt.f32.partialorder %v3039, 1e+30
      %vm3060 = vcmp.lt.f32.partialorder %v3042, 1e+30
      %vm3061 = vcmp.lt.f32.partialorder %v3045, 1e+30
      %vm3062 = vcmp.eq.f32.partialorder %v2966, %v3000
      %vm3063 = vcmp.eq.f32.partialorder %v2967, %v3000
      %vm3064 = vcmp.eq.f32.partialorder %v2968, %v3003
      %vm3065 = vcmp.eq.f32.partialorder %v2969, %v3003
      %vm3066 = vcmp.eq.f32.partialorder %v2970, %v3006
      %vm3067 = vcmp.eq.f32.partialorder %v2971, %v3006
      %vm3068 = vcmp.eq.f32.partialorder %v2972, %v3009
      %vm3069 = vcmp.eq.f32.partialorder %v2973, %v3009
      %vm3070 = vcmp.eq.f32.partialorder %v2974, %v3012
      %vm3071 = vcmp.eq.f32.partialorder %v2975, %v3012
      %vm3072 = vcmp.eq.f32.partialorder %v2976, %v3015
      %vm3073 = vcmp.eq.f32.partialorder %v2977, %v3015
      %vm3074 = vcmp.eq.f32.partialorder %v2978, %v3018
      %vm3075 = vcmp.eq.f32.partialorder %v2979, %v3018
      %vm3076 = vcmp.eq.f32.partialorder %v2980, %v3021
      %vm3077 = vcmp.eq.f32.partialorder %v2981, %v3021
      %vm3078 = vcmp.eq.f32.partialorder %v2982, %v3024
      %vm3079 = vcmp.eq.f32.partialorder %v2983, %v3024
      %vm3080 = vcmp.eq.f32.partialorder %v2984, %v3027
      %vm3081 = vcmp.eq.f32.partialorder %v2985, %v3027
      %vm3082 = vcmp.eq.f32.partialorder %v2986, %v3030
      %vm3083 = vcmp.eq.f32.partialorder %v2987, %v3030
      %vm3084 = vcmp.eq.f32.partialorder %v2988, %v3033
      %vm3085 = vcmp.eq.f32.partialorder %v2989, %v3033
      %vm3086 = vcmp.eq.f32.partialorder %v2990, %v3036
      %vm3087 = vcmp.eq.f32.partialorder %v2991, %v3036
      %vm3088 = vcmp.eq.f32.partialorder %v2992, %v3039
      %vm3089 = vcmp.eq.f32.partialorder %v2993, %v3039
      %vm3090 = vcmp.eq.f32.partialorder %v2994, %v3042
      %vm3091 = vcmp.eq.f32.partialorder %v2995, %v3042
      %vm3092 = vcmp.eq.f32.partialorder %v2996, %v3045
      %vm3093 = vcmp.eq.f32.partialorder %v2997, %v3045
      %v3094 = vsel %vm3062, %v899, 256
      %v3095 = vsel %vm3063, %v900, 256
      %v3096 = vsel %vm3064, %v899, 256
      %v3097 = vsel %vm3065, %v900, 256
      %v3098 = vsel %vm3066, %v899, 256
      %v3099 = vsel %vm3067, %v900, 256
      %v3100 = vsel %vm3068, %v899, 256
      %v3101 = vsel %vm3069, %v900, 256
      %v3102 = vsel %vm3070, %v899, 256
      %v3103 = vsel %vm3071, %v900, 256
      %v3104 = vsel %vm3072, %v899, 256
      %v3105 = vsel %vm3073, %v900, 256
      %v3106 = vsel %vm3074, %v899, 256
      %v3107 = vsel %vm3075, %v900, 256
      %v3108 = vsel %vm3076, %v899, 256
      %v3109 = vsel %vm3077, %v900, 256
      %v3110 = vsel %vm3078, %v899, 256
      %v3111 = vsel %vm3079, %v900, 256
      %v3112 = vsel %vm3080, %v899, 256
      %v3113 = vsel %vm3081, %v900, 256
      %v3114 = vsel %vm3082, %v899, 256
      %v3115 = vsel %vm3083, %v900, 256
      %v3116 = vsel %vm3084, %v899, 256
      %v3117 = vsel %vm3085, %v900, 256
      %v3118 = vsel %vm3086, %v899, 256
      %v3119 = vsel %vm3087, %v900, 256
      %v3120 = vsel %vm3088, %v899, 256
      %v3121 = vsel %vm3089, %v900, 256
      %v3122 = vsel %vm3090, %v899, 256
      %v3123 = vsel %vm3091, %v900, 256
      %v3124 = vsel %vm3092, %v899, 256
      %v3125 = vsel %vm3093, %v900, 256
      %vm3126 = vcmp.lt.s32.totalorder %v3094, %v3095
      %v3127 = vsel %vm3126, %v3094, %v3095
      %v3128 = vand.u32 %v3127, 65535
      %v3129 = vshra.s32 %v3127, 16
      %v3130 = vcvt.s32.f32 %v3128
      %v3131 = vcvt.s32.f32 %v3129
      %3132 = vmin.xlane.f32.xlu0 %v3131
      %v3133 = vpop.xlane.xlu0 %3132
      %vm3134 = vcmp.eq.f32.partialorder %v3131, %v3133
      %v3135 = vsel %vm3134, %v3130, inf
      %3136 = vmin.xlane.f32.xlu0 %v3135
      %v3137 = vpop.xlane.xlu0 %3136
      %v3138 = vcvt.f32.s32 %v3137
      %v3139 = vcvt.f32.s32 %v3133
      %v3140 = vshll.u32 %v3139, 16
      %v3141 = vadd.s32 %v3140, %v3138
      %vm3142 = vcmp.lt.s32.totalorder %v3096, %v3097
      %v3143 = vsel %vm3142, %v3096, %v3097
      %v3144 = vand.u32 %v3143, 65535
      %v3145 = vshra.s32 %v3143, 16
      %v3146 = vcvt.s32.f32 %v3144
      %v3147 = vcvt.s32.f32 %v3145
      %3148 = vmin.xlane.f32.xlu0 %v3147
      %v3149 = vpop.xlane.xlu0 %3148
      %vm3150 = vcmp.eq.f32.partialorder %v3147, %v3149
      %v3151 = vsel %vm3150, %v3146, inf
      %3152 = vmin.xlane.f32.xlu0 %v3151
      %v3153 = vpop.xlane.xlu0 %3152
      %v3154 = vcvt.f32.s32 %v3153
      %v3155 = vcvt.f32.s32 %v3149
      %v3156 = vshll.u32 %v3155, 16
      %v3157 = vadd.s32 %v3156, %v3154
      %vm3158 = vcmp.lt.s32.totalorder %v3098, %v3099
      %v3159 = vsel %vm3158, %v3098, %v3099
      %v3160 = vand.u32 %v3159, 65535
      %v3161 = vshra.s32 %v3159, 16
      %v3162 = vcvt.s32.f32 %v3160
      %v3163 = vcvt.s32.f32 %v3161
      %3164 = vmin.xlane.f32.xlu0 %v3163
      %v3165 = vpop.xlane.xlu0 %3164
      %vm3166 = vcmp.eq.f32.partialorder %v3163, %v3165
      %v3167 = vsel %vm3166, %v3162, inf
      %3168 = vmin.xlane.f32.xlu0 %v3167
      %v3169 = vpop.xlane.xlu0 %3168
      %v3170 = vcvt.f32.s32 %v3169
      %v3171 = vcvt.f32.s32 %v3165
      %v3172 = vshll.u32 %v3171, 16
      %v3173 = vadd.s32 %v3172, %v3170
      %vm3174 = vcmp.lt.s32.totalorder %v3100, %v3101
      %v3175 = vsel %vm3174, %v3100, %v3101
      %v3176 = vand.u32 %v3175, 65535
      %v3177 = vshra.s32 %v3175, 16
      %v3178 = vcvt.s32.f32 %v3176
      %v3179 = vcvt.s32.f32 %v3177
      %3180 = vmin.xlane.f32.xlu0 %v3179
      %v3181 = vpop.xlane.xlu0 %3180
      %vm3182 = vcmp.eq.f32.partialorder %v3179, %v3181
      %v3183 = vsel %vm3182, %v3178, inf
      %3184 = vmin.xlane.f32.xlu0 %v3183
      %v3185 = vpop.xlane.xlu0 %3184
      %v3186 = vcvt.f32.s32 %v3185
      %v3187 = vcvt.f32.s32 %v3181
      %v3188 = vshll.u32 %v3187, 16
      %v3189 = vadd.s32 %v3188, %v3186
      %vm3190 = vcmp.lt.s32.totalorder %v3102, %v3103
      %v3191 = vsel %vm3190, %v3102, %v3103
      %v3192 = vand.u32 %v3191, 65535
      %v3193 = vshra.s32 %v3191, 16
      %v3194 = vcvt.s32.f32 %v3192
      %v3195 = vcvt.s32.f32 %v3193
      %3196 = vmin.xlane.f32.xlu0 %v3195
      %v3197 = vpop.xlane.xlu0 %3196
      %vm3198 = vcmp.eq.f32.partialorder %v3195, %v3197
      %v3199 = vsel %vm3198, %v3194, inf
      %3200 = vmin.xlane.f32.xlu0 %v3199
      %v3201 = vpop.xlane.xlu0 %3200
      %v3202 = vcvt.f32.s32 %v3201
      %v3203 = vcvt.f32.s32 %v3197
      %v3204 = vshll.u32 %v3203, 16
      %v3205 = vadd.s32 %v3204, %v3202
      %vm3206 = vcmp.lt.s32.totalorder %v3104, %v3105
      %v3207 = vsel %vm3206, %v3104, %v3105
      %v3208 = vand.u32 %v3207, 65535
      %v3209 = vshra.s32 %v3207, 16
      %v3210 = vcvt.s32.f32 %v3208
      %v3211 = vcvt.s32.f32 %v3209
      %3212 = vmin.xlane.f32.xlu0 %v3211
      %v3213 = vpop.xlane.xlu0 %3212
      %vm3214 = vcmp.eq.f32.partialorder %v3211, %v3213
      %v3215 = vsel %vm3214, %v3210, inf
      %3216 = vmin.xlane.f32.xlu0 %v3215
      %v3217 = vpop.xlane.xlu0 %3216
      %v3218 = vcvt.f32.s32 %v3217
      %v3219 = vcvt.f32.s32 %v3213
      %v3220 = vshll.u32 %v3219, 16
      %v3221 = vadd.s32 %v3220, %v3218
      %vm3222 = vcmp.lt.s32.totalorder %v3106, %v3107
      %v3223 = vsel %vm3222, %v3106, %v3107
      %v3224 = vand.u32 %v3223, 65535
      %v3225 = vshra.s32 %v3223, 16
      %v3226 = vcvt.s32.f32 %v3224
      %v3227 = vcvt.s32.f32 %v3225
      %3228 = vmin.xlane.f32.xlu0 %v3227
      %v3229 = vpop.xlane.xlu0 %3228
      %vm3230 = vcmp.eq.f32.partialorder %v3227, %v3229
      %v3231 = vsel %vm3230, %v3226, inf
      %3232 = vmin.xlane.f32.xlu0 %v3231
      %v3233 = vpop.xlane.xlu0 %3232
      %v3234 = vcvt.f32.s32 %v3233
      %v3235 = vcvt.f32.s32 %v3229
      %v3236 = vshll.u32 %v3235, 16
      %v3237 = vadd.s32 %v3236, %v3234
      %vm3238 = vcmp.lt.s32.totalorder %v3108, %v3109
      %v3239 = vsel %vm3238, %v3108, %v3109
      %v3240 = vand.u32 %v3239, 65535
      %v3241 = vshra.s32 %v3239, 16
      %v3242 = vcvt.s32.f32 %v3240
      %v3243 = vcvt.s32.f32 %v3241
      %3244 = vmin.xlane.f32.xlu0 %v3243
      %v3245 = vpop.xlane.xlu0 %3244
      %vm3246 = vcmp.eq.f32.partialorder %v3243, %v3245
      %v3247 = vsel %vm3246, %v3242, inf
      %3248 = vmin.xlane.f32.xlu0 %v3247
      %v3249 = vpop.xlane.xlu0 %3248
      %v3250 = vcvt.f32.s32 %v3249
      %v3251 = vcvt.f32.s32 %v3245
      %v3252 = vshll.u32 %v3251, 16
      %v3253 = vadd.s32 %v3252, %v3250
      %vm3254 = vcmp.lt.s32.totalorder %v3110, %v3111
      %v3255 = vsel %vm3254, %v3110, %v3111
      %v3256 = vand.u32 %v3255, 65535
      %v3257 = vshra.s32 %v3255, 16
      %v3258 = vcvt.s32.f32 %v3256
      %v3259 = vcvt.s32.f32 %v3257
      %3260 = vmin.xlane.f32.xlu0 %v3259
      %v3261 = vpop.xlane.xlu0 %3260
      %vm3262 = vcmp.eq.f32.partialorder %v3259, %v3261
      %v3263 = vsel %vm3262, %v3258, inf
      %3264 = vmin.xlane.f32.xlu0 %v3263
      %v3265 = vpop.xlane.xlu0 %3264
      %v3266 = vcvt.f32.s32 %v3265
      %v3267 = vcvt.f32.s32 %v3261
      %v3268 = vshll.u32 %v3267, 16
      %v3269 = vadd.s32 %v3268, %v3266
      %vm3270 = vcmp.lt.s32.totalorder %v3112, %v3113
      %v3271 = vsel %vm3270, %v3112, %v3113
      %v3272 = vand.u32 %v3271, 65535
      %v3273 = vshra.s32 %v3271, 16
      %v3274 = vcvt.s32.f32 %v3272
      %v3275 = vcvt.s32.f32 %v3273
      %3276 = vmin.xlane.f32.xlu0 %v3275
      %v3277 = vpop.xlane.xlu0 %3276
      %vm3278 = vcmp.eq.f32.partialorder %v3275, %v3277
      %v3279 = vsel %vm3278, %v3274, inf
      %3280 = vmin.xlane.f32.xlu0 %v3279
      %v3281 = vpop.xlane.xlu0 %3280
      %v3282 = vcvt.f32.s32 %v3281
      %v3283 = vcvt.f32.s32 %v3277
      %v3284 = vshll.u32 %v3283, 16
      %v3285 = vadd.s32 %v3284, %v3282
      %vm3286 = vcmp.lt.s32.totalorder %v3114, %v3115
      %v3287 = vsel %vm3286, %v3114, %v3115
      %v3288 = vand.u32 %v3287, 65535
      %v3289 = vshra.s32 %v3287, 16
      %v3290 = vcvt.s32.f32 %v3288
      %v3291 = vcvt.s32.f32 %v3289
      %3292 = vmin.xlane.f32.xlu0 %v3291
      %v3293 = vpop.xlane.xlu0 %3292
      %vm3294 = vcmp.eq.f32.partialorder %v3291, %v3293
      %v3295 = vsel %vm3294, %v3290, inf
      %3296 = vmin.xlane.f32.xlu0 %v3295
      %v3297 = vpop.xlane.xlu0 %3296
      %v3298 = vcvt.f32.s32 %v3297
      %v3299 = vcvt.f32.s32 %v3293
      %v3300 = vshll.u32 %v3299, 16
      %v3301 = vadd.s32 %v3300, %v3298
      %vm3302 = vcmp.lt.s32.totalorder %v3116, %v3117
      %v3303 = vsel %vm3302, %v3116, %v3117
      %v3304 = vand.u32 %v3303, 65535
      %v3305 = vshra.s32 %v3303, 16
      %v3306 = vcvt.s32.f32 %v3304
      %v3307 = vcvt.s32.f32 %v3305
      %3308 = vmin.xlane.f32.xlu0 %v3307
      %v3309 = vpop.xlane.xlu0 %3308
      %vm3310 = vcmp.eq.f32.partialorder %v3307, %v3309
      %v3311 = vsel %vm3310, %v3306, inf
      %3312 = vmin.xlane.f32.xlu0 %v3311
      %v3313 = vpop.xlane.xlu0 %3312
      %v3314 = vcvt.f32.s32 %v3313
      %v3315 = vcvt.f32.s32 %v3309
      %v3316 = vshll.u32 %v3315, 16
      %v3317 = vadd.s32 %v3316, %v3314
      %vm3318 = vcmp.lt.s32.totalorder %v3118, %v3119
      %v3319 = vsel %vm3318, %v3118, %v3119
      %v3320 = vand.u32 %v3319, 65535
      %v3321 = vshra.s32 %v3319, 16
      %v3322 = vcvt.s32.f32 %v3320
      %v3323 = vcvt.s32.f32 %v3321
      %3324 = vmin.xlane.f32.xlu0 %v3323
      %v3325 = vpop.xlane.xlu0 %3324
      %vm3326 = vcmp.eq.f32.partialorder %v3323, %v3325
      %v3327 = vsel %vm3326, %v3322, inf
      %3328 = vmin.xlane.f32.xlu0 %v3327
      %v3329 = vpop.xlane.xlu0 %3328
      %v3330 = vcvt.f32.s32 %v3329
      %v3331 = vcvt.f32.s32 %v3325
      %v3332 = vshll.u32 %v3331, 16
      %v3333 = vadd.s32 %v3332, %v3330
      %vm3334 = vcmp.lt.s32.totalorder %v3120, %v3121
      %v3335 = vsel %vm3334, %v3120, %v3121
      %v3336 = vand.u32 %v3335, 65535
      %v3337 = vshra.s32 %v3335, 16
      %v3338 = vcvt.s32.f32 %v3336
      %v3339 = vcvt.s32.f32 %v3337
      %3340 = vmin.xlane.f32.xlu0 %v3339
      %v3341 = vpop.xlane.xlu0 %3340
      %vm3342 = vcmp.eq.f32.partialorder %v3339, %v3341
      %v3343 = vsel %vm3342, %v3338, inf
      %3344 = vmin.xlane.f32.xlu0 %v3343
      %v3345 = vpop.xlane.xlu0 %3344
      %v3346 = vcvt.f32.s32 %v3345
      %v3347 = vcvt.f32.s32 %v3341
      %v3348 = vshll.u32 %v3347, 16
      %v3349 = vadd.s32 %v3348, %v3346
      %vm3350 = vcmp.lt.s32.totalorder %v3122, %v3123
      %v3351 = vsel %vm3350, %v3122, %v3123
      %v3352 = vand.u32 %v3351, 65535
      %v3353 = vshra.s32 %v3351, 16
      %v3354 = vcvt.s32.f32 %v3352
      %v3355 = vcvt.s32.f32 %v3353
      %3356 = vmin.xlane.f32.xlu0 %v3355
      %v3357 = vpop.xlane.xlu0 %3356
      %vm3358 = vcmp.eq.f32.partialorder %v3355, %v3357
      %v3359 = vsel %vm3358, %v3354, inf
      %3360 = vmin.xlane.f32.xlu0 %v3359
      %v3361 = vpop.xlane.xlu0 %3360
      %v3362 = vcvt.f32.s32 %v3361
      %v3363 = vcvt.f32.s32 %v3357
      %v3364 = vshll.u32 %v3363, 16
      %v3365 = vadd.s32 %v3364, %v3362
      %vm3366 = vcmp.lt.s32.totalorder %v3124, %v3125
      %v3367 = vsel %vm3366, %v3124, %v3125
      %v3368 = vand.u32 %v3367, 65535
      %v3369 = vshra.s32 %v3367, 16
      %v3370 = vcvt.s32.f32 %v3368
      %v3371 = vcvt.s32.f32 %v3369
      %3372 = vmin.xlane.f32.xlu0 %v3371
      %v3373 = vpop.xlane.xlu0 %3372
      %vm3374 = vcmp.eq.f32.partialorder %v3371, %v3373
      %v3375 = vsel %vm3374, %v3370, inf
      %3376 = vmin.xlane.f32.xlu0 %v3375
      %v3377 = vpop.xlane.xlu0 %3376
      %v3378 = vcvt.f32.s32 %v3377
      %v3379 = vcvt.f32.s32 %v3373
      %v3380 = vshll.u32 %v3379, 16
      %v3381 = vadd.s32 %v3380, %v3378
      %vm3382 = vcmp.eq.s32.totalorder %v899, %v3141
      %vm3383 = vcmp.eq.s32.totalorder %v900, %v3141
      %vm3384 = vcmp.eq.s32.totalorder %v899, %v3157
      %vm3385 = vcmp.eq.s32.totalorder %v900, %v3157
      %vm3386 = vcmp.eq.s32.totalorder %v899, %v3173
      %vm3387 = vcmp.eq.s32.totalorder %v900, %v3173
      %vm3388 = vcmp.eq.s32.totalorder %v899, %v3189
      %vm3389 = vcmp.eq.s32.totalorder %v900, %v3189
      %vm3390 = vcmp.eq.s32.totalorder %v899, %v3205
      %vm3391 = vcmp.eq.s32.totalorder %v900, %v3205
      %vm3392 = vcmp.eq.s32.totalorder %v899, %v3221
      %vm3393 = vcmp.eq.s32.totalorder %v900, %v3221
      %vm3394 = vcmp.eq.s32.totalorder %v899, %v3237
      %vm3395 = vcmp.eq.s32.totalorder %v900, %v3237
      %vm3396 = vcmp.eq.s32.totalorder %v899, %v3253
      %vm3397 = vcmp.eq.s32.totalorder %v900, %v3253
      %vm3398 = vcmp.eq.s32.totalorder %v899, %v3269
      %vm3399 = vcmp.eq.s32.totalorder %v900, %v3269
      %vm3400 = vcmp.eq.s32.totalorder %v899, %v3285
      %vm3401 = vcmp.eq.s32.totalorder %v900, %v3285
      %vm3402 = vcmp.eq.s32.totalorder %v899, %v3301
      %vm3403 = vcmp.eq.s32.totalorder %v900, %v3301
      %vm3404 = vcmp.eq.s32.totalorder %v899, %v3317
      %vm3405 = vcmp.eq.s32.totalorder %v900, %v3317
      %vm3406 = vcmp.eq.s32.totalorder %v899, %v3333
      %vm3407 = vcmp.eq.s32.totalorder %v900, %v3333
      %vm3408 = vcmp.eq.s32.totalorder %v899, %v3349
      %vm3409 = vcmp.eq.s32.totalorder %v900, %v3349
      %vm3410 = vcmp.eq.s32.totalorder %v899, %v3365
      %vm3411 = vcmp.eq.s32.totalorder %v900, %v3365
      %vm3412 = vcmp.eq.s32.totalorder %v899, %v3381
      %vm3413 = vcmp.eq.s32.totalorder %v900, %v3381
      %v3414 = vsel %vm3382, 1, 0
      %v3415 = vsel %vm3383, 1, 0
      %v3416 = vsel %vm3384, 1, 0
      %v3417 = vsel %vm3385, 1, 0
      %v3418 = vsel %vm3386, 1, 0
      %v3419 = vsel %vm3387, 1, 0
      %v3420 = vsel %vm3388, 1, 0
      %v3421 = vsel %vm3389, 1, 0
      %v3422 = vsel %vm3390, 1, 0
      %v3423 = vsel %vm3391, 1, 0
      %v3424 = vsel %vm3392, 1, 0
      %v3425 = vsel %vm3393, 1, 0
      %v3426 = vsel %vm3394, 1, 0
      %v3427 = vsel %vm3395, 1, 0
      %v3428 = vsel %vm3396, 1, 0
      %v3429 = vsel %vm3397, 1, 0
      %v3430 = vsel %vm3398, 1, 0
      %v3431 = vsel %vm3399, 1, 0
      %v3432 = vsel %vm3400, 1, 0
      %v3433 = vsel %vm3401, 1, 0
      %v3434 = vsel %vm3402, 1, 0
      %v3435 = vsel %vm3403, 1, 0
      %v3436 = vsel %vm3404, 1, 0
      %v3437 = vsel %vm3405, 1, 0
      %v3438 = vsel %vm3406, 1, 0
      %v3439 = vsel %vm3407, 1, 0
      %v3440 = vsel %vm3408, 1, 0
      %v3441 = vsel %vm3409, 1, 0
      %v3442 = vsel %vm3410, 1, 0
      %v3443 = vsel %vm3411, 1, 0
      %v3444 = vsel %vm3412, 1, 0
      %v3445 = vsel %vm3413, 1, 0
      %v3446 = vcvt.s32.f32 %v3414
      %v3447 = vcvt.s32.f32 %v3415
      %v3448 = vcvt.s32.f32 %v3416
      %v3449 = vcvt.s32.f32 %v3417
      %v3450 = vcvt.s32.f32 %v3418
      %v3451 = vcvt.s32.f32 %v3419
      %v3452 = vcvt.s32.f32 %v3420
      %v3453 = vcvt.s32.f32 %v3421
      %v3454 = vcvt.s32.f32 %v3422
      %v3455 = vcvt.s32.f32 %v3423
      %v3456 = vcvt.s32.f32 %v3424
      %v3457 = vcvt.s32.f32 %v3425
      %v3458 = vcvt.s32.f32 %v3426
      %v3459 = vcvt.s32.f32 %v3427
      %v3460 = vcvt.s32.f32 %v3428
      %v3461 = vcvt.s32.f32 %v3429
      %v3462 = vcvt.s32.f32 %v3430
      %v3463 = vcvt.s32.f32 %v3431
      %v3464 = vcvt.s32.f32 %v3432
      %v3465 = vcvt.s32.f32 %v3433
      %v3466 = vcvt.s32.f32 %v3434
      %v3467 = vcvt.s32.f32 %v3435
      %v3468 = vcvt.s32.f32 %v3436
      %v3469 = vcvt.s32.f32 %v3437
      %v3470 = vcvt.s32.f32 %v3438
      %v3471 = vcvt.s32.f32 %v3439
      %v3472 = vcvt.s32.f32 %v3440
      %v3473 = vcvt.s32.f32 %v3441
      %v3474 = vcvt.s32.f32 %v3442
      %v3475 = vcvt.s32.f32 %v3443
      %v3476 = vcvt.s32.f32 %v3444
      %v3477 = vcvt.s32.f32 %v3445
      %3478 = vmatprep.subr.mxu0 0.0
      %3479 = vmatpush1.msra.mxu0 %v1404
      %3480 = vmatprep.subr.mxu0 0.0
      %3481 = vmatpush1.msra.mxu0 %v1403
      %3482 = vmatprep.subr.mxu0 0.0
      %3483 = vmatpush1.msra.mxu0 %v1402
      %3484 = vmatprep.subr.mxu0 0.0
      %3485 = vmatpush1.msra.mxu0 %v1401
      %3486 = vmatprep.subr.mxu0 0.0
      %3487 = vmatpush1.msra.mxu0 %v1400
      %3488 = vmatprep.subr.mxu0 0.0
      %3489 = vmatpush1.msra.mxu0 %v1399
      %3490 = vmatprep.subr.mxu0 0.0
      %3491 = vmatpush1.msra.mxu0 %v1398
      %3492 = vmatprep.subr.mxu0 0.0
      %3493 = vmatpush1.msra.mxu0 %v1397
      %3494 = vmatprep.subr.mxu0 0.0
      %3495 = vmatpush1.msra.mxu0 %v1396
      %3496 = vmatprep.subr.mxu0 0.0
      %3497 = vmatpush1.msra.mxu0 %v1395
      %3498 = vmatprep.subr.mxu0 0.0
      %3499 = vmatpush1.msra.mxu0 %v1394
      %3500 = vmatprep.subr.mxu0 0.0
      %3501 = vmatpush1.msra.mxu0 %v1393
      %3502 = vmatprep.subr.mxu0 0.0
      %3503 = vmatpush1.msra.mxu0 %v1392
      %3504 = vmatprep.subr.mxu0 0.0
      %3505 = vmatpush1.msra.mxu0 %v1391
      %3506 = vmatprep.subr.mxu0 0.0
      %3507 = vmatpush1.msra.mxu0 %v1390
      %3508 = vmatprep.subr.mxu0 0.0
      %3509 = vmatpush1.msra.mxu0 %v1389
      %3510 = vmatprep.subr.mxu0 0.0
      %3511 = vmatpush2.msra.mxu0 %v1420
      %3512 = vmatprep.subr.mxu0 0.0
      %3513 = vmatpush2.msra.mxu0 %v1419
      %3514 = vmatprep.subr.mxu0 0.0
      %3515 = vmatpush2.msra.mxu0 %v1418
      %3516 = vmatprep.subr.mxu0 0.0
      %3517 = vmatpush2.msra.mxu0 %v1417
      %3518 = vmatprep.subr.mxu0 0.0
      %3519 = vmatpush2.msra.mxu0 %v1416
      %3520 = vmatprep.subr.mxu0 0.0
      %3521 = vmatpush2.msra.mxu0 %v1415
      %3522 = vmatprep.subr.mxu0 0.0
      %3523 = vmatpush2.msra.mxu0 %v1414
      %3524 = vmatprep.subr.mxu0 0.0
      %3525 = vmatpush2.msra.mxu0 %v1413
      %3526 = vmatprep.subr.mxu0 0.0
      %3527 = vmatpush2.msra.mxu0 %v1412
      %3528 = vmatprep.subr.mxu0 0.0
      %3529 = vmatpush2.msra.mxu0 %v1411
      %3530 = vmatprep.subr.mxu0 0.0
      %3531 = vmatpush2.msra.mxu0 %v1410
      %3532 = vmatprep.subr.mxu0 0.0
      %3533 = vmatpush2.msra.mxu0 %v1409
      %3534 = vmatprep.subr.mxu0 0.0
      %3535 = vmatpush2.msra.mxu0 %v1408
      %3536 = vmatprep.subr.mxu0 0.0
      %3537 = vmatpush2.msra.mxu0 %v1407
      %3538 = vmatprep.subr.mxu0 0.0
      %3539 = vmatpush2.msra.mxu0 %v1406
      %3540 = vmatprep.subr.mxu0 0.0
      %3541 = vmatpush2.msra.mxu0 %v1405
      %3542 = vmatprep.mubr.f32.mxu0 %v3447
      %3543 = vmatmul.mubr.f32.gmra.mxu0 %v3446
      %v3544 = vpop.f32.mrf.mxu0
      %v3545 = vadd.f32 0.0, %v3544
      %v3546 = vpop.f32.mrf.mxu0
      %3547 = vmatprep.mubr.f32.mxu0 %v3449
      %3548 = vmatmul.mubr.f32.gmra.mxu0 %v3448
      %v3549 = vpop.f32.mrf.mxu0
      %v3550 = vadd.f32 0.0, %v3549
      %v3551 = vpop.f32.mrf.mxu0
      %3552 = vmatprep.mubr.f32.mxu0 %v3451
      %3553 = vmatmul.mubr.f32.gmra.mxu0 %v3450
      %v3554 = vpop.f32.mrf.mxu0
      %v3555 = vadd.f32 0.0, %v3554
      %v3556 = vpop.f32.mrf.mxu0
      %3557 = vmatprep.mubr.f32.mxu0 %v3453
      %3558 = vmatmul.mubr.f32.gmra.mxu0 %v3452
      %v3559 = vpop.f32.mrf.mxu0
      %v3560 = vadd.f32 0.0, %v3559
      %v3561 = vpop.f32.mrf.mxu0
      %3562 = vmatprep.mubr.f32.mxu0 %v3455
      %3563 = vmatmul.mubr.f32.gmra.mxu0 %v3454
      %v3564 = vpop.f32.mrf.mxu0
      %v3565 = vadd.f32 0.0, %v3564
      %v3566 = vpop.f32.mrf.mxu0
      %3567 = vmatprep.mubr.f32.mxu0 %v3457
      %3568 = vmatmul.mubr.f32.gmra.mxu0 %v3456
      %v3569 = vpop.f32.mrf.mxu0
      %v3570 = vadd.f32 0.0, %v3569
      %v3571 = vpop.f32.mrf.mxu0
      %3572 = vmatprep.mubr.f32.mxu0 %v3459
      %3573 = vmatmul.mubr.f32.gmra.mxu0 %v3458
      %v3574 = vpop.f32.mrf.mxu0
      %v3575 = vadd.f32 0.0, %v3574
      %v3576 = vpop.f32.mrf.mxu0
      %3577 = vmatprep.mubr.f32.mxu0 %v3461
      %3578 = vmatmul.mubr.f32.gmra.mxu0 %v3460
      %v3579 = vpop.f32.mrf.mxu0
      %v3580 = vadd.f32 0.0, %v3579
      %v3581 = vpop.f32.mrf.mxu0
      %3582 = vmatprep.mubr.f32.mxu0 %v3463
      %3583 = vmatmul.mubr.f32.gmra.mxu0 %v3462
      %v3584 = vpop.f32.mrf.mxu0
      %v3585 = vadd.f32 0.0, %v3584
      %v3586 = vpop.f32.mrf.mxu0
      %3587 = vmatprep.mubr.f32.mxu0 %v3465
      %3588 = vmatmul.mubr.f32.gmra.mxu0 %v3464
      %v3589 = vpop.f32.mrf.mxu0
      %v3590 = vadd.f32 0.0, %v3589
      %v3591 = vpop.f32.mrf.mxu0
      %3592 = vmatprep.mubr.f32.mxu0 %v3467
      %3593 = vmatmul.mubr.f32.gmra.mxu0 %v3466
      %v3594 = vpop.f32.mrf.mxu0
      %v3595 = vadd.f32 0.0, %v3594
      %v3596 = vpop.f32.mrf.mxu0
      %3597 = vmatprep.mubr.f32.mxu0 %v3469
      %3598 = vmatmul.mubr.f32.gmra.mxu0 %v3468
      %v3599 = vpop.f32.mrf.mxu0
      %v3600 = vadd.f32 0.0, %v3599
      %v3601 = vpop.f32.mrf.mxu0
      %3602 = vmatprep.mubr.f32.mxu0 %v3471
      %3603 = vmatmul.mubr.f32.gmra.mxu0 %v3470
      %v3604 = vpop.f32.mrf.mxu0
      %v3605 = vadd.f32 0.0, %v3604
      %v3606 = vpop.f32.mrf.mxu0
      %3607 = vmatprep.mubr.f32.mxu0 %v3473
      %3608 = vmatmul.mubr.f32.gmra.mxu0 %v3472
      %v3609 = vpop.f32.mrf.mxu0
      %v3610 = vadd.f32 0.0, %v3609
      %v3611 = vpop.f32.mrf.mxu0
      %3612 = vmatprep.mubr.f32.mxu0 %v3475
      %3613 = vmatmul.mubr.f32.gmra.mxu0 %v3474
      %v3614 = vpop.f32.mrf.mxu0
      %v3615 = vadd.f32 0.0, %v3614
      %v3616 = vpop.f32.mrf.mxu0
      %3617 = vmatprep.mubr.f32.mxu0 %v3477
      %3618 = vmatmul.mubr.f32.gmra.mxu0 %v3476
      %v3619 = vpop.f32.mrf.mxu0
      %v3620 = vadd.f32 0.0, %v3619
      %v3621 = vpop.f32.mrf.mxu0
      %3622 = vdwg.mxu0
      %v3623 = vmul.f32 %v3545, %v1311
      %v3624 = vmul.f32 %v3550, %v1316
      %v3625 = vmul.f32 %v3555, %v1321
      %v3626 = vmul.f32 %v3560, %v1326
      %v3627 = vmul.f32 %v3565, %v1331
      %v3628 = vmul.f32 %v3570, %v1336
      %v3629 = vmul.f32 %v3575, %v1341
      %v3630 = vmul.f32 %v3580, %v1346
      %v3631 = vmul.f32 %v3585, %v1351
      %v3632 = vmul.f32 %v3590, %v1356
      %v3633 = vmul.f32 %v3595, %v1361
      %v3634 = vmul.f32 %v3600, %v1366
      %v3635 = vmul.f32 %v3605, %v1371
      %v3636 = vmul.f32 %v3610, %v1376
      %v3637 = vmul.f32 %v3615, %v1381
      %v3638 = vmul.f32 %v3620, %v1386
      %v3639 = vsel %vm1191, %v3623, 0.0
      %3640 = vadd.xlane.f32.xlu0 %v3639
      %v3641 = vpop.xlane.xlu0 %3640
      %v3642 = vsel %vm1191, %v3624, 0.0
      %3643 = vadd.xlane.f32.xlu0 %v3642
      %v3644 = vpop.xlane.xlu0 %3643
      %v3645 = vsel %vm1191, %v3625, 0.0
      %3646 = vadd.xlane.f32.xlu0 %v3645
      %v3647 = vpop.xlane.xlu0 %3646
      %v3648 = vsel %vm1191, %v3626, 0.0
      %3649 = vadd.xlane.f32.xlu0 %v3648
      %v3650 = vpop.xlane.xlu0 %3649
      %v3651 = vsel %vm1191, %v3627, 0.0
      %3652 = vadd.xlane.f32.xlu0 %v3651
      %v3653 = vpop.xlane.xlu0 %3652
      %v3654 = vsel %vm1191, %v3628, 0.0
      %3655 = vadd.xlane.f32.xlu0 %v3654
      %v3656 = vpop.xlane.xlu0 %3655
      %v3657 = vsel %vm1191, %v3629, 0.0
      %3658 = vadd.xlane.f32.xlu0 %v3657
      %v3659 = vpop.xlane.xlu0 %3658
      %v3660 = vsel %vm1191, %v3630, 0.0
      %3661 = vadd.xlane.f32.xlu0 %v3660
      %v3662 = vpop.xlane.xlu0 %3661
      %v3663 = vsel %vm1191, %v3631, 0.0
      %3664 = vadd.xlane.f32.xlu0 %v3663
      %v3665 = vpop.xlane.xlu0 %3664
      %v3666 = vsel %vm1191, %v3632, 0.0
      %3667 = vadd.xlane.f32.xlu0 %v3666
      %v3668 = vpop.xlane.xlu0 %3667
      %v3669 = vsel %vm1191, %v3633, 0.0
      %3670 = vadd.xlane.f32.xlu0 %v3669
      %v3671 = vpop.xlane.xlu0 %3670
      %v3672 = vsel %vm1191, %v3634, 0.0
      %3673 = vadd.xlane.f32.xlu0 %v3672
      %v3674 = vpop.xlane.xlu0 %3673
      %v3675 = vsel %vm1191, %v3635, 0.0
      %3676 = vadd.xlane.f32.xlu0 %v3675
      %v3677 = vpop.xlane.xlu0 %3676
      %v3678 = vsel %vm1191, %v3636, 0.0
      %3679 = vadd.xlane.f32.xlu0 %v3678
      %v3680 = vpop.xlane.xlu0 %3679
      %v3681 = vsel %vm1191, %v3637, 0.0
      %3682 = vadd.xlane.f32.xlu0 %v3681
      %v3683 = vpop.xlane.xlu0 %3682
      %v3684 = vsel %vm1191, %v3638, 0.0
      %3685 = vadd.xlane.f32.xlu0 %v3684
      %v3686 = vpop.xlane.xlu0 %3685
      %v3687 = vadd.f32 %v3641, %v2115
      %v3688 = vadd.f32 %v3644, %v2115
      %v3689 = vadd.f32 %v3647, %v2115
      %v3690 = vadd.f32 %v3650, %v2115
      %v3691 = vadd.f32 %v3653, %v2115
      %v3692 = vadd.f32 %v3656, %v2115
      %v3693 = vadd.f32 %v3659, %v2115
      %v3694 = vadd.f32 %v3662, %v2115
      %v3695 = vadd.f32 %v3665, %v2115
      %v3696 = vadd.f32 %v3668, %v2115
      %v3697 = vadd.f32 %v3671, %v2115
      %v3698 = vadd.f32 %v3674, %v2115
      %v3699 = vadd.f32 %v3677, %v2115
      %v3700 = vadd.f32 %v3680, %v2115
      %v3701 = vadd.f32 %v3683, %v2115
      %v3702 = vadd.f32 %v3686, %v2115
      %v3703 = vsel %vm3046, %v3141, %v920
      %v3704 = vsel %vm3047, %v3157, %v921
      %v3705 = vsel %vm3048, %v3173, %v922
      %v3706 = vsel %vm3049, %v3189, %v923
      %v3707 = vsel %vm3050, %v3205, %v924
      %v3708 = vsel %vm3051, %v3221, %v925
      %v3709 = vsel %vm3052, %v3237, %v926
      %v3710 = vsel %vm3053, %v3253, %v927
      %v3711 = vsel %vm3054, %v3269, %v928
      %v3712 = vsel %vm3055, %v3285, %v929
      %v3713 = vsel %vm3056, %v3301, %v930
      %v3714 = vsel %vm3057, %v3317, %v931
      %v3715 = vsel %vm3058, %v3333, %v932
      %v3716 = vsel %vm3059, %v3349, %v933
      %v3717 = vsel %vm3060, %v3365, %v934
      %v3718 = vsel %vm3061, %v3381, %v935
      %v3719 = vsel %vm3046, %v3687, 0.0
      %v3720 = vsel %vm3047, %v3688, 0.0
      %v3721 = vsel %vm3048, %v3689, 0.0
      %v3722 = vsel %vm3049, %v3690, 0.0
      %v3723 = vsel %vm3050, %v3691, 0.0
      %v3724 = vsel %vm3051, %v3692, 0.0
      %v3725 = vsel %vm3052, %v3693, 0.0
      %v3726 = vsel %vm3053, %v3694, 0.0
      %v3727 = vsel %vm3054, %v3695, 0.0
      %v3728 = vsel %vm3055, %v3696, 0.0
      %v3729 = vsel %vm3056, %v3697, 0.0
      %v3730 = vsel %vm3057, %v3698, 0.0
      %v3731 = vsel %vm3058, %v3699, 0.0
      %v3732 = vsel %vm3059, %v3700, 0.0
      %v3733 = vsel %vm3060, %v3701, 0.0
      %v3734 = vsel %vm3061, %v3702, 0.0
      %v3735 = vsel %vm3046, 1, 0
      %v3736 = vsel %vm3047, 1, 0
      %v3737 = vsel %vm3048, 1, 0
      %v3738 = vsel %vm3049, 1, 0
      %v3739 = vsel %vm3050, 1, 0
      %v3740 = vsel %vm3051, 1, 0
      %v3741 = vsel %vm3052, 1, 0
      %v3742 = vsel %vm3053, 1, 0
      %v3743 = vsel %vm3054, 1, 0
      %v3744 = vsel %vm3055, 1, 0
      %v3745 = vsel %vm3056, 1, 0
      %v3746 = vsel %vm3057, 1, 0
      %v3747 = vsel %vm3058, 1, 0
      %v3748 = vsel %vm3059, 1, 0
      %v3749 = vsel %vm3060, 1, 0
      %v3750 = vsel %vm3061, 1, 0
      %v3751 = vsel %vm3382, 1e+30, %v2966
      %v3752 = vsel %vm3383, 1e+30, %v2967
      %v3753 = vsel %vm3384, 1e+30, %v2968
      %v3754 = vsel %vm3385, 1e+30, %v2969
      %v3755 = vsel %vm3386, 1e+30, %v2970
      %v3756 = vsel %vm3387, 1e+30, %v2971
      %v3757 = vsel %vm3388, 1e+30, %v2972
      %v3758 = vsel %vm3389, 1e+30, %v2973
      %v3759 = vsel %vm3390, 1e+30, %v2974
      %v3760 = vsel %vm3391, 1e+30, %v2975
      %v3761 = vsel %vm3392, 1e+30, %v2976
      %v3762 = vsel %vm3393, 1e+30, %v2977
      %v3763 = vsel %vm3394, 1e+30, %v2978
      %v3764 = vsel %vm3395, 1e+30, %v2979
      %v3765 = vsel %vm3396, 1e+30, %v2980
      %v3766 = vsel %vm3397, 1e+30, %v2981
      %v3767 = vsel %vm3398, 1e+30, %v2982
      %v3768 = vsel %vm3399, 1e+30, %v2983
      %v3769 = vsel %vm3400, 1e+30, %v2984
      %v3770 = vsel %vm3401, 1e+30, %v2985
      %v3771 = vsel %vm3402, 1e+30, %v2986
      %v3772 = vsel %vm3403, 1e+30, %v2987
      %v3773 = vsel %vm3404, 1e+30, %v2988
      %v3774 = vsel %vm3405, 1e+30, %v2989
      %v3775 = vsel %vm3406, 1e+30, %v2990
      %v3776 = vsel %vm3407, 1e+30, %v2991
      %v3777 = vsel %vm3408, 1e+30, %v2992
      %v3778 = vsel %vm3409, 1e+30, %v2993
      %v3779 = vsel %vm3410, 1e+30, %v2994
      %v3780 = vsel %vm3411, 1e+30, %v2995
      %v3781 = vsel %vm3412, 1e+30, %v2996
      %v3782 = vsel %vm3413, 1e+30, %v2997
      %v3783 = vmin.f32 %v3751, %v3752
      %3784 = vmin.xlane.f32.xlu0 %v3783
      %v3785 = vpop.xlane.xlu0 %3784
      %v3786 = vmin.f32 %v3753, %v3754
      %3787 = vmin.xlane.f32.xlu0 %v3786
      %v3788 = vpop.xlane.xlu0 %3787
      %v3789 = vmin.f32 %v3755, %v3756
      %3790 = vmin.xlane.f32.xlu0 %v3789
      %v3791 = vpop.xlane.xlu0 %3790
      %v3792 = vmin.f32 %v3757, %v3758
      %3793 = vmin.xlane.f32.xlu0 %v3792
      %v3794 = vpop.xlane.xlu0 %3793
      %v3795 = vmin.f32 %v3759, %v3760
      %3796 = vmin.xlane.f32.xlu0 %v3795
      %v3797 = vpop.xlane.xlu0 %3796
      %v3798 = vmin.f32 %v3761, %v3762
      %3799 = vmin.xlane.f32.xlu0 %v3798
      %v3800 = vpop.xlane.xlu0 %3799
      %v3801 = vmin.f32 %v3763, %v3764
      %3802 = vmin.xlane.f32.xlu0 %v3801
      %v3803 = vpop.xlane.xlu0 %3802
      %v3804 = vmin.f32 %v3765, %v3766
      %3805 = vmin.xlane.f32.xlu0 %v3804
      %v3806 = vpop.xlane.xlu0 %3805
      %v3807 = vmin.f32 %v3767, %v3768
      %3808 = vmin.xlane.f32.xlu0 %v3807
      %v3809 = vpop.xlane.xlu0 %3808
      %v3810 = vmin.f32 %v3769, %v3770
      %3811 = vmin.xlane.f32.xlu0 %v3810
      %v3812 = vpop.xlane.xlu0 %3811
      %v3813 = vmin.f32 %v3771, %v3772
      %3814 = vmin.xlane.f32.xlu0 %v3813
      %v3815 = vpop.xlane.xlu0 %3814
      %v3816 = vmin.f32 %v3773, %v3774
      %3817 = vmin.xlane.f32.xlu0 %v3816
      %v3818 = vpop.xlane.xlu0 %3817
      %v3819 = vmin.f32 %v3775, %v3776
      %3820 = vmin.xlane.f32.xlu0 %v3819
      %v3821 = vpop.xlane.xlu0 %3820
      %v3822 = vmin.f32 %v3777, %v3778
      %3823 = vmin.xlane.f32.xlu0 %v3822
      %v3824 = vpop.xlane.xlu0 %3823
      %v3825 = vmin.f32 %v3779, %v3780
      %3826 = vmin.xlane.f32.xlu0 %v3825
      %v3827 = vpop.xlane.xlu0 %3826
      %v3828 = vmin.f32 %v3781, %v3782
      %3829 = vmin.xlane.f32.xlu0 %v3828
      %v3830 = vpop.xlane.xlu0 %3829
      %vm3831 = vcmp.lt.f32.partialorder %v3785, 1e+30
      %vm3832 = vcmp.lt.f32.partialorder %v3788, 1e+30
      %vm3833 = vcmp.lt.f32.partialorder %v3791, 1e+30
      %vm3834 = vcmp.lt.f32.partialorder %v3794, 1e+30
      %vm3835 = vcmp.lt.f32.partialorder %v3797, 1e+30
      %vm3836 = vcmp.lt.f32.partialorder %v3800, 1e+30
      %vm3837 = vcmp.lt.f32.partialorder %v3803, 1e+30
      %vm3838 = vcmp.lt.f32.partialorder %v3806, 1e+30
      %vm3839 = vcmp.lt.f32.partialorder %v3809, 1e+30
      %vm3840 = vcmp.lt.f32.partialorder %v3812, 1e+30
      %vm3841 = vcmp.lt.f32.partialorder %v3815, 1e+30
      %vm3842 = vcmp.lt.f32.partialorder %v3818, 1e+30
      %vm3843 = vcmp.lt.f32.partialorder %v3821, 1e+30
      %vm3844 = vcmp.lt.f32.partialorder %v3824, 1e+30
      %vm3845 = vcmp.lt.f32.partialorder %v3827, 1e+30
      %vm3846 = vcmp.lt.f32.partialorder %v3830, 1e+30
      %vm3847 = vcmp.eq.f32.partialorder %v3751, %v3785
      %vm3848 = vcmp.eq.f32.partialorder %v3752, %v3785
      %vm3849 = vcmp.eq.f32.partialorder %v3753, %v3788
      %vm3850 = vcmp.eq.f32.partialorder %v3754, %v3788
      %vm3851 = vcmp.eq.f32.partialorder %v3755, %v3791
      %vm3852 = vcmp.eq.f32.partialorder %v3756, %v3791
      %vm3853 = vcmp.eq.f32.partialorder %v3757, %v3794
      %vm3854 = vcmp.eq.f32.partialorder %v3758, %v3794
      %vm3855 = vcmp.eq.f32.partialorder %v3759, %v3797
      %vm3856 = vcmp.eq.f32.partialorder %v3760, %v3797
      %vm3857 = vcmp.eq.f32.partialorder %v3761, %v3800
      %vm3858 = vcmp.eq.f32.partialorder %v3762, %v3800
      %vm3859 = vcmp.eq.f32.partialorder %v3763, %v3803
      %vm3860 = vcmp.eq.f32.partialorder %v3764, %v3803
      %vm3861 = vcmp.eq.f32.partialorder %v3765, %v3806
      %vm3862 = vcmp.eq.f32.partialorder %v3766, %v3806
      %vm3863 = vcmp.eq.f32.partialorder %v3767, %v3809
      %vm3864 = vcmp.eq.f32.partialorder %v3768, %v3809
      %vm3865 = vcmp.eq.f32.partialorder %v3769, %v3812
      %vm3866 = vcmp.eq.f32.partialorder %v3770, %v3812
      %vm3867 = vcmp.eq.f32.partialorder %v3771, %v3815
      %vm3868 = vcmp.eq.f32.partialorder %v3772, %v3815
      %vm3869 = vcmp.eq.f32.partialorder %v3773, %v3818
      %vm3870 = vcmp.eq.f32.partialorder %v3774, %v3818
      %vm3871 = vcmp.eq.f32.partialorder %v3775, %v3821
      %vm3872 = vcmp.eq.f32.partialorder %v3776, %v3821
      %vm3873 = vcmp.eq.f32.partialorder %v3777, %v3824
      %vm3874 = vcmp.eq.f32.partialorder %v3778, %v3824
      %vm3875 = vcmp.eq.f32.partialorder %v3779, %v3827
      %vm3876 = vcmp.eq.f32.partialorder %v3780, %v3827
      %vm3877 = vcmp.eq.f32.partialorder %v3781, %v3830
      %vm3878 = vcmp.eq.f32.partialorder %v3782, %v3830
      %v3879 = vsel %vm3847, %v899, 256
      %v3880 = vsel %vm3848, %v900, 256
      %v3881 = vsel %vm3849, %v899, 256
      %v3882 = vsel %vm3850, %v900, 256
      %v3883 = vsel %vm3851, %v899, 256
      %v3884 = vsel %vm3852, %v900, 256
      %v3885 = vsel %vm3853, %v899, 256
      %v3886 = vsel %vm3854, %v900, 256
      %v3887 = vsel %vm3855, %v899, 256
      %v3888 = vsel %vm3856, %v900, 256
      %v3889 = vsel %vm3857, %v899, 256
      %v3890 = vsel %vm3858, %v900, 256
      %v3891 = vsel %vm3859, %v899, 256
      %v3892 = vsel %vm3860, %v900, 256
      %v3893 = vsel %vm3861, %v899, 256
      %v3894 = vsel %vm3862, %v900, 256
      %v3895 = vsel %vm3863, %v899, 256
      %v3896 = vsel %vm3864, %v900, 256
      %v3897 = vsel %vm3865, %v899, 256
      %v3898 = vsel %vm3866, %v900, 256
      %v3899 = vsel %vm3867, %v899, 256
      %v3900 = vsel %vm3868, %v900, 256
      %v3901 = vsel %vm3869, %v899, 256
      %v3902 = vsel %vm3870, %v900, 256
      %v3903 = vsel %vm3871, %v899, 256
      %v3904 = vsel %vm3872, %v900, 256
      %v3905 = vsel %vm3873, %v899, 256
      %v3906 = vsel %vm3874, %v900, 256
      %v3907 = vsel %vm3875, %v899, 256
      %v3908 = vsel %vm3876, %v900, 256
      %v3909 = vsel %vm3877, %v899, 256
      %v3910 = vsel %vm3878, %v900, 256
      %vm3911 = vcmp.lt.s32.totalorder %v3879, %v3880
      %v3912 = vsel %vm3911, %v3879, %v3880
      %v3913 = vand.u32 %v3912, 65535
      %v3914 = vshra.s32 %v3912, 16
      %v3915 = vcvt.s32.f32 %v3913
      %v3916 = vcvt.s32.f32 %v3914
      %3917 = vmin.xlane.f32.xlu0 %v3916
      %v3918 = vpop.xlane.xlu0 %3917
      %vm3919 = vcmp.eq.f32.partialorder %v3916, %v3918
      %v3920 = vsel %vm3919, %v3915, inf
      %3921 = vmin.xlane.f32.xlu0 %v3920
      %v3922 = vpop.xlane.xlu0 %3921
      %v3923 = vcvt.f32.s32 %v3922
      %v3924 = vcvt.f32.s32 %v3918
      %v3925 = vshll.u32 %v3924, 16
      %v3926 = vadd.s32 %v3925, %v3923
      %vm3927 = vcmp.lt.s32.totalorder %v3881, %v3882
      %v3928 = vsel %vm3927, %v3881, %v3882
      %v3929 = vand.u32 %v3928, 65535
      %v3930 = vshra.s32 %v3928, 16
      %v3931 = vcvt.s32.f32 %v3929
      %v3932 = vcvt.s32.f32 %v3930
      %3933 = vmin.xlane.f32.xlu0 %v3932
      %v3934 = vpop.xlane.xlu0 %3933
      %vm3935 = vcmp.eq.f32.partialorder %v3932, %v3934
      %v3936 = vsel %vm3935, %v3931, inf
      %3937 = vmin.xlane.f32.xlu0 %v3936
      %v3938 = vpop.xlane.xlu0 %3937
      %v3939 = vcvt.f32.s32 %v3938
      %v3940 = vcvt.f32.s32 %v3934
      %v3941 = vshll.u32 %v3940, 16
      %v3942 = vadd.s32 %v3941, %v3939
      %vm3943 = vcmp.lt.s32.totalorder %v3883, %v3884
      %v3944 = vsel %vm3943, %v3883, %v3884
      %v3945 = vand.u32 %v3944, 65535
      %v3946 = vshra.s32 %v3944, 16
      %v3947 = vcvt.s32.f32 %v3945
      %v3948 = vcvt.s32.f32 %v3946
      %3949 = vmin.xlane.f32.xlu0 %v3948
      %v3950 = vpop.xlane.xlu0 %3949
      %vm3951 = vcmp.eq.f32.partialorder %v3948, %v3950
      %v3952 = vsel %vm3951, %v3947, inf
      %3953 = vmin.xlane.f32.xlu0 %v3952
      %v3954 = vpop.xlane.xlu0 %3953
      %v3955 = vcvt.f32.s32 %v3954
      %v3956 = vcvt.f32.s32 %v3950
      %v3957 = vshll.u32 %v3956, 16
      %v3958 = vadd.s32 %v3957, %v3955
      %vm3959 = vcmp.lt.s32.totalorder %v3885, %v3886
      %v3960 = vsel %vm3959, %v3885, %v3886
      %v3961 = vand.u32 %v3960, 65535
      %v3962 = vshra.s32 %v3960, 16
      %v3963 = vcvt.s32.f32 %v3961
      %v3964 = vcvt.s32.f32 %v3962
      %3965 = vmin.xlane.f32.xlu0 %v3964
      %v3966 = vpop.xlane.xlu0 %3965
      %vm3967 = vcmp.eq.f32.partialorder %v3964, %v3966
      %v3968 = vsel %vm3967, %v3963, inf
      %3969 = vmin.xlane.f32.xlu0 %v3968
      %v3970 = vpop.xlane.xlu0 %3969
      %v3971 = vcvt.f32.s32 %v3970
      %v3972 = vcvt.f32.s32 %v3966
      %v3973 = vshll.u32 %v3972, 16
      %v3974 = vadd.s32 %v3973, %v3971
      %vm3975 = vcmp.lt.s32.totalorder %v3887, %v3888
      %v3976 = vsel %vm3975, %v3887, %v3888
      %v3977 = vand.u32 %v3976, 65535
      %v3978 = vshra.s32 %v3976, 16
      %v3979 = vcvt.s32.f32 %v3977
      %v3980 = vcvt.s32.f32 %v3978
      %3981 = vmin.xlane.f32.xlu0 %v3980
      %v3982 = vpop.xlane.xlu0 %3981
      %vm3983 = vcmp.eq.f32.partialorder %v3980, %v3982
      %v3984 = vsel %vm3983, %v3979, inf
      %3985 = vmin.xlane.f32.xlu0 %v3984
      %v3986 = vpop.xlane.xlu0 %3985
      %v3987 = vcvt.f32.s32 %v3986
      %v3988 = vcvt.f32.s32 %v3982
      %v3989 = vshll.u32 %v3988, 16
      %v3990 = vadd.s32 %v3989, %v3987
      %vm3991 = vcmp.lt.s32.totalorder %v3889, %v3890
      %v3992 = vsel %vm3991, %v3889, %v3890
      %v3993 = vand.u32 %v3992, 65535
      %v3994 = vshra.s32 %v3992, 16
      %v3995 = vcvt.s32.f32 %v3993
      %v3996 = vcvt.s32.f32 %v3994
      %3997 = vmin.xlane.f32.xlu0 %v3996
      %v3998 = vpop.xlane.xlu0 %3997
      %vm3999 = vcmp.eq.f32.partialorder %v3996, %v3998
      %v4000 = vsel %vm3999, %v3995, inf
      %4001 = vmin.xlane.f32.xlu0 %v4000
      %v4002 = vpop.xlane.xlu0 %4001
      %v4003 = vcvt.f32.s32 %v4002
      %v4004 = vcvt.f32.s32 %v3998
      %v4005 = vshll.u32 %v4004, 16
      %v4006 = vadd.s32 %v4005, %v4003
      %vm4007 = vcmp.lt.s32.totalorder %v3891, %v3892
      %v4008 = vsel %vm4007, %v3891, %v3892
      %v4009 = vand.u32 %v4008, 65535
      %v4010 = vshra.s32 %v4008, 16
      %v4011 = vcvt.s32.f32 %v4009
      %v4012 = vcvt.s32.f32 %v4010
      %4013 = vmin.xlane.f32.xlu0 %v4012
      %v4014 = vpop.xlane.xlu0 %4013
      %vm4015 = vcmp.eq.f32.partialorder %v4012, %v4014
      %v4016 = vsel %vm4015, %v4011, inf
      %4017 = vmin.xlane.f32.xlu0 %v4016
      %v4018 = vpop.xlane.xlu0 %4017
      %v4019 = vcvt.f32.s32 %v4018
      %v4020 = vcvt.f32.s32 %v4014
      %v4021 = vshll.u32 %v4020, 16
      %v4022 = vadd.s32 %v4021, %v4019
      %vm4023 = vcmp.lt.s32.totalorder %v3893, %v3894
      %v4024 = vsel %vm4023, %v3893, %v3894
      %v4025 = vand.u32 %v4024, 65535
      %v4026 = vshra.s32 %v4024, 16
      %v4027 = vcvt.s32.f32 %v4025
      %v4028 = vcvt.s32.f32 %v4026
      %4029 = vmin.xlane.f32.xlu0 %v4028
      %v4030 = vpop.xlane.xlu0 %4029
      %vm4031 = vcmp.eq.f32.partialorder %v4028, %v4030
      %v4032 = vsel %vm4031, %v4027, inf
      %4033 = vmin.xlane.f32.xlu0 %v4032
      %v4034 = vpop.xlane.xlu0 %4033
      %v4035 = vcvt.f32.s32 %v4034
      %v4036 = vcvt.f32.s32 %v4030
      %v4037 = vshll.u32 %v4036, 16
      %v4038 = vadd.s32 %v4037, %v4035
      %vm4039 = vcmp.lt.s32.totalorder %v3895, %v3896
      %v4040 = vsel %vm4039, %v3895, %v3896
      %v4041 = vand.u32 %v4040, 65535
      %v4042 = vshra.s32 %v4040, 16
      %v4043 = vcvt.s32.f32 %v4041
      %v4044 = vcvt.s32.f32 %v4042
      %4045 = vmin.xlane.f32.xlu0 %v4044
      %v4046 = vpop.xlane.xlu0 %4045
      %vm4047 = vcmp.eq.f32.partialorder %v4044, %v4046
      %v4048 = vsel %vm4047, %v4043, inf
      %4049 = vmin.xlane.f32.xlu0 %v4048
      %v4050 = vpop.xlane.xlu0 %4049
      %v4051 = vcvt.f32.s32 %v4050
      %v4052 = vcvt.f32.s32 %v4046
      %v4053 = vshll.u32 %v4052, 16
      %v4054 = vadd.s32 %v4053, %v4051
      %vm4055 = vcmp.lt.s32.totalorder %v3897, %v3898
      %v4056 = vsel %vm4055, %v3897, %v3898
      %v4057 = vand.u32 %v4056, 65535
      %v4058 = vshra.s32 %v4056, 16
      %v4059 = vcvt.s32.f32 %v4057
      %v4060 = vcvt.s32.f32 %v4058
      %4061 = vmin.xlane.f32.xlu0 %v4060
      %v4062 = vpop.xlane.xlu0 %4061
      %vm4063 = vcmp.eq.f32.partialorder %v4060, %v4062
      %v4064 = vsel %vm4063, %v4059, inf
      %4065 = vmin.xlane.f32.xlu0 %v4064
      %v4066 = vpop.xlane.xlu0 %4065
      %v4067 = vcvt.f32.s32 %v4066
      %v4068 = vcvt.f32.s32 %v4062
      %v4069 = vshll.u32 %v4068, 16
      %v4070 = vadd.s32 %v4069, %v4067
      %vm4071 = vcmp.lt.s32.totalorder %v3899, %v3900
      %v4072 = vsel %vm4071, %v3899, %v3900
      %v4073 = vand.u32 %v4072, 65535
      %v4074 = vshra.s32 %v4072, 16
      %v4075 = vcvt.s32.f32 %v4073
      %v4076 = vcvt.s32.f32 %v4074
      %4077 = vmin.xlane.f32.xlu0 %v4076
      %v4078 = vpop.xlane.xlu0 %4077
      %vm4079 = vcmp.eq.f32.partialorder %v4076, %v4078
      %v4080 = vsel %vm4079, %v4075, inf
      %4081 = vmin.xlane.f32.xlu0 %v4080
      %v4082 = vpop.xlane.xlu0 %4081
      %v4083 = vcvt.f32.s32 %v4082
      %v4084 = vcvt.f32.s32 %v4078
      %v4085 = vshll.u32 %v4084, 16
      %v4086 = vadd.s32 %v4085, %v4083
      %vm4087 = vcmp.lt.s32.totalorder %v3901, %v3902
      %v4088 = vsel %vm4087, %v3901, %v3902
      %v4089 = vand.u32 %v4088, 65535
      %v4090 = vshra.s32 %v4088, 16
      %v4091 = vcvt.s32.f32 %v4089
      %v4092 = vcvt.s32.f32 %v4090
      %4093 = vmin.xlane.f32.xlu0 %v4092
      %v4094 = vpop.xlane.xlu0 %4093
      %vm4095 = vcmp.eq.f32.partialorder %v4092, %v4094
      %v4096 = vsel %vm4095, %v4091, inf
      %4097 = vmin.xlane.f32.xlu0 %v4096
      %v4098 = vpop.xlane.xlu0 %4097
      %v4099 = vcvt.f32.s32 %v4098
      %v4100 = vcvt.f32.s32 %v4094
      %v4101 = vshll.u32 %v4100, 16
      %v4102 = vadd.s32 %v4101, %v4099
      %vm4103 = vcmp.lt.s32.totalorder %v3903, %v3904
      %v4104 = vsel %vm4103, %v3903, %v3904
      %v4105 = vand.u32 %v4104, 65535
      %v4106 = vshra.s32 %v4104, 16
      %v4107 = vcvt.s32.f32 %v4105
      %v4108 = vcvt.s32.f32 %v4106
      %4109 = vmin.xlane.f32.xlu0 %v4108
      %v4110 = vpop.xlane.xlu0 %4109
      %vm4111 = vcmp.eq.f32.partialorder %v4108, %v4110
      %v4112 = vsel %vm4111, %v4107, inf
      %4113 = vmin.xlane.f32.xlu0 %v4112
      %v4114 = vpop.xlane.xlu0 %4113
      %v4115 = vcvt.f32.s32 %v4114
      %v4116 = vcvt.f32.s32 %v4110
      %v4117 = vshll.u32 %v4116, 16
      %v4118 = vadd.s32 %v4117, %v4115
      %vm4119 = vcmp.lt.s32.totalorder %v3905, %v3906
      %v4120 = vsel %vm4119, %v3905, %v3906
      %v4121 = vand.u32 %v4120, 65535
      %v4122 = vshra.s32 %v4120, 16
      %v4123 = vcvt.s32.f32 %v4121
      %v4124 = vcvt.s32.f32 %v4122
      %4125 = vmin.xlane.f32.xlu0 %v4124
      %v4126 = vpop.xlane.xlu0 %4125
      %vm4127 = vcmp.eq.f32.partialorder %v4124, %v4126
      %v4128 = vsel %vm4127, %v4123, inf
      %4129 = vmin.xlane.f32.xlu0 %v4128
      %v4130 = vpop.xlane.xlu0 %4129
      %v4131 = vcvt.f32.s32 %v4130
      %v4132 = vcvt.f32.s32 %v4126
      %v4133 = vshll.u32 %v4132, 16
      %v4134 = vadd.s32 %v4133, %v4131
      %vm4135 = vcmp.lt.s32.totalorder %v3907, %v3908
      %v4136 = vsel %vm4135, %v3907, %v3908
      %v4137 = vand.u32 %v4136, 65535
      %v4138 = vshra.s32 %v4136, 16
      %v4139 = vcvt.s32.f32 %v4137
      %v4140 = vcvt.s32.f32 %v4138
      %4141 = vmin.xlane.f32.xlu0 %v4140
      %v4142 = vpop.xlane.xlu0 %4141
      %vm4143 = vcmp.eq.f32.partialorder %v4140, %v4142
      %v4144 = vsel %vm4143, %v4139, inf
      %4145 = vmin.xlane.f32.xlu0 %v4144
      %v4146 = vpop.xlane.xlu0 %4145
      %v4147 = vcvt.f32.s32 %v4146
      %v4148 = vcvt.f32.s32 %v4142
      %v4149 = vshll.u32 %v4148, 16
      %v4150 = vadd.s32 %v4149, %v4147
      %vm4151 = vcmp.lt.s32.totalorder %v3909, %v3910
      %v4152 = vsel %vm4151, %v3909, %v3910
      %v4153 = vand.u32 %v4152, 65535
      %v4154 = vshra.s32 %v4152, 16
      %v4155 = vcvt.s32.f32 %v4153
      %v4156 = vcvt.s32.f32 %v4154
      %4157 = vmin.xlane.f32.xlu0 %v4156
      %v4158 = vpop.xlane.xlu0 %4157
      %vm4159 = vcmp.eq.f32.partialorder %v4156, %v4158
      %v4160 = vsel %vm4159, %v4155, inf
      %4161 = vmin.xlane.f32.xlu0 %v4160
      %v4162 = vpop.xlane.xlu0 %4161
      %v4163 = vcvt.f32.s32 %v4162
      %v4164 = vcvt.f32.s32 %v4158
      %v4165 = vshll.u32 %v4164, 16
      %v4166 = vadd.s32 %v4165, %v4163
      %vm4167 = vcmp.eq.s32.totalorder %v899, %v3926
      %vm4168 = vcmp.eq.s32.totalorder %v900, %v3926
      %vm4169 = vcmp.eq.s32.totalorder %v899, %v3942
      %vm4170 = vcmp.eq.s32.totalorder %v900, %v3942
      %vm4171 = vcmp.eq.s32.totalorder %v899, %v3958
      %vm4172 = vcmp.eq.s32.totalorder %v900, %v3958
      %vm4173 = vcmp.eq.s32.totalorder %v899, %v3974
      %vm4174 = vcmp.eq.s32.totalorder %v900, %v3974
      %vm4175 = vcmp.eq.s32.totalorder %v899, %v3990
      %vm4176 = vcmp.eq.s32.totalorder %v900, %v3990
      %vm4177 = vcmp.eq.s32.totalorder %v899, %v4006
      %vm4178 = vcmp.eq.s32.totalorder %v900, %v4006
      %vm4179 = vcmp.eq.s32.totalorder %v899, %v4022
      %vm4180 = vcmp.eq.s32.totalorder %v900, %v4022
      %vm4181 = vcmp.eq.s32.totalorder %v899, %v4038
      %vm4182 = vcmp.eq.s32.totalorder %v900, %v4038
      %vm4183 = vcmp.eq.s32.totalorder %v899, %v4054
      %vm4184 = vcmp.eq.s32.totalorder %v900, %v4054
      %vm4185 = vcmp.eq.s32.totalorder %v899, %v4070
      %vm4186 = vcmp.eq.s32.totalorder %v900, %v4070
      %vm4187 = vcmp.eq.s32.totalorder %v899, %v4086
      %vm4188 = vcmp.eq.s32.totalorder %v900, %v4086
      %vm4189 = vcmp.eq.s32.totalorder %v899, %v4102
      %vm4190 = vcmp.eq.s32.totalorder %v900, %v4102
      %vm4191 = vcmp.eq.s32.totalorder %v899, %v4118
      %vm4192 = vcmp.eq.s32.totalorder %v900, %v4118
      %vm4193 = vcmp.eq.s32.totalorder %v899, %v4134
      %vm4194 = vcmp.eq.s32.totalorder %v900, %v4134
      %vm4195 = vcmp.eq.s32.totalorder %v899, %v4150
      %vm4196 = vcmp.eq.s32.totalorder %v900, %v4150
      %vm4197 = vcmp.eq.s32.totalorder %v899, %v4166
      %vm4198 = vcmp.eq.s32.totalorder %v900, %v4166
      %v4199 = vsel %vm4167, 1, 0
      %v4200 = vsel %vm4168, 1, 0
      %v4201 = vsel %vm4169, 1, 0
      %v4202 = vsel %vm4170, 1, 0
      %v4203 = vsel %vm4171, 1, 0
      %v4204 = vsel %vm4172, 1, 0
      %v4205 = vsel %vm4173, 1, 0
      %v4206 = vsel %vm4174, 1, 0
      %v4207 = vsel %vm4175, 1, 0
      %v4208 = vsel %vm4176, 1, 0
      %v4209 = vsel %vm4177, 1, 0
      %v4210 = vsel %vm4178, 1, 0
      %v4211 = vsel %vm4179, 1, 0
      %v4212 = vsel %vm4180, 1, 0
      %v4213 = vsel %vm4181, 1, 0
      %v4214 = vsel %vm4182, 1, 0
      %v4215 = vsel %vm4183, 1, 0
      %v4216 = vsel %vm4184, 1, 0
      %v4217 = vsel %vm4185, 1, 0
      %v4218 = vsel %vm4186, 1, 0
      %v4219 = vsel %vm4187, 1, 0
      %v4220 = vsel %vm4188, 1, 0
      %v4221 = vsel %vm4189, 1, 0
      %v4222 = vsel %vm4190, 1, 0
      %v4223 = vsel %vm4191, 1, 0
      %v4224 = vsel %vm4192, 1, 0
      %v4225 = vsel %vm4193, 1, 0
      %v4226 = vsel %vm4194, 1, 0
      %v4227 = vsel %vm4195, 1, 0
      %v4228 = vsel %vm4196, 1, 0
      %v4229 = vsel %vm4197, 1, 0
      %v4230 = vsel %vm4198, 1, 0
      %v4231 = vcvt.s32.f32 %v4199
      %v4232 = vcvt.s32.f32 %v4200
      %v4233 = vcvt.s32.f32 %v4201
      %v4234 = vcvt.s32.f32 %v4202
      %v4235 = vcvt.s32.f32 %v4203
      %v4236 = vcvt.s32.f32 %v4204
      %v4237 = vcvt.s32.f32 %v4205
      %v4238 = vcvt.s32.f32 %v4206
      %v4239 = vcvt.s32.f32 %v4207
      %v4240 = vcvt.s32.f32 %v4208
      %v4241 = vcvt.s32.f32 %v4209
      %v4242 = vcvt.s32.f32 %v4210
      %v4243 = vcvt.s32.f32 %v4211
      %v4244 = vcvt.s32.f32 %v4212
      %v4245 = vcvt.s32.f32 %v4213
      %v4246 = vcvt.s32.f32 %v4214
      %v4247 = vcvt.s32.f32 %v4215
      %v4248 = vcvt.s32.f32 %v4216
      %v4249 = vcvt.s32.f32 %v4217
      %v4250 = vcvt.s32.f32 %v4218
      %v4251 = vcvt.s32.f32 %v4219
      %v4252 = vcvt.s32.f32 %v4220
      %v4253 = vcvt.s32.f32 %v4221
      %v4254 = vcvt.s32.f32 %v4222
      %v4255 = vcvt.s32.f32 %v4223
      %v4256 = vcvt.s32.f32 %v4224
      %v4257 = vcvt.s32.f32 %v4225
      %v4258 = vcvt.s32.f32 %v4226
      %v4259 = vcvt.s32.f32 %v4227
      %v4260 = vcvt.s32.f32 %v4228
      %v4261 = vcvt.s32.f32 %v4229
      %v4262 = vcvt.s32.f32 %v4230
      %4263 = vmatprep.subr.mxu0 0.0
      %4264 = vmatpush1.msra.mxu0 %v1404
      %4265 = vmatprep.subr.mxu0 0.0
      %4266 = vmatpush1.msra.mxu0 %v1403
      %4267 = vmatprep.subr.mxu0 0.0
      %4268 = vmatpush1.msra.mxu0 %v1402
      %4269 = vmatprep.subr.mxu0 0.0
      %4270 = vmatpush1.msra.mxu0 %v1401
      %4271 = vmatprep.subr.mxu0 0.0
      %4272 = vmatpush1.msra.mxu0 %v1400
      %4273 = vmatprep.subr.mxu0 0.0
      %4274 = vmatpush1.msra.mxu0 %v1399
      %4275 = vmatprep.subr.mxu0 0.0
      %4276 = vmatpush1.msra.mxu0 %v1398
      %4277 = vmatprep.subr.mxu0 0.0
      %4278 = vmatpush1.msra.mxu0 %v1397
      %4279 = vmatprep.subr.mxu0 0.0
      %4280 = vmatpush1.msra.mxu0 %v1396
      %4281 = vmatprep.subr.mxu0 0.0
      %4282 = vmatpush1.msra.mxu0 %v1395
      %4283 = vmatprep.subr.mxu0 0.0
      %4284 = vmatpush1.msra.mxu0 %v1394
      %4285 = vmatprep.subr.mxu0 0.0
      %4286 = vmatpush1.msra.mxu0 %v1393
      %4287 = vmatprep.subr.mxu0 0.0
      %4288 = vmatpush1.msra.mxu0 %v1392
      %4289 = vmatprep.subr.mxu0 0.0
      %4290 = vmatpush1.msra.mxu0 %v1391
      %4291 = vmatprep.subr.mxu0 0.0
      %4292 = vmatpush1.msra.mxu0 %v1390
      %4293 = vmatprep.subr.mxu0 0.0
      %4294 = vmatpush1.msra.mxu0 %v1389
      %4295 = vmatprep.subr.mxu0 0.0
      %4296 = vmatpush2.msra.mxu0 %v1420
      %4297 = vmatprep.subr.mxu0 0.0
      %4298 = vmatpush2.msra.mxu0 %v1419
      %4299 = vmatprep.subr.mxu0 0.0
      %4300 = vmatpush2.msra.mxu0 %v1418
      %4301 = vmatprep.subr.mxu0 0.0
      %4302 = vmatpush2.msra.mxu0 %v1417
      %4303 = vmatprep.subr.mxu0 0.0
      %4304 = vmatpush2.msra.mxu0 %v1416
      %4305 = vmatprep.subr.mxu0 0.0
      %4306 = vmatpush2.msra.mxu0 %v1415
      %4307 = vmatprep.subr.mxu0 0.0
      %4308 = vmatpush2.msra.mxu0 %v1414
      %4309 = vmatprep.subr.mxu0 0.0
      %4310 = vmatpush2.msra.mxu0 %v1413
      %4311 = vmatprep.subr.mxu0 0.0
      %4312 = vmatpush2.msra.mxu0 %v1412
      %4313 = vmatprep.subr.mxu0 0.0
      %4314 = vmatpush2.msra.mxu0 %v1411
      %4315 = vmatprep.subr.mxu0 0.0
      %4316 = vmatpush2.msra.mxu0 %v1410
      %4317 = vmatprep.subr.mxu0 0.0
      %4318 = vmatpush2.msra.mxu0 %v1409
      %4319 = vmatprep.subr.mxu0 0.0
      %4320 = vmatpush2.msra.mxu0 %v1408
      %4321 = vmatprep.subr.mxu0 0.0
      %4322 = vmatpush2.msra.mxu0 %v1407
      %4323 = vmatprep.subr.mxu0 0.0
      %4324 = vmatpush2.msra.mxu0 %v1406
      %4325 = vmatprep.subr.mxu0 0.0
      %4326 = vmatpush2.msra.mxu0 %v1405
      %4327 = vmatprep.mubr.f32.mxu0 %v4232
      %4328 = vmatmul.mubr.f32.gmra.mxu0 %v4231
      %v4329 = vpop.f32.mrf.mxu0
      %v4330 = vadd.f32 0.0, %v4329
      %v4331 = vpop.f32.mrf.mxu0
      %4332 = vmatprep.mubr.f32.mxu0 %v4234
      %4333 = vmatmul.mubr.f32.gmra.mxu0 %v4233
      %v4334 = vpop.f32.mrf.mxu0
      %v4335 = vadd.f32 0.0, %v4334
      %v4336 = vpop.f32.mrf.mxu0
      %4337 = vmatprep.mubr.f32.mxu0 %v4236
      %4338 = vmatmul.mubr.f32.gmra.mxu0 %v4235
      %v4339 = vpop.f32.mrf.mxu0
      %v4340 = vadd.f32 0.0, %v4339
      %v4341 = vpop.f32.mrf.mxu0
      %4342 = vmatprep.mubr.f32.mxu0 %v4238
      %4343 = vmatmul.mubr.f32.gmra.mxu0 %v4237
      %v4344 = vpop.f32.mrf.mxu0
      %v4345 = vadd.f32 0.0, %v4344
      %v4346 = vpop.f32.mrf.mxu0
      %4347 = vmatprep.mubr.f32.mxu0 %v4240
      %4348 = vmatmul.mubr.f32.gmra.mxu0 %v4239
      %v4349 = vpop.f32.mrf.mxu0
      %v4350 = vadd.f32 0.0, %v4349
      %v4351 = vpop.f32.mrf.mxu0
      %4352 = vmatprep.mubr.f32.mxu0 %v4242
      %4353 = vmatmul.mubr.f32.gmra.mxu0 %v4241
      %v4354 = vpop.f32.mrf.mxu0
      %v4355 = vadd.f32 0.0, %v4354
      %v4356 = vpop.f32.mrf.mxu0
      %4357 = vmatprep.mubr.f32.mxu0 %v4244
      %4358 = vmatmul.mubr.f32.gmra.mxu0 %v4243
      %v4359 = vpop.f32.mrf.mxu0
      %v4360 = vadd.f32 0.0, %v4359
      %v4361 = vpop.f32.mrf.mxu0
      %4362 = vmatprep.mubr.f32.mxu0 %v4246
      %4363 = vmatmul.mubr.f32.gmra.mxu0 %v4245
      %v4364 = vpop.f32.mrf.mxu0
      %v4365 = vadd.f32 0.0, %v4364
      %v4366 = vpop.f32.mrf.mxu0
      %4367 = vmatprep.mubr.f32.mxu0 %v4248
      %4368 = vmatmul.mubr.f32.gmra.mxu0 %v4247
      %v4369 = vpop.f32.mrf.mxu0
      %v4370 = vadd.f32 0.0, %v4369
      %v4371 = vpop.f32.mrf.mxu0
      %4372 = vmatprep.mubr.f32.mxu0 %v4250
      %4373 = vmatmul.mubr.f32.gmra.mxu0 %v4249
      %v4374 = vpop.f32.mrf.mxu0
      %v4375 = vadd.f32 0.0, %v4374
      %v4376 = vpop.f32.mrf.mxu0
      %4377 = vmatprep.mubr.f32.mxu0 %v4252
      %4378 = vmatmul.mubr.f32.gmra.mxu0 %v4251
      %v4379 = vpop.f32.mrf.mxu0
      %v4380 = vadd.f32 0.0, %v4379
      %v4381 = vpop.f32.mrf.mxu0
      %4382 = vmatprep.mubr.f32.mxu0 %v4254
      %4383 = vmatmul.mubr.f32.gmra.mxu0 %v4253
      %v4384 = vpop.f32.mrf.mxu0
      %v4385 = vadd.f32 0.0, %v4384
      %v4386 = vpop.f32.mrf.mxu0
      %4387 = vmatprep.mubr.f32.mxu0 %v4256
      %4388 = vmatmul.mubr.f32.gmra.mxu0 %v4255
      %v4389 = vpop.f32.mrf.mxu0
      %v4390 = vadd.f32 0.0, %v4389
      %v4391 = vpop.f32.mrf.mxu0
      %4392 = vmatprep.mubr.f32.mxu0 %v4258
      %4393 = vmatmul.mubr.f32.gmra.mxu0 %v4257
      %v4394 = vpop.f32.mrf.mxu0
      %v4395 = vadd.f32 0.0, %v4394
      %v4396 = vpop.f32.mrf.mxu0
      %4397 = vmatprep.mubr.f32.mxu0 %v4260
      %4398 = vmatmul.mubr.f32.gmra.mxu0 %v4259
      %v4399 = vpop.f32.mrf.mxu0
      %v4400 = vadd.f32 0.0, %v4399
      %v4401 = vpop.f32.mrf.mxu0
      %4402 = vmatprep.mubr.f32.mxu0 %v4262
      %4403 = vmatmul.mubr.f32.gmra.mxu0 %v4261
      %v4404 = vpop.f32.mrf.mxu0
      %v4405 = vadd.f32 0.0, %v4404
      %v4406 = vpop.f32.mrf.mxu0
      %4407 = vdwg.mxu0
      %v4408 = vmul.f32 %v4330, %v1311
      %v4409 = vmul.f32 %v4335, %v1316
      %v4410 = vmul.f32 %v4340, %v1321
      %v4411 = vmul.f32 %v4345, %v1326
      %v4412 = vmul.f32 %v4350, %v1331
      %v4413 = vmul.f32 %v4355, %v1336
      %v4414 = vmul.f32 %v4360, %v1341
      %v4415 = vmul.f32 %v4365, %v1346
      %v4416 = vmul.f32 %v4370, %v1351
      %v4417 = vmul.f32 %v4375, %v1356
      %v4418 = vmul.f32 %v4380, %v1361
      %v4419 = vmul.f32 %v4385, %v1366
      %v4420 = vmul.f32 %v4390, %v1371
      %v4421 = vmul.f32 %v4395, %v1376
      %v4422 = vmul.f32 %v4400, %v1381
      %v4423 = vmul.f32 %v4405, %v1386
      %v4424 = vsel %vm1191, %v4408, 0.0
      %4425 = vadd.xlane.f32.xlu0 %v4424
      %v4426 = vpop.xlane.xlu0 %4425
      %v4427 = vsel %vm1191, %v4409, 0.0
      %4428 = vadd.xlane.f32.xlu0 %v4427
      %v4429 = vpop.xlane.xlu0 %4428
      %v4430 = vsel %vm1191, %v4410, 0.0
      %4431 = vadd.xlane.f32.xlu0 %v4430
      %v4432 = vpop.xlane.xlu0 %4431
      %v4433 = vsel %vm1191, %v4411, 0.0
      %4434 = vadd.xlane.f32.xlu0 %v4433
      %v4435 = vpop.xlane.xlu0 %4434
      %v4436 = vsel %vm1191, %v4412, 0.0
      %4437 = vadd.xlane.f32.xlu0 %v4436
      %v4438 = vpop.xlane.xlu0 %4437
      %v4439 = vsel %vm1191, %v4413, 0.0
      %4440 = vadd.xlane.f32.xlu0 %v4439
      %v4441 = vpop.xlane.xlu0 %4440
      %v4442 = vsel %vm1191, %v4414, 0.0
      %4443 = vadd.xlane.f32.xlu0 %v4442
      %v4444 = vpop.xlane.xlu0 %4443
      %v4445 = vsel %vm1191, %v4415, 0.0
      %4446 = vadd.xlane.f32.xlu0 %v4445
      %v4447 = vpop.xlane.xlu0 %4446
      %v4448 = vsel %vm1191, %v4416, 0.0
      %4449 = vadd.xlane.f32.xlu0 %v4448
      %v4450 = vpop.xlane.xlu0 %4449
      %v4451 = vsel %vm1191, %v4417, 0.0
      %4452 = vadd.xlane.f32.xlu0 %v4451
      %v4453 = vpop.xlane.xlu0 %4452
      %v4454 = vsel %vm1191, %v4418, 0.0
      %4455 = vadd.xlane.f32.xlu0 %v4454
      %v4456 = vpop.xlane.xlu0 %4455
      %v4457 = vsel %vm1191, %v4419, 0.0
      %4458 = vadd.xlane.f32.xlu0 %v4457
      %v4459 = vpop.xlane.xlu0 %4458
      %v4460 = vsel %vm1191, %v4420, 0.0
      %4461 = vadd.xlane.f32.xlu0 %v4460
      %v4462 = vpop.xlane.xlu0 %4461
      %v4463 = vsel %vm1191, %v4421, 0.0
      %4464 = vadd.xlane.f32.xlu0 %v4463
      %v4465 = vpop.xlane.xlu0 %4464
      %v4466 = vsel %vm1191, %v4422, 0.0
      %4467 = vadd.xlane.f32.xlu0 %v4466
      %v4468 = vpop.xlane.xlu0 %4467
      %v4469 = vsel %vm1191, %v4423, 0.0
      %4470 = vadd.xlane.f32.xlu0 %v4469
      %v4471 = vpop.xlane.xlu0 %4470
      %v4472 = vadd.f32 %v4426, %v2115
      %v4473 = vadd.f32 %v4429, %v2115
      %v4474 = vadd.f32 %v4432, %v2115
      %v4475 = vadd.f32 %v4435, %v2115
      %v4476 = vadd.f32 %v4438, %v2115
      %v4477 = vadd.f32 %v4441, %v2115
      %v4478 = vadd.f32 %v4444, %v2115
      %v4479 = vadd.f32 %v4447, %v2115
      %v4480 = vadd.f32 %v4450, %v2115
      %v4481 = vadd.f32 %v4453, %v2115
      %v4482 = vadd.f32 %v4456, %v2115
      %v4483 = vadd.f32 %v4459, %v2115
      %v4484 = vadd.f32 %v4462, %v2115
      %v4485 = vadd.f32 %v4465, %v2115
      %v4486 = vadd.f32 %v4468, %v2115
      %v4487 = vadd.f32 %v4471, %v2115
      %v4488 = vsel %vm3831, %v3926, %v920
      %v4489 = vsel %vm3832, %v3942, %v921
      %v4490 = vsel %vm3833, %v3958, %v922
      %v4491 = vsel %vm3834, %v3974, %v923
      %v4492 = vsel %vm3835, %v3990, %v924
      %v4493 = vsel %vm3836, %v4006, %v925
      %v4494 = vsel %vm3837, %v4022, %v926
      %v4495 = vsel %vm3838, %v4038, %v927
      %v4496 = vsel %vm3839, %v4054, %v928
      %v4497 = vsel %vm3840, %v4070, %v929
      %v4498 = vsel %vm3841, %v4086, %v930
      %v4499 = vsel %vm3842, %v4102, %v931
      %v4500 = vsel %vm3843, %v4118, %v932
      %v4501 = vsel %vm3844, %v4134, %v933
      %v4502 = vsel %vm3845, %v4150, %v934
      %v4503 = vsel %vm3846, %v4166, %v935
      %v4504 = vsel %vm3831, %v4472, 0.0
      %v4505 = vsel %vm3832, %v4473, 0.0
      %v4506 = vsel %vm3833, %v4474, 0.0
      %v4507 = vsel %vm3834, %v4475, 0.0
      %v4508 = vsel %vm3835, %v4476, 0.0
      %v4509 = vsel %vm3836, %v4477, 0.0
      %v4510 = vsel %vm3837, %v4478, 0.0
      %v4511 = vsel %vm3838, %v4479, 0.0
      %v4512 = vsel %vm3839, %v4480, 0.0
      %v4513 = vsel %vm3840, %v4481, 0.0
      %v4514 = vsel %vm3841, %v4482, 0.0
      %v4515 = vsel %vm3842, %v4483, 0.0
      %v4516 = vsel %vm3843, %v4484, 0.0
      %v4517 = vsel %vm3844, %v4485, 0.0
      %v4518 = vsel %vm3845, %v4486, 0.0
      %v4519 = vsel %vm3846, %v4487, 0.0
      %v4520 = vsel %vm3831, 1, 0
      %v4521 = vsel %vm3832, 1, 0
      %v4522 = vsel %vm3833, 1, 0
      %v4523 = vsel %vm3834, 1, 0
      %v4524 = vsel %vm3835, 1, 0
      %v4525 = vsel %vm3836, 1, 0
      %v4526 = vsel %vm3837, 1, 0
      %v4527 = vsel %vm3838, 1, 0
      %v4528 = vsel %vm3839, 1, 0
      %v4529 = vsel %vm3840, 1, 0
      %v4530 = vsel %vm3841, 1, 0
      %v4531 = vsel %vm3842, 1, 0
      %v4532 = vsel %vm3843, 1, 0
      %v4533 = vsel %vm3844, 1, 0
      %v4534 = vsel %vm3845, 1, 0
      %v4535 = vsel %vm3846, 1, 0
      %v4536 = vsel %vm4167, 1e+30, %v3751
      %v4537 = vsel %vm4168, 1e+30, %v3752
      %v4538 = vsel %vm4169, 1e+30, %v3753
      %v4539 = vsel %vm4170, 1e+30, %v3754
      %v4540 = vsel %vm4171, 1e+30, %v3755
      %v4541 = vsel %vm4172, 1e+30, %v3756
      %v4542 = vsel %vm4173, 1e+30, %v3757
      %v4543 = vsel %vm4174, 1e+30, %v3758
      %v4544 = vsel %vm4175, 1e+30, %v3759
      %v4545 = vsel %vm4176, 1e+30, %v3760
      %v4546 = vsel %vm4177, 1e+30, %v3761
      %v4547 = vsel %vm4178, 1e+30, %v3762
      %v4548 = vsel %vm4179, 1e+30, %v3763
      %v4549 = vsel %vm4180, 1e+30, %v3764
      %v4550 = vsel %vm4181, 1e+30, %v3765
      %v4551 = vsel %vm4182, 1e+30, %v3766
      %v4552 = vsel %vm4183, 1e+30, %v3767
      %v4553 = vsel %vm4184, 1e+30, %v3768
      %v4554 = vsel %vm4185, 1e+30, %v3769
      %v4555 = vsel %vm4186, 1e+30, %v3770
      %v4556 = vsel %vm4187, 1e+30, %v3771
      %v4557 = vsel %vm4188, 1e+30, %v3772
      %v4558 = vsel %vm4189, 1e+30, %v3773
      %v4559 = vsel %vm4190, 1e+30, %v3774
      %v4560 = vsel %vm4191, 1e+30, %v3775
      %v4561 = vsel %vm4192, 1e+30, %v3776
      %v4562 = vsel %vm4193, 1e+30, %v3777
      %v4563 = vsel %vm4194, 1e+30, %v3778
      %v4564 = vsel %vm4195, 1e+30, %v3779
      %v4565 = vsel %vm4196, 1e+30, %v3780
      %v4566 = vsel %vm4197, 1e+30, %v3781
      %v4567 = vsel %vm4198, 1e+30, %v3782
      %v4568 = vmin.f32 %v4536, %v4537
      %4569 = vmin.xlane.f32.xlu0 %v4568
      %v4570 = vpop.xlane.xlu0 %4569
      %v4571 = vmin.f32 %v4538, %v4539
      %4572 = vmin.xlane.f32.xlu0 %v4571
      %v4573 = vpop.xlane.xlu0 %4572
      %v4574 = vmin.f32 %v4540, %v4541
      %4575 = vmin.xlane.f32.xlu0 %v4574
      %v4576 = vpop.xlane.xlu0 %4575
      %v4577 = vmin.f32 %v4542, %v4543
      %4578 = vmin.xlane.f32.xlu0 %v4577
      %v4579 = vpop.xlane.xlu0 %4578
      %v4580 = vmin.f32 %v4544, %v4545
      %4581 = vmin.xlane.f32.xlu0 %v4580
      %v4582 = vpop.xlane.xlu0 %4581
      %v4583 = vmin.f32 %v4546, %v4547
      %4584 = vmin.xlane.f32.xlu0 %v4583
      %v4585 = vpop.xlane.xlu0 %4584
      %v4586 = vmin.f32 %v4548, %v4549
      %4587 = vmin.xlane.f32.xlu0 %v4586
      %v4588 = vpop.xlane.xlu0 %4587
      %v4589 = vmin.f32 %v4550, %v4551
      %4590 = vmin.xlane.f32.xlu0 %v4589
      %v4591 = vpop.xlane.xlu0 %4590
      %v4592 = vmin.f32 %v4552, %v4553
      %4593 = vmin.xlane.f32.xlu0 %v4592
      %v4594 = vpop.xlane.xlu0 %4593
      %v4595 = vmin.f32 %v4554, %v4555
      %4596 = vmin.xlane.f32.xlu0 %v4595
      %v4597 = vpop.xlane.xlu0 %4596
      %v4598 = vmin.f32 %v4556, %v4557
      %4599 = vmin.xlane.f32.xlu0 %v4598
      %v4600 = vpop.xlane.xlu0 %4599
      %v4601 = vmin.f32 %v4558, %v4559
      %4602 = vmin.xlane.f32.xlu0 %v4601
      %v4603 = vpop.xlane.xlu0 %4602
      %v4604 = vmin.f32 %v4560, %v4561
      %4605 = vmin.xlane.f32.xlu0 %v4604
      %v4606 = vpop.xlane.xlu0 %4605
      %v4607 = vmin.f32 %v4562, %v4563
      %4608 = vmin.xlane.f32.xlu0 %v4607
      %v4609 = vpop.xlane.xlu0 %4608
      %v4610 = vmin.f32 %v4564, %v4565
      %4611 = vmin.xlane.f32.xlu0 %v4610
      %v4612 = vpop.xlane.xlu0 %4611
      %v4613 = vmin.f32 %v4566, %v4567
      %4614 = vmin.xlane.f32.xlu0 %v4613
      %v4615 = vpop.xlane.xlu0 %4614
      %vm4616 = vcmp.lt.f32.partialorder %v4570, 1e+30
      %vm4617 = vcmp.lt.f32.partialorder %v4573, 1e+30
      %vm4618 = vcmp.lt.f32.partialorder %v4576, 1e+30
      %vm4619 = vcmp.lt.f32.partialorder %v4579, 1e+30
      %vm4620 = vcmp.lt.f32.partialorder %v4582, 1e+30
      %vm4621 = vcmp.lt.f32.partialorder %v4585, 1e+30
      %vm4622 = vcmp.lt.f32.partialorder %v4588, 1e+30
      %vm4623 = vcmp.lt.f32.partialorder %v4591, 1e+30
      %vm4624 = vcmp.lt.f32.partialorder %v4594, 1e+30
      %vm4625 = vcmp.lt.f32.partialorder %v4597, 1e+30
      %vm4626 = vcmp.lt.f32.partialorder %v4600, 1e+30
      %vm4627 = vcmp.lt.f32.partialorder %v4603, 1e+30
      %vm4628 = vcmp.lt.f32.partialorder %v4606, 1e+30
      %vm4629 = vcmp.lt.f32.partialorder %v4609, 1e+30
      %vm4630 = vcmp.lt.f32.partialorder %v4612, 1e+30
      %vm4631 = vcmp.lt.f32.partialorder %v4615, 1e+30
      %vm4632 = vcmp.eq.f32.partialorder %v4536, %v4570
      %vm4633 = vcmp.eq.f32.partialorder %v4537, %v4570
      %vm4634 = vcmp.eq.f32.partialorder %v4538, %v4573
      %vm4635 = vcmp.eq.f32.partialorder %v4539, %v4573
      %vm4636 = vcmp.eq.f32.partialorder %v4540, %v4576
      %vm4637 = vcmp.eq.f32.partialorder %v4541, %v4576
      %vm4638 = vcmp.eq.f32.partialorder %v4542, %v4579
      %vm4639 = vcmp.eq.f32.partialorder %v4543, %v4579
      %vm4640 = vcmp.eq.f32.partialorder %v4544, %v4582
      %vm4641 = vcmp.eq.f32.partialorder %v4545, %v4582
      %vm4642 = vcmp.eq.f32.partialorder %v4546, %v4585
      %vm4643 = vcmp.eq.f32.partialorder %v4547, %v4585
      %vm4644 = vcmp.eq.f32.partialorder %v4548, %v4588
      %vm4645 = vcmp.eq.f32.partialorder %v4549, %v4588
      %vm4646 = vcmp.eq.f32.partialorder %v4550, %v4591
      %vm4647 = vcmp.eq.f32.partialorder %v4551, %v4591
      %vm4648 = vcmp.eq.f32.partialorder %v4552, %v4594
      %vm4649 = vcmp.eq.f32.partialorder %v4553, %v4594
      %vm4650 = vcmp.eq.f32.partialorder %v4554, %v4597
      %vm4651 = vcmp.eq.f32.partialorder %v4555, %v4597
      %vm4652 = vcmp.eq.f32.partialorder %v4556, %v4600
      %vm4653 = vcmp.eq.f32.partialorder %v4557, %v4600
      %vm4654 = vcmp.eq.f32.partialorder %v4558, %v4603
      %vm4655 = vcmp.eq.f32.partialorder %v4559, %v4603
      %vm4656 = vcmp.eq.f32.partialorder %v4560, %v4606
      %vm4657 = vcmp.eq.f32.partialorder %v4561, %v4606
      %vm4658 = vcmp.eq.f32.partialorder %v4562, %v4609
      %vm4659 = vcmp.eq.f32.partialorder %v4563, %v4609
      %vm4660 = vcmp.eq.f32.partialorder %v4564, %v4612
      %vm4661 = vcmp.eq.f32.partialorder %v4565, %v4612
      %vm4662 = vcmp.eq.f32.partialorder %v4566, %v4615
      %vm4663 = vcmp.eq.f32.partialorder %v4567, %v4615
      %v4664 = vsel %vm4632, %v899, 256
      %v4665 = vsel %vm4633, %v900, 256
      %v4666 = vsel %vm4634, %v899, 256
      %v4667 = vsel %vm4635, %v900, 256
      %v4668 = vsel %vm4636, %v899, 256
      %v4669 = vsel %vm4637, %v900, 256
      %v4670 = vsel %vm4638, %v899, 256
      %v4671 = vsel %vm4639, %v900, 256
      %v4672 = vsel %vm4640, %v899, 256
      %v4673 = vsel %vm4641, %v900, 256
      %v4674 = vsel %vm4642, %v899, 256
      %v4675 = vsel %vm4643, %v900, 256
      %v4676 = vsel %vm4644, %v899, 256
      %v4677 = vsel %vm4645, %v900, 256
      %v4678 = vsel %vm4646, %v899, 256
      %v4679 = vsel %vm4647, %v900, 256
      %v4680 = vsel %vm4648, %v899, 256
      %v4681 = vsel %vm4649, %v900, 256
      %v4682 = vsel %vm4650, %v899, 256
      %v4683 = vsel %vm4651, %v900, 256
      %v4684 = vsel %vm4652, %v899, 256
      %v4685 = vsel %vm4653, %v900, 256
      %v4686 = vsel %vm4654, %v899, 256
      %v4687 = vsel %vm4655, %v900, 256
      %v4688 = vsel %vm4656, %v899, 256
      %v4689 = vsel %vm4657, %v900, 256
      %v4690 = vsel %vm4658, %v899, 256
      %v4691 = vsel %vm4659, %v900, 256
      %v4692 = vsel %vm4660, %v899, 256
      %v4693 = vsel %vm4661, %v900, 256
      %v4694 = vsel %vm4662, %v899, 256
      %v4695 = vsel %vm4663, %v900, 256
      %vm4696 = vcmp.lt.s32.totalorder %v4664, %v4665
      %v4697 = vsel %vm4696, %v4664, %v4665
      %v4698 = vand.u32 %v4697, 65535
      %v4699 = vshra.s32 %v4697, 16
      %v4700 = vcvt.s32.f32 %v4698
      %v4701 = vcvt.s32.f32 %v4699
      %4702 = vmin.xlane.f32.xlu0 %v4701
      %v4703 = vpop.xlane.xlu0 %4702
      %vm4704 = vcmp.eq.f32.partialorder %v4701, %v4703
      %v4705 = vsel %vm4704, %v4700, inf
      %4706 = vmin.xlane.f32.xlu0 %v4705
      %v4707 = vpop.xlane.xlu0 %4706
      %v4708 = vcvt.f32.s32 %v4707
      %v4709 = vcvt.f32.s32 %v4703
      %v4710 = vshll.u32 %v4709, 16
      %v4711 = vadd.s32 %v4710, %v4708
      %vm4712 = vcmp.lt.s32.totalorder %v4666, %v4667
      %v4713 = vsel %vm4712, %v4666, %v4667
      %v4714 = vand.u32 %v4713, 65535
      %v4715 = vshra.s32 %v4713, 16
      %v4716 = vcvt.s32.f32 %v4714
      %v4717 = vcvt.s32.f32 %v4715
      %4718 = vmin.xlane.f32.xlu0 %v4717
      %v4719 = vpop.xlane.xlu0 %4718
      %vm4720 = vcmp.eq.f32.partialorder %v4717, %v4719
      %v4721 = vsel %vm4720, %v4716, inf
      %4722 = vmin.xlane.f32.xlu0 %v4721
      %v4723 = vpop.xlane.xlu0 %4722
      %v4724 = vcvt.f32.s32 %v4723
      %v4725 = vcvt.f32.s32 %v4719
      %v4726 = vshll.u32 %v4725, 16
      %v4727 = vadd.s32 %v4726, %v4724
      %vm4728 = vcmp.lt.s32.totalorder %v4668, %v4669
      %v4729 = vsel %vm4728, %v4668, %v4669
      %v4730 = vand.u32 %v4729, 65535
      %v4731 = vshra.s32 %v4729, 16
      %v4732 = vcvt.s32.f32 %v4730
      %v4733 = vcvt.s32.f32 %v4731
      %4734 = vmin.xlane.f32.xlu0 %v4733
      %v4735 = vpop.xlane.xlu0 %4734
      %vm4736 = vcmp.eq.f32.partialorder %v4733, %v4735
      %v4737 = vsel %vm4736, %v4732, inf
      %4738 = vmin.xlane.f32.xlu0 %v4737
      %v4739 = vpop.xlane.xlu0 %4738
      %v4740 = vcvt.f32.s32 %v4739
      %v4741 = vcvt.f32.s32 %v4735
      %v4742 = vshll.u32 %v4741, 16
      %v4743 = vadd.s32 %v4742, %v4740
      %vm4744 = vcmp.lt.s32.totalorder %v4670, %v4671
      %v4745 = vsel %vm4744, %v4670, %v4671
      %v4746 = vand.u32 %v4745, 65535
      %v4747 = vshra.s32 %v4745, 16
      %v4748 = vcvt.s32.f32 %v4746
      %v4749 = vcvt.s32.f32 %v4747
      %4750 = vmin.xlane.f32.xlu0 %v4749
      %v4751 = vpop.xlane.xlu0 %4750
      %vm4752 = vcmp.eq.f32.partialorder %v4749, %v4751
      %v4753 = vsel %vm4752, %v4748, inf
      %4754 = vmin.xlane.f32.xlu0 %v4753
      %v4755 = vpop.xlane.xlu0 %4754
      %v4756 = vcvt.f32.s32 %v4755
      %v4757 = vcvt.f32.s32 %v4751
      %v4758 = vshll.u32 %v4757, 16
      %v4759 = vadd.s32 %v4758, %v4756
      %vm4760 = vcmp.lt.s32.totalorder %v4672, %v4673
      %v4761 = vsel %vm4760, %v4672, %v4673
      %v4762 = vand.u32 %v4761, 65535
      %v4763 = vshra.s32 %v4761, 16
      %v4764 = vcvt.s32.f32 %v4762
      %v4765 = vcvt.s32.f32 %v4763
      %4766 = vmin.xlane.f32.xlu0 %v4765
      %v4767 = vpop.xlane.xlu0 %4766
      %vm4768 = vcmp.eq.f32.partialorder %v4765, %v4767
      %v4769 = vsel %vm4768, %v4764, inf
      %4770 = vmin.xlane.f32.xlu0 %v4769
      %v4771 = vpop.xlane.xlu0 %4770
      %v4772 = vcvt.f32.s32 %v4771
      %v4773 = vcvt.f32.s32 %v4767
      %v4774 = vshll.u32 %v4773, 16
      %v4775 = vadd.s32 %v4774, %v4772
      %vm4776 = vcmp.lt.s32.totalorder %v4674, %v4675
      %v4777 = vsel %vm4776, %v4674, %v4675
      %v4778 = vand.u32 %v4777, 65535
      %v4779 = vshra.s32 %v4777, 16
      %v4780 = vcvt.s32.f32 %v4778
      %v4781 = vcvt.s32.f32 %v4779
      %4782 = vmin.xlane.f32.xlu0 %v4781
      %v4783 = vpop.xlane.xlu0 %4782
      %vm4784 = vcmp.eq.f32.partialorder %v4781, %v4783
      %v4785 = vsel %vm4784, %v4780, inf
      %4786 = vmin.xlane.f32.xlu0 %v4785
      %v4787 = vpop.xlane.xlu0 %4786
      %v4788 = vcvt.f32.s32 %v4787
      %v4789 = vcvt.f32.s32 %v4783
      %v4790 = vshll.u32 %v4789, 16
      %v4791 = vadd.s32 %v4790, %v4788
      %vm4792 = vcmp.lt.s32.totalorder %v4676, %v4677
      %v4793 = vsel %vm4792, %v4676, %v4677
      %v4794 = vand.u32 %v4793, 65535
      %v4795 = vshra.s32 %v4793, 16
      %v4796 = vcvt.s32.f32 %v4794
      %v4797 = vcvt.s32.f32 %v4795
      %4798 = vmin.xlane.f32.xlu0 %v4797
      %v4799 = vpop.xlane.xlu0 %4798
      %vm4800 = vcmp.eq.f32.partialorder %v4797, %v4799
      %v4801 = vsel %vm4800, %v4796, inf
      %4802 = vmin.xlane.f32.xlu0 %v4801
      %v4803 = vpop.xlane.xlu0 %4802
      %v4804 = vcvt.f32.s32 %v4803
      %v4805 = vcvt.f32.s32 %v4799
      %v4806 = vshll.u32 %v4805, 16
      %v4807 = vadd.s32 %v4806, %v4804
      %vm4808 = vcmp.lt.s32.totalorder %v4678, %v4679
      %v4809 = vsel %vm4808, %v4678, %v4679
      %v4810 = vand.u32 %v4809, 65535
      %v4811 = vshra.s32 %v4809, 16
      %v4812 = vcvt.s32.f32 %v4810
      %v4813 = vcvt.s32.f32 %v4811
      %4814 = vmin.xlane.f32.xlu0 %v4813
      %v4815 = vpop.xlane.xlu0 %4814
      %vm4816 = vcmp.eq.f32.partialorder %v4813, %v4815
      %v4817 = vsel %vm4816, %v4812, inf
      %4818 = vmin.xlane.f32.xlu0 %v4817
      %v4819 = vpop.xlane.xlu0 %4818
      %v4820 = vcvt.f32.s32 %v4819
      %v4821 = vcvt.f32.s32 %v4815
      %v4822 = vshll.u32 %v4821, 16
      %v4823 = vadd.s32 %v4822, %v4820
      %vm4824 = vcmp.lt.s32.totalorder %v4680, %v4681
      %v4825 = vsel %vm4824, %v4680, %v4681
      %v4826 = vand.u32 %v4825, 65535
      %v4827 = vshra.s32 %v4825, 16
      %v4828 = vcvt.s32.f32 %v4826
      %v4829 = vcvt.s32.f32 %v4827
      %4830 = vmin.xlane.f32.xlu0 %v4829
      %v4831 = vpop.xlane.xlu0 %4830
      %vm4832 = vcmp.eq.f32.partialorder %v4829, %v4831
      %v4833 = vsel %vm4832, %v4828, inf
      %4834 = vmin.xlane.f32.xlu0 %v4833
      %v4835 = vpop.xlane.xlu0 %4834
      %v4836 = vcvt.f32.s32 %v4835
      %v4837 = vcvt.f32.s32 %v4831
      %v4838 = vshll.u32 %v4837, 16
      %v4839 = vadd.s32 %v4838, %v4836
      %vm4840 = vcmp.lt.s32.totalorder %v4682, %v4683
      %v4841 = vsel %vm4840, %v4682, %v4683
      %v4842 = vand.u32 %v4841, 65535
      %v4843 = vshra.s32 %v4841, 16
      %v4844 = vcvt.s32.f32 %v4842
      %v4845 = vcvt.s32.f32 %v4843
      %4846 = vmin.xlane.f32.xlu0 %v4845
      %v4847 = vpop.xlane.xlu0 %4846
      %vm4848 = vcmp.eq.f32.partialorder %v4845, %v4847
      %v4849 = vsel %vm4848, %v4844, inf
      %4850 = vmin.xlane.f32.xlu0 %v4849
      %v4851 = vpop.xlane.xlu0 %4850
      %v4852 = vcvt.f32.s32 %v4851
      %v4853 = vcvt.f32.s32 %v4847
      %v4854 = vshll.u32 %v4853, 16
      %v4855 = vadd.s32 %v4854, %v4852
      %vm4856 = vcmp.lt.s32.totalorder %v4684, %v4685
      %v4857 = vsel %vm4856, %v4684, %v4685
      %v4858 = vand.u32 %v4857, 65535
      %v4859 = vshra.s32 %v4857, 16
      %v4860 = vcvt.s32.f32 %v4858
      %v4861 = vcvt.s32.f32 %v4859
      %4862 = vmin.xlane.f32.xlu0 %v4861
      %v4863 = vpop.xlane.xlu0 %4862
      %vm4864 = vcmp.eq.f32.partialorder %v4861, %v4863
      %v4865 = vsel %vm4864, %v4860, inf
      %4866 = vmin.xlane.f32.xlu0 %v4865
      %v4867 = vpop.xlane.xlu0 %4866
      %v4868 = vcvt.f32.s32 %v4867
      %v4869 = vcvt.f32.s32 %v4863
      %v4870 = vshll.u32 %v4869, 16
      %v4871 = vadd.s32 %v4870, %v4868
      %vm4872 = vcmp.lt.s32.totalorder %v4686, %v4687
      %v4873 = vsel %vm4872, %v4686, %v4687
      %v4874 = vand.u32 %v4873, 65535
      %v4875 = vshra.s32 %v4873, 16
      %v4876 = vcvt.s32.f32 %v4874
      %v4877 = vcvt.s32.f32 %v4875
      %4878 = vmin.xlane.f32.xlu0 %v4877
      %v4879 = vpop.xlane.xlu0 %4878
      %vm4880 = vcmp.eq.f32.partialorder %v4877, %v4879
      %v4881 = vsel %vm4880, %v4876, inf
      %4882 = vmin.xlane.f32.xlu0 %v4881
      %v4883 = vpop.xlane.xlu0 %4882
      %v4884 = vcvt.f32.s32 %v4883
      %v4885 = vcvt.f32.s32 %v4879
      %v4886 = vshll.u32 %v4885, 16
      %v4887 = vadd.s32 %v4886, %v4884
      %vm4888 = vcmp.lt.s32.totalorder %v4688, %v4689
      %v4889 = vsel %vm4888, %v4688, %v4689
      %v4890 = vand.u32 %v4889, 65535
      %v4891 = vshra.s32 %v4889, 16
      %v4892 = vcvt.s32.f32 %v4890
      %v4893 = vcvt.s32.f32 %v4891
      %4894 = vmin.xlane.f32.xlu0 %v4893
      %v4895 = vpop.xlane.xlu0 %4894
      %vm4896 = vcmp.eq.f32.partialorder %v4893, %v4895
      %v4897 = vsel %vm4896, %v4892, inf
      %4898 = vmin.xlane.f32.xlu0 %v4897
      %v4899 = vpop.xlane.xlu0 %4898
      %v4900 = vcvt.f32.s32 %v4899
      %v4901 = vcvt.f32.s32 %v4895
      %v4902 = vshll.u32 %v4901, 16
      %v4903 = vadd.s32 %v4902, %v4900
      %vm4904 = vcmp.lt.s32.totalorder %v4690, %v4691
      %v4905 = vsel %vm4904, %v4690, %v4691
      %v4906 = vand.u32 %v4905, 65535
      %v4907 = vshra.s32 %v4905, 16
      %v4908 = vcvt.s32.f32 %v4906
      %v4909 = vcvt.s32.f32 %v4907
      %4910 = vmin.xlane.f32.xlu0 %v4909
      %v4911 = vpop.xlane.xlu0 %4910
      %vm4912 = vcmp.eq.f32.partialorder %v4909, %v4911
      %v4913 = vsel %vm4912, %v4908, inf
      %4914 = vmin.xlane.f32.xlu0 %v4913
      %v4915 = vpop.xlane.xlu0 %4914
      %v4916 = vcvt.f32.s32 %v4915
      %v4917 = vcvt.f32.s32 %v4911
      %v4918 = vshll.u32 %v4917, 16
      %v4919 = vadd.s32 %v4918, %v4916
      %vm4920 = vcmp.lt.s32.totalorder %v4692, %v4693
      %v4921 = vsel %vm4920, %v4692, %v4693
      %v4922 = vand.u32 %v4921, 65535
      %v4923 = vshra.s32 %v4921, 16
      %v4924 = vcvt.s32.f32 %v4922
      %v4925 = vcvt.s32.f32 %v4923
      %4926 = vmin.xlane.f32.xlu0 %v4925
      %v4927 = vpop.xlane.xlu0 %4926
      %vm4928 = vcmp.eq.f32.partialorder %v4925, %v4927
      %v4929 = vsel %vm4928, %v4924, inf
      %4930 = vmin.xlane.f32.xlu0 %v4929
      %v4931 = vpop.xlane.xlu0 %4930
      %v4932 = vcvt.f32.s32 %v4931
      %v4933 = vcvt.f32.s32 %v4927
      %v4934 = vshll.u32 %v4933, 16
      %v4935 = vadd.s32 %v4934, %v4932
      %vm4936 = vcmp.lt.s32.totalorder %v4694, %v4695
      %v4937 = vsel %vm4936, %v4694, %v4695
      %v4938 = vand.u32 %v4937, 65535
      %v4939 = vshra.s32 %v4937, 16
      %v4940 = vcvt.s32.f32 %v4938
      %v4941 = vcvt.s32.f32 %v4939
      %4942 = vmin.xlane.f32.xlu0 %v4941
      %v4943 = vpop.xlane.xlu0 %4942
      %vm4944 = vcmp.eq.f32.partialorder %v4941, %v4943
      %v4945 = vsel %vm4944, %v4940, inf
      %4946 = vmin.xlane.f32.xlu0 %v4945
      %v4947 = vpop.xlane.xlu0 %4946
      %v4948 = vcvt.f32.s32 %v4947
      %v4949 = vcvt.f32.s32 %v4943
      %v4950 = vshll.u32 %v4949, 16
      %v4951 = vadd.s32 %v4950, %v4948
      %vm4952 = vcmp.eq.s32.totalorder %v899, %v4711
      %vm4953 = vcmp.eq.s32.totalorder %v900, %v4711
      %vm4954 = vcmp.eq.s32.totalorder %v899, %v4727
      %vm4955 = vcmp.eq.s32.totalorder %v900, %v4727
      %vm4956 = vcmp.eq.s32.totalorder %v899, %v4743
      %vm4957 = vcmp.eq.s32.totalorder %v900, %v4743
      %vm4958 = vcmp.eq.s32.totalorder %v899, %v4759
      %vm4959 = vcmp.eq.s32.totalorder %v900, %v4759
      %vm4960 = vcmp.eq.s32.totalorder %v899, %v4775
      %vm4961 = vcmp.eq.s32.totalorder %v900, %v4775
      %vm4962 = vcmp.eq.s32.totalorder %v899, %v4791
      %vm4963 = vcmp.eq.s32.totalorder %v900, %v4791
      %vm4964 = vcmp.eq.s32.totalorder %v899, %v4807
      %vm4965 = vcmp.eq.s32.totalorder %v900, %v4807
      %vm4966 = vcmp.eq.s32.totalorder %v899, %v4823
      %vm4967 = vcmp.eq.s32.totalorder %v900, %v4823
      %vm4968 = vcmp.eq.s32.totalorder %v899, %v4839
      %vm4969 = vcmp.eq.s32.totalorder %v900, %v4839
      %vm4970 = vcmp.eq.s32.totalorder %v899, %v4855
      %vm4971 = vcmp.eq.s32.totalorder %v900, %v4855
      %vm4972 = vcmp.eq.s32.totalorder %v899, %v4871
      %vm4973 = vcmp.eq.s32.totalorder %v900, %v4871
      %vm4974 = vcmp.eq.s32.totalorder %v899, %v4887
      %vm4975 = vcmp.eq.s32.totalorder %v900, %v4887
      %vm4976 = vcmp.eq.s32.totalorder %v899, %v4903
      %vm4977 = vcmp.eq.s32.totalorder %v900, %v4903
      %vm4978 = vcmp.eq.s32.totalorder %v899, %v4919
      %vm4979 = vcmp.eq.s32.totalorder %v900, %v4919
      %vm4980 = vcmp.eq.s32.totalorder %v899, %v4935
      %vm4981 = vcmp.eq.s32.totalorder %v900, %v4935
      %vm4982 = vcmp.eq.s32.totalorder %v899, %v4951
      %vm4983 = vcmp.eq.s32.totalorder %v900, %v4951
      %v4984 = vsel %vm4952, 1, 0
      %v4985 = vsel %vm4953, 1, 0
      %v4986 = vsel %vm4954, 1, 0
      %v4987 = vsel %vm4955, 1, 0
      %v4988 = vsel %vm4956, 1, 0
      %v4989 = vsel %vm4957, 1, 0
      %v4990 = vsel %vm4958, 1, 0
      %v4991 = vsel %vm4959, 1, 0
      %v4992 = vsel %vm4960, 1, 0
      %v4993 = vsel %vm4961, 1, 0
      %v4994 = vsel %vm4962, 1, 0
      %v4995 = vsel %vm4963, 1, 0
      %v4996 = vsel %vm4964, 1, 0
      %v4997 = vsel %vm4965, 1, 0
      %v4998 = vsel %vm4966, 1, 0
      %v4999 = vsel %vm4967, 1, 0
      %v5000 = vsel %vm4968, 1, 0
      %v5001 = vsel %vm4969, 1, 0
      %v5002 = vsel %vm4970, 1, 0
      %v5003 = vsel %vm4971, 1, 0
      %v5004 = vsel %vm4972, 1, 0
      %v5005 = vsel %vm4973, 1, 0
      %v5006 = vsel %vm4974, 1, 0
      %v5007 = vsel %vm4975, 1, 0
      %v5008 = vsel %vm4976, 1, 0
      %v5009 = vsel %vm4977, 1, 0
      %v5010 = vsel %vm4978, 1, 0
      %v5011 = vsel %vm4979, 1, 0
      %v5012 = vsel %vm4980, 1, 0
      %v5013 = vsel %vm4981, 1, 0
      %v5014 = vsel %vm4982, 1, 0
      %v5015 = vsel %vm4983, 1, 0
      %v5016 = vcvt.s32.f32 %v4984
      %v5017 = vcvt.s32.f32 %v4985
      %v5018 = vcvt.s32.f32 %v4986
      %v5019 = vcvt.s32.f32 %v4987
      %v5020 = vcvt.s32.f32 %v4988
      %v5021 = vcvt.s32.f32 %v4989
      %v5022 = vcvt.s32.f32 %v4990
      %v5023 = vcvt.s32.f32 %v4991
      %v5024 = vcvt.s32.f32 %v4992
      %v5025 = vcvt.s32.f32 %v4993
      %v5026 = vcvt.s32.f32 %v4994
      %v5027 = vcvt.s32.f32 %v4995
      %v5028 = vcvt.s32.f32 %v4996
      %v5029 = vcvt.s32.f32 %v4997
      %v5030 = vcvt.s32.f32 %v4998
      %v5031 = vcvt.s32.f32 %v4999
      %v5032 = vcvt.s32.f32 %v5000
      %v5033 = vcvt.s32.f32 %v5001
      %v5034 = vcvt.s32.f32 %v5002
      %v5035 = vcvt.s32.f32 %v5003
      %v5036 = vcvt.s32.f32 %v5004
      %v5037 = vcvt.s32.f32 %v5005
      %v5038 = vcvt.s32.f32 %v5006
      %v5039 = vcvt.s32.f32 %v5007
      %v5040 = vcvt.s32.f32 %v5008
      %v5041 = vcvt.s32.f32 %v5009
      %v5042 = vcvt.s32.f32 %v5010
      %v5043 = vcvt.s32.f32 %v5011
      %v5044 = vcvt.s32.f32 %v5012
      %v5045 = vcvt.s32.f32 %v5013
      %v5046 = vcvt.s32.f32 %v5014
      %v5047 = vcvt.s32.f32 %v5015
      %5048 = vmatprep.subr.mxu0 0.0
      %5049 = vmatpush1.msra.mxu0 %v1404
      %5050 = vmatprep.subr.mxu0 0.0
      %5051 = vmatpush1.msra.mxu0 %v1403
      %5052 = vmatprep.subr.mxu0 0.0
      %5053 = vmatpush1.msra.mxu0 %v1402
      %5054 = vmatprep.subr.mxu0 0.0
      %5055 = vmatpush1.msra.mxu0 %v1401
      %5056 = vmatprep.subr.mxu0 0.0
      %5057 = vmatpush1.msra.mxu0 %v1400
      %5058 = vmatprep.subr.mxu0 0.0
      %5059 = vmatpush1.msra.mxu0 %v1399
      %5060 = vmatprep.subr.mxu0 0.0
      %5061 = vmatpush1.msra.mxu0 %v1398
      %5062 = vmatprep.subr.mxu0 0.0
      %5063 = vmatpush1.msra.mxu0 %v1397
      %5064 = vmatprep.subr.mxu0 0.0
      %5065 = vmatpush1.msra.mxu0 %v1396
      %5066 = vmatprep.subr.mxu0 0.0
      %5067 = vmatpush1.msra.mxu0 %v1395
      %5068 = vmatprep.subr.mxu0 0.0
      %5069 = vmatpush1.msra.mxu0 %v1394
      %5070 = vmatprep.subr.mxu0 0.0
      %5071 = vmatpush1.msra.mxu0 %v1393
      %5072 = vmatprep.subr.mxu0 0.0
      %5073 = vmatpush1.msra.mxu0 %v1392
      %5074 = vmatprep.subr.mxu0 0.0
      %5075 = vmatpush1.msra.mxu0 %v1391
      %5076 = vmatprep.subr.mxu0 0.0
      %5077 = vmatpush1.msra.mxu0 %v1390
      %5078 = vmatprep.subr.mxu0 0.0
      %5079 = vmatpush1.msra.mxu0 %v1389
      %5080 = vmatprep.subr.mxu0 0.0
      %5081 = vmatpush2.msra.mxu0 %v1420
      %5082 = vmatprep.subr.mxu0 0.0
      %5083 = vmatpush2.msra.mxu0 %v1419
      %5084 = vmatprep.subr.mxu0 0.0
      %5085 = vmatpush2.msra.mxu0 %v1418
      %5086 = vmatprep.subr.mxu0 0.0
      %5087 = vmatpush2.msra.mxu0 %v1417
      %5088 = vmatprep.subr.mxu0 0.0
      %5089 = vmatpush2.msra.mxu0 %v1416
      %5090 = vmatprep.subr.mxu0 0.0
      %5091 = vmatpush2.msra.mxu0 %v1415
      %5092 = vmatprep.subr.mxu0 0.0
      %5093 = vmatpush2.msra.mxu0 %v1414
      %5094 = vmatprep.subr.mxu0 0.0
      %5095 = vmatpush2.msra.mxu0 %v1413
      %5096 = vmatprep.subr.mxu0 0.0
      %5097 = vmatpush2.msra.mxu0 %v1412
      %5098 = vmatprep.subr.mxu0 0.0
      %5099 = vmatpush2.msra.mxu0 %v1411
      %5100 = vmatprep.subr.mxu0 0.0
      %5101 = vmatpush2.msra.mxu0 %v1410
      %5102 = vmatprep.subr.mxu0 0.0
      %5103 = vmatpush2.msra.mxu0 %v1409
      %5104 = vmatprep.subr.mxu0 0.0
      %5105 = vmatpush2.msra.mxu0 %v1408
      %5106 = vmatprep.subr.mxu0 0.0
      %5107 = vmatpush2.msra.mxu0 %v1407
      %5108 = vmatprep.subr.mxu0 0.0
      %5109 = vmatpush2.msra.mxu0 %v1406
      %5110 = vmatprep.subr.mxu0 0.0
      %5111 = vmatpush2.msra.mxu0 %v1405
      %5112 = vmatprep.mubr.f32.mxu0 %v5017
      %5113 = vmatmul.mubr.f32.gmra.mxu0 %v5016
      %v5114 = vpop.f32.mrf.mxu0
      %v5115 = vadd.f32 0.0, %v5114
      %v5116 = vpop.f32.mrf.mxu0
      %5117 = vmatprep.mubr.f32.mxu0 %v5019
      %5118 = vmatmul.mubr.f32.gmra.mxu0 %v5018
      %v5119 = vpop.f32.mrf.mxu0
      %v5120 = vadd.f32 0.0, %v5119
      %v5121 = vpop.f32.mrf.mxu0
      %5122 = vmatprep.mubr.f32.mxu0 %v5021
      %5123 = vmatmul.mubr.f32.gmra.mxu0 %v5020
      %v5124 = vpop.f32.mrf.mxu0
      %v5125 = vadd.f32 0.0, %v5124
      %v5126 = vpop.f32.mrf.mxu0
      %5127 = vmatprep.mubr.f32.mxu0 %v5023
      %5128 = vmatmul.mubr.f32.gmra.mxu0 %v5022
      %v5129 = vpop.f32.mrf.mxu0
      %v5130 = vadd.f32 0.0, %v5129
      %v5131 = vpop.f32.mrf.mxu0
      %5132 = vmatprep.mubr.f32.mxu0 %v5025
      %5133 = vmatmul.mubr.f32.gmra.mxu0 %v5024
      %v5134 = vpop.f32.mrf.mxu0
      %v5135 = vadd.f32 0.0, %v5134
      %v5136 = vpop.f32.mrf.mxu0
      %5137 = vmatprep.mubr.f32.mxu0 %v5027
      %5138 = vmatmul.mubr.f32.gmra.mxu0 %v5026
      %v5139 = vpop.f32.mrf.mxu0
      %v5140 = vadd.f32 0.0, %v5139
      %v5141 = vpop.f32.mrf.mxu0
      %5142 = vmatprep.mubr.f32.mxu0 %v5029
      %5143 = vmatmul.mubr.f32.gmra.mxu0 %v5028
      %v5144 = vpop.f32.mrf.mxu0
      %v5145 = vadd.f32 0.0, %v5144
      %v5146 = vpop.f32.mrf.mxu0
      %5147 = vmatprep.mubr.f32.mxu0 %v5031
      %5148 = vmatmul.mubr.f32.gmra.mxu0 %v5030
      %v5149 = vpop.f32.mrf.mxu0
      %v5150 = vadd.f32 0.0, %v5149
      %v5151 = vpop.f32.mrf.mxu0
      %5152 = vmatprep.mubr.f32.mxu0 %v5033
      %5153 = vmatmul.mubr.f32.gmra.mxu0 %v5032
      %v5154 = vpop.f32.mrf.mxu0
      %v5155 = vadd.f32 0.0, %v5154
      %v5156 = vpop.f32.mrf.mxu0
      %5157 = vmatprep.mubr.f32.mxu0 %v5035
      %5158 = vmatmul.mubr.f32.gmra.mxu0 %v5034
      %v5159 = vpop.f32.mrf.mxu0
      %v5160 = vadd.f32 0.0, %v5159
      %v5161 = vpop.f32.mrf.mxu0
      %5162 = vmatprep.mubr.f32.mxu0 %v5037
      %5163 = vmatmul.mubr.f32.gmra.mxu0 %v5036
      %v5164 = vpop.f32.mrf.mxu0
      %v5165 = vadd.f32 0.0, %v5164
      %v5166 = vpop.f32.mrf.mxu0
      %5167 = vmatprep.mubr.f32.mxu0 %v5039
      %5168 = vmatmul.mubr.f32.gmra.mxu0 %v5038
      %v5169 = vpop.f32.mrf.mxu0
      %v5170 = vadd.f32 0.0, %v5169
      %v5171 = vpop.f32.mrf.mxu0
      %5172 = vmatprep.mubr.f32.mxu0 %v5041
      %5173 = vmatmul.mubr.f32.gmra.mxu0 %v5040
      %v5174 = vpop.f32.mrf.mxu0
      %v5175 = vadd.f32 0.0, %v5174
      %v5176 = vpop.f32.mrf.mxu0
      %5177 = vmatprep.mubr.f32.mxu0 %v5043
      %5178 = vmatmul.mubr.f32.gmra.mxu0 %v5042
      %v5179 = vpop.f32.mrf.mxu0
      %v5180 = vadd.f32 0.0, %v5179
      %v5181 = vpop.f32.mrf.mxu0
      %5182 = vmatprep.mubr.f32.mxu0 %v5045
      %5183 = vmatmul.mubr.f32.gmra.mxu0 %v5044
      %v5184 = vpop.f32.mrf.mxu0
      %v5185 = vadd.f32 0.0, %v5184
      %v5186 = vpop.f32.mrf.mxu0
      %5187 = vmatprep.mubr.f32.mxu0 %v5047
      %5188 = vmatmul.mubr.f32.gmra.mxu0 %v5046
      %v5189 = vpop.f32.mrf.mxu0
      %v5190 = vadd.f32 0.0, %v5189
      %v5191 = vpop.f32.mrf.mxu0
      %5192 = vdwg.mxu0
      %v5193 = vmul.f32 %v5115, %v1311
      %v5194 = vmul.f32 %v5120, %v1316
      %v5195 = vmul.f32 %v5125, %v1321
      %v5196 = vmul.f32 %v5130, %v1326
      %v5197 = vmul.f32 %v5135, %v1331
      %v5198 = vmul.f32 %v5140, %v1336
      %v5199 = vmul.f32 %v5145, %v1341
      %v5200 = vmul.f32 %v5150, %v1346
      %v5201 = vmul.f32 %v5155, %v1351
      %v5202 = vmul.f32 %v5160, %v1356
      %v5203 = vmul.f32 %v5165, %v1361
      %v5204 = vmul.f32 %v5170, %v1366
      %v5205 = vmul.f32 %v5175, %v1371
      %v5206 = vmul.f32 %v5180, %v1376
      %v5207 = vmul.f32 %v5185, %v1381
      %v5208 = vmul.f32 %v5190, %v1386
      %v5209 = vsel %vm1191, %v5193, 0.0
      %5210 = vadd.xlane.f32.xlu0 %v5209
      %v5211 = vpop.xlane.xlu0 %5210
      %v5212 = vsel %vm1191, %v5194, 0.0
      %5213 = vadd.xlane.f32.xlu0 %v5212
      %v5214 = vpop.xlane.xlu0 %5213
      %v5215 = vsel %vm1191, %v5195, 0.0
      %5216 = vadd.xlane.f32.xlu0 %v5215
      %v5217 = vpop.xlane.xlu0 %5216
      %v5218 = vsel %vm1191, %v5196, 0.0
      %5219 = vadd.xlane.f32.xlu0 %v5218
      %v5220 = vpop.xlane.xlu0 %5219
      %v5221 = vsel %vm1191, %v5197, 0.0
      %5222 = vadd.xlane.f32.xlu0 %v5221
      %v5223 = vpop.xlane.xlu0 %5222
      %v5224 = vsel %vm1191, %v5198, 0.0
      %5225 = vadd.xlane.f32.xlu0 %v5224
      %v5226 = vpop.xlane.xlu0 %5225
      %v5227 = vsel %vm1191, %v5199, 0.0
      %5228 = vadd.xlane.f32.xlu0 %v5227
      %v5229 = vpop.xlane.xlu0 %5228
      %v5230 = vsel %vm1191, %v5200, 0.0
      %5231 = vadd.xlane.f32.xlu0 %v5230
      %v5232 = vpop.xlane.xlu0 %5231
      %v5233 = vsel %vm1191, %v5201, 0.0
      %5234 = vadd.xlane.f32.xlu0 %v5233
      %v5235 = vpop.xlane.xlu0 %5234
      %v5236 = vsel %vm1191, %v5202, 0.0
      %5237 = vadd.xlane.f32.xlu0 %v5236
      %v5238 = vpop.xlane.xlu0 %5237
      %v5239 = vsel %vm1191, %v5203, 0.0
      %5240 = vadd.xlane.f32.xlu0 %v5239
      %v5241 = vpop.xlane.xlu0 %5240
      %v5242 = vsel %vm1191, %v5204, 0.0
      %5243 = vadd.xlane.f32.xlu0 %v5242
      %v5244 = vpop.xlane.xlu0 %5243
      %v5245 = vsel %vm1191, %v5205, 0.0
      %5246 = vadd.xlane.f32.xlu0 %v5245
      %v5247 = vpop.xlane.xlu0 %5246
      %v5248 = vsel %vm1191, %v5206, 0.0
      %5249 = vadd.xlane.f32.xlu0 %v5248
      %v5250 = vpop.xlane.xlu0 %5249
      %v5251 = vsel %vm1191, %v5207, 0.0
      %5252 = vadd.xlane.f32.xlu0 %v5251
      %v5253 = vpop.xlane.xlu0 %5252
      %v5254 = vsel %vm1191, %v5208, 0.0
      %5255 = vadd.xlane.f32.xlu0 %v5254
      %v5256 = vpop.xlane.xlu0 %5255
      %v5257 = vadd.f32 %v5211, %v2115
      %v5258 = vadd.f32 %v5214, %v2115
      %v5259 = vadd.f32 %v5217, %v2115
      %v5260 = vadd.f32 %v5220, %v2115
      %v5261 = vadd.f32 %v5223, %v2115
      %v5262 = vadd.f32 %v5226, %v2115
      %v5263 = vadd.f32 %v5229, %v2115
      %v5264 = vadd.f32 %v5232, %v2115
      %v5265 = vadd.f32 %v5235, %v2115
      %v5266 = vadd.f32 %v5238, %v2115
      %v5267 = vadd.f32 %v5241, %v2115
      %v5268 = vadd.f32 %v5244, %v2115
      %v5269 = vadd.f32 %v5247, %v2115
      %v5270 = vadd.f32 %v5250, %v2115
      %v5271 = vadd.f32 %v5253, %v2115
      %v5272 = vadd.f32 %v5256, %v2115
      %v5273 = vsel %vm4616, %v4711, %v920
      %v5274 = vsel %vm4617, %v4727, %v921
      %v5275 = vsel %vm4618, %v4743, %v922
      %v5276 = vsel %vm4619, %v4759, %v923
      %v5277 = vsel %vm4620, %v4775, %v924
      %v5278 = vsel %vm4621, %v4791, %v925
      %v5279 = vsel %vm4622, %v4807, %v926
      %v5280 = vsel %vm4623, %v4823, %v927
      %v5281 = vsel %vm4624, %v4839, %v928
      %v5282 = vsel %vm4625, %v4855, %v929
      %v5283 = vsel %vm4626, %v4871, %v930
      %v5284 = vsel %vm4627, %v4887, %v931
      %v5285 = vsel %vm4628, %v4903, %v932
      %v5286 = vsel %vm4629, %v4919, %v933
      %v5287 = vsel %vm4630, %v4935, %v934
      %v5288 = vsel %vm4631, %v4951, %v935
      %v5289 = vsel %vm4616, %v5257, 0.0
      %v5290 = vsel %vm4617, %v5258, 0.0
      %v5291 = vsel %vm4618, %v5259, 0.0
      %v5292 = vsel %vm4619, %v5260, 0.0
      %v5293 = vsel %vm4620, %v5261, 0.0
      %v5294 = vsel %vm4621, %v5262, 0.0
      %v5295 = vsel %vm4622, %v5263, 0.0
      %v5296 = vsel %vm4623, %v5264, 0.0
      %v5297 = vsel %vm4624, %v5265, 0.0
      %v5298 = vsel %vm4625, %v5266, 0.0
      %v5299 = vsel %vm4626, %v5267, 0.0
      %v5300 = vsel %vm4627, %v5268, 0.0
      %v5301 = vsel %vm4628, %v5269, 0.0
      %v5302 = vsel %vm4629, %v5270, 0.0
      %v5303 = vsel %vm4630, %v5271, 0.0
      %v5304 = vsel %vm4631, %v5272, 0.0
      %v5305 = vsel %vm4616, 1, 0
      %v5306 = vsel %vm4617, 1, 0
      %v5307 = vsel %vm4618, 1, 0
      %v5308 = vsel %vm4619, 1, 0
      %v5309 = vsel %vm4620, 1, 0
      %v5310 = vsel %vm4621, 1, 0
      %v5311 = vsel %vm4622, 1, 0
      %v5312 = vsel %vm4623, 1, 0
      %v5313 = vsel %vm4624, 1, 0
      %v5314 = vsel %vm4625, 1, 0
      %v5315 = vsel %vm4626, 1, 0
      %v5316 = vsel %vm4627, 1, 0
      %v5317 = vsel %vm4628, 1, 0
      %v5318 = vsel %vm4629, 1, 0
      %v5319 = vsel %vm4630, 1, 0
      %v5320 = vsel %vm4631, 1, 0
      %vm5321 = vcmask 7168
      %v5322 = vsel %vm5321, %v2133, %v2918
      %v5323 = vsel %vm5321, %v2134, %v2919
      %v5324 = vsel %vm5321, %v2135, %v2920
      %v5325 = vsel %vm5321, %v2136, %v2921
      %v5326 = vsel %vm5321, %v2137, %v2922
      %v5327 = vsel %vm5321, %v2138, %v2923
      %v5328 = vsel %vm5321, %v2139, %v2924
      %v5329 = vsel %vm5321, %v2140, %v2925
      %v5330 = vsel %vm5321, %v2141, %v2926
      %v5331 = vsel %vm5321, %v2142, %v2927
      %v5332 = vsel %vm5321, %v2143, %v2928
      %v5333 = vsel %vm5321, %v2144, %v2929
      %v5334 = vsel %vm5321, %v2145, %v2930
      %v5335 = vsel %vm5321, %v2146, %v2931
      %v5336 = vsel %vm5321, %v2147, %v2932
      %v5337 = vsel %vm5321, %v2148, %v2933
      %vm5338 = vcmask 15360
      %v5339 = vsel %vm5338, %v5322, %v3703
      %v5340 = vsel %vm5338, %v5323, %v3704
      %v5341 = vsel %vm5338, %v5324, %v3705
      %v5342 = vsel %vm5338, %v5325, %v3706
      %v5343 = vsel %vm5338, %v5326, %v3707
      %v5344 = vsel %vm5338, %v5327, %v3708
      %v5345 = vsel %vm5338, %v5328, %v3709
      %v5346 = vsel %vm5338, %v5329, %v3710
      %v5347 = vsel %vm5338, %v5330, %v3711
      %v5348 = vsel %vm5338, %v5331, %v3712
      %v5349 = vsel %vm5338, %v5332, %v3713
      %v5350 = vsel %vm5338, %v5333, %v3714
      %v5351 = vsel %vm5338, %v5334, %v3715
      %v5352 = vsel %vm5338, %v5335, %v3716
      %v5353 = vsel %vm5338, %v5336, %v3717
      %v5354 = vsel %vm5338, %v5337, %v3718
      %vm5355 = vcmask 23552
      %v5356 = vsel %vm5355, %v5339, %v4488
      %v5357 = vsel %vm5355, %v5340, %v4489
      %v5358 = vsel %vm5355, %v5341, %v4490
      %v5359 = vsel %vm5355, %v5342, %v4491
      %v5360 = vsel %vm5355, %v5343, %v4492
      %v5361 = vsel %vm5355, %v5344, %v4493
      %v5362 = vsel %vm5355, %v5345, %v4494
      %v5363 = vsel %vm5355, %v5346, %v4495
      %v5364 = vsel %vm5355, %v5347, %v4496
      %v5365 = vsel %vm5355, %v5348, %v4497
      %v5366 = vsel %vm5355, %v5349, %v4498
      %v5367 = vsel %vm5355, %v5350, %v4499
      %v5368 = vsel %vm5355, %v5351, %v4500
      %v5369 = vsel %vm5355, %v5352, %v4501
      %v5370 = vsel %vm5355, %v5353, %v4502
      %v5371 = vsel %vm5355, %v5354, %v4503
      %vm5372 = vcmask 31744
      %v5373 = vsel %vm5372, %v5356, %v5273
      %v5374 = vsel %vm5372, %v5357, %v5274
      %v5375 = vsel %vm5372, %v5358, %v5275
      %v5376 = vsel %vm5372, %v5359, %v5276
      %v5377 = vsel %vm5372, %v5360, %v5277
      %v5378 = vsel %vm5372, %v5361, %v5278
      %v5379 = vsel %vm5372, %v5362, %v5279
      %v5380 = vsel %vm5372, %v5363, %v5280
      %v5381 = vsel %vm5372, %v5364, %v5281
      %v5382 = vsel %vm5372, %v5365, %v5282
      %v5383 = vsel %vm5372, %v5366, %v5283
      %v5384 = vsel %vm5372, %v5367, %v5284
      %v5385 = vsel %vm5372, %v5368, %v5285
      %v5386 = vsel %vm5372, %v5369, %v5286
      %v5387 = vsel %vm5372, %v5370, %v5287
      %v5388 = vsel %vm5372, %v5371, %v5288
      %vm5389 = vcmask 39936
      %5390 = vst.msk [vmem:[%s451] sm:$0xff] %vm5389, %v5373
      %5391 = vst.msk [vmem:[%s451 + $0x8] sm:$0xff] %vm5389, %v5374
      %5392 = vst.msk [vmem:[%s451 + $0x10] sm:$0xff] %vm5389, %v5375
      %5393 = vst.msk [vmem:[%s451 + $0x18] sm:$0xff] %vm5389, %v5376
      %5394 = vst.msk [vmem:[%s451 + $0x20] sm:$0xff] %vm5389, %v5377
      %5395 = vst.msk [vmem:[%s451 + $0x28] sm:$0xff] %vm5389, %v5378
      %5396 = vst.msk [vmem:[%s451 + $0x30] sm:$0xff] %vm5389, %v5379
      %5397 = vst.msk [vmem:[%s451 + $0x38] sm:$0xff] %vm5389, %v5380
      %5398 = vst.msk [vmem:[%s451 + $0x40] sm:$0xff] %vm5389, %v5381
      %5399 = vst.msk [vmem:[%s451 + $0x48] sm:$0xff] %vm5389, %v5382
      %5400 = vst.msk [vmem:[%s451 + $0x50] sm:$0xff] %vm5389, %v5383
      %5401 = vst.msk [vmem:[%s451 + $0x58] sm:$0xff] %vm5389, %v5384
      %5402 = vst.msk [vmem:[%s451 + $0x60] sm:$0xff] %vm5389, %v5385
      %5403 = vst.msk [vmem:[%s451 + $0x68] sm:$0xff] %vm5389, %v5386
      %5404 = vst.msk [vmem:[%s451 + $0x70] sm:$0xff] %vm5389, %v5387
      %5405 = vst.msk [vmem:[%s451 + $0x78] sm:$0xff] %vm5389, %v5388
      %5422 = vrot.lane.b32.xlu0 %v2934, 1
      %v5423 = vpop.permute.xlu0 %5422
      %5424 = vrot.lane.b32.xlu0 %v2935, 1
      %v5425 = vpop.permute.xlu0 %5424
      %5426 = vrot.lane.b32.xlu0 %v2936, 1
      %v5427 = vpop.permute.xlu0 %5426
      %5428 = vrot.lane.b32.xlu0 %v2937, 1
      %v5429 = vpop.permute.xlu0 %5428
      %5430 = vrot.lane.b32.xlu0 %v2938, 1
      %v5431 = vpop.permute.xlu0 %5430
      %5432 = vrot.lane.b32.xlu0 %v2939, 1
      %v5433 = vpop.permute.xlu0 %5432
      %5434 = vrot.lane.b32.xlu0 %v2940, 1
      %v5435 = vpop.permute.xlu0 %5434
      %5436 = vrot.lane.b32.xlu0 %v2941, 1
      %v5437 = vpop.permute.xlu0 %5436
      %5438 = vrot.lane.b32.xlu0 %v2942, 1
      %v5439 = vpop.permute.xlu0 %5438
      %5440 = vrot.lane.b32.xlu0 %v2943, 1
      %v5441 = vpop.permute.xlu0 %5440
      %5442 = vrot.lane.b32.xlu0 %v2944, 1
      %v5443 = vpop.permute.xlu0 %5442
      %5444 = vrot.lane.b32.xlu0 %v2945, 1
      %v5445 = vpop.permute.xlu0 %5444
      %5446 = vrot.lane.b32.xlu0 %v2946, 1
      %v5447 = vpop.permute.xlu0 %5446
      %5448 = vrot.lane.b32.xlu0 %v2947, 1
      %v5449 = vpop.permute.xlu0 %5448
      %5450 = vrot.lane.b32.xlu0 %v2948, 1
      %v5451 = vpop.permute.xlu0 %5450
      %5452 = vrot.lane.b32.xlu0 %v2949, 1
      %v5453 = vpop.permute.xlu0 %5452
      %5486 = vrot.lane.b32.xlu0 %v3719, 2
      %v5487 = vpop.permute.xlu0 %5486
      %5488 = vrot.lane.b32.xlu0 %v3720, 2
      %v5489 = vpop.permute.xlu0 %5488
      %5490 = vrot.lane.b32.xlu0 %v3721, 2
      %v5491 = vpop.permute.xlu0 %5490
      %5492 = vrot.lane.b32.xlu0 %v3722, 2
      %v5493 = vpop.permute.xlu0 %5492
      %5494 = vrot.lane.b32.xlu0 %v3723, 2
      %v5495 = vpop.permute.xlu0 %5494
      %5496 = vrot.lane.b32.xlu0 %v3724, 2
      %v5497 = vpop.permute.xlu0 %5496
      %5498 = vrot.lane.b32.xlu0 %v3725, 2
      %v5499 = vpop.permute.xlu0 %5498
      %5500 = vrot.lane.b32.xlu0 %v3726, 2
      %v5501 = vpop.permute.xlu0 %5500
      %5502 = vrot.lane.b32.xlu0 %v3727, 2
      %v5503 = vpop.permute.xlu0 %5502
      %5504 = vrot.lane.b32.xlu0 %v3728, 2
      %v5505 = vpop.permute.xlu0 %5504
      %5506 = vrot.lane.b32.xlu0 %v3729, 2
      %v5507 = vpop.permute.xlu0 %5506
      %5508 = vrot.lane.b32.xlu0 %v3730, 2
      %v5509 = vpop.permute.xlu0 %5508
      %5510 = vrot.lane.b32.xlu0 %v3731, 2
      %v5511 = vpop.permute.xlu0 %5510
      %5512 = vrot.lane.b32.xlu0 %v3732, 2
      %v5513 = vpop.permute.xlu0 %5512
      %5514 = vrot.lane.b32.xlu0 %v3733, 2
      %v5515 = vpop.permute.xlu0 %5514
      %5516 = vrot.lane.b32.xlu0 %v3734, 2
      %v5517 = vpop.permute.xlu0 %5516
      %5550 = vrot.lane.b32.xlu0 %v4504, 3
      %v5551 = vpop.permute.xlu0 %5550
      %5552 = vrot.lane.b32.xlu0 %v4505, 3
      %v5553 = vpop.permute.xlu0 %5552
      %5554 = vrot.lane.b32.xlu0 %v4506, 3
      %v5555 = vpop.permute.xlu0 %5554
      %5556 = vrot.lane.b32.xlu0 %v4507, 3
      %v5557 = vpop.permute.xlu0 %5556
      %5558 = vrot.lane.b32.xlu0 %v4508, 3
      %v5559 = vpop.permute.xlu0 %5558
      %5560 = vrot.lane.b32.xlu0 %v4509, 3
      %v5561 = vpop.permute.xlu0 %5560
      %5562 = vrot.lane.b32.xlu0 %v4510, 3
      %v5563 = vpop.permute.xlu0 %5562
      %5564 = vrot.lane.b32.xlu0 %v4511, 3
      %v5565 = vpop.permute.xlu0 %5564
      %5566 = vrot.lane.b32.xlu0 %v4512, 3
      %v5567 = vpop.permute.xlu0 %5566
      %5568 = vrot.lane.b32.xlu0 %v4513, 3
      %v5569 = vpop.permute.xlu0 %5568
      %5570 = vrot.lane.b32.xlu0 %v4514, 3
      %v5571 = vpop.permute.xlu0 %5570
      %5572 = vrot.lane.b32.xlu0 %v4515, 3
      %v5573 = vpop.permute.xlu0 %5572
      %5574 = vrot.lane.b32.xlu0 %v4516, 3
      %v5575 = vpop.permute.xlu0 %5574
      %5576 = vrot.lane.b32.xlu0 %v4517, 3
      %v5577 = vpop.permute.xlu0 %5576
      %5578 = vrot.lane.b32.xlu0 %v4518, 3
      %v5579 = vpop.permute.xlu0 %5578
      %5580 = vrot.lane.b32.xlu0 %v4519, 3
      %v5581 = vpop.permute.xlu0 %5580
      %5614 = vrot.lane.b32.xlu0 %v5289, 4
      %v5615 = vpop.permute.xlu0 %5614
      %5616 = vrot.lane.b32.xlu0 %v5290, 4
      %v5617 = vpop.permute.xlu0 %5616
      %5618 = vrot.lane.b32.xlu0 %v5291, 4
      %v5619 = vpop.permute.xlu0 %5618
      %5620 = vrot.lane.b32.xlu0 %v5292, 4
      %v5621 = vpop.permute.xlu0 %5620
      %5622 = vrot.lane.b32.xlu0 %v5293, 4
      %v5623 = vpop.permute.xlu0 %5622
      %5624 = vrot.lane.b32.xlu0 %v5294, 4
      %v5625 = vpop.permute.xlu0 %5624
      %5626 = vrot.lane.b32.xlu0 %v5295, 4
      %v5627 = vpop.permute.xlu0 %5626
      %5628 = vrot.lane.b32.xlu0 %v5296, 4
      %v5629 = vpop.permute.xlu0 %5628
      %5630 = vrot.lane.b32.xlu0 %v5297, 4
      %v5631 = vpop.permute.xlu0 %5630
      %5632 = vrot.lane.b32.xlu0 %v5298, 4
      %v5633 = vpop.permute.xlu0 %5632
      %5634 = vrot.lane.b32.xlu0 %v5299, 4
      %v5635 = vpop.permute.xlu0 %5634
      %5636 = vrot.lane.b32.xlu0 %v5300, 4
      %v5637 = vpop.permute.xlu0 %5636
      %5638 = vrot.lane.b32.xlu0 %v5301, 4
      %v5639 = vpop.permute.xlu0 %5638
      %5640 = vrot.lane.b32.xlu0 %v5302, 4
      %v5641 = vpop.permute.xlu0 %5640
      %5642 = vrot.lane.b32.xlu0 %v5303, 4
      %v5643 = vpop.permute.xlu0 %5642
      %5644 = vrot.lane.b32.xlu0 %v5304, 4
      %v5645 = vpop.permute.xlu0 %5644
      %v5662 = vsel %vm5321, %v2149, %v5423
      %v5663 = vsel %vm5321, %v2150, %v5425
      %v5664 = vsel %vm5321, %v2151, %v5427
      %v5665 = vsel %vm5321, %v2152, %v5429
      %v5666 = vsel %vm5321, %v2153, %v5431
      %v5667 = vsel %vm5321, %v2154, %v5433
      %v5668 = vsel %vm5321, %v2155, %v5435
      %v5669 = vsel %vm5321, %v2156, %v5437
      %v5670 = vsel %vm5321, %v2157, %v5439
      %v5671 = vsel %vm5321, %v2158, %v5441
      %v5672 = vsel %vm5321, %v2159, %v5443
      %v5673 = vsel %vm5321, %v2160, %v5445
      %v5674 = vsel %vm5321, %v2161, %v5447
      %v5675 = vsel %vm5321, %v2162, %v5449
      %v5676 = vsel %vm5321, %v2163, %v5451
      %v5677 = vsel %vm5321, %v2164, %v5453
      %v5678 = vsel %vm5338, %v5662, %v5487
      %v5679 = vsel %vm5338, %v5663, %v5489
      %v5680 = vsel %vm5338, %v5664, %v5491
      %v5681 = vsel %vm5338, %v5665, %v5493
      %v5682 = vsel %vm5338, %v5666, %v5495
      %v5683 = vsel %vm5338, %v5667, %v5497
      %v5684 = vsel %vm5338, %v5668, %v5499
      %v5685 = vsel %vm5338, %v5669, %v5501
      %v5686 = vsel %vm5338, %v5670, %v5503
      %v5687 = vsel %vm5338, %v5671, %v5505
      %v5688 = vsel %vm5338, %v5672, %v5507
      %v5689 = vsel %vm5338, %v5673, %v5509
      %v5690 = vsel %vm5338, %v5674, %v5511
      %v5691 = vsel %vm5338, %v5675, %v5513
      %v5692 = vsel %vm5338, %v5676, %v5515
      %v5693 = vsel %vm5338, %v5677, %v5517
      %v5694 = vsel %vm5355, %v5678, %v5551
      %v5695 = vsel %vm5355, %v5679, %v5553
      %v5696 = vsel %vm5355, %v5680, %v5555
      %v5697 = vsel %vm5355, %v5681, %v5557
      %v5698 = vsel %vm5355, %v5682, %v5559
      %v5699 = vsel %vm5355, %v5683, %v5561
      %v5700 = vsel %vm5355, %v5684, %v5563
      %v5701 = vsel %vm5355, %v5685, %v5565
      %v5702 = vsel %vm5355, %v5686, %v5567
      %v5703 = vsel %vm5355, %v5687, %v5569
      %v5704 = vsel %vm5355, %v5688, %v5571
      %v5705 = vsel %vm5355, %v5689, %v5573
      %v5706 = vsel %vm5355, %v5690, %v5575
      %v5707 = vsel %vm5355, %v5691, %v5577
      %v5708 = vsel %vm5355, %v5692, %v5579
      %v5709 = vsel %vm5355, %v5693, %v5581
      %v5710 = vsel %vm5372, %v5694, %v5615
      %v5711 = vsel %vm5372, %v5695, %v5617
      %v5712 = vsel %vm5372, %v5696, %v5619
      %v5713 = vsel %vm5372, %v5697, %v5621
      %v5714 = vsel %vm5372, %v5698, %v5623
      %v5715 = vsel %vm5372, %v5699, %v5625
      %v5716 = vsel %vm5372, %v5700, %v5627
      %v5717 = vsel %vm5372, %v5701, %v5629
      %v5718 = vsel %vm5372, %v5702, %v5631
      %v5719 = vsel %vm5372, %v5703, %v5633
      %v5720 = vsel %vm5372, %v5704, %v5635
      %v5721 = vsel %vm5372, %v5705, %v5637
      %v5722 = vsel %vm5372, %v5706, %v5639
      %v5723 = vsel %vm5372, %v5707, %v5641
      %v5724 = vsel %vm5372, %v5708, %v5643
      %v5725 = vsel %vm5372, %v5709, %v5645
      %5726 = vst.msk [vmem:[%s457] sm:$0xff] %vm5389, %v5710
      %5727 = vst.msk [vmem:[%s457 + $0x8] sm:$0xff] %vm5389, %v5711
      %5728 = vst.msk [vmem:[%s457 + $0x10] sm:$0xff] %vm5389, %v5712
      %5729 = vst.msk [vmem:[%s457 + $0x18] sm:$0xff] %vm5389, %v5713
      %5730 = vst.msk [vmem:[%s457 + $0x20] sm:$0xff] %vm5389, %v5714
      %5731 = vst.msk [vmem:[%s457 + $0x28] sm:$0xff] %vm5389, %v5715
      %5732 = vst.msk [vmem:[%s457 + $0x30] sm:$0xff] %vm5389, %v5716
      %5733 = vst.msk [vmem:[%s457 + $0x38] sm:$0xff] %vm5389, %v5717
      %5734 = vst.msk [vmem:[%s457 + $0x40] sm:$0xff] %vm5389, %v5718
      %5735 = vst.msk [vmem:[%s457 + $0x48] sm:$0xff] %vm5389, %v5719
      %5736 = vst.msk [vmem:[%s457 + $0x50] sm:$0xff] %vm5389, %v5720
      %5737 = vst.msk [vmem:[%s457 + $0x58] sm:$0xff] %vm5389, %v5721
      %5738 = vst.msk [vmem:[%s457 + $0x60] sm:$0xff] %vm5389, %v5722
      %5739 = vst.msk [vmem:[%s457 + $0x68] sm:$0xff] %vm5389, %v5723
      %5740 = vst.msk [vmem:[%s457 + $0x70] sm:$0xff] %vm5389, %v5724
      %5741 = vst.msk [vmem:[%s457 + $0x78] sm:$0xff] %vm5389, %v5725
      %v5742 = vsel %vm5321, %v2165, %v2950
      %v5743 = vsel %vm5321, %v2166, %v2951
      %v5744 = vsel %vm5321, %v2167, %v2952
      %v5745 = vsel %vm5321, %v2168, %v2953
      %v5746 = vsel %vm5321, %v2169, %v2954
      %v5747 = vsel %vm5321, %v2170, %v2955
      %v5748 = vsel %vm5321, %v2171, %v2956
      %v5749 = vsel %vm5321, %v2172, %v2957
      %v5750 = vsel %vm5321, %v2173, %v2958
      %v5751 = vsel %vm5321, %v2174, %v2959
      %v5752 = vsel %vm5321, %v2175, %v2960
      %v5753 = vsel %vm5321, %v2176, %v2961
      %v5754 = vsel %vm5321, %v2177, %v2962
      %v5755 = vsel %vm5321, %v2178, %v2963
      %v5756 = vsel %vm5321, %v2179, %v2964
      %v5757 = vsel %vm5321, %v2180, %v2965
      %v5758 = vsel %vm5338, %v5742, %v3735
      %v5759 = vsel %vm5338, %v5743, %v3736
      %v5760 = vsel %vm5338, %v5744, %v3737
      %v5761 = vsel %vm5338, %v5745, %v3738
      %v5762 = vsel %vm5338, %v5746, %v3739
      %v5763 = vsel %vm5338, %v5747, %v3740
      %v5764 = vsel %vm5338, %v5748, %v3741
      %v5765 = vsel %vm5338, %v5749, %v3742
      %v5766 = vsel %vm5338, %v5750, %v3743
      %v5767 = vsel %vm5338, %v5751, %v3744
      %v5768 = vsel %vm5338, %v5752, %v3745
      %v5769 = vsel %vm5338, %v5753, %v3746
      %v5770 = vsel %vm5338, %v5754, %v3747
      %v5771 = vsel %vm5338, %v5755, %v3748
      %v5772 = vsel %vm5338, %v5756, %v3749
      %v5773 = vsel %vm5338, %v5757, %v3750
      %v5774 = vsel %vm5355, %v5758, %v4520
      %v5775 = vsel %vm5355, %v5759, %v4521
      %v5776 = vsel %vm5355, %v5760, %v4522
      %v5777 = vsel %vm5355, %v5761, %v4523
      %v5778 = vsel %vm5355, %v5762, %v4524
      %v5779 = vsel %vm5355, %v5763, %v4525
      %v5780 = vsel %vm5355, %v5764, %v4526
      %v5781 = vsel %vm5355, %v5765, %v4527
      %v5782 = vsel %vm5355, %v5766, %v4528
      %v5783 = vsel %vm5355, %v5767, %v4529
      %v5784 = vsel %vm5355, %v5768, %v4530
      %v5785 = vsel %vm5355, %v5769, %v4531
      %v5786 = vsel %vm5355, %v5770, %v4532
      %v5787 = vsel %vm5355, %v5771, %v4533
      %v5788 = vsel %vm5355, %v5772, %v4534
      %v5789 = vsel %vm5355, %v5773, %v4535
      %v5790 = vsel %vm5372, %v5774, %v5305
      %v5791 = vsel %vm5372, %v5775, %v5306
      %v5792 = vsel %vm5372, %v5776, %v5307
      %v5793 = vsel %vm5372, %v5777, %v5308
      %v5794 = vsel %vm5372, %v5778, %v5309
      %v5795 = vsel %vm5372, %v5779, %v5310
      %v5796 = vsel %vm5372, %v5780, %v5311
      %v5797 = vsel %vm5372, %v5781, %v5312
      %v5798 = vsel %vm5372, %v5782, %v5313
      %v5799 = vsel %vm5372, %v5783, %v5314
      %v5800 = vsel %vm5372, %v5784, %v5315
      %v5801 = vsel %vm5372, %v5785, %v5316
      %v5802 = vsel %vm5372, %v5786, %v5317
      %v5803 = vsel %vm5372, %v5787, %v5318
      %v5804 = vsel %vm5372, %v5788, %v5319
      %v5805 = vsel %vm5372, %v5789, %v5320
      %5806 = vst.msk [vmem:[%s463] sm:$0xff] %vm5389, %v5790
      %5807 = vst.msk [vmem:[%s463 + $0x8] sm:$0xff] %vm5389, %v5791
      %5808 = vst.msk [vmem:[%s463 + $0x10] sm:$0xff] %vm5389, %v5792
      %5809 = vst.msk [vmem:[%s463 + $0x18] sm:$0xff] %vm5389, %v5793
      %5810 = vst.msk [vmem:[%s463 + $0x20] sm:$0xff] %vm5389, %v5794
      %5811 = vst.msk [vmem:[%s463 + $0x28] sm:$0xff] %vm5389, %v5795
      %5812 = vst.msk [vmem:[%s463 + $0x30] sm:$0xff] %vm5389, %v5796
      %5813 = vst.msk [vmem:[%s463 + $0x38] sm:$0xff] %vm5389, %v5797
      %5814 = vst.msk [vmem:[%s463 + $0x40] sm:$0xff] %vm5389, %v5798
      %5815 = vst.msk [vmem:[%s463 + $0x48] sm:$0xff] %vm5389, %v5799
      %5816 = vst.msk [vmem:[%s463 + $0x50] sm:$0xff] %vm5389, %v5800
      %5817 = vst.msk [vmem:[%s463 + $0x58] sm:$0xff] %vm5389, %v5801
      %5818 = vst.msk [vmem:[%s463 + $0x60] sm:$0xff] %vm5389, %v5802
      %5819 = vst.msk [vmem:[%s463 + $0x68] sm:$0xff] %vm5389, %v5803
      %5820 = vst.msk [vmem:[%s463 + $0x70] sm:$0xff] %vm5389, %v5804
      %5821 = vst.msk [vmem:[%s463 + $0x78] sm:$0xff] %vm5389, %v5805
      %s5822 = smul.u32 16, %s27
      %p5823 = scmp.lt.s32.totalorder %s5822, 31
      %s5824 = scalar_select %p5823, %s5822, 31
      %s5825 = smul.addr %s5824, 8
      %s5826 = scalar_lea.vmem %s10, %s5825
      %s5827 = smul.u32 16, %s27
      %p5828 = scmp.lt.s32.totalorder %s5827, 31
      %s5829 = scalar_select %p5828, %s5827, 31
      %s5830 = smul.addr %s5829, 8
      %s5831 = scalar_lea.vmem %s11, %s5830
      %s5832 = smul.u32 16, %s27
      %p5833 = scmp.lt.s32.totalorder %s5832, 31
      %s5834 = scalar_select %p5833, %s5832, 31
      %s5835 = smul.addr %s5834, 8
      %s5836 = scalar_lea.vmem %s12, %s5835
      // Predicated region
      $region57: #{_forward_device.3} parent=55 // pred_check
        %p5837 = pneg %p249
      $region58: #{_forward_device.3} parent=55 // pred_check_branch
        %5839 = sbr.rel (%p5837) target = $region60
      $region59: #{_forward_device.3} parent=55 // pred_region
        %s5840 = smul.u32 16, %s27
      $region60: #{_forward_device.3} parent=55 // pred_fallthru
        _
      // Predicated region
      $region61: #{_forward_device.3} parent=55 // pred_check
        %p5841 = pneg %p275
      $region62: #{_forward_device.3} parent=55 // pred_check_branch
        %5843 = sbr.rel (%p5841) target = $region64
      $region63: #{_forward_device.3} parent=55 // pred_region
        %s5844 = smul.u32 16, %s27
      $region64: #{_forward_device.3} parent=55 // pred_fallthru
        _
      // Predicated region
      $region65: #{_forward_device.3} parent=55 // pred_check
        %p5845 = pneg %p301
      $region66: #{_forward_device.3} parent=55 // pred_check_branch
        %5847 = sbr.rel (%p5845) target = $region68
      $region67: #{_forward_device.3} parent=55 // pred_region
        %s5848 = smul.u32 16, %s27
      $region68: #{_forward_device.3} parent=55 // pred_fallthru
        _
    $region56: #{_forward_device.3} parent=5 // pred_fallthru
      _
    %p5849 = scmp.le.s32.totalorder 2, %s22
    // Predicated region
    $region69: #{_forward_device.3} parent=5 // pred_check
      %p5850 = pneg %p5849
    $region70: #{_forward_device.3} parent=5 // pred_check_branch
      %5852 = sbr.rel (%p5850) target = $region72
    $region71: #{_forward_device.3} parent=5 // pred_region
      %s5853 = ssub.s32 %s22, 2
      // Predicated region
      $region73: #{_forward_device.3} parent=71 // pred_check
        %p5854 = pneg %p255
      $region74: #{_forward_device.3} parent=71 // pred_check_branch
        %5856 = sbr.rel (%p5854) target = $region76
      $region75: #{_forward_device.3} parent=71 // pred_region
        %s5857 = smul.u32 16, %s28
        %p5858 = scmp.lt.s32.totalorder %s5857, 31
        %s5859 = scalar_select %p5858, %s5857, 31
        %s5860 = smul.addr %s5859, 8
        %s5861 = scalar_lea.vmem %s10, %s5860
      $region76: #{_forward_device.3} parent=71 // pred_fallthru
        _
      // Predicated region
      $region77: #{_forward_device.3} parent=71 // pred_check
        %p5862 = pneg %p281
      $region78: #{_forward_device.3} parent=71 // pred_check_branch
        %5864 = sbr.rel (%p5862) target = $region80
      $region79: #{_forward_device.3} parent=71 // pred_region
        %s5865 = smul.u32 16, %s28
        %p5866 = scmp.lt.s32.totalorder %s5865, 31
        %s5867 = scalar_select %p5866, %s5865, 31
        %s5868 = smul.addr %s5867, 8
        %s5869 = scalar_lea.vmem %s11, %s5868
      $region80: #{_forward_device.3} parent=71 // pred_fallthru
        _
      // Predicated region
      $region81: #{_forward_device.3} parent=71 // pred_check
        %p5870 = pneg %p307
      $region82: #{_forward_device.3} parent=71 // pred_check_branch
        %5872 = sbr.rel (%p5870) target = $region84
      $region83: #{_forward_device.3} parent=71 // pred_region
        %s5873 = smul.u32 16, %s28
        %p5874 = scmp.lt.s32.totalorder %s5873, 31
        %s5875 = scalar_select %p5874, %s5873, 31
        %s5876 = smul.addr %s5875, 8
        %s5877 = scalar_lea.vmem %s12, %s5876
      $region84: #{_forward_device.3} parent=71 // pred_fallthru
        _
    $region72: #{_forward_device.3} parent=5 // pred_fallthru
      _
  $region6: #{_forward_device.3} parent=0 // loop_footer
    %s26 = sadd.s32 1, %s22
  $region7: #{_forward_device.3} parent=0 // loop_footer_branch
    %21 = sbr.rel target = $region3
  $region8: #{_forward_device.3} parent=0 // loop_exit
    _

</llo_original>
